<compile_context>
chip_gen: v7x
topology: tpu7x:2x2x1
jax: 0.10.0
libtpu: 0.0.40
codegen_flags: <defaults>
</compile_context>

<pallas_src>
import functools

import jax
import jax.numpy as jnp
from jax import lax
from jax.experimental import pallas as pl
from jax.experimental.pallas import tpu as pltpu

F32 = jnp.float32
BF16 = jnp.bfloat16
VMEM = pl.BlockSpec(memory_space=pltpu.MemorySpace.VMEM)


def _mxu(a, w):
    # bf16 MXU operands, f32 accumulation (weights are pre-cast bf16 on the host).
    return jnp.dot(a.astype(BF16), w.astype(BF16), preferred_element_type=jnp.float32)


def _dotf(a, b):
    # exact f32 dot (used for the one-hot gather so parent rows are bit-exact).
    return jnp.dot(a, b, preferred_element_type=jnp.float32)


# --------------------------- single fused classifier kernel ---------------------------

def _classifier_kernel(xcat_ref, mask_ref, gum_ref,
                       wih_bi_ref, whh_bi_ref, b_bi_ref,
                       ws1t_ref, ws1b_ref, ws2t_ref, ws2b_ref, ipt_ref, ipb_ref,
                       wihd_ref, whhd_ref, bd_ref, ws3t_ref, ws3b_ref, ws4t_ref, ws4b_ref,
                       wihc_ref, whhc_ref, bc_ref, w1t_ref, w2t_ref, vtr_ref, vtb_ref,
                       pret_ref, preb_ref, predt_ref, predb_ref,
                       oa_ref, oc_ref, loss_ref,
                       of_scr, ob_scr, inner_scr, *, is_test):
    T, B, _ = xcat_ref.shape          # time-major word inputs, B == number of sentences
    H = of_scr.shape[-1]              # per-direction hidden size
    D = 2 * H                         # hidden_dim * 2
    N = inner_scr.shape[0]            # number of sentences (== B)

    # ---------------- 1. fused forward+backward word LSTM (one recurrence) ----------------
    # xcat lanes [0:E] = x[t], lanes [E:2E] = x[T-1-t]; gate columns are interleaved
    # [i_f,i_b | f_f,f_b | g_f,g_b | o_f,o_b] so both directions share one (B,8H=128) gate.
    xcat = xcat_ref[...].reshape(T * B, xcat_ref.shape[-1])
    p_bi = _mxu(xcat, wih_bi_ref[...]) + b_bi_ref[...]          # hoisted input projection
    whh_bi = whh_bi_ref[...]
    h_cat = jnp.zeros((B, D), F32)
    c_cat = jnp.zeros((B, D), F32)
    for t in range(T):                                          # fully unrolled, T is static
        g = p_bi[t * B:(t + 1) * B, :] + _mxu(h_cat, whh_bi)    # (B, 8H)
        i = jax.nn.sigmoid(g[:, 0:D])
        f = jax.nn.sigmoid(g[:, D:2 * D])
        gg = jnp.tanh(g[:, 2 * D:3 * D])
        o = jax.nn.sigmoid(g[:, 3 * D:4 * D])
        c_cat = f * c_cat + i * gg
        h_cat = o * jnp.tanh(c_cat)
        of_scr[t] = h_cat[:, :H]                                # forward output at time t
        ob_scr[T - 1 - t] = h_cat[:, H:]                        # backward output, un-reversed

    # -------- 2. masked self-attention pooling over time + tanh(inner_pred) --------
    ws1t = ws1t_ref[...]
    xf_all = of_scr[...].reshape(T * B, H)
    xb_all = ob_scr[...].reshape(T * B, H)
    h1 = jnp.tanh(_mxu(xf_all, ws1t[:H, :]) + _mxu(xb_all, ws1t[H:, :]) + ws1b_ref[...])
    s_all = _mxu(h1, ws2t_ref[...]) + ws2b_ref[...]             # (T*B, 1) attention logits

    msc = []
    for t in range(T):
        sc_t = s_all[t * B:(t + 1) * B, :]                      # (B, 1)
        mk_t = mask_ref[t]                                      # (B, 1)
        msc.append(jnp.where(mk_t > 0.0, sc_t, sc_t - 10000.0))
    m = msc[0]
    for t in range(1, T):
        m = jnp.maximum(m, msc[t])
    denom = jnp.zeros((B, 1), F32)
    num_f = jnp.zeros((B, H), F32)
    num_b = jnp.zeros((B, H), F32)
    for t in range(T):
        e_t = jnp.exp(msc[t] - m)
        denom = denom + e_t
        num_f = num_f + e_t * of_scr[t]
        num_b = num_b + e_t * ob_scr[t]
    inv = pl.reciprocal(denom, approx=True)
    pooled_f = num_f * inv
    pooled_b = num_b * inv
    ipt = ipt_ref[...]
    sent = jnp.tanh(_mxu(pooled_f, ipt[:H, :]) + _mxu(pooled_b, ipt[H:, :]) + ipb_ref[...])

    # ---------------- 3. discourse LSTM over sentences + doc attention ----------------
    p_d = _mxu(sent, wihd_ref[...]) + bd_ref[...]               # (N, 4D) hoisted input proj
    whh_d = whhd_ref[...]
    h = jnp.zeros((1, D), F32)
    c = jnp.zeros((1, D), F32)
    for t in range(N):                                          # fully unrolled
        g = p_d[t:t + 1, :] + _mxu(h, whh_d)                    # (1, 4D)
        i = jax.nn.sigmoid(g[:, 0:D])
        f = jax.nn.sigmoid(g[:, D:2 * D])
        gg = jnp.tanh(g[:, 2 * D:3 * D])
        o = jax.nn.sigmoid(g[:, 3 * D:4 * D])
        c = f * c + i * gg
        h = o * jnp.tanh(c)
        inner_scr[pl.ds(t, 1), :] = h
    inner = inner_scr[...]                                      # (N, D) sentence states

    h3 = jnp.tanh(_mxu(inner, ws3t_ref[...]) + ws3b_ref[...])
    s3 = _mxu(h3, ws4t_ref[...]) + ws4b_ref[...]                # (N, 1)
    m3 = jnp.max(s3, axis=0, keepdims=True)
    e3 = jnp.exp(s3 - m3)
    attn3 = e3 * pl.reciprocal(jnp.sum(e3, axis=0, keepdims=True), approx=True)
    doc = jnp.sum(inner * attn3, axis=0, keepdims=True)         # (1, D) doc encoding

    # ------- 4. pointer decoder: actor sample + critic argmax + RL cross-entropy -------
    p_c = _mxu(inner, wihc_ref[...]) + bc_ref[...]              # (N, 4D) hoisted input proj
    whh_c = whhc_ref[...]
    e1 = _mxu(inner, w1t_ref[...])                              # (N, D), loop invariant
    w2t = w2t_ref[...]
    vtr = vtr_ref[...]                                          # (1, 2D): vt weight row
    vtm = vtr[:, :D]
    vtd = vtr[:, D:]
    vtb = vtb_ref[...]
    ids = lax.broadcasted_iota(jnp.int32, (N, 1), 0)
    ids_f = ids.astype(F32)

    def first_max_index(v):                                     # argmax, first-index tie-break
        best = jnp.max(v, axis=0, keepdims=True)
        cand = jnp.where(v >= best, ids_f, float(N))
        return jnp.min(cand, axis=0, keepdims=True).astype(jnp.int32)   # (1, 1)

    h = doc
    c = doc
    pa = jnp.zeros((N, 1), jnp.int32)                           # actor parents
    pc = jnp.zeros((N, 1), jnp.int32)                           # critic parents
    loss = jnp.zeros((1, 1), F32)
    for ind in range(2, N):                                     # fully unrolled decoder
        g = p_c[ind:ind + 1, :] + _mxu(h, whh_c)                # LSTMCell (input is enc[ind])
        i = jax.nn.sigmoid(g[:, 0:D])
        f = jax.nn.sigmoid(g[:, D:2 * D])
        gg = jnp.tanh(g[:, 2 * D:3 * D])
        o = jax.nn.sigmoid(g[:, 3 * D:4 * D])
        c = f * c + i * gg
        h = o * jnp.tanh(c)
        e2 = _mxu(h, w2t)                                       # (1, D)
        # pointer score vt([tanh(e1*e2), tanh(e1-e2)]) done on VPU/XLU (no per-step MXU dot)
        attn = (jnp.sum(jnp.tanh(e1 * e2) * vtm + jnp.tanh(e1 - e2) * vtd,
                        axis=-1, keepdims=True) + vtb)          # (N, 1)
        valid = ids < ind
        scores = jnp.where(valid, attn, attn - 10000.0)
        # critic: deterministic argmax (scores identical to the actor pass)
        parent_c = jnp.minimum(first_max_index(scores), ind - 1)
        # actor: Gumbel-max sample ~ Categorical(softmax(scores)); noise pre-drawn on host
        gum = gum_ref[ind]                                      # (N, 1)
        parent_s = jnp.minimum(first_max_index(scores + gum), ind - 1)
        parent_a = parent_c if is_test else parent_s
        # F.cross_entropy(scores[:ind], parent) == logsumexp(prefix) - attn[parent]
        mm = jnp.max(jnp.where(valid, attn, -1e30), axis=0, keepdims=True)
        ex = jnp.where(valid, jnp.exp(attn - mm), 0.0)
        lse = mm + jnp.log(jnp.sum(ex, axis=0, keepdims=True))
        picked = jnp.sum(jnp.where(ids == parent_a, attn, 0.0), axis=0, keepdims=True)
        loss = loss + (lse - picked)
        pa = jnp.where(ids == ind, parent_a, pa)
        pc = jnp.where(ids == ind, parent_c, pc)
    loss_ref[...] = loss * (1.0 / (N - 2 + 1e-5))

    # ------------- 5. DiscourseAct heads for actor + critic parents -------------
    child = inner[1:, :]                                        # (N-1, D)
    pret = pret_ref[...]                                        # (2D, D) pre-transposed
    pw_child = pret[:D, :]
    pw_parent = pret[D:, :]
    preb = preb_ref[...]
    predt = predt_ref[...]
    predb = predb_ref[...]
    cols = lax.broadcasted_iota(jnp.int32, (N - 1, N), 1)

    def head(parents, out_ref):
        pidx = parents[1:, :]                                   # (N-1, 1)
        onehot = (cols == pidx).astype(F32)                     # gather-as-matmul (exact)
        parent_rows = _dotf(onehot, inner)                      # (N-1, D)
        pre = jnp.tanh(_mxu(child, pw_child) + _mxu(parent_rows, pw_parent) + preb)
        out_ref[...] = _mxu(pre, predt) + predb

    head(pa, oa_ref)
    head(pc, oc_ref)


def classifier_fused(p, xcat_tm, mask_tm, gumbel, is_test):
    T, N, _ = xcat_tm.shape
    H = p["bilstm"][1].shape[0] // 2
    D = 2 * H
    OUT = p["pred_t"].shape[1]
    inputs = (xcat_tm, mask_tm, gumbel,
              *p["bilstm"],
              p["ws1_t"], p["ws1_b"], p["ws2_t"], p["ws2_b"],
              p["inner_pred_t"], p["inner_pred_b"],
              *p["disc_lstm"],
              p["ws3_t"], p["ws3_b"], p["ws4_t"], p["ws4_b"],
              *p["cell"],
              p["W1_t"], p["W2_t"], p["vt_row"], p["vt_b"],
              p["pre_pred_t"], p["pre_pred_b"], p["pred_t"], p["pred_b"])
    return pl.pallas_call(
        functools.partial(_classifier_kernel, is_test=is_test),
        out_shape=(jax.ShapeDtypeStruct((N - 1, OUT), F32),     # actor logits
                   jax.ShapeDtypeStruct((N - 1, OUT), F32),     # critic logits
                   jax.ShapeDtypeStruct((1, 1), F32)),          # rl loss
        in_specs=[VMEM] * len(inputs),
        out_specs=(VMEM, VMEM, VMEM),
        scratch_shapes=[pltpu.VMEM((T, N, H), F32),             # forward word-LSTM outputs
                        pltpu.VMEM((T, N, H), F32),             # backward word-LSTM outputs
                        pltpu.VMEM((N, D), F32)],               # discourse LSTM states
    )(*inputs)


# --------------------------------- model glue ---------------------------------

def classifier_forward(p, outp_ctxt, ctxt_mask, is_test=False, rng=None):
    # outp_ctxt: (N, T, E) word embeddings, ctxt_mask: (N, T)
    N = outp_ctxt.shape[0]
    x_tm = jnp.transpose(outp_ctxt, (1, 0, 2))                  # (T, N, E) time-major
    x_rev = x_tm[::-1]                                          # backward-direction inputs
    xcat_tm = jnp.concatenate([x_tm, x_rev], axis=-1)           # (T, N, 2E)
    mask_tm = jnp.transpose(ctxt_mask.astype(F32), (1, 0))[:, :, None]
    # Pre-drawn Gumbel noise (one (N,1) column per decoder step) replaces torch.multinomial.
    gumbel = jax.random.gumbel(rng, (N, N, 1), F32)
    pred, critic_pred, rl_loss = classifier_fused(p, xcat_tm, mask_tm, gumbel, is_test)
    return pred, critic_pred, rl_loss[0, 0]


# ------------------------------ parameter construction ------------------------------

def _torch_linear(key, out_dim, in_dim):
    kw, kb = jax.random.split(key)
    w = jax.random.normal(kw, (out_dim, in_dim), F32) * 0.1     # torch nn.Linear layout
    b = jax.random.normal(kb, (out_dim,), F32) * 0.05
    return w, b


def lin_t(key, out_dim, in_dim):
    w, b = _torch_linear(key, out_dim, in_dim)
    return w.T.astype(BF16), b.reshape(1, -1)                   # pre-transposed, bf16 MXU side


def _torch_lstm(key, in_dim, hidden):
    k1, k2, k3 = jax.random.split(key, 3)
    wih = jax.random.normal(k1, (4 * hidden, in_dim), F32) * 0.1
    whh = jax.random.normal(k2, (4 * hidden, hidden), F32) * 0.1
    b = jax.random.normal(k3, (4 * hidden,), F32) * 0.05        # b_ih + b_hh combined
    return wih, whh, b


def unidir_lstm_t(key, in_dim, hidden):
    wih, whh, b = _torch_lstm(key, in_dim, hidden)
    return wih.T.astype(BF16), whh.T.astype(BF16), b.reshape(1, -1)


def fuse_bidir_lstm(kf, kb, E, H):
    # Build block-diagonal, gate-interleaved weights so fwd+bwd share one 8H=128-lane gate:
    # gate columns [i_f,i_b | f_f,f_b | g_f,g_b | o_f,o_b]; input lanes [x | x_reversed].
    wf_ih, wf_hh, bf = _torch_lstm(kf, E, H)
    wb_ih, wb_hh, bb = _torch_lstm(kb, E, H)
    wih = jnp.zeros((2 * E, 8 * H), F32)
    whh = jnp.zeros((2 * H, 8 * H), F32)
    b = jnp.zeros((1, 8 * H), F32)
    for k in range(4):                                          # PyTorch gate order i, f, g, o
        cf = slice(2 * k * H, 2 * k * H + H)
        cb = slice(2 * k * H + H, 2 * (k + 1) * H)
        rows = slice(k * H, (k + 1) * H)
        wih = wih.at[:E, cf].set(wf_ih[rows, :].T)
        wih = wih.at[E:, cb].set(wb_ih[rows, :].T)
        whh = whh.at[:H, cf].set(wf_hh[rows, :].T)
        whh = whh.at[H:, cb].set(wb_hh[rows, :].T)
        b = b.at[0, cf].set(bf[rows])
        b = b.at[0, cb].set(bb[rows])
    return wih.astype(BF16), whh.astype(BF16), b


if __name__ == "__main__":
    # config: hidden_dim=16, embedding_dim=32, num_layers=1, bidirectional, out_dim=4, dropout=0
    N, T, E, H, OUT = 8, 8, 32, 16, 4
    D = 2 * H

    key = jax.random.PRNGKey(0)
    ks = jax.random.split(key, 20)
    ws1_t, ws1_b = lin_t(ks[2], D, D)
    ws2_t, ws2_b = lin_t(ks[3], 1, D)
    ip_t, ip_b = lin_t(ks[4], D, D)
    ws3_t, ws3_b = lin_t(ks[6], D, D)
    ws4_t, ws4_b = lin_t(ks[7], 1, D)
    W1_t, _ = lin_t(ks[9], D, D)                                # bias=False
    W2_t, _ = lin_t(ks[10], D, D)                               # bias=False
    vt_w, vt_b = _torch_linear(ks[11], 1, 2 * D)                # kept f32 (used on VPU)
    pre_t, pre_b = lin_t(ks[12], D, 2 * D)
    pred_t, pred_b = lin_t(ks[13], OUT, D)
    params = {
        "bilstm": fuse_bidir_lstm(ks[0], ks[1], E, H),
        "ws1_t": ws1_t, "ws1_b": ws1_b.astype(F32),
        "ws2_t": ws2_t, "ws2_b": ws2_b.astype(F32),
        "inner_pred_t": ip_t, "inner_pred_b": ip_b.astype(F32),
        "disc_lstm": unidir_lstm_t(ks[5], D, D),
        "ws3_t": ws3_t, "ws3_b": ws3_b.astype(F32),
        "ws4_t": ws4_t, "ws4_b": ws4_b.astype(F32),
        "cell": unidir_lstm_t(ks[8], D, D),
        "W1_t": W1_t, "W2_t": W2_t,
        "vt_row": vt_w.reshape(1, 2 * D), "vt_b": vt_b.reshape(1, 1),
        "pre_pred_t": pre_t, "pre_pred_b": pre_b.astype(F32),
        "pred_t": pred_t, "pred_b": pred_b.astype(F32),
    }

    # TODO(synk): ELMo character-CNN embedder (get_word_embeddings) has no Pallas equivalent;
    # replaced with deterministic random word embeddings and an all-ones mask (equal lengths,
    # so pack_padded_sequence is identity).
    outp_ctxt = jax.random.normal(ks[14], (N, T, E), F32)
    ctxt_mask = jnp.ones((N, T), jnp.int32)

    fwd = jax.jit(classifier_forward, static_argnums=(3,))
    pred, critic_pred, rl_loss = fwd(params, outp_ctxt, ctxt_mask, False, jax.random.PRNGKey(1))
    jax.block_until_ready((pred, critic_pred, rl_loss))
    assert pred.shape == (N - 1, OUT) and critic_pred.shape == (N - 1, OUT)
    print("KERNEL_OK")
</pallas_src>

<mosaic_0001>
module attributes {stable_mosaic.version = 11 : i64} {
  func.func @_classifier_kernel(%arg0: memref<8x8x64xf32, #tpu.memory_space<vmem>>, %arg1: memref<8x8x1xf32, #tpu.memory_space<vmem>>, %arg2: memref<8x8x1xf32, #tpu.memory_space<vmem>>, %arg3: memref<64x128xbf16, #tpu.memory_space<vmem>>, %arg4: memref<32x128xbf16, #tpu.memory_space<vmem>>, %arg5: memref<1x128xf32, #tpu.memory_space<vmem>>, %arg6: memref<32x32xbf16, #tpu.memory_space<vmem>>, %arg7: memref<1x32xf32, #tpu.memory_space<vmem>>, %arg8: memref<32x1xbf16, #tpu.memory_space<vmem>>, %arg9: memref<1x1xf32, #tpu.memory_space<vmem>>, %arg10: memref<32x32xbf16, #tpu.memory_space<vmem>>, %arg11: memref<1x32xf32, #tpu.memory_space<vmem>>, %arg12: memref<32x128xbf16, #tpu.memory_space<vmem>>, %arg13: memref<32x128xbf16, #tpu.memory_space<vmem>>, %arg14: memref<1x128xf32, #tpu.memory_space<vmem>>, %arg15: memref<32x32xbf16, #tpu.memory_space<vmem>>, %arg16: memref<1x32xf32, #tpu.memory_space<vmem>>, %arg17: memref<32x1xbf16, #tpu.memory_space<vmem>>, %arg18: memref<1x1xf32, #tpu.memory_space<vmem>>, %arg19: memref<32x128xbf16, #tpu.memory_space<vmem>>, %arg20: memref<32x128xbf16, #tpu.memory_space<vmem>>, %arg21: memref<1x128xf32, #tpu.memory_space<vmem>>, %arg22: memref<32x32xbf16, #tpu.memory_space<vmem>>, %arg23: memref<32x32xbf16, #tpu.memory_space<vmem>>, %arg24: memref<1x64xf32, #tpu.memory_space<vmem>>, %arg25: memref<1x1xf32, #tpu.memory_space<vmem>>, %arg26: memref<64x32xbf16, #tpu.memory_space<vmem>>, %arg27: memref<1x32xf32, #tpu.memory_space<vmem>>, %arg28: memref<32x4xbf16, #tpu.memory_space<vmem>>, %arg29: memref<1x4xf32, #tpu.memory_space<vmem>>, %arg30: memref<7x4xf32, #tpu.memory_space<vmem>>, %arg31: memref<7x4xf32, #tpu.memory_space<vmem>>, %arg32: memref<1x1xf32, #tpu.memory_space<vmem>>, %arg33: memref<8x8x16xf32, #tpu.memory_space<vmem>>, %arg34: memref<8x8x16xf32, #tpu.memory_space<vmem>>, %arg35: memref<8x32xf32, #tpu.memory_space<vmem>>) attributes {dimension_semantics = [], scalar_prefetch = 0 : i64, scratch_operands = 3 : i64, tpu.core_type = #tpu.core_type<tc>} {
    %c0 = arith.constant 0 : index
    %c0_0 = arith.constant 0 : index
    %c0_1 = arith.constant 0 : index
    %0 = vector.load %arg0[%c0, %c0_0, %c0_1] : memref<8x8x64xf32, #tpu.memory_space<vmem>>, vector<8x8x64xf32>
    %1 = vector.shape_cast %0 : vector<8x8x64xf32> to vector<64x64xf32>
    %c0_2 = arith.constant 0 : index
    %c0_3 = arith.constant 0 : index
    %2 = vector.load %arg3[%c0_2, %c0_3] : memref<64x128xbf16, #tpu.memory_space<vmem>>, vector<64x128xbf16>
    %3 = arith.truncf %1 : vector<64x64xf32> to vector<64x64xbf16>
    %cst = arith.constant dense<0.000000e+00> : vector<64x128xf32>
    %4 = tpu.matmul %3, %2, %cst {dimension_numbers = #tpu.dot_dimension_numbers<[1], [0], [0], [1], [0, 0, 1, 1], [], []>} : vector<64x64xbf16>, vector<64x128xbf16>, vector<64x128xf32> -> vector<64x128xf32>
    %c0_4 = arith.constant 0 : index
    %c0_5 = arith.constant 0 : index
    %5 = vector.load %arg5[%c0_4, %c0_5] : memref<1x128xf32, #tpu.memory_space<vmem>>, vector<1x128xf32>
    %6 = vector.broadcast %5 : vector<1x128xf32> to vector<64x128xf32>
    %7 = arith.addf %4, %6 : vector<64x128xf32>
    %c0_6 = arith.constant 0 : index
    %c0_7 = arith.constant 0 : index
    %8 = vector.load %arg4[%c0_6, %c0_7] : memref<32x128xbf16, #tpu.memory_space<vmem>>, vector<32x128xbf16>
    %cst_8 = arith.constant 0.000000e+00 : f32
    %9 = vector.broadcast %cst_8 : f32 to vector<8x32xf32>
    %cst_9 = arith.constant 0.000000e+00 : f32
    %10 = vector.broadcast %cst_9 : f32 to vector<8x32xf32>
    %11 = vector.extract_strided_slice %7 {offsets = [0, 0], sizes = [8, 128], strides = [1, 1]} : vector<64x128xf32> to vector<8x128xf32>
    %12 = arith.truncf %9 : vector<8x32xf32> to vector<8x32xbf16>
    %cst_10 = arith.constant dense<0.000000e+00> : vector<8x128xf32>
    %13 = tpu.matmul %12, %8, %cst_10 {dimension_numbers = #tpu.dot_dimension_numbers<[1], [0], [0], [1], [0, 0, 1, 1], [], []>} : vector<8x32xbf16>, vector<32x128xbf16>, vector<8x128xf32> -> vector<8x128xf32>
    %14 = arith.addf %11, %13 : vector<8x128xf32>
    %15 = vector.extract_strided_slice %14 {offsets = [0, 0], sizes = [8, 32], strides = [1, 1]} : vector<8x128xf32> to vector<8x32xf32>
    %16 = arith.negf %15 : vector<8x32xf32>
    %17 = math.exp %16 : vector<8x32xf32>
    %cst_11 = arith.constant 1.000000e+00 : f32
    %18 = vector.broadcast %cst_11 : f32 to vector<8x32xf32>
    %19 = arith.addf %18, %17 : vector<8x32xf32>
    %20 = arith.divf %18, %19 : vector<8x32xf32>
    %21 = vector.extract_strided_slice %14 {offsets = [0, 32], sizes = [8, 32], strides = [1, 1]} : vector<8x128xf32> to vector<8x32xf32>
    %22 = arith.negf %21 : vector<8x32xf32>
    %23 = math.exp %22 : vector<8x32xf32>
    %cst_12 = arith.constant 1.000000e+00 : f32
    %24 = vector.broadcast %cst_12 : f32 to vector<8x32xf32>
    %25 = arith.addf %24, %23 : vector<8x32xf32>
    %26 = arith.divf %24, %25 : vector<8x32xf32>
    %27 = vector.extract_strided_slice %14 {offsets = [0, 64], sizes = [8, 32], strides = [1, 1]} : vector<8x128xf32> to vector<8x32xf32>
    %28 = math.tanh %27 : vector<8x32xf32>
    %29 = vector.extract_strided_slice %14 {offsets = [0, 96], sizes = [8, 32], strides = [1, 1]} : vector<8x128xf32> to vector<8x32xf32>
    %30 = arith.negf %29 : vector<8x32xf32>
    %31 = math.exp %30 : vector<8x32xf32>
    %cst_13 = arith.constant 1.000000e+00 : f32
    %32 = vector.broadcast %cst_13 : f32 to vector<8x32xf32>
    %33 = arith.addf %32, %31 : vector<8x32xf32>
    %34 = arith.divf %32, %33 : vector<8x32xf32>
    %35 = arith.mulf %26, %10 : vector<8x32xf32>
    %36 = arith.mulf %20, %28 : vector<8x32xf32>
    %37 = arith.addf %35, %36 : vector<8x32xf32>
    %38 = math.tanh %37 : vector<8x32xf32>
    %39 = arith.mulf %34, %38 : vector<8x32xf32>
    %40 = vector.extract_strided_slice %39 {offsets = [0, 0], sizes = [8, 16], strides = [1, 1]} : vector<8x32xf32> to vector<8x16xf32>
    %c0_14 = arith.constant 0 : index
    %c0_15 = arith.constant 0 : index
    %c0_16 = arith.constant 0 : index
    %41 = vector.load %arg33[%c0_14, %c0_15, %c0_16] : memref<8x8x16xf32, #tpu.memory_space<vmem>>, vector<1x8x16xf32>
    %42 = vector.shape_cast %41 : vector<1x8x16xf32> to vector<8x16xf32>
    %43 = vector.shape_cast %40 : vector<8x16xf32> to vector<1x8x16xf32>
    tpu.vector_store %arg33[%c0_14, %c0_15, %c0_16], %43 {strides = array<i32>} : memref<8x8x16xf32, #tpu.memory_space<vmem>>, vector<1x8x16xf32>,
    %44 = vector.extract_strided_slice %39 {offsets = [0, 16], sizes = [8, 16], strides = [1, 1]} : vector<8x32xf32> to vector<8x16xf32>
    %c7 = arith.constant 7 : index
    %c0_17 = arith.constant 0 : index
    %c0_18 = arith.constant 0 : index
    %45 = vector.load %arg34[%c7, %c0_17, %c0_18] : memref<8x8x16xf32, #tpu.memory_space<vmem>>, vector<1x8x16xf32>
    %46 = vector.shape_cast %45 : vector<1x8x16xf32> to vector<8x16xf32>
    %47 = vector.shape_cast %44 : vector<8x16xf32> to vector<1x8x16xf32>
    tpu.vector_store %arg34[%c7, %c0_17, %c0_18], %47 {strides = array<i32>} : memref<8x8x16xf32, #tpu.memory_space<vmem>>, vector<1x8x16xf32>,
    %48 = vector.extract_strided_slice %7 {offsets = [8, 0], sizes = [8, 128], strides = [1, 1]} : vector<64x128xf32> to vector<8x128xf32>
    %49 = arith.truncf %39 : vector<8x32xf32> to vector<8x32xbf16>
    %cst_19 = arith.constant dense<0.000000e+00> : vector<8x128xf32>
    %50 = tpu.matmul %49, %8, %cst_19 {dimension_numbers = #tpu.dot_dimension_numbers<[1], [0], [0], [1], [0, 0, 1, 1], [], []>} : vector<8x32xbf16>, vector<32x128xbf16>, vector<8x128xf32> -> vector<8x128xf32>
    %51 = arith.addf %48, %50 : vector<8x128xf32>
    %52 = vector.extract_strided_slice %51 {offsets = [0, 0], sizes = [8, 32], strides = [1, 1]} : vector<8x128xf32> to vector<8x32xf32>
    %53 = arith.negf %52 : vector<8x32xf32>
    %54 = math.exp %53 : vector<8x32xf32>
    %cst_20 = arith.constant 1.000000e+00 : f32
    %55 = vector.broadcast %cst_20 : f32 to vector<8x32xf32>
    %56 = arith.addf %55, %54 : vector<8x32xf32>
    %57 = arith.divf %55, %56 : vector<8x32xf32>
    %58 = vector.extract_strided_slice %51 {offsets = [0, 32], sizes = [8, 32], strides = [1, 1]} : vector<8x128xf32> to vector<8x32xf32>
    %59 = arith.negf %58 : vector<8x32xf32>
    %60 = math.exp %59 : vector<8x32xf32>
    %cst_21 = arith.constant 1.000000e+00 : f32
    %61 = vector.broadcast %cst_21 : f32 to vector<8x32xf32>
    %62 = arith.addf %61, %60 : vector<8x32xf32>
    %63 = arith.divf %61, %62 : vector<8x32xf32>
    %64 = vector.extract_strided_slice %51 {offsets = [0, 64], sizes = [8, 32], strides = [1, 1]} : vector<8x128xf32> to vector<8x32xf32>
    %65 = math.tanh %64 : vector<8x32xf32>
    %66 = vector.extract_strided_slice %51 {offsets = [0, 96], sizes = [8, 32], strides = [1, 1]} : vector<8x128xf32> to vector<8x32xf32>
    %67 = arith.negf %66 : vector<8x32xf32>
    %68 = math.exp %67 : vector<8x32xf32>
    %cst_22 = arith.constant 1.000000e+00 : f32
    %69 = vector.broadcast %cst_22 : f32 to vector<8x32xf32>
    %70 = arith.addf %69, %68 : vector<8x32xf32>
    %71 = arith.divf %69, %70 : vector<8x32xf32>
    %72 = arith.mulf %63, %37 : vector<8x32xf32>
    %73 = arith.mulf %57, %65 : vector<8x32xf32>
    %74 = arith.addf %72, %73 : vector<8x32xf32>
    %75 = math.tanh %74 : vector<8x32xf32>
    %76 = arith.mulf %71, %75 : vector<8x32xf32>
    %77 = vector.extract_strided_slice %76 {offsets = [0, 0], sizes = [8, 16], strides = [1, 1]} : vector<8x32xf32> to vector<8x16xf32>
    %c1 = arith.constant 1 : index
    %c0_23 = arith.constant 0 : index
    %c0_24 = arith.constant 0 : index
    %78 = vector.load %arg33[%c1, %c0_23, %c0_24] : memref<8x8x16xf32, #tpu.memory_space<vmem>>, vector<1x8x16xf32>
    %79 = vector.shape_cast %78 : vector<1x8x16xf32> to vector<8x16xf32>
    %80 = vector.shape_cast %77 : vector<8x16xf32> to vector<1x8x16xf32>
    tpu.vector_store %arg33[%c1, %c0_23, %c0_24], %80 {strides = array<i32>} : memref<8x8x16xf32, #tpu.memory_space<vmem>>, vector<1x8x16xf32>,
    %81 = vector.extract_strided_slice %76 {offsets = [0, 16], sizes = [8, 16], strides = [1, 1]} : vector<8x32xf32> to vector<8x16xf32>
    %c6 = arith.constant 6 : index
    %c0_25 = arith.constant 0 : index
    %c0_26 = arith.constant 0 : index
    %82 = vector.load %arg34[%c6, %c0_25, %c0_26] : memref<8x8x16xf32, #tpu.memory_space<vmem>>, vector<1x8x16xf32>
    %83 = vector.shape_cast %82 : vector<1x8x16xf32> to vector<8x16xf32>
    %84 = vector.shape_cast %81 : vector<8x16xf32> to vector<1x8x16xf32>
    tpu.vector_store %arg34[%c6, %c0_25, %c0_26], %84 {strides = array<i32>} : memref<8x8x16xf32, #tpu.memory_space<vmem>>, vector<1x8x16xf32>,
    %85 = vector.extract_strided_slice %7 {offsets = [16, 0], sizes = [8, 128], strides = [1, 1]} : vector<64x128xf32> to vector<8x128xf32>
    %86 = arith.truncf %76 : vector<8x32xf32> to vector<8x32xbf16>
    %cst_27 = arith.constant dense<0.000000e+00> : vector<8x128xf32>
    %87 = tpu.matmul %86, %8, %cst_27 {dimension_numbers = #tpu.dot_dimension_numbers<[1], [0], [0], [1], [0, 0, 1, 1], [], []>} : vector<8x32xbf16>, vector<32x128xbf16>, vector<8x128xf32> -> vector<8x128xf32>
    %88 = arith.addf %85, %87 : vector<8x128xf32>
    %89 = vector.extract_strided_slice %88 {offsets = [0, 0], sizes = [8, 32], strides = [1, 1]} : vector<8x128xf32> to vector<8x32xf32>
    %90 = arith.negf %89 : vector<8x32xf32>
    %91 = math.exp %90 : vector<8x32xf32>
    %cst_28 = arith.constant 1.000000e+00 : f32
    %92 = vector.broadcast %cst_28 : f32 to vector<8x32xf32>
    %93 = arith.addf %92, %91 : vector<8x32xf32>
    %94 = arith.divf %92, %93 : vector<8x32xf32>
    %95 = vector.extract_strided_slice %88 {offsets = [0, 32], sizes = [8, 32], strides = [1, 1]} : vector<8x128xf32> to vector<8x32xf32>
    %96 = arith.negf %95 : vector<8x32xf32>
    %97 = math.exp %96 : vector<8x32xf32>
    %cst_29 = arith.constant 1.000000e+00 : f32
    %98 = vector.broadcast %cst_29 : f32 to vector<8x32xf32>
    %99 = arith.addf %98, %97 : vector<8x32xf32>
    %100 = arith.divf %98, %99 : vector<8x32xf32>
    %101 = vector.extract_strided_slice %88 {offsets = [0, 64], sizes = [8, 32], strides = [1, 1]} : vector<8x128xf32> to vector<8x32xf32>
    %102 = math.tanh %101 : vector<8x32xf32>
    %103 = vector.extract_strided_slice %88 {offsets = [0, 96], sizes = [8, 32], strides = [1, 1]} : vector<8x128xf32> to vector<8x32xf32>
    %104 = arith.negf %103 : vector<8x32xf32>
    %105 = math.exp %104 : vector<8x32xf32>
    %cst_30 = arith.constant 1.000000e+00 : f32
    %106 = vector.broadcast %cst_30 : f32 to vector<8x32xf32>
    %107 = arith.addf %106, %105 : vector<8x32xf32>
    %108 = arith.divf %106, %107 : vector<8x32xf32>
    %109 = arith.mulf %100, %74 : vector<8x32xf32>
    %110 = arith.mulf %94, %102 : vector<8x32xf32>
    %111 = arith.addf %109, %110 : vector<8x32xf32>
    %112 = math.tanh %111 : vector<8x32xf32>
    %113 = arith.mulf %108, %112 : vector<8x32xf32>
    %114 = vector.extract_strided_slice %113 {offsets = [0, 0], sizes = [8, 16], strides = [1, 1]} : vector<8x32xf32> to vector<8x16xf32>
    %c2 = arith.constant 2 : index
    %c0_31 = arith.constant 0 : index
    %c0_32 = arith.constant 0 : index
    %115 = vector.load %arg33[%c2, %c0_31, %c0_32] : memref<8x8x16xf32, #tpu.memory_space<vmem>>, vector<1x8x16xf32>
    %116 = vector.shape_cast %115 : vector<1x8x16xf32> to vector<8x16xf32>
    %117 = vector.shape_cast %114 : vector<8x16xf32> to vector<1x8x16xf32>
    tpu.vector_store %arg33[%c2, %c0_31, %c0_32], %117 {strides = array<i32>} : memref<8x8x16xf32, #tpu.memory_space<vmem>>, vector<1x8x16xf32>,
    %118 = vector.extract_strided_slice %113 {offsets = [0, 16], sizes = [8, 16], strides = [1, 1]} : vector<8x32xf32> to vector<8x16xf32>
    %c5 = arith.constant 5 : index
    %c0_33 = arith.constant 0 : index
    %c0_34 = arith.constant 0 : index
    %119 = vector.load %arg34[%c5, %c0_33, %c0_34] : memref<8x8x16xf32, #tpu.memory_space<vmem>>, vector<1x8x16xf32>
    %120 = vector.shape_cast %119 : vector<1x8x16xf32> to vector<8x16xf32>
    %121 = vector.shape_cast %118 : vector<8x16xf32> to vector<1x8x16xf32>
    tpu.vector_store %arg34[%c5, %c0_33, %c0_34], %121 {strides = array<i32>} : memref<8x8x16xf32, #tpu.memory_space<vmem>>, vector<1x8x16xf32>,
    %122 = vector.extract_strided_slice %7 {offsets = [24, 0], sizes = [8, 128], strides = [1, 1]} : vector<64x128xf32> to vector<8x128xf32>
    %123 = arith.truncf %113 : vector<8x32xf32> to vector<8x32xbf16>
    %cst_35 = arith.constant dense<0.000000e+00> : vector<8x128xf32>
    %124 = tpu.matmul %123, %8, %cst_35 {dimension_numbers = #tpu.dot_dimension_numbers<[1], [0], [0], [1], [0, 0, 1, 1], [], []>} : vector<8x32xbf16>, vector<32x128xbf16>, vector<8x128xf32> -> vector<8x128xf32>
    %125 = arith.addf %122, %124 : vector<8x128xf32>
    %126 = vector.extract_strided_slice %125 {offsets = [0, 0], sizes = [8, 32], strides = [1, 1]} : vector<8x128xf32> to vector<8x32xf32>
    %127 = arith.negf %126 : vector<8x32xf32>
    %128 = math.exp %127 : vector<8x32xf32>
    %cst_36 = arith.constant 1.000000e+00 : f32
    %129 = vector.broadcast %cst_36 : f32 to vector<8x32xf32>
    %130 = arith.addf %129, %128 : vector<8x32xf32>
    %131 = arith.divf %129, %130 : vector<8x32xf32>
    %132 = vector.extract_strided_slice %125 {offsets = [0, 32], sizes = [8, 32], strides = [1, 1]} : vector<8x128xf32> to vector<8x32xf32>
    %133 = arith.negf %132 : vector<8x32xf32>
    %134 = math.exp %133 : vector<8x32xf32>
    %cst_37 = arith.constant 1.000000e+00 : f32
    %135 = vector.broadcast %cst_37 : f32 to vector<8x32xf32>
    %136 = arith.addf %135, %134 : vector<8x32xf32>
    %137 = arith.divf %135, %136 : vector<8x32xf32>
    %138 = vector.extract_strided_slice %125 {offsets = [0, 64], sizes = [8, 32], strides = [1, 1]} : vector<8x128xf32> to vector<8x32xf32>
    %139 = math.tanh %138 : vector<8x32xf32>
    %140 = vector.extract_strided_slice %125 {offsets = [0, 96], sizes = [8, 32], strides = [1, 1]} : vector<8x128xf32> to vector<8x32xf32>
    %141 = arith.negf %140 : vector<8x32xf32>
    %142 = math.exp %141 : vector<8x32xf32>
    %cst_38 = arith.constant 1.000000e+00 : f32
    %143 = vector.broadcast %cst_38 : f32 to vector<8x32xf32>
    %144 = arith.addf %143, %142 : vector<8x32xf32>
    %145 = arith.divf %143, %144 : vector<8x32xf32>
    %146 = arith.mulf %137, %111 : vector<8x32xf32>
    %147 = arith.mulf %131, %139 : vector<8x32xf32>
    %148 = arith.addf %146, %147 : vector<8x32xf32>
    %149 = math.tanh %148 : vector<8x32xf32>
    %150 = arith.mulf %145, %149 : vector<8x32xf32>
    %151 = vector.extract_strided_slice %150 {offsets = [0, 0], sizes = [8, 16], strides = [1, 1]} : vector<8x32xf32> to vector<8x16xf32>
    %c3 = arith.constant 3 : index
    %c0_39 = arith.constant 0 : index
    %c0_40 = arith.constant 0 : index
    %152 = vector.load %arg33[%c3, %c0_39, %c0_40] : memref<8x8x16xf32, #tpu.memory_space<vmem>>, vector<1x8x16xf32>
    %153 = vector.shape_cast %152 : vector<1x8x16xf32> to vector<8x16xf32>
    %154 = vector.shape_cast %151 : vector<8x16xf32> to vector<1x8x16xf32>
    tpu.vector_store %arg33[%c3, %c0_39, %c0_40], %154 {strides = array<i32>} : memref<8x8x16xf32, #tpu.memory_space<vmem>>, vector<1x8x16xf32>,
    %155 = vector.extract_strided_slice %150 {offsets = [0, 16], sizes = [8, 16], strides = [1, 1]} : vector<8x32xf32> to vector<8x16xf32>
    %c4 = arith.constant 4 : index
    %c0_41 = arith.constant 0 : index
    %c0_42 = arith.constant 0 : index
    %156 = vector.load %arg34[%c4, %c0_41, %c0_42] : memref<8x8x16xf32, #tpu.memory_space<vmem>>, vector<1x8x16xf32>
    %157 = vector.shape_cast %156 : vector<1x8x16xf32> to vector<8x16xf32>
    %158 = vector.shape_cast %155 : vector<8x16xf32> to vector<1x8x16xf32>
    tpu.vector_store %arg34[%c4, %c0_41, %c0_42], %158 {strides = array<i32>} : memref<8x8x16xf32, #tpu.memory_space<vmem>>, vector<1x8x16xf32>,
    %159 = vector.extract_strided_slice %7 {offsets = [32, 0], sizes = [8, 128], strides = [1, 1]} : vector<64x128xf32> to vector<8x128xf32>
    %160 = arith.truncf %150 : vector<8x32xf32> to vector<8x32xbf16>
    %cst_43 = arith.constant dense<0.000000e+00> : vector<8x128xf32>
    %161 = tpu.matmul %160, %8, %cst_43 {dimension_numbers = #tpu.dot_dimension_numbers<[1], [0], [0], [1], [0, 0, 1, 1], [], []>} : vector<8x32xbf16>, vector<32x128xbf16>, vector<8x128xf32> -> vector<8x128xf32>
    %162 = arith.addf %159, %161 : vector<8x128xf32>
    %163 = vector.extract_strided_slice %162 {offsets = [0, 0], sizes = [8, 32], strides = [1, 1]} : vector<8x128xf32> to vector<8x32xf32>
    %164 = arith.negf %163 : vector<8x32xf32>
    %165 = math.exp %164 : vector<8x32xf32>
    %cst_44 = arith.constant 1.000000e+00 : f32
    %166 = vector.broadcast %cst_44 : f32 to vector<8x32xf32>
    %167 = arith.addf %166, %165 : vector<8x32xf32>
    %168 = arith.divf %166, %167 : vector<8x32xf32>
    %169 = vector.extract_strided_slice %162 {offsets = [0, 32], sizes = [8, 32], strides = [1, 1]} : vector<8x128xf32> to vector<8x32xf32>
    %170 = arith.negf %169 : vector<8x32xf32>
    %171 = math.exp %170 : vector<8x32xf32>
    %cst_45 = arith.constant 1.000000e+00 : f32
    %172 = vector.broadcast %cst_45 : f32 to vector<8x32xf32>
    %173 = arith.addf %172, %171 : vector<8x32xf32>
    %174 = arith.divf %172, %173 : vector<8x32xf32>
    %175 = vector.extract_strided_slice %162 {offsets = [0, 64], sizes = [8, 32], strides = [1, 1]} : vector<8x128xf32> to vector<8x32xf32>
    %176 = math.tanh %175 : vector<8x32xf32>
    %177 = vector.extract_strided_slice %162 {offsets = [0, 96], sizes = [8, 32], strides = [1, 1]} : vector<8x128xf32> to vector<8x32xf32>
    %178 = arith.negf %177 : vector<8x32xf32>
    %179 = math.exp %178 : vector<8x32xf32>
    %cst_46 = arith.constant 1.000000e+00 : f32
    %180 = vector.broadcast %cst_46 : f32 to vector<8x32xf32>
    %181 = arith.addf %180, %179 : vector<8x32xf32>
    %182 = arith.divf %180, %181 : vector<8x32xf32>
    %183 = arith.mulf %174, %148 : vector<8x32xf32>
    %184 = arith.mulf %168, %176 : vector<8x32xf32>
    %185 = arith.addf %183, %184 : vector<8x32xf32>
    %186 = math.tanh %185 : vector<8x32xf32>
    %187 = arith.mulf %182, %186 : vector<8x32xf32>
    %188 = vector.extract_strided_slice %187 {offsets = [0, 0], sizes = [8, 16], strides = [1, 1]} : vector<8x32xf32> to vector<8x16xf32>
    %c4_47 = arith.constant 4 : index
    %c0_48 = arith.constant 0 : index
    %c0_49 = arith.constant 0 : index
    %189 = vector.load %arg33[%c4_47, %c0_48, %c0_49] : memref<8x8x16xf32, #tpu.memory_space<vmem>>, vector<1x8x16xf32>
    %190 = vector.shape_cast %189 : vector<1x8x16xf32> to vector<8x16xf32>
    %191 = vector.shape_cast %188 : vector<8x16xf32> to vector<1x8x16xf32>
    tpu.vector_store %arg33[%c4_47, %c0_48, %c0_49], %191 {strides = array<i32>} : memref<8x8x16xf32, #tpu.memory_space<vmem>>, vector<1x8x16xf32>,
    %192 = vector.extract_strided_slice %187 {offsets = [0, 16], sizes = [8, 16], strides = [1, 1]} : vector<8x32xf32> to vector<8x16xf32>
    %c3_50 = arith.constant 3 : index
    %c0_51 = arith.constant 0 : index
    %c0_52 = arith.constant 0 : index
    %193 = vector.load %arg34[%c3_50, %c0_51, %c0_52] : memref<8x8x16xf32, #tpu.memory_space<vmem>>, vector<1x8x16xf32>
    %194 = vector.shape_cast %193 : vector<1x8x16xf32> to vector<8x16xf32>
    %195 = vector.shape_cast %192 : vector<8x16xf32> to vector<1x8x16xf32>
    tpu.vector_store %arg34[%c3_50, %c0_51, %c0_52], %195 {strides = array<i32>} : memref<8x8x16xf32, #tpu.memory_space<vmem>>, vector<1x8x16xf32>,
    %196 = vector.extract_strided_slice %7 {offsets = [40, 0], sizes = [8, 128], strides = [1, 1]} : vector<64x128xf32> to vector<8x128xf32>
    %197 = arith.truncf %187 : vector<8x32xf32> to vector<8x32xbf16>
    %cst_53 = arith.constant dense<0.000000e+00> : vector<8x128xf32>
    %198 = tpu.matmul %197, %8, %cst_53 {dimension_numbers = #tpu.dot_dimension_numbers<[1], [0], [0], [1], [0, 0, 1, 1], [], []>} : vector<8x32xbf16>, vector<32x128xbf16>, vector<8x128xf32> -> vector<8x128xf32>
    %199 = arith.addf %196, %198 : vector<8x128xf32>
    %200 = vector.extract_strided_slice %199 {offsets = [0, 0], sizes = [8, 32], strides = [1, 1]} : vector<8x128xf32> to vector<8x32xf32>
    %201 = arith.negf %200 : vector<8x32xf32>
    %202 = math.exp %201 : vector<8x32xf32>
    %cst_54 = arith.constant 1.000000e+00 : f32
    %203 = vector.broadcast %cst_54 : f32 to vector<8x32xf32>
    %204 = arith.addf %203, %202 : vector<8x32xf32>
    %205 = arith.divf %203, %204 : vector<8x32xf32>
    %206 = vector.extract_strided_slice %199 {offsets = [0, 32], sizes = [8, 32], strides = [1, 1]} : vector<8x128xf32> to vector<8x32xf32>
    %207 = arith.negf %206 : vector<8x32xf32>
    %208 = math.exp %207 : vector<8x32xf32>
    %cst_55 = arith.constant 1.000000e+00 : f32
    %209 = vector.broadcast %cst_55 : f32 to vector<8x32xf32>
    %210 = arith.addf %209, %208 : vector<8x32xf32>
    %211 = arith.divf %209, %210 : vector<8x32xf32>
    %212 = vector.extract_strided_slice %199 {offsets = [0, 64], sizes = [8, 32], strides = [1, 1]} : vector<8x128xf32> to vector<8x32xf32>
    %213 = math.tanh %212 : vector<8x32xf32>
    %214 = vector.extract_strided_slice %199 {offsets = [0, 96], sizes = [8, 32], strides = [1, 1]} : vector<8x128xf32> to vector<8x32xf32>
    %215 = arith.negf %214 : vector<8x32xf32>
    %216 = math.exp %215 : vector<8x32xf32>
    %cst_56 = arith.constant 1.000000e+00 : f32
    %217 = vector.broadcast %cst_56 : f32 to vector<8x32xf32>
    %218 = arith.addf %217, %216 : vector<8x32xf32>
    %219 = arith.divf %217, %218 : vector<8x32xf32>
    %220 = arith.mulf %211, %185 : vector<8x32xf32>
    %221 = arith.mulf %205, %213 : vector<8x32xf32>
    %222 = arith.addf %220, %221 : vector<8x32xf32>
    %223 = math.tanh %222 : vector<8x32xf32>
    %224 = arith.mulf %219, %223 : vector<8x32xf32>
    %225 = vector.extract_strided_slice %224 {offsets = [0, 0], sizes = [8, 16], strides = [1, 1]} : vector<8x32xf32> to vector<8x16xf32>
    %c5_57 = arith.constant 5 : index
    %c0_58 = arith.constant 0 : index
    %c0_59 = arith.constant 0 : index
    %226 = vector.load %arg33[%c5_57, %c0_58, %c0_59] : memref<8x8x16xf32, #tpu.memory_space<vmem>>, vector<1x8x16xf32>
    %227 = vector.shape_cast %226 : vector<1x8x16xf32> to vector<8x16xf32>
    %228 = vector.shape_cast %225 : vector<8x16xf32> to vector<1x8x16xf32>
    tpu.vector_store %arg33[%c5_57, %c0_58, %c0_59], %228 {strides = array<i32>} : memref<8x8x16xf32, #tpu.memory_space<vmem>>, vector<1x8x16xf32>,
    %229 = vector.extract_strided_slice %224 {offsets = [0, 16], sizes = [8, 16], strides = [1, 1]} : vector<8x32xf32> to vector<8x16xf32>
    %c2_60 = arith.constant 2 : index
    %c0_61 = arith.constant 0 : index
    %c0_62 = arith.constant 0 : index
    %230 = vector.load %arg34[%c2_60, %c0_61, %c0_62] : memref<8x8x16xf32, #tpu.memory_space<vmem>>, vector<1x8x16xf32>
    %231 = vector.shape_cast %230 : vector<1x8x16xf32> to vector<8x16xf32>
    %232 = vector.shape_cast %229 : vector<8x16xf32> to vector<1x8x16xf32>
    tpu.vector_store %arg34[%c2_60, %c0_61, %c0_62], %232 {strides = array<i32>} : memref<8x8x16xf32, #tpu.memory_space<vmem>>, vector<1x8x16xf32>,
    %233 = vector.extract_strided_slice %7 {offsets = [48, 0], sizes = [8, 128], strides = [1, 1]} : vector<64x128xf32> to vector<8x128xf32>
    %234 = arith.truncf %224 : vector<8x32xf32> to vector<8x32xbf16>
    %cst_63 = arith.constant dense<0.000000e+00> : vector<8x128xf32>
    %235 = tpu.matmul %234, %8, %cst_63 {dimension_numbers = #tpu.dot_dimension_numbers<[1], [0], [0], [1], [0, 0, 1, 1], [], []>} : vector<8x32xbf16>, vector<32x128xbf16>, vector<8x128xf32> -> vector<8x128xf32>
    %236 = arith.addf %233, %235 : vector<8x128xf32>
    %237 = vector.extract_strided_slice %236 {offsets = [0, 0], sizes = [8, 32], strides = [1, 1]} : vector<8x128xf32> to vector<8x32xf32>
    %238 = arith.negf %237 : vector<8x32xf32>
    %239 = math.exp %238 : vector<8x32xf32>
    %cst_64 = arith.constant 1.000000e+00 : f32
    %240 = vector.broadcast %cst_64 : f32 to vector<8x32xf32>
    %241 = arith.addf %240, %239 : vector<8x32xf32>
    %242 = arith.divf %240, %241 : vector<8x32xf32>
    %243 = vector.extract_strided_slice %236 {offsets = [0, 32], sizes = [8, 32], strides = [1, 1]} : vector<8x128xf32> to vector<8x32xf32>
    %244 = arith.negf %243 : vector<8x32xf32>
    %245 = math.exp %244 : vector<8x32xf32>
    %cst_65 = arith.constant 1.000000e+00 : f32
    %246 = vector.broadcast %cst_65 : f32 to vector<8x32xf32>
    %247 = arith.addf %246, %245 : vector<8x32xf32>
    %248 = arith.divf %246, %247 : vector<8x32xf32>
    %249 = vector.extract_strided_slice %236 {offsets = [0, 64], sizes = [8, 32], strides = [1, 1]} : vector<8x128xf32> to vector<8x32xf32>
    %250 = math.tanh %249 : vector<8x32xf32>
    %251 = vector.extract_strided_slice %236 {offsets = [0, 96], sizes = [8, 32], strides = [1, 1]} : vector<8x128xf32> to vector<8x32xf32>
    %252 = arith.negf %251 : vector<8x32xf32>
    %253 = math.exp %252 : vector<8x32xf32>
    %cst_66 = arith.constant 1.000000e+00 : f32
    %254 = vector.broadcast %cst_66 : f32 to vector<8x32xf32>
    %255 = arith.addf %254, %253 : vector<8x32xf32>
    %256 = arith.divf %254, %255 : vector<8x32xf32>
    %257 = arith.mulf %248, %222 : vector<8x32xf32>
    %258 = arith.mulf %242, %250 : vector<8x32xf32>
    %259 = arith.addf %257, %258 : vector<8x32xf32>
    %260 = math.tanh %259 : vector<8x32xf32>
    %261 = arith.mulf %256, %260 : vector<8x32xf32>
    %262 = vector.extract_strided_slice %261 {offsets = [0, 0], sizes = [8, 16], strides = [1, 1]} : vector<8x32xf32> to vector<8x16xf32>
    %c6_67 = arith.constant 6 : index
    %c0_68 = arith.constant 0 : index
    %c0_69 = arith.constant 0 : index
    %263 = vector.load %arg33[%c6_67, %c0_68, %c0_69] : memref<8x8x16xf32, #tpu.memory_space<vmem>>, vector<1x8x16xf32>
    %264 = vector.shape_cast %263 : vector<1x8x16xf32> to vector<8x16xf32>
    %265 = vector.shape_cast %262 : vector<8x16xf32> to vector<1x8x16xf32>
    tpu.vector_store %arg33[%c6_67, %c0_68, %c0_69], %265 {strides = array<i32>} : memref<8x8x16xf32, #tpu.memory_space<vmem>>, vector<1x8x16xf32>,
    %266 = vector.extract_strided_slice %261 {offsets = [0, 16], sizes = [8, 16], strides = [1, 1]} : vector<8x32xf32> to vector<8x16xf32>
    %c1_70 = arith.constant 1 : index
    %c0_71 = arith.constant 0 : index
    %c0_72 = arith.constant 0 : index
    %267 = vector.load %arg34[%c1_70, %c0_71, %c0_72] : memref<8x8x16xf32, #tpu.memory_space<vmem>>, vector<1x8x16xf32>
    %268 = vector.shape_cast %267 : vector<1x8x16xf32> to vector<8x16xf32>
    %269 = vector.shape_cast %266 : vector<8x16xf32> to vector<1x8x16xf32>
    tpu.vector_store %arg34[%c1_70, %c0_71, %c0_72], %269 {strides = array<i32>} : memref<8x8x16xf32, #tpu.memory_space<vmem>>, vector<1x8x16xf32>,
    %270 = vector.extract_strided_slice %7 {offsets = [56, 0], sizes = [8, 128], strides = [1, 1]} : vector<64x128xf32> to vector<8x128xf32>
    %271 = arith.truncf %261 : vector<8x32xf32> to vector<8x32xbf16>
    %cst_73 = arith.constant dense<0.000000e+00> : vector<8x128xf32>
    %272 = tpu.matmul %271, %8, %cst_73 {dimension_numbers = #tpu.dot_dimension_numbers<[1], [0], [0], [1], [0, 0, 1, 1], [], []>} : vector<8x32xbf16>, vector<32x128xbf16>, vector<8x128xf32> -> vector<8x128xf32>
    %273 = arith.addf %270, %272 : vector<8x128xf32>
    %274 = vector.extract_strided_slice %273 {offsets = [0, 0], sizes = [8, 32], strides = [1, 1]} : vector<8x128xf32> to vector<8x32xf32>
    %275 = arith.negf %274 : vector<8x32xf32>
    %276 = math.exp %275 : vector<8x32xf32>
    %cst_74 = arith.constant 1.000000e+00 : f32
    %277 = vector.broadcast %cst_74 : f32 to vector<8x32xf32>
    %278 = arith.addf %277, %276 : vector<8x32xf32>
    %279 = arith.divf %277, %278 : vector<8x32xf32>
    %280 = vector.extract_strided_slice %273 {offsets = [0, 32], sizes = [8, 32], strides = [1, 1]} : vector<8x128xf32> to vector<8x32xf32>
    %281 = arith.negf %280 : vector<8x32xf32>
    %282 = math.exp %281 : vector<8x32xf32>
    %cst_75 = arith.constant 1.000000e+00 : f32
    %283 = vector.broadcast %cst_75 : f32 to vector<8x32xf32>
    %284 = arith.addf %283, %282 : vector<8x32xf32>
    %285 = arith.divf %283, %284 : vector<8x32xf32>
    %286 = vector.extract_strided_slice %273 {offsets = [0, 64], sizes = [8, 32], strides = [1, 1]} : vector<8x128xf32> to vector<8x32xf32>
    %287 = math.tanh %286 : vector<8x32xf32>
    %288 = vector.extract_strided_slice %273 {offsets = [0, 96], sizes = [8, 32], strides = [1, 1]} : vector<8x128xf32> to vector<8x32xf32>
    %289 = arith.negf %288 : vector<8x32xf32>
    %290 = math.exp %289 : vector<8x32xf32>
    %cst_76 = arith.constant 1.000000e+00 : f32
    %291 = vector.broadcast %cst_76 : f32 to vector<8x32xf32>
    %292 = arith.addf %291, %290 : vector<8x32xf32>
    %293 = arith.divf %291, %292 : vector<8x32xf32>
    %294 = arith.mulf %285, %259 : vector<8x32xf32>
    %295 = arith.mulf %279, %287 : vector<8x32xf32>
    %296 = arith.addf %294, %295 : vector<8x32xf32>
    %297 = math.tanh %296 : vector<8x32xf32>
    %298 = arith.mulf %293, %297 : vector<8x32xf32>
    %299 = vector.extract_strided_slice %298 {offsets = [0, 0], sizes = [8, 16], strides = [1, 1]} : vector<8x32xf32> to vector<8x16xf32>
    %c7_77 = arith.constant 7 : index
    %c0_78 = arith.constant 0 : index
    %c0_79 = arith.constant 0 : index
    %300 = vector.load %arg33[%c7_77, %c0_78, %c0_79] : memref<8x8x16xf32, #tpu.memory_space<vmem>>, vector<1x8x16xf32>
    %301 = vector.shape_cast %300 : vector<1x8x16xf32> to vector<8x16xf32>
    %302 = vector.shape_cast %299 : vector<8x16xf32> to vector<1x8x16xf32>
    tpu.vector_store %arg33[%c7_77, %c0_78, %c0_79], %302 {strides = array<i32>} : memref<8x8x16xf32, #tpu.memory_space<vmem>>, vector<1x8x16xf32>,
    %303 = vector.extract_strided_slice %298 {offsets = [0, 16], sizes = [8, 16], strides = [1, 1]} : vector<8x32xf32> to vector<8x16xf32>
    %c0_80 = arith.constant 0 : index
    %c0_81 = arith.constant 0 : index
    %c0_82 = arith.constant 0 : index
    %304 = vector.load %arg34[%c0_80, %c0_81, %c0_82] : memref<8x8x16xf32, #tpu.memory_space<vmem>>, vector<1x8x16xf32>
    %305 = vector.shape_cast %304 : vector<1x8x16xf32> to vector<8x16xf32>
    %306 = vector.shape_cast %303 : vector<8x16xf32> to vector<1x8x16xf32>
    tpu.vector_store %arg34[%c0_80, %c0_81, %c0_82], %306 {strides = array<i32>} : memref<8x8x16xf32, #tpu.memory_space<vmem>>, vector<1x8x16xf32>,
    %c0_83 = arith.constant 0 : index
    %c0_84 = arith.constant 0 : index
    %307 = vector.load %arg6[%c0_83, %c0_84] : memref<32x32xbf16, #tpu.memory_space<vmem>>, vector<32x32xbf16>
    %c0_85 = arith.constant 0 : index
    %c0_86 = arith.constant 0 : index
    %c0_87 = arith.constant 0 : index
    %308 = vector.load %arg33[%c0_85, %c0_86, %c0_87] : memref<8x8x16xf32, #tpu.memory_space<vmem>>, vector<8x8x16xf32>
    %309 = vector.shape_cast %308 : vector<8x8x16xf32> to vector<64x16xf32>
    %c0_88 = arith.constant 0 : index
    %c0_89 = arith.constant 0 : index
    %c0_90 = arith.constant 0 : index
    %310 = vector.load %arg34[%c0_88, %c0_89, %c0_90] : memref<8x8x16xf32, #tpu.memory_space<vmem>>, vector<8x8x16xf32>
    %311 = vector.shape_cast %310 : vector<8x8x16xf32> to vector<64x16xf32>
    %312 = vector.extract_strided_slice %307 {offsets = [0, 0], sizes = [16, 32], strides = [1, 1]} : vector<32x32xbf16> to vector<16x32xbf16>
    %313 = arith.truncf %309 : vector<64x16xf32> to vector<64x16xbf16>
    %cst_91 = arith.constant dense<0.000000e+00> : vector<64x32xf32>
    %314 = tpu.matmul %313, %312, %cst_91 {dimension_numbers = #tpu.dot_dimension_numbers<[1], [0], [0], [1], [0, 0, 1, 1], [], []>} : vector<64x16xbf16>, vector<16x32xbf16>, vector<64x32xf32> -> vector<64x32xf32>
    %315 = vector.extract_strided_slice %307 {offsets = [16, 0], sizes = [16, 32], strides = [1, 1]} : vector<32x32xbf16> to vector<16x32xbf16>
    %316 = arith.truncf %311 : vector<64x16xf32> to vector<64x16xbf16>
    %cst_92 = arith.constant dense<0.000000e+00> : vector<64x32xf32>
    %317 = tpu.matmul %316, %315, %cst_92 {dimension_numbers = #tpu.dot_dimension_numbers<[1], [0], [0], [1], [0, 0, 1, 1], [], []>} : vector<64x16xbf16>, vector<16x32xbf16>, vector<64x32xf32> -> vector<64x32xf32>
    %318 = arith.addf %314, %317 : vector<64x32xf32>
    %c0_93 = arith.constant 0 : index
    %c0_94 = arith.constant 0 : index
    %319 = vector.load %arg7[%c0_93, %c0_94] : memref<1x32xf32, #tpu.memory_space<vmem>>, vector<1x32xf32>
    %320 = vector.broadcast %319 : vector<1x32xf32> to vector<64x32xf32>
    %321 = arith.addf %318, %320 : vector<64x32xf32>
    %322 = math.tanh %321 : vector<64x32xf32>
    %c0_95 = arith.constant 0 : index
    %c0_96 = arith.constant 0 : index
    %323 = vector.load %arg8[%c0_95, %c0_96] : memref<32x1xbf16, #tpu.memory_space<vmem>>, vector<32x1xbf16>
    %324 = arith.truncf %322 : vector<64x32xf32> to vector<64x32xbf16>
    %cst_97 = arith.constant dense<0.000000e+00> : vector<64x1xf32>
    %325 = tpu.matmul %324, %323, %cst_97 {dimension_numbers = #tpu.dot_dimension_numbers<[1], [0], [0], [1], [0, 0, 1, 1], [], []>} : vector<64x32xbf16>, vector<32x1xbf16>, vector<64x1xf32> -> vector<64x1xf32>
    %c0_98 = arith.constant 0 : index
    %c0_99 = arith.constant 0 : index
    %326 = vector.load %arg9[%c0_98, %c0_99] : memref<1x1xf32, #tpu.memory_space<vmem>>, vector<1x1xf32>
    %327 = vector.broadcast %326 : vector<1x1xf32> to vector<64x1xf32>
    %328 = arith.addf %325, %327 : vector<64x1xf32>
    %329 = vector.extract_strided_slice %328 {offsets = [0, 0], sizes = [8, 1], strides = [1, 1]} : vector<64x1xf32> to vector<8x1xf32>
    %c0_100 = arith.constant 0 : index
    %c0_101 = arith.constant 0 : index
    %c0_102 = arith.constant 0 : index
    %330 = vector.load %arg1[%c0_100, %c0_101, %c0_102] : memref<8x8x1xf32, #tpu.memory_space<vmem>>, vector<1x8x1xf32>
    %331 = vector.shape_cast %330 : vector<1x8x1xf32> to vector<8x1xf32>
    %cst_103 = arith.constant 0.000000e+00 : f32
    %332 = vector.broadcast %cst_103 : f32 to vector<8x1xf32>
    %333 = arith.cmpf ogt, %331, %332 : vector<8x1xf32>
    %cst_104 = arith.constant 1.000000e+04 : f32
    %334 = vector.broadcast %cst_104 : f32 to vector<8x1xf32>
    %335 = arith.subf %329, %334 : vector<8x1xf32>
    %336 = arith.select %333, %329, %335 : vector<8x1xi1>, vector<8x1xf32>
    %337 = vector.extract_strided_slice %328 {offsets = [8, 0], sizes = [8, 1], strides = [1, 1]} : vector<64x1xf32> to vector<8x1xf32>
    %c1_105 = arith.constant 1 : index
    %c0_106 = arith.constant 0 : index
    %c0_107 = arith.constant 0 : index
    %338 = vector.load %arg1[%c1_105, %c0_106, %c0_107] : memref<8x8x1xf32, #tpu.memory_space<vmem>>, vector<1x8x1xf32>
    %339 = vector.shape_cast %338 : vector<1x8x1xf32> to vector<8x1xf32>
    %cst_108 = arith.constant 0.000000e+00 : f32
    %340 = vector.broadcast %cst_108 : f32 to vector<8x1xf32>
    %341 = arith.cmpf ogt, %339, %340 : vector<8x1xf32>
    %cst_109 = arith.constant 1.000000e+04 : f32
    %342 = vector.broadcast %cst_109 : f32 to vector<8x1xf32>
    %343 = arith.subf %337, %342 : vector<8x1xf32>
    %344 = arith.select %341, %337, %343 : vector<8x1xi1>, vector<8x1xf32>
    %345 = vector.extract_strided_slice %328 {offsets = [16, 0], sizes = [8, 1], strides = [1, 1]} : vector<64x1xf32> to vector<8x1xf32>
    %c2_110 = arith.constant 2 : index
    %c0_111 = arith.constant 0 : index
    %c0_112 = arith.constant 0 : index
    %346 = vector.load %arg1[%c2_110, %c0_111, %c0_112] : memref<8x8x1xf32, #tpu.memory_space<vmem>>, vector<1x8x1xf32>
    %347 = vector.shape_cast %346 : vector<1x8x1xf32> to vector<8x1xf32>
    %cst_113 = arith.constant 0.000000e+00 : f32
    %348 = vector.broadcast %cst_113 : f32 to vector<8x1xf32>
    %349 = arith.cmpf ogt, %347, %348 : vector<8x1xf32>
    %cst_114 = arith.constant 1.000000e+04 : f32
    %350 = vector.broadcast %cst_114 : f32 to vector<8x1xf32>
    %351 = arith.subf %345, %350 : vector<8x1xf32>
    %352 = arith.select %349, %345, %351 : vector<8x1xi1>, vector<8x1xf32>
    %353 = vector.extract_strided_slice %328 {offsets = [24, 0], sizes = [8, 1], strides = [1, 1]} : vector<64x1xf32> to vector<8x1xf32>
    %c3_115 = arith.constant 3 : index
    %c0_116 = arith.constant 0 : index
    %c0_117 = arith.constant 0 : index
    %354 = vector.load %arg1[%c3_115, %c0_116, %c0_117] : memref<8x8x1xf32, #tpu.memory_space<vmem>>, vector<1x8x1xf32>
    %355 = vector.shape_cast %354 : vector<1x8x1xf32> to vector<8x1xf32>
    %cst_118 = arith.constant 0.000000e+00 : f32
    %356 = vector.broadcast %cst_118 : f32 to vector<8x1xf32>
    %357 = arith.cmpf ogt, %355, %356 : vector<8x1xf32>
    %cst_119 = arith.constant 1.000000e+04 : f32
    %358 = vector.broadcast %cst_119 : f32 to vector<8x1xf32>
    %359 = arith.subf %353, %358 : vector<8x1xf32>
    %360 = arith.select %357, %353, %359 : vector<8x1xi1>, vector<8x1xf32>
    %361 = vector.extract_strided_slice %328 {offsets = [32, 0], sizes = [8, 1], strides = [1, 1]} : vector<64x1xf32> to vector<8x1xf32>
    %c4_120 = arith.constant 4 : index
    %c0_121 = arith.constant 0 : index
    %c0_122 = arith.constant 0 : index
    %362 = vector.load %arg1[%c4_120, %c0_121, %c0_122] : memref<8x8x1xf32, #tpu.memory_space<vmem>>, vector<1x8x1xf32>
    %363 = vector.shape_cast %362 : vector<1x8x1xf32> to vector<8x1xf32>
    %cst_123 = arith.constant 0.000000e+00 : f32
    %364 = vector.broadcast %cst_123 : f32 to vector<8x1xf32>
    %365 = arith.cmpf ogt, %363, %364 : vector<8x1xf32>
    %cst_124 = arith.constant 1.000000e+04 : f32
    %366 = vector.broadcast %cst_124 : f32 to vector<8x1xf32>
    %367 = arith.subf %361, %366 : vector<8x1xf32>
    %368 = arith.select %365, %361, %367 : vector<8x1xi1>, vector<8x1xf32>
    %369 = vector.extract_strided_slice %328 {offsets = [40, 0], sizes = [8, 1], strides = [1, 1]} : vector<64x1xf32> to vector<8x1xf32>
    %c5_125 = arith.constant 5 : index
    %c0_126 = arith.constant 0 : index
    %c0_127 = arith.constant 0 : index
    %370 = vector.load %arg1[%c5_125, %c0_126, %c0_127] : memref<8x8x1xf32, #tpu.memory_space<vmem>>, vector<1x8x1xf32>
    %371 = vector.shape_cast %370 : vector<1x8x1xf32> to vector<8x1xf32>
    %cst_128 = arith.constant 0.000000e+00 : f32
    %372 = vector.broadcast %cst_128 : f32 to vector<8x1xf32>
    %373 = arith.cmpf ogt, %371, %372 : vector<8x1xf32>
    %cst_129 = arith.constant 1.000000e+04 : f32
    %374 = vector.broadcast %cst_129 : f32 to vector<8x1xf32>
    %375 = arith.subf %369, %374 : vector<8x1xf32>
    %376 = arith.select %373, %369, %375 : vector<8x1xi1>, vector<8x1xf32>
    %377 = vector.extract_strided_slice %328 {offsets = [48, 0], sizes = [8, 1], strides = [1, 1]} : vector<64x1xf32> to vector<8x1xf32>
    %c6_130 = arith.constant 6 : index
    %c0_131 = arith.constant 0 : index
    %c0_132 = arith.constant 0 : index
    %378 = vector.load %arg1[%c6_130, %c0_131, %c0_132] : memref<8x8x1xf32, #tpu.memory_space<vmem>>, vector<1x8x1xf32>
    %379 = vector.shape_cast %378 : vector<1x8x1xf32> to vector<8x1xf32>
    %cst_133 = arith.constant 0.000000e+00 : f32
    %380 = vector.broadcast %cst_133 : f32 to vector<8x1xf32>
    %381 = arith.cmpf ogt, %379, %380 : vector<8x1xf32>
    %cst_134 = arith.constant 1.000000e+04 : f32
    %382 = vector.broadcast %cst_134 : f32 to vector<8x1xf32>
    %383 = arith.subf %377, %382 : vector<8x1xf32>
    %384 = arith.select %381, %377, %383 : vector<8x1xi1>, vector<8x1xf32>
    %385 = vector.extract_strided_slice %328 {offsets = [56, 0], sizes = [8, 1], strides = [1, 1]} : vector<64x1xf32> to vector<8x1xf32>
    %c7_135 = arith.constant 7 : index
    %c0_136 = arith.constant 0 : index
    %c0_137 = arith.constant 0 : index
    %386 = vector.load %arg1[%c7_135, %c0_136, %c0_137] : memref<8x8x1xf32, #tpu.memory_space<vmem>>, vector<1x8x1xf32>
    %387 = vector.shape_cast %386 : vector<1x8x1xf32> to vector<8x1xf32>
    %cst_138 = arith.constant 0.000000e+00 : f32
    %388 = vector.broadcast %cst_138 : f32 to vector<8x1xf32>
    %389 = arith.cmpf ogt, %387, %388 : vector<8x1xf32>
    %cst_139 = arith.constant 1.000000e+04 : f32
    %390 = vector.broadcast %cst_139 : f32 to vector<8x1xf32>
    %391 = arith.subf %385, %390 : vector<8x1xf32>
    %392 = arith.select %389, %385, %391 : vector<8x1xi1>, vector<8x1xf32>
    %393 = arith.maximumf %336, %344 : vector<8x1xf32>
    %394 = arith.maximumf %393, %352 : vector<8x1xf32>
    %395 = arith.maximumf %394, %360 : vector<8x1xf32>
    %396 = arith.maximumf %395, %368 : vector<8x1xf32>
    %397 = arith.maximumf %396, %376 : vector<8x1xf32>
    %398 = arith.maximumf %397, %384 : vector<8x1xf32>
    %399 = arith.maximumf %398, %392 : vector<8x1xf32>
    %cst_140 = arith.constant 0.000000e+00 : f32
    %400 = vector.broadcast %cst_140 : f32 to vector<8x1xf32>
    %cst_141 = arith.constant 0.000000e+00 : f32
    %401 = vector.broadcast %cst_141 : f32 to vector<8x16xf32>
    %cst_142 = arith.constant 0.000000e+00 : f32
    %402 = vector.broadcast %cst_142 : f32 to vector<8x16xf32>
    %403 = arith.subf %336, %399 : vector<8x1xf32>
    %404 = math.exp %403 : vector<8x1xf32>
    %405 = arith.addf %400, %404 : vector<8x1xf32>
    %c0_143 = arith.constant 0 : index
    %c0_144 = arith.constant 0 : index
    %c0_145 = arith.constant 0 : index
    %406 = vector.load %arg33[%c0_143, %c0_144, %c0_145] : memref<8x8x16xf32, #tpu.memory_space<vmem>>, vector<1x8x16xf32>
    %407 = vector.shape_cast %406 : vector<1x8x16xf32> to vector<8x16xf32>
    %408 = vector.broadcast %404 : vector<8x1xf32> to vector<8x16xf32>
    %409 = arith.mulf %408, %407 : vector<8x16xf32>
    %410 = arith.addf %401, %409 : vector<8x16xf32>
    %c0_146 = arith.constant 0 : index
    %c0_147 = arith.constant 0 : index
    %c0_148 = arith.constant 0 : index
    %411 = vector.load %arg34[%c0_146, %c0_147, %c0_148] : memref<8x8x16xf32, #tpu.memory_space<vmem>>, vector<1x8x16xf32>
    %412 = vector.shape_cast %411 : vector<1x8x16xf32> to vector<8x16xf32>
    %413 = vector.broadcast %404 : vector<8x1xf32> to vector<8x16xf32>
    %414 = arith.mulf %413, %412 : vector<8x16xf32>
    %415 = arith.addf %402, %414 : vector<8x16xf32>
    %416 = arith.subf %344, %399 : vector<8x1xf32>
    %417 = math.exp %416 : vector<8x1xf32>
    %418 = arith.addf %405, %417 : vector<8x1xf32>
    %c1_149 = arith.constant 1 : index
    %c0_150 = arith.constant 0 : index
    %c0_151 = arith.constant 0 : index
    %419 = vector.load %arg33[%c1_149, %c0_150, %c0_151] : memref<8x8x16xf32, #tpu.memory_space<vmem>>, vector<1x8x16xf32>
    %420 = vector.shape_cast %419 : vector<1x8x16xf32> to vector<8x16xf32>
    %421 = vector.broadcast %417 : vector<8x1xf32> to vector<8x16xf32>
    %422 = arith.mulf %421, %420 : vector<8x16xf32>
    %423 = arith.addf %410, %422 : vector<8x16xf32>
    %c1_152 = arith.constant 1 : index
    %c0_153 = arith.constant 0 : index
    %c0_154 = arith.constant 0 : index
    %424 = vector.load %arg34[%c1_152, %c0_153, %c0_154] : memref<8x8x16xf32, #tpu.memory_space<vmem>>, vector<1x8x16xf32>
    %425 = vector.shape_cast %424 : vector<1x8x16xf32> to vector<8x16xf32>
    %426 = vector.broadcast %417 : vector<8x1xf32> to vector<8x16xf32>
    %427 = arith.mulf %426, %425 : vector<8x16xf32>
    %428 = arith.addf %415, %427 : vector<8x16xf32>
    %429 = arith.subf %352, %399 : vector<8x1xf32>
    %430 = math.exp %429 : vector<8x1xf32>
    %431 = arith.addf %418, %430 : vector<8x1xf32>
    %c2_155 = arith.constant 2 : index
    %c0_156 = arith.constant 0 : index
    %c0_157 = arith.constant 0 : index
    %432 = vector.load %arg33[%c2_155, %c0_156, %c0_157] : memref<8x8x16xf32, #tpu.memory_space<vmem>>, vector<1x8x16xf32>
    %433 = vector.shape_cast %432 : vector<1x8x16xf32> to vector<8x16xf32>
    %434 = vector.broadcast %430 : vector<8x1xf32> to vector<8x16xf32>
    %435 = arith.mulf %434, %433 : vector<8x16xf32>
    %436 = arith.addf %423, %435 : vector<8x16xf32>
    %c2_158 = arith.constant 2 : index
    %c0_159 = arith.constant 0 : index
    %c0_160 = arith.constant 0 : index
    %437 = vector.load %arg34[%c2_158, %c0_159, %c0_160] : memref<8x8x16xf32, #tpu.memory_space<vmem>>, vector<1x8x16xf32>
    %438 = vector.shape_cast %437 : vector<1x8x16xf32> to vector<8x16xf32>
    %439 = vector.broadcast %430 : vector<8x1xf32> to vector<8x16xf32>
    %440 = arith.mulf %439, %438 : vector<8x16xf32>
    %441 = arith.addf %428, %440 : vector<8x16xf32>
    %442 = arith.subf %360, %399 : vector<8x1xf32>
    %443 = math.exp %442 : vector<8x1xf32>
    %444 = arith.addf %431, %443 : vector<8x1xf32>
    %c3_161 = arith.constant 3 : index
    %c0_162 = arith.constant 0 : index
    %c0_163 = arith.constant 0 : index
    %445 = vector.load %arg33[%c3_161, %c0_162, %c0_163] : memref<8x8x16xf32, #tpu.memory_space<vmem>>, vector<1x8x16xf32>
    %446 = vector.shape_cast %445 : vector<1x8x16xf32> to vector<8x16xf32>
    %447 = vector.broadcast %443 : vector<8x1xf32> to vector<8x16xf32>
    %448 = arith.mulf %447, %446 : vector<8x16xf32>
    %449 = arith.addf %436, %448 : vector<8x16xf32>
    %c3_164 = arith.constant 3 : index
    %c0_165 = arith.constant 0 : index
    %c0_166 = arith.constant 0 : index
    %450 = vector.load %arg34[%c3_164, %c0_165, %c0_166] : memref<8x8x16xf32, #tpu.memory_space<vmem>>, vector<1x8x16xf32>
    %451 = vector.shape_cast %450 : vector<1x8x16xf32> to vector<8x16xf32>
    %452 = vector.broadcast %443 : vector<8x1xf32> to vector<8x16xf32>
    %453 = arith.mulf %452, %451 : vector<8x16xf32>
    %454 = arith.addf %441, %453 : vector<8x16xf32>
    %455 = arith.subf %368, %399 : vector<8x1xf32>
    %456 = math.exp %455 : vector<8x1xf32>
    %457 = arith.addf %444, %456 : vector<8x1xf32>
    %c4_167 = arith.constant 4 : index
    %c0_168 = arith.constant 0 : index
    %c0_169 = arith.constant 0 : index
    %458 = vector.load %arg33[%c4_167, %c0_168, %c0_169] : memref<8x8x16xf32, #tpu.memory_space<vmem>>, vector<1x8x16xf32>
    %459 = vector.shape_cast %458 : vector<1x8x16xf32> to vector<8x16xf32>
    %460 = vector.broadcast %456 : vector<8x1xf32> to vector<8x16xf32>
    %461 = arith.mulf %460, %459 : vector<8x16xf32>
    %462 = arith.addf %449, %461 : vector<8x16xf32>
    %c4_170 = arith.constant 4 : index
    %c0_171 = arith.constant 0 : index
    %c0_172 = arith.constant 0 : index
    %463 = vector.load %arg34[%c4_170, %c0_171, %c0_172] : memref<8x8x16xf32, #tpu.memory_space<vmem>>, vector<1x8x16xf32>
    %464 = vector.shape_cast %463 : vector<1x8x16xf32> to vector<8x16xf32>
    %465 = vector.broadcast %456 : vector<8x1xf32> to vector<8x16xf32>
    %466 = arith.mulf %465, %464 : vector<8x16xf32>
    %467 = arith.addf %454, %466 : vector<8x16xf32>
    %468 = arith.subf %376, %399 : vector<8x1xf32>
    %469 = math.exp %468 : vector<8x1xf32>
    %470 = arith.addf %457, %469 : vector<8x1xf32>
    %c5_173 = arith.constant 5 : index
    %c0_174 = arith.constant 0 : index
    %c0_175 = arith.constant 0 : index
    %471 = vector.load %arg33[%c5_173, %c0_174, %c0_175] : memref<8x8x16xf32, #tpu.memory_space<vmem>>, vector<1x8x16xf32>
    %472 = vector.shape_cast %471 : vector<1x8x16xf32> to vector<8x16xf32>
    %473 = vector.broadcast %469 : vector<8x1xf32> to vector<8x16xf32>
    %474 = arith.mulf %473, %472 : vector<8x16xf32>
    %475 = arith.addf %462, %474 : vector<8x16xf32>
    %c5_176 = arith.constant 5 : index
    %c0_177 = arith.constant 0 : index
    %c0_178 = arith.constant 0 : index
    %476 = vector.load %arg34[%c5_176, %c0_177, %c0_178] : memref<8x8x16xf32, #tpu.memory_space<vmem>>, vector<1x8x16xf32>
    %477 = vector.shape_cast %476 : vector<1x8x16xf32> to vector<8x16xf32>
    %478 = vector.broadcast %469 : vector<8x1xf32> to vector<8x16xf32>
    %479 = arith.mulf %478, %477 : vector<8x16xf32>
    %480 = arith.addf %467, %479 : vector<8x16xf32>
    %481 = arith.subf %384, %399 : vector<8x1xf32>
    %482 = math.exp %481 : vector<8x1xf32>
    %483 = arith.addf %470, %482 : vector<8x1xf32>
    %c6_179 = arith.constant 6 : index
    %c0_180 = arith.constant 0 : index
    %c0_181 = arith.constant 0 : index
    %484 = vector.load %arg33[%c6_179, %c0_180, %c0_181] : memref<8x8x16xf32, #tpu.memory_space<vmem>>, vector<1x8x16xf32>
    %485 = vector.shape_cast %484 : vector<1x8x16xf32> to vector<8x16xf32>
    %486 = vector.broadcast %482 : vector<8x1xf32> to vector<8x16xf32>
    %487 = arith.mulf %486, %485 : vector<8x16xf32>
    %488 = arith.addf %475, %487 : vector<8x16xf32>
    %c6_182 = arith.constant 6 : index
    %c0_183 = arith.constant 0 : index
    %c0_184 = arith.constant 0 : index
    %489 = vector.load %arg34[%c6_182, %c0_183, %c0_184] : memref<8x8x16xf32, #tpu.memory_space<vmem>>, vector<1x8x16xf32>
    %490 = vector.shape_cast %489 : vector<1x8x16xf32> to vector<8x16xf32>
    %491 = vector.broadcast %482 : vector<8x1xf32> to vector<8x16xf32>
    %492 = arith.mulf %491, %490 : vector<8x16xf32>
    %493 = arith.addf %480, %492 : vector<8x16xf32>
    %494 = arith.subf %392, %399 : vector<8x1xf32>
    %495 = math.exp %494 : vector<8x1xf32>
    %496 = arith.addf %483, %495 : vector<8x1xf32>
    %c7_185 = arith.constant 7 : index
    %c0_186 = arith.constant 0 : index
    %c0_187 = arith.constant 0 : index
    %497 = vector.load %arg33[%c7_185, %c0_186, %c0_187] : memref<8x8x16xf32, #tpu.memory_space<vmem>>, vector<1x8x16xf32>
    %498 = vector.shape_cast %497 : vector<1x8x16xf32> to vector<8x16xf32>
    %499 = vector.broadcast %495 : vector<8x1xf32> to vector<8x16xf32>
    %500 = arith.mulf %499, %498 : vector<8x16xf32>
    %501 = arith.addf %488, %500 : vector<8x16xf32>
    %c7_188 = arith.constant 7 : index
    %c0_189 = arith.constant 0 : index
    %c0_190 = arith.constant 0 : index
    %502 = vector.load %arg34[%c7_188, %c0_189, %c0_190] : memref<8x8x16xf32, #tpu.memory_space<vmem>>, vector<1x8x16xf32>
    %503 = vector.shape_cast %502 : vector<1x8x16xf32> to vector<8x16xf32>
    %504 = vector.broadcast %495 : vector<8x1xf32> to vector<8x16xf32>
    %505 = arith.mulf %504, %503 : vector<8x16xf32>
    %506 = arith.addf %493, %505 : vector<8x16xf32>
    %507 = tpu.reciprocal %496 {approx = true} : vector<8x1xf32> -> vector<8x1xf32>
    %508 = vector.broadcast %507 : vector<8x1xf32> to vector<8x16xf32>
    %509 = arith.mulf %501, %508 : vector<8x16xf32>
    %510 = vector.broadcast %507 : vector<8x1xf32> to vector<8x16xf32>
    %511 = arith.mulf %506, %510 : vector<8x16xf32>
    %c0_191 = arith.constant 0 : index
    %c0_192 = arith.constant 0 : index
    %512 = vector.load %arg10[%c0_191, %c0_192] : memref<32x32xbf16, #tpu.memory_space<vmem>>, vector<32x32xbf16>
    %513 = vector.extract_strided_slice %512 {offsets = [0, 0], sizes = [16, 32], strides = [1, 1]} : vector<32x32xbf16> to vector<16x32xbf16>
    %514 = arith.truncf %509 : vector<8x16xf32> to vector<8x16xbf16>
    %cst_193 = arith.constant dense<0.000000e+00> : vector<8x32xf32>
    %515 = tpu.matmul %514, %513, %cst_193 {dimension_numbers = #tpu.dot_dimension_numbers<[1], [0], [0], [1], [0, 0, 1, 1], [], []>} : vector<8x16xbf16>, vector<16x32xbf16>, vector<8x32xf32> -> vector<8x32xf32>
    %516 = vector.extract_strided_slice %512 {offsets = [16, 0], sizes = [16, 32], strides = [1, 1]} : vector<32x32xbf16> to vector<16x32xbf16>
    %517 = arith.truncf %511 : vector<8x16xf32> to vector<8x16xbf16>
    %cst_194 = arith.constant dense<0.000000e+00> : vector<8x32xf32>
    %518 = tpu.matmul %517, %516, %cst_194 {dimension_numbers = #tpu.dot_dimension_numbers<[1], [0], [0], [1], [0, 0, 1, 1], [], []>} : vector<8x16xbf16>, vector<16x32xbf16>, vector<8x32xf32> -> vector<8x32xf32>
    %519 = arith.addf %515, %518 : vector<8x32xf32>
    %c0_195 = arith.constant 0 : index
    %c0_196 = arith.constant 0 : index
    %520 = vector.load %arg11[%c0_195, %c0_196] : memref<1x32xf32, #tpu.memory_space<vmem>>, vector<1x32xf32>
    %521 = vector.broadcast %520 : vector<1x32xf32> to vector<8x32xf32>
    %522 = arith.addf %519, %521 : vector<8x32xf32>
    %523 = math.tanh %522 : vector<8x32xf32>
    %c0_197 = arith.constant 0 : index
    %c0_198 = arith.constant 0 : index
    %524 = vector.load %arg12[%c0_197, %c0_198] : memref<32x128xbf16, #tpu.memory_space<vmem>>, vector<32x128xbf16>
    %525 = arith.truncf %523 : vector<8x32xf32> to vector<8x32xbf16>
    %cst_199 = arith.constant dense<0.000000e+00> : vector<8x128xf32>
    %526 = tpu.matmul %525, %524, %cst_199 {dimension_numbers = #tpu.dot_dimension_numbers<[1], [0], [0], [1], [0, 0, 1, 1], [], []>} : vector<8x32xbf16>, vector<32x128xbf16>, vector<8x128xf32> -> vector<8x128xf32>
    %c0_200 = arith.constant 0 : index
    %c0_201 = arith.constant 0 : index
    %527 = vector.load %arg14[%c0_200, %c0_201] : memref<1x128xf32, #tpu.memory_space<vmem>>, vector<1x128xf32>
    %528 = vector.broadcast %527 : vector<1x128xf32> to vector<8x128xf32>
    %529 = arith.addf %526, %528 : vector<8x128xf32>
    %c0_202 = arith.constant 0 : index
    %c0_203 = arith.constant 0 : index
    %530 = vector.load %arg13[%c0_202, %c0_203] : memref<32x128xbf16, #tpu.memory_space<vmem>>, vector<32x128xbf16>
    %cst_204 = arith.constant 0.000000e+00 : f32
    %531 = vector.broadcast %cst_204 : f32 to vector<1x32xf32>
    %cst_205 = arith.constant 0.000000e+00 : f32
    %532 = vector.broadcast %cst_205 : f32 to vector<1x32xf32>
    %533 = vector.extract_strided_slice %529 {offsets = [0, 0], sizes = [1, 128], strides = [1, 1]} : vector<8x128xf32> to vector<1x128xf32>
    %534 = arith.truncf %531 : vector<1x32xf32> to vector<1x32xbf16>
    %cst_206 = arith.constant dense<0.000000e+00> : vector<1x128xf32>
    %535 = tpu.matmul %534, %530, %cst_206 {dimension_numbers = #tpu.dot_dimension_numbers<[1], [0], [0], [1], [0, 0, 1, 1], [], []>} : vector<1x32xbf16>, vector<32x128xbf16>, vector<1x128xf32> -> vector<1x128xf32>
    %536 = arith.addf %533, %535 : vector<1x128xf32>
    %537 = vector.extract_strided_slice %536 {offsets = [0, 0], sizes = [1, 32], strides = [1, 1]} : vector<1x128xf32> to vector<1x32xf32>
    %538 = arith.negf %537 : vector<1x32xf32>
    %539 = math.exp %538 : vector<1x32xf32>
    %cst_207 = arith.constant 1.000000e+00 : f32
    %540 = vector.broadcast %cst_207 : f32 to vector<1x32xf32>
    %541 = arith.addf %540, %539 : vector<1x32xf32>
    %542 = arith.divf %540, %541 : vector<1x32xf32>
    %543 = vector.extract_strided_slice %536 {offsets = [0, 32], sizes = [1, 32], strides = [1, 1]} : vector<1x128xf32> to vector<1x32xf32>
    %544 = arith.negf %543 : vector<1x32xf32>
    %545 = math.exp %544 : vector<1x32xf32>
    %cst_208 = arith.constant 1.000000e+00 : f32
    %546 = vector.broadcast %cst_208 : f32 to vector<1x32xf32>
    %547 = arith.addf %546, %545 : vector<1x32xf32>
    %548 = arith.divf %546, %547 : vector<1x32xf32>
    %549 = vector.extract_strided_slice %536 {offsets = [0, 64], sizes = [1, 32], strides = [1, 1]} : vector<1x128xf32> to vector<1x32xf32>
    %550 = math.tanh %549 : vector<1x32xf32>
    %551 = vector.extract_strided_slice %536 {offsets = [0, 96], sizes = [1, 32], strides = [1, 1]} : vector<1x128xf32> to vector<1x32xf32>
    %552 = arith.negf %551 : vector<1x32xf32>
    %553 = math.exp %552 : vector<1x32xf32>
    %cst_209 = arith.constant 1.000000e+00 : f32
    %554 = vector.broadcast %cst_209 : f32 to vector<1x32xf32>
    %555 = arith.addf %554, %553 : vector<1x32xf32>
    %556 = arith.divf %554, %555 : vector<1x32xf32>
    %557 = arith.mulf %548, %532 : vector<1x32xf32>
    %558 = arith.mulf %542, %550 : vector<1x32xf32>
    %559 = arith.addf %557, %558 : vector<1x32xf32>
    %560 = math.tanh %559 : vector<1x32xf32>
    %561 = arith.mulf %556, %560 : vector<1x32xf32>
    %c0_210 = arith.constant 0 : index
    %c0_211 = arith.constant 0 : index
    %562 = vector.load %arg35[%c0_210, %c0_211] : memref<8x32xf32, #tpu.memory_space<vmem>>, vector<1x32xf32>
    tpu.vector_store %arg35[%c0_210, %c0_211], %561 {strides = array<i32>} : memref<8x32xf32, #tpu.memory_space<vmem>>, vector<1x32xf32>,
    %563 = vector.extract_strided_slice %529 {offsets = [1, 0], sizes = [1, 128], strides = [1, 1]} : vector<8x128xf32> to vector<1x128xf32>
    %564 = arith.truncf %561 : vector<1x32xf32> to vector<1x32xbf16>
    %cst_212 = arith.constant dense<0.000000e+00> : vector<1x128xf32>
    %565 = tpu.matmul %564, %530, %cst_212 {dimension_numbers = #tpu.dot_dimension_numbers<[1], [0], [0], [1], [0, 0, 1, 1], [], []>} : vector<1x32xbf16>, vector<32x128xbf16>, vector<1x128xf32> -> vector<1x128xf32>
    %566 = arith.addf %563, %565 : vector<1x128xf32>
    %567 = vector.extract_strided_slice %566 {offsets = [0, 0], sizes = [1, 32], strides = [1, 1]} : vector<1x128xf32> to vector<1x32xf32>
    %568 = arith.negf %567 : vector<1x32xf32>
    %569 = math.exp %568 : vector<1x32xf32>
    %cst_213 = arith.constant 1.000000e+00 : f32
    %570 = vector.broadcast %cst_213 : f32 to vector<1x32xf32>
    %571 = arith.addf %570, %569 : vector<1x32xf32>
    %572 = arith.divf %570, %571 : vector<1x32xf32>
    %573 = vector.extract_strided_slice %566 {offsets = [0, 32], sizes = [1, 32], strides = [1, 1]} : vector<1x128xf32> to vector<1x32xf32>
    %574 = arith.negf %573 : vector<1x32xf32>
    %575 = math.exp %574 : vector<1x32xf32>
    %cst_214 = arith.constant 1.000000e+00 : f32
    %576 = vector.broadcast %cst_214 : f32 to vector<1x32xf32>
    %577 = arith.addf %576, %575 : vector<1x32xf32>
    %578 = arith.divf %576, %577 : vector<1x32xf32>
    %579 = vector.extract_strided_slice %566 {offsets = [0, 64], sizes = [1, 32], strides = [1, 1]} : vector<1x128xf32> to vector<1x32xf32>
    %580 = math.tanh %579 : vector<1x32xf32>
    %581 = vector.extract_strided_slice %566 {offsets = [0, 96], sizes = [1, 32], strides = [1, 1]} : vector<1x128xf32> to vector<1x32xf32>
    %582 = arith.negf %581 : vector<1x32xf32>
    %583 = math.exp %582 : vector<1x32xf32>
    %cst_215 = arith.constant 1.000000e+00 : f32
    %584 = vector.broadcast %cst_215 : f32 to vector<1x32xf32>
    %585 = arith.addf %584, %583 : vector<1x32xf32>
    %586 = arith.divf %584, %585 : vector<1x32xf32>
    %587 = arith.mulf %578, %559 : vector<1x32xf32>
    %588 = arith.mulf %572, %580 : vector<1x32xf32>
    %589 = arith.addf %587, %588 : vector<1x32xf32>
    %590 = math.tanh %589 : vector<1x32xf32>
    %591 = arith.mulf %586, %590 : vector<1x32xf32>
    %c1_216 = arith.constant 1 : index
    %c0_217 = arith.constant 0 : index
    %592 = vector.load %arg35[%c1_216, %c0_217] : memref<8x32xf32, #tpu.memory_space<vmem>>, vector<1x32xf32>
    tpu.vector_store %arg35[%c1_216, %c0_217], %591 {strides = array<i32>} : memref<8x32xf32, #tpu.memory_space<vmem>>, vector<1x32xf32>,
    %593 = vector.extract_strided_slice %529 {offsets = [2, 0], sizes = [1, 128], strides = [1, 1]} : vector<8x128xf32> to vector<1x128xf32>
    %594 = arith.truncf %591 : vector<1x32xf32> to vector<1x32xbf16>
    %cst_218 = arith.constant dense<0.000000e+00> : vector<1x128xf32>
    %595 = tpu.matmul %594, %530, %cst_218 {dimension_numbers = #tpu.dot_dimension_numbers<[1], [0], [0], [1], [0, 0, 1, 1], [], []>} : vector<1x32xbf16>, vector<32x128xbf16>, vector<1x128xf32> -> vector<1x128xf32>
    %596 = arith.addf %593, %595 : vector<1x128xf32>
    %597 = vector.extract_strided_slice %596 {offsets = [0, 0], sizes = [1, 32], strides = [1, 1]} : vector<1x128xf32> to vector<1x32xf32>
    %598 = arith.negf %597 : vector<1x32xf32>
    %599 = math.exp %598 : vector<1x32xf32>
    %cst_219 = arith.constant 1.000000e+00 : f32
    %600 = vector.broadcast %cst_219 : f32 to vector<1x32xf32>
    %601 = arith.addf %600, %599 : vector<1x32xf32>
    %602 = arith.divf %600, %601 : vector<1x32xf32>
    %603 = vector.extract_strided_slice %596 {offsets = [0, 32], sizes = [1, 32], strides = [1, 1]} : vector<1x128xf32> to vector<1x32xf32>
    %604 = arith.negf %603 : vector<1x32xf32>
    %605 = math.exp %604 : vector<1x32xf32>
    %cst_220 = arith.constant 1.000000e+00 : f32
    %606 = vector.broadcast %cst_220 : f32 to vector<1x32xf32>
    %607 = arith.addf %606, %605 : vector<1x32xf32>
    %608 = arith.divf %606, %607 : vector<1x32xf32>
    %609 = vector.extract_strided_slice %596 {offsets = [0, 64], sizes = [1, 32], strides = [1, 1]} : vector<1x128xf32> to vector<1x32xf32>
    %610 = math.tanh %609 : vector<1x32xf32>
    %611 = vector.extract_strided_slice %596 {offsets = [0, 96], sizes = [1, 32], strides = [1, 1]} : vector<1x128xf32> to vector<1x32xf32>
    %612 = arith.negf %611 : vector<1x32xf32>
    %613 = math.exp %612 : vector<1x32xf32>
    %cst_221 = arith.constant 1.000000e+00 : f32
    %614 = vector.broadcast %cst_221 : f32 to vector<1x32xf32>
    %615 = arith.addf %614, %613 : vector<1x32xf32>
    %616 = arith.divf %614, %615 : vector<1x32xf32>
    %617 = arith.mulf %608, %589 : vector<1x32xf32>
    %618 = arith.mulf %602, %610 : vector<1x32xf32>
    %619 = arith.addf %617, %618 : vector<1x32xf32>
    %620 = math.tanh %619 : vector<1x32xf32>
    %621 = arith.mulf %616, %620 : vector<1x32xf32>
    %c2_222 = arith.constant 2 : index
    %c0_223 = arith.constant 0 : index
    %622 = vector.load %arg35[%c2_222, %c0_223] : memref<8x32xf32, #tpu.memory_space<vmem>>, vector<1x32xf32>
    tpu.vector_store %arg35[%c2_222, %c0_223], %621 {strides = array<i32>} : memref<8x32xf32, #tpu.memory_space<vmem>>, vector<1x32xf32>,
    %623 = vector.extract_strided_slice %529 {offsets = [3, 0], sizes = [1, 128], strides = [1, 1]} : vector<8x128xf32> to vector<1x128xf32>
    %624 = arith.truncf %621 : vector<1x32xf32> to vector<1x32xbf16>
    %cst_224 = arith.constant dense<0.000000e+00> : vector<1x128xf32>
    %625 = tpu.matmul %624, %530, %cst_224 {dimension_numbers = #tpu.dot_dimension_numbers<[1], [0], [0], [1], [0, 0, 1, 1], [], []>} : vector<1x32xbf16>, vector<32x128xbf16>, vector<1x128xf32> -> vector<1x128xf32>
    %626 = arith.addf %623, %625 : vector<1x128xf32>
    %627 = vector.extract_strided_slice %626 {offsets = [0, 0], sizes = [1, 32], strides = [1, 1]} : vector<1x128xf32> to vector<1x32xf32>
    %628 = arith.negf %627 : vector<1x32xf32>
    %629 = math.exp %628 : vector<1x32xf32>
    %cst_225 = arith.constant 1.000000e+00 : f32
    %630 = vector.broadcast %cst_225 : f32 to vector<1x32xf32>
    %631 = arith.addf %630, %629 : vector<1x32xf32>
    %632 = arith.divf %630, %631 : vector<1x32xf32>
    %633 = vector.extract_strided_slice %626 {offsets = [0, 32], sizes = [1, 32], strides = [1, 1]} : vector<1x128xf32> to vector<1x32xf32>
    %634 = arith.negf %633 : vector<1x32xf32>
    %635 = math.exp %634 : vector<1x32xf32>
    %cst_226 = arith.constant 1.000000e+00 : f32
    %636 = vector.broadcast %cst_226 : f32 to vector<1x32xf32>
    %637 = arith.addf %636, %635 : vector<1x32xf32>
    %638 = arith.divf %636, %637 : vector<1x32xf32>
    %639 = vector.extract_strided_slice %626 {offsets = [0, 64], sizes = [1, 32], strides = [1, 1]} : vector<1x128xf32> to vector<1x32xf32>
    %640 = math.tanh %639 : vector<1x32xf32>
    %641 = vector.extract_strided_slice %626 {offsets = [0, 96], sizes = [1, 32], strides = [1, 1]} : vector<1x128xf32> to vector<1x32xf32>
    %642 = arith.negf %641 : vector<1x32xf32>
    %643 = math.exp %642 : vector<1x32xf32>
    %cst_227 = arith.constant 1.000000e+00 : f32
    %644 = vector.broadcast %cst_227 : f32 to vector<1x32xf32>
    %645 = arith.addf %644, %643 : vector<1x32xf32>
    %646 = arith.divf %644, %645 : vector<1x32xf32>
    %647 = arith.mulf %638, %619 : vector<1x32xf32>
    %648 = arith.mulf %632, %640 : vector<1x32xf32>
    %649 = arith.addf %647, %648 : vector<1x32xf32>
    %650 = math.tanh %649 : vector<1x32xf32>
    %651 = arith.mulf %646, %650 : vector<1x32xf32>
    %c3_228 = arith.constant 3 : index
    %c0_229 = arith.constant 0 : index
    %652 = vector.load %arg35[%c3_228, %c0_229] : memref<8x32xf32, #tpu.memory_space<vmem>>, vector<1x32xf32>
    tpu.vector_store %arg35[%c3_228, %c0_229], %651 {strides = array<i32>} : memref<8x32xf32, #tpu.memory_space<vmem>>, vector<1x32xf32>,
    %653 = vector.extract_strided_slice %529 {offsets = [4, 0], sizes = [1, 128], strides = [1, 1]} : vector<8x128xf32> to vector<1x128xf32>
    %654 = arith.truncf %651 : vector<1x32xf32> to vector<1x32xbf16>
    %cst_230 = arith.constant dense<0.000000e+00> : vector<1x128xf32>
    %655 = tpu.matmul %654, %530, %cst_230 {dimension_numbers = #tpu.dot_dimension_numbers<[1], [0], [0], [1], [0, 0, 1, 1], [], []>} : vector<1x32xbf16>, vector<32x128xbf16>, vector<1x128xf32> -> vector<1x128xf32>
    %656 = arith.addf %653, %655 : vector<1x128xf32>
    %657 = vector.extract_strided_slice %656 {offsets = [0, 0], sizes = [1, 32], strides = [1, 1]} : vector<1x128xf32> to vector<1x32xf32>
    %658 = arith.negf %657 : vector<1x32xf32>
    %659 = math.exp %658 : vector<1x32xf32>
    %cst_231 = arith.constant 1.000000e+00 : f32
    %660 = vector.broadcast %cst_231 : f32 to vector<1x32xf32>
    %661 = arith.addf %660, %659 : vector<1x32xf32>
    %662 = arith.divf %660, %661 : vector<1x32xf32>
    %663 = vector.extract_strided_slice %656 {offsets = [0, 32], sizes = [1, 32], strides = [1, 1]} : vector<1x128xf32> to vector<1x32xf32>
    %664 = arith.negf %663 : vector<1x32xf32>
    %665 = math.exp %664 : vector<1x32xf32>
    %cst_232 = arith.constant 1.000000e+00 : f32
    %666 = vector.broadcast %cst_232 : f32 to vector<1x32xf32>
    %667 = arith.addf %666, %665 : vector<1x32xf32>
    %668 = arith.divf %666, %667 : vector<1x32xf32>
    %669 = vector.extract_strided_slice %656 {offsets = [0, 64], sizes = [1, 32], strides = [1, 1]} : vector<1x128xf32> to vector<1x32xf32>
    %670 = math.tanh %669 : vector<1x32xf32>
    %671 = vector.extract_strided_slice %656 {offsets = [0, 96], sizes = [1, 32], strides = [1, 1]} : vector<1x128xf32> to vector<1x32xf32>
    %672 = arith.negf %671 : vector<1x32xf32>
    %673 = math.exp %672 : vector<1x32xf32>
    %cst_233 = arith.constant 1.000000e+00 : f32
    %674 = vector.broadcast %cst_233 : f32 to vector<1x32xf32>
    %675 = arith.addf %674, %673 : vector<1x32xf32>
    %676 = arith.divf %674, %675 : vector<1x32xf32>
    %677 = arith.mulf %668, %649 : vector<1x32xf32>
    %678 = arith.mulf %662, %670 : vector<1x32xf32>
    %679 = arith.addf %677, %678 : vector<1x32xf32>
    %680 = math.tanh %679 : vector<1x32xf32>
    %681 = arith.mulf %676, %680 : vector<1x32xf32>
    %c4_234 = arith.constant 4 : index
    %c0_235 = arith.constant 0 : index
    %682 = vector.load %arg35[%c4_234, %c0_235] : memref<8x32xf32, #tpu.memory_space<vmem>>, vector<1x32xf32>
    tpu.vector_store %arg35[%c4_234, %c0_235], %681 {strides = array<i32>} : memref<8x32xf32, #tpu.memory_space<vmem>>, vector<1x32xf32>,
    %683 = vector.extract_strided_slice %529 {offsets = [5, 0], sizes = [1, 128], strides = [1, 1]} : vector<8x128xf32> to vector<1x128xf32>
    %684 = arith.truncf %681 : vector<1x32xf32> to vector<1x32xbf16>
    %cst_236 = arith.constant dense<0.000000e+00> : vector<1x128xf32>
    %685 = tpu.matmul %684, %530, %cst_236 {dimension_numbers = #tpu.dot_dimension_numbers<[1], [0], [0], [1], [0, 0, 1, 1], [], []>} : vector<1x32xbf16>, vector<32x128xbf16>, vector<1x128xf32> -> vector<1x128xf32>
    %686 = arith.addf %683, %685 : vector<1x128xf32>
    %687 = vector.extract_strided_slice %686 {offsets = [0, 0], sizes = [1, 32], strides = [1, 1]} : vector<1x128xf32> to vector<1x32xf32>
    %688 = arith.negf %687 : vector<1x32xf32>
    %689 = math.exp %688 : vector<1x32xf32>
    %cst_237 = arith.constant 1.000000e+00 : f32
    %690 = vector.broadcast %cst_237 : f32 to vector<1x32xf32>
    %691 = arith.addf %690, %689 : vector<1x32xf32>
    %692 = arith.divf %690, %691 : vector<1x32xf32>
    %693 = vector.extract_strided_slice %686 {offsets = [0, 32], sizes = [1, 32], strides = [1, 1]} : vector<1x128xf32> to vector<1x32xf32>
    %694 = arith.negf %693 : vector<1x32xf32>
    %695 = math.exp %694 : vector<1x32xf32>
    %cst_238 = arith.constant 1.000000e+00 : f32
    %696 = vector.broadcast %cst_238 : f32 to vector<1x32xf32>
    %697 = arith.addf %696, %695 : vector<1x32xf32>
    %698 = arith.divf %696, %697 : vector<1x32xf32>
    %699 = vector.extract_strided_slice %686 {offsets = [0, 64], sizes = [1, 32], strides = [1, 1]} : vector<1x128xf32> to vector<1x32xf32>
    %700 = math.tanh %699 : vector<1x32xf32>
    %701 = vector.extract_strided_slice %686 {offsets = [0, 96], sizes = [1, 32], strides = [1, 1]} : vector<1x128xf32> to vector<1x32xf32>
    %702 = arith.negf %701 : vector<1x32xf32>
    %703 = math.exp %702 : vector<1x32xf32>
    %cst_239 = arith.constant 1.000000e+00 : f32
    %704 = vector.broadcast %cst_239 : f32 to vector<1x32xf32>
    %705 = arith.addf %704, %703 : vector<1x32xf32>
    %706 = arith.divf %704, %705 : vector<1x32xf32>
    %707 = arith.mulf %698, %679 : vector<1x32xf32>
    %708 = arith.mulf %692, %700 : vector<1x32xf32>
    %709 = arith.addf %707, %708 : vector<1x32xf32>
    %710 = math.tanh %709 : vector<1x32xf32>
    %711 = arith.mulf %706, %710 : vector<1x32xf32>
    %c5_240 = arith.constant 5 : index
    %c0_241 = arith.constant 0 : index
    %712 = vector.load %arg35[%c5_240, %c0_241] : memref<8x32xf32, #tpu.memory_space<vmem>>, vector<1x32xf32>
    tpu.vector_store %arg35[%c5_240, %c0_241], %711 {strides = array<i32>} : memref<8x32xf32, #tpu.memory_space<vmem>>, vector<1x32xf32>,
    %713 = vector.extract_strided_slice %529 {offsets = [6, 0], sizes = [1, 128], strides = [1, 1]} : vector<8x128xf32> to vector<1x128xf32>
    %714 = arith.truncf %711 : vector<1x32xf32> to vector<1x32xbf16>
    %cst_242 = arith.constant dense<0.000000e+00> : vector<1x128xf32>
    %715 = tpu.matmul %714, %530, %cst_242 {dimension_numbers = #tpu.dot_dimension_numbers<[1], [0], [0], [1], [0, 0, 1, 1], [], []>} : vector<1x32xbf16>, vector<32x128xbf16>, vector<1x128xf32> -> vector<1x128xf32>
    %716 = arith.addf %713, %715 : vector<1x128xf32>
    %717 = vector.extract_strided_slice %716 {offsets = [0, 0], sizes = [1, 32], strides = [1, 1]} : vector<1x128xf32> to vector<1x32xf32>
    %718 = arith.negf %717 : vector<1x32xf32>
    %719 = math.exp %718 : vector<1x32xf32>
    %cst_243 = arith.constant 1.000000e+00 : f32
    %720 = vector.broadcast %cst_243 : f32 to vector<1x32xf32>
    %721 = arith.addf %720, %719 : vector<1x32xf32>
    %722 = arith.divf %720, %721 : vector<1x32xf32>
    %723 = vector.extract_strided_slice %716 {offsets = [0, 32], sizes = [1, 32], strides = [1, 1]} : vector<1x128xf32> to vector<1x32xf32>
    %724 = arith.negf %723 : vector<1x32xf32>
    %725 = math.exp %724 : vector<1x32xf32>
    %cst_244 = arith.constant 1.000000e+00 : f32
    %726 = vector.broadcast %cst_244 : f32 to vector<1x32xf32>
    %727 = arith.addf %726, %725 : vector<1x32xf32>
    %728 = arith.divf %726, %727 : vector<1x32xf32>
    %729 = vector.extract_strided_slice %716 {offsets = [0, 64], sizes = [1, 32], strides = [1, 1]} : vector<1x128xf32> to vector<1x32xf32>
    %730 = math.tanh %729 : vector<1x32xf32>
    %731 = vector.extract_strided_slice %716 {offsets = [0, 96], sizes = [1, 32], strides = [1, 1]} : vector<1x128xf32> to vector<1x32xf32>
    %732 = arith.negf %731 : vector<1x32xf32>
    %733 = math.exp %732 : vector<1x32xf32>
    %cst_245 = arith.constant 1.000000e+00 : f32
    %734 = vector.broadcast %cst_245 : f32 to vector<1x32xf32>
    %735 = arith.addf %734, %733 : vector<1x32xf32>
    %736 = arith.divf %734, %735 : vector<1x32xf32>
    %737 = arith.mulf %728, %709 : vector<1x32xf32>
    %738 = arith.mulf %722, %730 : vector<1x32xf32>
    %739 = arith.addf %737, %738 : vector<1x32xf32>
    %740 = math.tanh %739 : vector<1x32xf32>
    %741 = arith.mulf %736, %740 : vector<1x32xf32>
    %c6_246 = arith.constant 6 : index
    %c0_247 = arith.constant 0 : index
    %742 = vector.load %arg35[%c6_246, %c0_247] : memref<8x32xf32, #tpu.memory_space<vmem>>, vector<1x32xf32>
    tpu.vector_store %arg35[%c6_246, %c0_247], %741 {strides = array<i32>} : memref<8x32xf32, #tpu.memory_space<vmem>>, vector<1x32xf32>,
    %743 = vector.extract_strided_slice %529 {offsets = [7, 0], sizes = [1, 128], strides = [1, 1]} : vector<8x128xf32> to vector<1x128xf32>
    %744 = arith.truncf %741 : vector<1x32xf32> to vector<1x32xbf16>
    %cst_248 = arith.constant dense<0.000000e+00> : vector<1x128xf32>
    %745 = tpu.matmul %744, %530, %cst_248 {dimension_numbers = #tpu.dot_dimension_numbers<[1], [0], [0], [1], [0, 0, 1, 1], [], []>} : vector<1x32xbf16>, vector<32x128xbf16>, vector<1x128xf32> -> vector<1x128xf32>
    %746 = arith.addf %743, %745 : vector<1x128xf32>
    %747 = vector.extract_strided_slice %746 {offsets = [0, 0], sizes = [1, 32], strides = [1, 1]} : vector<1x128xf32> to vector<1x32xf32>
    %748 = arith.negf %747 : vector<1x32xf32>
    %749 = math.exp %748 : vector<1x32xf32>
    %cst_249 = arith.constant 1.000000e+00 : f32
    %750 = vector.broadcast %cst_249 : f32 to vector<1x32xf32>
    %751 = arith.addf %750, %749 : vector<1x32xf32>
    %752 = arith.divf %750, %751 : vector<1x32xf32>
    %753 = vector.extract_strided_slice %746 {offsets = [0, 32], sizes = [1, 32], strides = [1, 1]} : vector<1x128xf32> to vector<1x32xf32>
    %754 = arith.negf %753 : vector<1x32xf32>
    %755 = math.exp %754 : vector<1x32xf32>
    %cst_250 = arith.constant 1.000000e+00 : f32
    %756 = vector.broadcast %cst_250 : f32 to vector<1x32xf32>
    %757 = arith.addf %756, %755 : vector<1x32xf32>
    %758 = arith.divf %756, %757 : vector<1x32xf32>
    %759 = vector.extract_strided_slice %746 {offsets = [0, 64], sizes = [1, 32], strides = [1, 1]} : vector<1x128xf32> to vector<1x32xf32>
    %760 = math.tanh %759 : vector<1x32xf32>
    %761 = vector.extract_strided_slice %746 {offsets = [0, 96], sizes = [1, 32], strides = [1, 1]} : vector<1x128xf32> to vector<1x32xf32>
    %762 = arith.negf %761 : vector<1x32xf32>
    %763 = math.exp %762 : vector<1x32xf32>
    %cst_251 = arith.constant 1.000000e+00 : f32
    %764 = vector.broadcast %cst_251 : f32 to vector<1x32xf32>
    %765 = arith.addf %764, %763 : vector<1x32xf32>
    %766 = arith.divf %764, %765 : vector<1x32xf32>
    %767 = arith.mulf %758, %739 : vector<1x32xf32>
    %768 = arith.mulf %752, %760 : vector<1x32xf32>
    %769 = arith.addf %767, %768 : vector<1x32xf32>
    %770 = math.tanh %769 : vector<1x32xf32>
    %771 = arith.mulf %766, %770 : vector<1x32xf32>
    %c7_252 = arith.constant 7 : index
    %c0_253 = arith.constant 0 : index
    %772 = vector.load %arg35[%c7_252, %c0_253] : memref<8x32xf32, #tpu.memory_space<vmem>>, vector<1x32xf32>
    tpu.vector_store %arg35[%c7_252, %c0_253], %771 {strides = array<i32>} : memref<8x32xf32, #tpu.memory_space<vmem>>, vector<1x32xf32>,
    %c0_254 = arith.constant 0 : index
    %c0_255 = arith.constant 0 : index
    %773 = vector.load %arg35[%c0_254, %c0_255] : memref<8x32xf32, #tpu.memory_space<vmem>>, vector<8x32xf32>
    %c0_256 = arith.constant 0 : index
    %c0_257 = arith.constant 0 : index
    %774 = vector.load %arg15[%c0_256, %c0_257] : memref<32x32xbf16, #tpu.memory_space<vmem>>, vector<32x32xbf16>
    %775 = arith.truncf %773 : vector<8x32xf32> to vector<8x32xbf16>
    %cst_258 = arith.constant dense<0.000000e+00> : vector<8x32xf32>
    %776 = tpu.matmul %775, %774, %cst_258 {dimension_numbers = #tpu.dot_dimension_numbers<[1], [0], [0], [1], [0, 0, 1, 1], [], []>} : vector<8x32xbf16>, vector<32x32xbf16>, vector<8x32xf32> -> vector<8x32xf32>
    %c0_259 = arith.constant 0 : index
    %c0_260 = arith.constant 0 : index
    %777 = vector.load %arg16[%c0_259, %c0_260] : memref<1x32xf32, #tpu.memory_space<vmem>>, vector<1x32xf32>
    %778 = vector.broadcast %777 : vector<1x32xf32> to vector<8x32xf32>
    %779 = arith.addf %776, %778 : vector<8x32xf32>
    %780 = math.tanh %779 : vector<8x32xf32>
    %c0_261 = arith.constant 0 : index
    %c0_262 = arith.constant 0 : index
    %781 = vector.load %arg17[%c0_261, %c0_262] : memref<32x1xbf16, #tpu.memory_space<vmem>>, vector<32x1xbf16>
    %782 = arith.truncf %780 : vector<8x32xf32> to vector<8x32xbf16>
    %cst_263 = arith.constant dense<0.000000e+00> : vector<8x1xf32>
    %783 = tpu.matmul %782, %781, %cst_263 {dimension_numbers = #tpu.dot_dimension_numbers<[1], [0], [0], [1], [0, 0, 1, 1], [], []>} : vector<8x32xbf16>, vector<32x1xbf16>, vector<8x1xf32> -> vector<8x1xf32>
    %c0_264 = arith.constant 0 : index
    %c0_265 = arith.constant 0 : index
    %784 = vector.load %arg18[%c0_264, %c0_265] : memref<1x1xf32, #tpu.memory_space<vmem>>, vector<1x1xf32>
    %785 = vector.broadcast %784 : vector<1x1xf32> to vector<8x1xf32>
    %786 = arith.addf %783, %785 : vector<8x1xf32>
    %cst_266 = arith.constant dense<0xFF800000> : vector<1xf32>
    %787 = vector.multi_reduction <maximumf>, %786, %cst_266 [0] : vector<8x1xf32> to vector<1xf32>
    %788 = vector.shape_cast %787 : vector<1xf32> to vector<1x1xf32>
    %789 = vector.broadcast %788 : vector<1x1xf32> to vector<8x1xf32>
    %790 = arith.subf %786, %789 : vector<8x1xf32>
    %791 = math.exp %790 : vector<8x1xf32>
    %cst_267 = arith.constant dense<0.000000e+00> : vector<1xf32>
    %792 = vector.multi_reduction <add>, %791, %cst_267 [0] : vector<8x1xf32> to vector<1xf32>
    %793 = vector.shape_cast %792 : vector<1xf32> to vector<1x1xf32>
    %794 = tpu.reciprocal %793 {approx = true} : vector<1x1xf32> -> vector<1x1xf32>
    %795 = vector.broadcast %794 : vector<1x1xf32> to vector<8x1xf32>
    %796 = arith.mulf %791, %795 : vector<8x1xf32>
    %797 = vector.broadcast %796 : vector<8x1xf32> to vector<8x32xf32>
    %798 = arith.mulf %773, %797 : vector<8x32xf32>
    %cst_268 = arith.constant dense<0.000000e+00> : vector<32xf32>
    %799 = vector.multi_reduction <add>, %798, %cst_268 [0] : vector<8x32xf32> to vector<32xf32>
    %800 = vector.shape_cast %799 : vector<32xf32> to vector<1x32xf32>
    %c0_269 = arith.constant 0 : index
    %c0_270 = arith.constant 0 : index
    %801 = vector.load %arg19[%c0_269, %c0_270] : memref<32x128xbf16, #tpu.memory_space<vmem>>, vector<32x128xbf16>
    %802 = arith.truncf %773 : vector<8x32xf32> to vector<8x32xbf16>
    %cst_271 = arith.constant dense<0.000000e+00> : vector<8x128xf32>
    %803 = tpu.matmul %802, %801, %cst_271 {dimension_numbers = #tpu.dot_dimension_numbers<[1], [0], [0], [1], [0, 0, 1, 1], [], []>} : vector<8x32xbf16>, vector<32x128xbf16>, vector<8x128xf32> -> vector<8x128xf32>
    %c0_272 = arith.constant 0 : index
    %c0_273 = arith.constant 0 : index
    %804 = vector.load %arg21[%c0_272, %c0_273] : memref<1x128xf32, #tpu.memory_space<vmem>>, vector<1x128xf32>
    %805 = vector.broadcast %804 : vector<1x128xf32> to vector<8x128xf32>
    %806 = arith.addf %803, %805 : vector<8x128xf32>
    %c0_274 = arith.constant 0 : index
    %c0_275 = arith.constant 0 : index
    %807 = vector.load %arg20[%c0_274, %c0_275] : memref<32x128xbf16, #tpu.memory_space<vmem>>, vector<32x128xbf16>
    %c0_276 = arith.constant 0 : index
    %c0_277 = arith.constant 0 : index
    %808 = vector.load %arg22[%c0_276, %c0_277] : memref<32x32xbf16, #tpu.memory_space<vmem>>, vector<32x32xbf16>
    %809 = arith.truncf %773 : vector<8x32xf32> to vector<8x32xbf16>
    %cst_278 = arith.constant dense<0.000000e+00> : vector<8x32xf32>
    %810 = tpu.matmul %809, %808, %cst_278 {dimension_numbers = #tpu.dot_dimension_numbers<[1], [0], [0], [1], [0, 0, 1, 1], [], []>} : vector<8x32xbf16>, vector<32x32xbf16>, vector<8x32xf32> -> vector<8x32xf32>
    %c0_279 = arith.constant 0 : index
    %c0_280 = arith.constant 0 : index
    %811 = vector.load %arg23[%c0_279, %c0_280] : memref<32x32xbf16, #tpu.memory_space<vmem>>, vector<32x32xbf16>
    %c0_281 = arith.constant 0 : index
    %c0_282 = arith.constant 0 : index
    %812 = vector.load %arg24[%c0_281, %c0_282] : memref<1x64xf32, #tpu.memory_space<vmem>>, vector<1x64xf32>
    %813 = vector.extract_strided_slice %812 {offsets = [0, 0], sizes = [1, 32], strides = [1, 1]} : vector<1x64xf32> to vector<1x32xf32>
    %814 = vector.extract_strided_slice %812 {offsets = [0, 32], sizes = [1, 32], strides = [1, 1]} : vector<1x64xf32> to vector<1x32xf32>
    %c0_283 = arith.constant 0 : index
    %c0_284 = arith.constant 0 : index
    %815 = vector.load %arg25[%c0_283, %c0_284] : memref<1x1xf32, #tpu.memory_space<vmem>>, vector<1x1xf32>
    %816 = tpu.iota {dimensions = array<i32: 0>} : vector<8x1xi32>
    %817 = arith.sitofp %816 : vector<8x1xi32> to vector<8x1xf32>
    %c0_i32 = arith.constant 0 : i32
    %818 = vector.broadcast %c0_i32 : i32 to vector<8x1xi32>
    %c0_i32_285 = arith.constant 0 : i32
    %819 = vector.broadcast %c0_i32_285 : i32 to vector<8x1xi32>
    %cst_286 = arith.constant 0.000000e+00 : f32
    %820 = vector.broadcast %cst_286 : f32 to vector<1x1xf32>
    %821 = vector.extract_strided_slice %806 {offsets = [2, 0], sizes = [1, 128], strides = [1, 1]} : vector<8x128xf32> to vector<1x128xf32>
    %822 = arith.truncf %800 : vector<1x32xf32> to vector<1x32xbf16>
    %cst_287 = arith.constant dense<0.000000e+00> : vector<1x128xf32>
    %823 = tpu.matmul %822, %807, %cst_287 {dimension_numbers = #tpu.dot_dimension_numbers<[1], [0], [0], [1], [0, 0, 1, 1], [], []>} : vector<1x32xbf16>, vector<32x128xbf16>, vector<1x128xf32> -> vector<1x128xf32>
    %824 = arith.addf %821, %823 : vector<1x128xf32>
    %825 = vector.extract_strided_slice %824 {offsets = [0, 0], sizes = [1, 32], strides = [1, 1]} : vector<1x128xf32> to vector<1x32xf32>
    %826 = arith.negf %825 : vector<1x32xf32>
    %827 = math.exp %826 : vector<1x32xf32>
    %cst_288 = arith.constant 1.000000e+00 : f32
    %828 = vector.broadcast %cst_288 : f32 to vector<1x32xf32>
    %829 = arith.addf %828, %827 : vector<1x32xf32>
    %830 = arith.divf %828, %829 : vector<1x32xf32>
    %831 = vector.extract_strided_slice %824 {offsets = [0, 32], sizes = [1, 32], strides = [1, 1]} : vector<1x128xf32> to vector<1x32xf32>
    %832 = arith.negf %831 : vector<1x32xf32>
    %833 = math.exp %832 : vector<1x32xf32>
    %cst_289 = arith.constant 1.000000e+00 : f32
    %834 = vector.broadcast %cst_289 : f32 to vector<1x32xf32>
    %835 = arith.addf %834, %833 : vector<1x32xf32>
    %836 = arith.divf %834, %835 : vector<1x32xf32>
    %837 = vector.extract_strided_slice %824 {offsets = [0, 64], sizes = [1, 32], strides = [1, 1]} : vector<1x128xf32> to vector<1x32xf32>
    %838 = math.tanh %837 : vector<1x32xf32>
    %839 = vector.extract_strided_slice %824 {offsets = [0, 96], sizes = [1, 32], strides = [1, 1]} : vector<1x128xf32> to vector<1x32xf32>
    %840 = arith.negf %839 : vector<1x32xf32>
    %841 = math.exp %840 : vector<1x32xf32>
    %cst_290 = arith.constant 1.000000e+00 : f32
    %842 = vector.broadcast %cst_290 : f32 to vector<1x32xf32>
    %843 = arith.addf %842, %841 : vector<1x32xf32>
    %844 = arith.divf %842, %843 : vector<1x32xf32>
    %845 = arith.mulf %836, %800 : vector<1x32xf32>
    %846 = arith.mulf %830, %838 : vector<1x32xf32>
    %847 = arith.addf %845, %846 : vector<1x32xf32>
    %848 = math.tanh %847 : vector<1x32xf32>
    %849 = arith.mulf %844, %848 : vector<1x32xf32>
    %850 = arith.truncf %849 : vector<1x32xf32> to vector<1x32xbf16>
    %cst_291 = arith.constant dense<0.000000e+00> : vector<1x32xf32>
    %851 = tpu.matmul %850, %811, %cst_291 {dimension_numbers = #tpu.dot_dimension_numbers<[1], [0], [0], [1], [0, 0, 1, 1], [], []>} : vector<1x32xbf16>, vector<32x32xbf16>, vector<1x32xf32> -> vector<1x32xf32>
    %852 = vector.broadcast %851 : vector<1x32xf32> to vector<8x32xf32>
    %853 = arith.mulf %810, %852 : vector<8x32xf32>
    %854 = math.tanh %853 : vector<8x32xf32>
    %855 = vector.broadcast %813 : vector<1x32xf32> to vector<8x32xf32>
    %856 = arith.mulf %854, %855 : vector<8x32xf32>
    %857 = vector.broadcast %851 : vector<1x32xf32> to vector<8x32xf32>
    %858 = arith.subf %810, %857 : vector<8x32xf32>
    %859 = math.tanh %858 : vector<8x32xf32>
    %860 = vector.broadcast %814 : vector<1x32xf32> to vector<8x32xf32>
    %861 = arith.mulf %859, %860 : vector<8x32xf32>
    %862 = arith.addf %856, %861 : vector<8x32xf32>
    %cst_292 = arith.constant dense<0.000000e+00> : vector<8xf32>
    %863 = vector.multi_reduction <add>, %862, %cst_292 [1] : vector<8x32xf32> to vector<8xf32>
    %864 = vector.shape_cast %863 : vector<8xf32> to vector<8x1xf32>
    %865 = vector.broadcast %815 : vector<1x1xf32> to vector<8x1xf32>
    %866 = arith.addf %864, %865 : vector<8x1xf32>
    %c2_i32 = arith.constant 2 : i32
    %867 = vector.broadcast %c2_i32 : i32 to vector<8x1xi32>
    %868 = arith.cmpi slt, %816, %867 : vector<8x1xi32>
    %cst_293 = arith.constant 1.000000e+04 : f32
    %869 = vector.broadcast %cst_293 : f32 to vector<8x1xf32>
    %870 = arith.subf %866, %869 : vector<8x1xf32>
    %871 = arith.select %868, %866, %870 : vector<8x1xi1>, vector<8x1xf32>
    %cst_294 = arith.constant dense<0xFF800000> : vector<1xf32>
    %872 = vector.multi_reduction <maximumf>, %871, %cst_294 [0] : vector<8x1xf32> to vector<1xf32>
    %873 = vector.shape_cast %872 : vector<1xf32> to vector<1x1xf32>
    %874 = vector.broadcast %873 : vector<1x1xf32> to vector<8x1xf32>
    %875 = arith.cmpf oge, %871, %874 : vector<8x1xf32>
    %cst_295 = arith.constant 8.000000e+00 : f32
    %876 = vector.broadcast %cst_295 : f32 to vector<8x1xf32>
    %877 = arith.select %875, %817, %876 : vector<8x1xi1>, vector<8x1xf32>
    %cst_296 = arith.constant dense<0x7F800000> : vector<1xf32>
    %878 = vector.multi_reduction <minimumf>, %877, %cst_296 [0] : vector<8x1xf32> to vector<1xf32>
    %879 = vector.shape_cast %878 : vector<1xf32> to vector<1x1xf32>
    %880 = arith.fptosi %879 : vector<1x1xf32> to vector<1x1xi32>
    %c1_i32 = arith.constant 1 : i32
    %881 = vector.broadcast %c1_i32 : i32 to vector<1x1xi32>
    %882 = arith.minsi %880, %881 : vector<1x1xi32>
    %c2_297 = arith.constant 2 : index
    %c0_298 = arith.constant 0 : index
    %c0_299 = arith.constant 0 : index
    %883 = vector.load %arg2[%c2_297, %c0_298, %c0_299] : memref<8x8x1xf32, #tpu.memory_space<vmem>>, vector<1x8x1xf32>
    %884 = vector.shape_cast %883 : vector<1x8x1xf32> to vector<8x1xf32>
    %885 = arith.addf %871, %884 : vector<8x1xf32>
    %cst_300 = arith.constant dense<0xFF800000> : vector<1xf32>
    %886 = vector.multi_reduction <maximumf>, %885, %cst_300 [0] : vector<8x1xf32> to vector<1xf32>
    %887 = vector.shape_cast %886 : vector<1xf32> to vector<1x1xf32>
    %888 = vector.broadcast %887 : vector<1x1xf32> to vector<8x1xf32>
    %889 = arith.cmpf oge, %885, %888 : vector<8x1xf32>
    %cst_301 = arith.constant 8.000000e+00 : f32
    %890 = vector.broadcast %cst_301 : f32 to vector<8x1xf32>
    %891 = arith.select %889, %817, %890 : vector<8x1xi1>, vector<8x1xf32>
    %cst_302 = arith.constant dense<0x7F800000> : vector<1xf32>
    %892 = vector.multi_reduction <minimumf>, %891, %cst_302 [0] : vector<8x1xf32> to vector<1xf32>
    %893 = vector.shape_cast %892 : vector<1xf32> to vector<1x1xf32>
    %894 = arith.fptosi %893 : vector<1x1xf32> to vector<1x1xi32>
    %c1_i32_303 = arith.constant 1 : i32
    %895 = vector.broadcast %c1_i32_303 : i32 to vector<1x1xi32>
    %896 = arith.minsi %894, %895 : vector<1x1xi32>
    %cst_304 = arith.constant -1.000000e+30 : f32
    %897 = vector.broadcast %cst_304 : f32 to vector<8x1xf32>
    %898 = arith.select %868, %866, %897 : vector<8x1xi1>, vector<8x1xf32>
    %cst_305 = arith.constant dense<0xFF800000> : vector<1xf32>
    %899 = vector.multi_reduction <maximumf>, %898, %cst_305 [0] : vector<8x1xf32> to vector<1xf32>
    %900 = vector.shape_cast %899 : vector<1xf32> to vector<1x1xf32>
    %901 = vector.broadcast %900 : vector<1x1xf32> to vector<8x1xf32>
    %902 = arith.subf %866, %901 : vector<8x1xf32>
    %903 = math.exp %902 : vector<8x1xf32>
    %cst_306 = arith.constant 0.000000e+00 : f32
    %904 = vector.broadcast %cst_306 : f32 to vector<8x1xf32>
    %905 = arith.select %868, %903, %904 : vector<8x1xi1>, vector<8x1xf32>
    %cst_307 = arith.constant dense<0.000000e+00> : vector<1xf32>
    %906 = vector.multi_reduction <add>, %905, %cst_307 [0] : vector<8x1xf32> to vector<1xf32>
    %907 = vector.shape_cast %906 : vector<1xf32> to vector<1x1xf32>
    %908 = math.log %907 : vector<1x1xf32>
    %909 = arith.addf %900, %908 : vector<1x1xf32>
    %910 = vector.broadcast %896 : vector<1x1xi32> to vector<8x1xi32>
    %911 = arith.cmpi eq, %816, %910 : vector<8x1xi32>
    %cst_308 = arith.constant 0.000000e+00 : f32
    %912 = vector.broadcast %cst_308 : f32 to vector<8x1xf32>
    %913 = arith.select %911, %866, %912 : vector<8x1xi1>, vector<8x1xf32>
    %cst_309 = arith.constant dense<0.000000e+00> : vector<1xf32>
    %914 = vector.multi_reduction <add>, %913, %cst_309 [0] : vector<8x1xf32> to vector<1xf32>
    %915 = vector.shape_cast %914 : vector<1xf32> to vector<1x1xf32>
    %916 = arith.subf %909, %915 : vector<1x1xf32>
    %917 = arith.addf %820, %916 : vector<1x1xf32>
    %c2_i32_310 = arith.constant 2 : i32
    %918 = vector.broadcast %c2_i32_310 : i32 to vector<8x1xi32>
    %919 = arith.cmpi eq, %816, %918 : vector<8x1xi32>
    %920 = vector.shape_cast %896 : vector<1x1xi32> to vector<1x1xi32>
    %921 = vector.broadcast %920 : vector<1x1xi32> to vector<8x1xi32>
    %922 = arith.select %919, %921, %818 : vector<8x1xi1>, vector<8x1xi32>
    %c2_i32_311 = arith.constant 2 : i32
    %923 = vector.broadcast %c2_i32_311 : i32 to vector<8x1xi32>
    %924 = arith.cmpi eq, %816, %923 : vector<8x1xi32>
    %925 = vector.shape_cast %882 : vector<1x1xi32> to vector<1x1xi32>
    %926 = vector.broadcast %925 : vector<1x1xi32> to vector<8x1xi32>
    %927 = arith.select %924, %926, %819 : vector<8x1xi1>, vector<8x1xi32>
    %928 = vector.extract_strided_slice %806 {offsets = [3, 0], sizes = [1, 128], strides = [1, 1]} : vector<8x128xf32> to vector<1x128xf32>
    %929 = arith.truncf %849 : vector<1x32xf32> to vector<1x32xbf16>
    %cst_312 = arith.constant dense<0.000000e+00> : vector<1x128xf32>
    %930 = tpu.matmul %929, %807, %cst_312 {dimension_numbers = #tpu.dot_dimension_numbers<[1], [0], [0], [1], [0, 0, 1, 1], [], []>} : vector<1x32xbf16>, vector<32x128xbf16>, vector<1x128xf32> -> vector<1x128xf32>
    %931 = arith.addf %928, %930 : vector<1x128xf32>
    %932 = vector.extract_strided_slice %931 {offsets = [0, 0], sizes = [1, 32], strides = [1, 1]} : vector<1x128xf32> to vector<1x32xf32>
    %933 = arith.negf %932 : vector<1x32xf32>
    %934 = math.exp %933 : vector<1x32xf32>
    %cst_313 = arith.constant 1.000000e+00 : f32
    %935 = vector.broadcast %cst_313 : f32 to vector<1x32xf32>
    %936 = arith.addf %935, %934 : vector<1x32xf32>
    %937 = arith.divf %935, %936 : vector<1x32xf32>
    %938 = vector.extract_strided_slice %931 {offsets = [0, 32], sizes = [1, 32], strides = [1, 1]} : vector<1x128xf32> to vector<1x32xf32>
    %939 = arith.negf %938 : vector<1x32xf32>
    %940 = math.exp %939 : vector<1x32xf32>
    %cst_314 = arith.constant 1.000000e+00 : f32
    %941 = vector.broadcast %cst_314 : f32 to vector<1x32xf32>
    %942 = arith.addf %941, %940 : vector<1x32xf32>
    %943 = arith.divf %941, %942 : vector<1x32xf32>
    %944 = vector.extract_strided_slice %931 {offsets = [0, 64], sizes = [1, 32], strides = [1, 1]} : vector<1x128xf32> to vector<1x32xf32>
    %945 = math.tanh %944 : vector<1x32xf32>
    %946 = vector.extract_strided_slice %931 {offsets = [0, 96], sizes = [1, 32], strides = [1, 1]} : vector<1x128xf32> to vector<1x32xf32>
    %947 = arith.negf %946 : vector<1x32xf32>
    %948 = math.exp %947 : vector<1x32xf32>
    %cst_315 = arith.constant 1.000000e+00 : f32
    %949 = vector.broadcast %cst_315 : f32 to vector<1x32xf32>
    %950 = arith.addf %949, %948 : vector<1x32xf32>
    %951 = arith.divf %949, %950 : vector<1x32xf32>
    %952 = arith.mulf %943, %847 : vector<1x32xf32>
    %953 = arith.mulf %937, %945 : vector<1x32xf32>
    %954 = arith.addf %952, %953 : vector<1x32xf32>
    %955 = math.tanh %954 : vector<1x32xf32>
    %956 = arith.mulf %951, %955 : vector<1x32xf32>
    %957 = arith.truncf %956 : vector<1x32xf32> to vector<1x32xbf16>
    %cst_316 = arith.constant dense<0.000000e+00> : vector<1x32xf32>
    %958 = tpu.matmul %957, %811, %cst_316 {dimension_numbers = #tpu.dot_dimension_numbers<[1], [0], [0], [1], [0, 0, 1, 1], [], []>} : vector<1x32xbf16>, vector<32x32xbf16>, vector<1x32xf32> -> vector<1x32xf32>
    %959 = vector.broadcast %958 : vector<1x32xf32> to vector<8x32xf32>
    %960 = arith.mulf %810, %959 : vector<8x32xf32>
    %961 = math.tanh %960 : vector<8x32xf32>
    %962 = vector.broadcast %813 : vector<1x32xf32> to vector<8x32xf32>
    %963 = arith.mulf %961, %962 : vector<8x32xf32>
    %964 = vector.broadcast %958 : vector<1x32xf32> to vector<8x32xf32>
    %965 = arith.subf %810, %964 : vector<8x32xf32>
    %966 = math.tanh %965 : vector<8x32xf32>
    %967 = vector.broadcast %814 : vector<1x32xf32> to vector<8x32xf32>
    %968 = arith.mulf %966, %967 : vector<8x32xf32>
    %969 = arith.addf %963, %968 : vector<8x32xf32>
    %cst_317 = arith.constant dense<0.000000e+00> : vector<8xf32>
    %970 = vector.multi_reduction <add>, %969, %cst_317 [1] : vector<8x32xf32> to vector<8xf32>
    %971 = vector.shape_cast %970 : vector<8xf32> to vector<8x1xf32>
    %972 = vector.broadcast %815 : vector<1x1xf32> to vector<8x1xf32>
    %973 = arith.addf %971, %972 : vector<8x1xf32>
    %c3_i32 = arith.constant 3 : i32
    %974 = vector.broadcast %c3_i32 : i32 to vector<8x1xi32>
    %975 = arith.cmpi slt, %816, %974 : vector<8x1xi32>
    %cst_318 = arith.constant 1.000000e+04 : f32
    %976 = vector.broadcast %cst_318 : f32 to vector<8x1xf32>
    %977 = arith.subf %973, %976 : vector<8x1xf32>
    %978 = arith.select %975, %973, %977 : vector<8x1xi1>, vector<8x1xf32>
    %cst_319 = arith.constant dense<0xFF800000> : vector<1xf32>
    %979 = vector.multi_reduction <maximumf>, %978, %cst_319 [0] : vector<8x1xf32> to vector<1xf32>
    %980 = vector.shape_cast %979 : vector<1xf32> to vector<1x1xf32>
    %981 = vector.broadcast %980 : vector<1x1xf32> to vector<8x1xf32>
    %982 = arith.cmpf oge, %978, %981 : vector<8x1xf32>
    %cst_320 = arith.constant 8.000000e+00 : f32
    %983 = vector.broadcast %cst_320 : f32 to vector<8x1xf32>
    %984 = arith.select %982, %817, %983 : vector<8x1xi1>, vector<8x1xf32>
    %cst_321 = arith.constant dense<0x7F800000> : vector<1xf32>
    %985 = vector.multi_reduction <minimumf>, %984, %cst_321 [0] : vector<8x1xf32> to vector<1xf32>
    %986 = vector.shape_cast %985 : vector<1xf32> to vector<1x1xf32>
    %987 = arith.fptosi %986 : vector<1x1xf32> to vector<1x1xi32>
    %c2_i32_322 = arith.constant 2 : i32
    %988 = vector.broadcast %c2_i32_322 : i32 to vector<1x1xi32>
    %989 = arith.minsi %987, %988 : vector<1x1xi32>
    %c3_323 = arith.constant 3 : index
    %c0_324 = arith.constant 0 : index
    %c0_325 = arith.constant 0 : index
    %990 = vector.load %arg2[%c3_323, %c0_324, %c0_325] : memref<8x8x1xf32, #tpu.memory_space<vmem>>, vector<1x8x1xf32>
    %991 = vector.shape_cast %990 : vector<1x8x1xf32> to vector<8x1xf32>
    %992 = arith.addf %978, %991 : vector<8x1xf32>
    %cst_326 = arith.constant dense<0xFF800000> : vector<1xf32>
    %993 = vector.multi_reduction <maximumf>, %992, %cst_326 [0] : vector<8x1xf32> to vector<1xf32>
    %994 = vector.shape_cast %993 : vector<1xf32> to vector<1x1xf32>
    %995 = vector.broadcast %994 : vector<1x1xf32> to vector<8x1xf32>
    %996 = arith.cmpf oge, %992, %995 : vector<8x1xf32>
    %cst_327 = arith.constant 8.000000e+00 : f32
    %997 = vector.broadcast %cst_327 : f32 to vector<8x1xf32>
    %998 = arith.select %996, %817, %997 : vector<8x1xi1>, vector<8x1xf32>
    %cst_328 = arith.constant dense<0x7F800000> : vector<1xf32>
    %999 = vector.multi_reduction <minimumf>, %998, %cst_328 [0] : vector<8x1xf32> to vector<1xf32>
    %1000 = vector.shape_cast %999 : vector<1xf32> to vector<1x1xf32>
    %1001 = arith.fptosi %1000 : vector<1x1xf32> to vector<1x1xi32>
    %c2_i32_329 = arith.constant 2 : i32
    %1002 = vector.broadcast %c2_i32_329 : i32 to vector<1x1xi32>
    %1003 = arith.minsi %1001, %1002 : vector<1x1xi32>
    %cst_330 = arith.constant -1.000000e+30 : f32
    %1004 = vector.broadcast %cst_330 : f32 to vector<8x1xf32>
    %1005 = arith.select %975, %973, %1004 : vector<8x1xi1>, vector<8x1xf32>
    %cst_331 = arith.constant dense<0xFF800000> : vector<1xf32>
    %1006 = vector.multi_reduction <maximumf>, %1005, %cst_331 [0] : vector<8x1xf32> to vector<1xf32>
    %1007 = vector.shape_cast %1006 : vector<1xf32> to vector<1x1xf32>
    %1008 = vector.broadcast %1007 : vector<1x1xf32> to vector<8x1xf32>
    %1009 = arith.subf %973, %1008 : vector<8x1xf32>
    %1010 = math.exp %1009 : vector<8x1xf32>
    %cst_332 = arith.constant 0.000000e+00 : f32
    %1011 = vector.broadcast %cst_332 : f32 to vector<8x1xf32>
    %1012 = arith.select %975, %1010, %1011 : vector<8x1xi1>, vector<8x1xf32>
    %cst_333 = arith.constant dense<0.000000e+00> : vector<1xf32>
    %1013 = vector.multi_reduction <add>, %1012, %cst_333 [0] : vector<8x1xf32> to vector<1xf32>
    %1014 = vector.shape_cast %1013 : vector<1xf32> to vector<1x1xf32>
    %1015 = math.log %1014 : vector<1x1xf32>
    %1016 = arith.addf %1007, %1015 : vector<1x1xf32>
    %1017 = vector.broadcast %1003 : vector<1x1xi32> to vector<8x1xi32>
    %1018 = arith.cmpi eq, %816, %1017 : vector<8x1xi32>
    %cst_334 = arith.constant 0.000000e+00 : f32
    %1019 = vector.broadcast %cst_334 : f32 to vector<8x1xf32>
    %1020 = arith.select %1018, %973, %1019 : vector<8x1xi1>, vector<8x1xf32>
    %cst_335 = arith.constant dense<0.000000e+00> : vector<1xf32>
    %1021 = vector.multi_reduction <add>, %1020, %cst_335 [0] : vector<8x1xf32> to vector<1xf32>
    %1022 = vector.shape_cast %1021 : vector<1xf32> to vector<1x1xf32>
    %1023 = arith.subf %1016, %1022 : vector<1x1xf32>
    %1024 = arith.addf %917, %1023 : vector<1x1xf32>
    %c3_i32_336 = arith.constant 3 : i32
    %1025 = vector.broadcast %c3_i32_336 : i32 to vector<8x1xi32>
    %1026 = arith.cmpi eq, %816, %1025 : vector<8x1xi32>
    %1027 = vector.shape_cast %1003 : vector<1x1xi32> to vector<1x1xi32>
    %1028 = vector.broadcast %1027 : vector<1x1xi32> to vector<8x1xi32>
    %1029 = arith.select %1026, %1028, %922 : vector<8x1xi1>, vector<8x1xi32>
    %c3_i32_337 = arith.constant 3 : i32
    %1030 = vector.broadcast %c3_i32_337 : i32 to vector<8x1xi32>
    %1031 = arith.cmpi eq, %816, %1030 : vector<8x1xi32>
    %1032 = vector.shape_cast %989 : vector<1x1xi32> to vector<1x1xi32>
    %1033 = vector.broadcast %1032 : vector<1x1xi32> to vector<8x1xi32>
    %1034 = arith.select %1031, %1033, %927 : vector<8x1xi1>, vector<8x1xi32>
    %1035 = vector.extract_strided_slice %806 {offsets = [4, 0], sizes = [1, 128], strides = [1, 1]} : vector<8x128xf32> to vector<1x128xf32>
    %1036 = arith.truncf %956 : vector<1x32xf32> to vector<1x32xbf16>
    %cst_338 = arith.constant dense<0.000000e+00> : vector<1x128xf32>
    %1037 = tpu.matmul %1036, %807, %cst_338 {dimension_numbers = #tpu.dot_dimension_numbers<[1], [0], [0], [1], [0, 0, 1, 1], [], []>} : vector<1x32xbf16>, vector<32x128xbf16>, vector<1x128xf32> -> vector<1x128xf32>
    %1038 = arith.addf %1035, %1037 : vector<1x128xf32>
    %1039 = vector.extract_strided_slice %1038 {offsets = [0, 0], sizes = [1, 32], strides = [1, 1]} : vector<1x128xf32> to vector<1x32xf32>
    %1040 = arith.negf %1039 : vector<1x32xf32>
    %1041 = math.exp %1040 : vector<1x32xf32>
    %cst_339 = arith.constant 1.000000e+00 : f32
    %1042 = vector.broadcast %cst_339 : f32 to vector<1x32xf32>
    %1043 = arith.addf %1042, %1041 : vector<1x32xf32>
    %1044 = arith.divf %1042, %1043 : vector<1x32xf32>
    %1045 = vector.extract_strided_slice %1038 {offsets = [0, 32], sizes = [1, 32], strides = [1, 1]} : vector<1x128xf32> to vector<1x32xf32>
    %1046 = arith.negf %1045 : vector<1x32xf32>
    %1047 = math.exp %1046 : vector<1x32xf32>
    %cst_340 = arith.constant 1.000000e+00 : f32
    %1048 = vector.broadcast %cst_340 : f32 to vector<1x32xf32>
    %1049 = arith.addf %1048, %1047 : vector<1x32xf32>
    %1050 = arith.divf %1048, %1049 : vector<1x32xf32>
    %1051 = vector.extract_strided_slice %1038 {offsets = [0, 64], sizes = [1, 32], strides = [1, 1]} : vector<1x128xf32> to vector<1x32xf32>
    %1052 = math.tanh %1051 : vector<1x32xf32>
    %1053 = vector.extract_strided_slice %1038 {offsets = [0, 96], sizes = [1, 32], strides = [1, 1]} : vector<1x128xf32> to vector<1x32xf32>
    %1054 = arith.negf %1053 : vector<1x32xf32>
    %1055 = math.exp %1054 : vector<1x32xf32>
    %cst_341 = arith.constant 1.000000e+00 : f32
    %1056 = vector.broadcast %cst_341 : f32 to vector<1x32xf32>
    %1057 = arith.addf %1056, %1055 : vector<1x32xf32>
    %1058 = arith.divf %1056, %1057 : vector<1x32xf32>
    %1059 = arith.mulf %1050, %954 : vector<1x32xf32>
    %1060 = arith.mulf %1044, %1052 : vector<1x32xf32>
    %1061 = arith.addf %1059, %1060 : vector<1x32xf32>
    %1062 = math.tanh %1061 : vector<1x32xf32>
    %1063 = arith.mulf %1058, %1062 : vector<1x32xf32>
    %1064 = arith.truncf %1063 : vector<1x32xf32> to vector<1x32xbf16>
    %cst_342 = arith.constant dense<0.000000e+00> : vector<1x32xf32>
    %1065 = tpu.matmul %1064, %811, %cst_342 {dimension_numbers = #tpu.dot_dimension_numbers<[1], [0], [0], [1], [0, 0, 1, 1], [], []>} : vector<1x32xbf16>, vector<32x32xbf16>, vector<1x32xf32> -> vector<1x32xf32>
    %1066 = vector.broadcast %1065 : vector<1x32xf32> to vector<8x32xf32>
    %1067 = arith.mulf %810, %1066 : vector<8x32xf32>
    %1068 = math.tanh %1067 : vector<8x32xf32>
    %1069 = vector.broadcast %813 : vector<1x32xf32> to vector<8x32xf32>
    %1070 = arith.mulf %1068, %1069 : vector<8x32xf32>
    %1071 = vector.broadcast %1065 : vector<1x32xf32> to vector<8x32xf32>
    %1072 = arith.subf %810, %1071 : vector<8x32xf32>
    %1073 = math.tanh %1072 : vector<8x32xf32>
    %1074 = vector.broadcast %814 : vector<1x32xf32> to vector<8x32xf32>
    %1075 = arith.mulf %1073, %1074 : vector<8x32xf32>
    %1076 = arith.addf %1070, %1075 : vector<8x32xf32>
    %cst_343 = arith.constant dense<0.000000e+00> : vector<8xf32>
    %1077 = vector.multi_reduction <add>, %1076, %cst_343 [1] : vector<8x32xf32> to vector<8xf32>
    %1078 = vector.shape_cast %1077 : vector<8xf32> to vector<8x1xf32>
    %1079 = vector.broadcast %815 : vector<1x1xf32> to vector<8x1xf32>
    %1080 = arith.addf %1078, %1079 : vector<8x1xf32>
    %c4_i32 = arith.constant 4 : i32
    %1081 = vector.broadcast %c4_i32 : i32 to vector<8x1xi32>
    %1082 = arith.cmpi slt, %816, %1081 : vector<8x1xi32>
    %cst_344 = arith.constant 1.000000e+04 : f32
    %1083 = vector.broadcast %cst_344 : f32 to vector<8x1xf32>
    %1084 = arith.subf %1080, %1083 : vector<8x1xf32>
    %1085 = arith.select %1082, %1080, %1084 : vector<8x1xi1>, vector<8x1xf32>
    %cst_345 = arith.constant dense<0xFF800000> : vector<1xf32>
    %1086 = vector.multi_reduction <maximumf>, %1085, %cst_345 [0] : vector<8x1xf32> to vector<1xf32>
    %1087 = vector.shape_cast %1086 : vector<1xf32> to vector<1x1xf32>
    %1088 = vector.broadcast %1087 : vector<1x1xf32> to vector<8x1xf32>
    %1089 = arith.cmpf oge, %1085, %1088 : vector<8x1xf32>
    %cst_346 = arith.constant 8.000000e+00 : f32
    %1090 = vector.broadcast %cst_346 : f32 to vector<8x1xf32>
    %1091 = arith.select %1089, %817, %1090 : vector<8x1xi1>, vector<8x1xf32>
    %cst_347 = arith.constant dense<0x7F800000> : vector<1xf32>
    %1092 = vector.multi_reduction <minimumf>, %1091, %cst_347 [0] : vector<8x1xf32> to vector<1xf32>
    %1093 = vector.shape_cast %1092 : vector<1xf32> to vector<1x1xf32>
    %1094 = arith.fptosi %1093 : vector<1x1xf32> to vector<1x1xi32>
    %c3_i32_348 = arith.constant 3 : i32
    %1095 = vector.broadcast %c3_i32_348 : i32 to vector<1x1xi32>
    %1096 = arith.minsi %1094, %1095 : vector<1x1xi32>
    %c4_349 = arith.constant 4 : index
    %c0_350 = arith.constant 0 : index
    %c0_351 = arith.constant 0 : index
    %1097 = vector.load %arg2[%c4_349, %c0_350, %c0_351] : memref<8x8x1xf32, #tpu.memory_space<vmem>>, vector<1x8x1xf32>
    %1098 = vector.shape_cast %1097 : vector<1x8x1xf32> to vector<8x1xf32>
    %1099 = arith.addf %1085, %1098 : vector<8x1xf32>
    %cst_352 = arith.constant dense<0xFF800000> : vector<1xf32>
    %1100 = vector.multi_reduction <maximumf>, %1099, %cst_352 [0] : vector<8x1xf32> to vector<1xf32>
    %1101 = vector.shape_cast %1100 : vector<1xf32> to vector<1x1xf32>
    %1102 = vector.broadcast %1101 : vector<1x1xf32> to vector<8x1xf32>
    %1103 = arith.cmpf oge, %1099, %1102 : vector<8x1xf32>
    %cst_353 = arith.constant 8.000000e+00 : f32
    %1104 = vector.broadcast %cst_353 : f32 to vector<8x1xf32>
    %1105 = arith.select %1103, %817, %1104 : vector<8x1xi1>, vector<8x1xf32>
    %cst_354 = arith.constant dense<0x7F800000> : vector<1xf32>
    %1106 = vector.multi_reduction <minimumf>, %1105, %cst_354 [0] : vector<8x1xf32> to vector<1xf32>
    %1107 = vector.shape_cast %1106 : vector<1xf32> to vector<1x1xf32>
    %1108 = arith.fptosi %1107 : vector<1x1xf32> to vector<1x1xi32>
    %c3_i32_355 = arith.constant 3 : i32
    %1109 = vector.broadcast %c3_i32_355 : i32 to vector<1x1xi32>
    %1110 = arith.minsi %1108, %1109 : vector<1x1xi32>
    %cst_356 = arith.constant -1.000000e+30 : f32
    %1111 = vector.broadcast %cst_356 : f32 to vector<8x1xf32>
    %1112 = arith.select %1082, %1080, %1111 : vector<8x1xi1>, vector<8x1xf32>
    %cst_357 = arith.constant dense<0xFF800000> : vector<1xf32>
    %1113 = vector.multi_reduction <maximumf>, %1112, %cst_357 [0] : vector<8x1xf32> to vector<1xf32>
    %1114 = vector.shape_cast %1113 : vector<1xf32> to vector<1x1xf32>
    %1115 = vector.broadcast %1114 : vector<1x1xf32> to vector<8x1xf32>
    %1116 = arith.subf %1080, %1115 : vector<8x1xf32>
    %1117 = math.exp %1116 : vector<8x1xf32>
    %cst_358 = arith.constant 0.000000e+00 : f32
    %1118 = vector.broadcast %cst_358 : f32 to vector<8x1xf32>
    %1119 = arith.select %1082, %1117, %1118 : vector<8x1xi1>, vector<8x1xf32>
    %cst_359 = arith.constant dense<0.000000e+00> : vector<1xf32>
    %1120 = vector.multi_reduction <add>, %1119, %cst_359 [0] : vector<8x1xf32> to vector<1xf32>
    %1121 = vector.shape_cast %1120 : vector<1xf32> to vector<1x1xf32>
    %1122 = math.log %1121 : vector<1x1xf32>
    %1123 = arith.addf %1114, %1122 : vector<1x1xf32>
    %1124 = vector.broadcast %1110 : vector<1x1xi32> to vector<8x1xi32>
    %1125 = arith.cmpi eq, %816, %1124 : vector<8x1xi32>
    %cst_360 = arith.constant 0.000000e+00 : f32
    %1126 = vector.broadcast %cst_360 : f32 to vector<8x1xf32>
    %1127 = arith.select %1125, %1080, %1126 : vector<8x1xi1>, vector<8x1xf32>
    %cst_361 = arith.constant dense<0.000000e+00> : vector<1xf32>
    %1128 = vector.multi_reduction <add>, %1127, %cst_361 [0] : vector<8x1xf32> to vector<1xf32>
    %1129 = vector.shape_cast %1128 : vector<1xf32> to vector<1x1xf32>
    %1130 = arith.subf %1123, %1129 : vector<1x1xf32>
    %1131 = arith.addf %1024, %1130 : vector<1x1xf32>
    %c4_i32_362 = arith.constant 4 : i32
    %1132 = vector.broadcast %c4_i32_362 : i32 to vector<8x1xi32>
    %1133 = arith.cmpi eq, %816, %1132 : vector<8x1xi32>
    %1134 = vector.shape_cast %1110 : vector<1x1xi32> to vector<1x1xi32>
    %1135 = vector.broadcast %1134 : vector<1x1xi32> to vector<8x1xi32>
    %1136 = arith.select %1133, %1135, %1029 : vector<8x1xi1>, vector<8x1xi32>
    %c4_i32_363 = arith.constant 4 : i32
    %1137 = vector.broadcast %c4_i32_363 : i32 to vector<8x1xi32>
    %1138 = arith.cmpi eq, %816, %1137 : vector<8x1xi32>
    %1139 = vector.shape_cast %1096 : vector<1x1xi32> to vector<1x1xi32>
    %1140 = vector.broadcast %1139 : vector<1x1xi32> to vector<8x1xi32>
    %1141 = arith.select %1138, %1140, %1034 : vector<8x1xi1>, vector<8x1xi32>
    %1142 = vector.extract_strided_slice %806 {offsets = [5, 0], sizes = [1, 128], strides = [1, 1]} : vector<8x128xf32> to vector<1x128xf32>
    %1143 = arith.truncf %1063 : vector<1x32xf32> to vector<1x32xbf16>
    %cst_364 = arith.constant dense<0.000000e+00> : vector<1x128xf32>
    %1144 = tpu.matmul %1143, %807, %cst_364 {dimension_numbers = #tpu.dot_dimension_numbers<[1], [0], [0], [1], [0, 0, 1, 1], [], []>} : vector<1x32xbf16>, vector<32x128xbf16>, vector<1x128xf32> -> vector<1x128xf32>
    %1145 = arith.addf %1142, %1144 : vector<1x128xf32>
    %1146 = vector.extract_strided_slice %1145 {offsets = [0, 0], sizes = [1, 32], strides = [1, 1]} : vector<1x128xf32> to vector<1x32xf32>
    %1147 = arith.negf %1146 : vector<1x32xf32>
    %1148 = math.exp %1147 : vector<1x32xf32>
    %cst_365 = arith.constant 1.000000e+00 : f32
    %1149 = vector.broadcast %cst_365 : f32 to vector<1x32xf32>
    %1150 = arith.addf %1149, %1148 : vector<1x32xf32>
    %1151 = arith.divf %1149, %1150 : vector<1x32xf32>
    %1152 = vector.extract_strided_slice %1145 {offsets = [0, 32], sizes = [1, 32], strides = [1, 1]} : vector<1x128xf32> to vector<1x32xf32>
    %1153 = arith.negf %1152 : vector<1x32xf32>
    %1154 = math.exp %1153 : vector<1x32xf32>
    %cst_366 = arith.constant 1.000000e+00 : f32
    %1155 = vector.broadcast %cst_366 : f32 to vector<1x32xf32>
    %1156 = arith.addf %1155, %1154 : vector<1x32xf32>
    %1157 = arith.divf %1155, %1156 : vector<1x32xf32>
    %1158 = vector.extract_strided_slice %1145 {offsets = [0, 64], sizes = [1, 32], strides = [1, 1]} : vector<1x128xf32> to vector<1x32xf32>
    %1159 = math.tanh %1158 : vector<1x32xf32>
    %1160 = vector.extract_strided_slice %1145 {offsets = [0, 96], sizes = [1, 32], strides = [1, 1]} : vector<1x128xf32> to vector<1x32xf32>
    %1161 = arith.negf %1160 : vector<1x32xf32>
    %1162 = math.exp %1161 : vector<1x32xf32>
    %cst_367 = arith.constant 1.000000e+00 : f32
    %1163 = vector.broadcast %cst_367 : f32 to vector<1x32xf32>
    %1164 = arith.addf %1163, %1162 : vector<1x32xf32>
    %1165 = arith.divf %1163, %1164 : vector<1x32xf32>
    %1166 = arith.mulf %1157, %1061 : vector<1x32xf32>
    %1167 = arith.mulf %1151, %1159 : vector<1x32xf32>
    %1168 = arith.addf %1166, %1167 : vector<1x32xf32>
    %1169 = math.tanh %1168 : vector<1x32xf32>
    %1170 = arith.mulf %1165, %1169 : vector<1x32xf32>
    %1171 = arith.truncf %1170 : vector<1x32xf32> to vector<1x32xbf16>
    %cst_368 = arith.constant dense<0.000000e+00> : vector<1x32xf32>
    %1172 = tpu.matmul %1171, %811, %cst_368 {dimension_numbers = #tpu.dot_dimension_numbers<[1], [0], [0], [1], [0, 0, 1, 1], [], []>} : vector<1x32xbf16>, vector<32x32xbf16>, vector<1x32xf32> -> vector<1x32xf32>
    %1173 = vector.broadcast %1172 : vector<1x32xf32> to vector<8x32xf32>
    %1174 = arith.mulf %810, %1173 : vector<8x32xf32>
    %1175 = math.tanh %1174 : vector<8x32xf32>
    %1176 = vector.broadcast %813 : vector<1x32xf32> to vector<8x32xf32>
    %1177 = arith.mulf %1175, %1176 : vector<8x32xf32>
    %1178 = vector.broadcast %1172 : vector<1x32xf32> to vector<8x32xf32>
    %1179 = arith.subf %810, %1178 : vector<8x32xf32>
    %1180 = math.tanh %1179 : vector<8x32xf32>
    %1181 = vector.broadcast %814 : vector<1x32xf32> to vector<8x32xf32>
    %1182 = arith.mulf %1180, %1181 : vector<8x32xf32>
    %1183 = arith.addf %1177, %1182 : vector<8x32xf32>
    %cst_369 = arith.constant dense<0.000000e+00> : vector<8xf32>
    %1184 = vector.multi_reduction <add>, %1183, %cst_369 [1] : vector<8x32xf32> to vector<8xf32>
    %1185 = vector.shape_cast %1184 : vector<8xf32> to vector<8x1xf32>
    %1186 = vector.broadcast %815 : vector<1x1xf32> to vector<8x1xf32>
    %1187 = arith.addf %1185, %1186 : vector<8x1xf32>
    %c5_i32 = arith.constant 5 : i32
    %1188 = vector.broadcast %c5_i32 : i32 to vector<8x1xi32>
    %1189 = arith.cmpi slt, %816, %1188 : vector<8x1xi32>
    %cst_370 = arith.constant 1.000000e+04 : f32
    %1190 = vector.broadcast %cst_370 : f32 to vector<8x1xf32>
    %1191 = arith.subf %1187, %1190 : vector<8x1xf32>
    %1192 = arith.select %1189, %1187, %1191 : vector<8x1xi1>, vector<8x1xf32>
    %cst_371 = arith.constant dense<0xFF800000> : vector<1xf32>
    %1193 = vector.multi_reduction <maximumf>, %1192, %cst_371 [0] : vector<8x1xf32> to vector<1xf32>
    %1194 = vector.shape_cast %1193 : vector<1xf32> to vector<1x1xf32>
    %1195 = vector.broadcast %1194 : vector<1x1xf32> to vector<8x1xf32>
    %1196 = arith.cmpf oge, %1192, %1195 : vector<8x1xf32>
    %cst_372 = arith.constant 8.000000e+00 : f32
    %1197 = vector.broadcast %cst_372 : f32 to vector<8x1xf32>
    %1198 = arith.select %1196, %817, %1197 : vector<8x1xi1>, vector<8x1xf32>
    %cst_373 = arith.constant dense<0x7F800000> : vector<1xf32>
    %1199 = vector.multi_reduction <minimumf>, %1198, %cst_373 [0] : vector<8x1xf32> to vector<1xf32>
    %1200 = vector.shape_cast %1199 : vector<1xf32> to vector<1x1xf32>
    %1201 = arith.fptosi %1200 : vector<1x1xf32> to vector<1x1xi32>
    %c4_i32_374 = arith.constant 4 : i32
    %1202 = vector.broadcast %c4_i32_374 : i32 to vector<1x1xi32>
    %1203 = arith.minsi %1201, %1202 : vector<1x1xi32>
    %c5_375 = arith.constant 5 : index
    %c0_376 = arith.constant 0 : index
    %c0_377 = arith.constant 0 : index
    %1204 = vector.load %arg2[%c5_375, %c0_376, %c0_377] : memref<8x8x1xf32, #tpu.memory_space<vmem>>, vector<1x8x1xf32>
    %1205 = vector.shape_cast %1204 : vector<1x8x1xf32> to vector<8x1xf32>
    %1206 = arith.addf %1192, %1205 : vector<8x1xf32>
    %cst_378 = arith.constant dense<0xFF800000> : vector<1xf32>
    %1207 = vector.multi_reduction <maximumf>, %1206, %cst_378 [0] : vector<8x1xf32> to vector<1xf32>
    %1208 = vector.shape_cast %1207 : vector<1xf32> to vector<1x1xf32>
    %1209 = vector.broadcast %1208 : vector<1x1xf32> to vector<8x1xf32>
    %1210 = arith.cmpf oge, %1206, %1209 : vector<8x1xf32>
    %cst_379 = arith.constant 8.000000e+00 : f32
    %1211 = vector.broadcast %cst_379 : f32 to vector<8x1xf32>
    %1212 = arith.select %1210, %817, %1211 : vector<8x1xi1>, vector<8x1xf32>
    %cst_380 = arith.constant dense<0x7F800000> : vector<1xf32>
    %1213 = vector.multi_reduction <minimumf>, %1212, %cst_380 [0] : vector<8x1xf32> to vector<1xf32>
    %1214 = vector.shape_cast %1213 : vector<1xf32> to vector<1x1xf32>
    %1215 = arith.fptosi %1214 : vector<1x1xf32> to vector<1x1xi32>
    %c4_i32_381 = arith.constant 4 : i32
    %1216 = vector.broadcast %c4_i32_381 : i32 to vector<1x1xi32>
    %1217 = arith.minsi %1215, %1216 : vector<1x1xi32>
    %cst_382 = arith.constant -1.000000e+30 : f32
    %1218 = vector.broadcast %cst_382 : f32 to vector<8x1xf32>
    %1219 = arith.select %1189, %1187, %1218 : vector<8x1xi1>, vector<8x1xf32>
    %cst_383 = arith.constant dense<0xFF800000> : vector<1xf32>
    %1220 = vector.multi_reduction <maximumf>, %1219, %cst_383 [0] : vector<8x1xf32> to vector<1xf32>
    %1221 = vector.shape_cast %1220 : vector<1xf32> to vector<1x1xf32>
    %1222 = vector.broadcast %1221 : vector<1x1xf32> to vector<8x1xf32>
    %1223 = arith.subf %1187, %1222 : vector<8x1xf32>
    %1224 = math.exp %1223 : vector<8x1xf32>
    %cst_384 = arith.constant 0.000000e+00 : f32
    %1225 = vector.broadcast %cst_384 : f32 to vector<8x1xf32>
    %1226 = arith.select %1189, %1224, %1225 : vector<8x1xi1>, vector<8x1xf32>
    %cst_385 = arith.constant dense<0.000000e+00> : vector<1xf32>
    %1227 = vector.multi_reduction <add>, %1226, %cst_385 [0] : vector<8x1xf32> to vector<1xf32>
    %1228 = vector.shape_cast %1227 : vector<1xf32> to vector<1x1xf32>
    %1229 = math.log %1228 : vector<1x1xf32>
    %1230 = arith.addf %1221, %1229 : vector<1x1xf32>
    %1231 = vector.broadcast %1217 : vector<1x1xi32> to vector<8x1xi32>
    %1232 = arith.cmpi eq, %816, %1231 : vector<8x1xi32>
    %cst_386 = arith.constant 0.000000e+00 : f32
    %1233 = vector.broadcast %cst_386 : f32 to vector<8x1xf32>
    %1234 = arith.select %1232, %1187, %1233 : vector<8x1xi1>, vector<8x1xf32>
    %cst_387 = arith.constant dense<0.000000e+00> : vector<1xf32>
    %1235 = vector.multi_reduction <add>, %1234, %cst_387 [0] : vector<8x1xf32> to vector<1xf32>
    %1236 = vector.shape_cast %1235 : vector<1xf32> to vector<1x1xf32>
    %1237 = arith.subf %1230, %1236 : vector<1x1xf32>
    %1238 = arith.addf %1131, %1237 : vector<1x1xf32>
    %c5_i32_388 = arith.constant 5 : i32
    %1239 = vector.broadcast %c5_i32_388 : i32 to vector<8x1xi32>
    %1240 = arith.cmpi eq, %816, %1239 : vector<8x1xi32>
    %1241 = vector.shape_cast %1217 : vector<1x1xi32> to vector<1x1xi32>
    %1242 = vector.broadcast %1241 : vector<1x1xi32> to vector<8x1xi32>
    %1243 = arith.select %1240, %1242, %1136 : vector<8x1xi1>, vector<8x1xi32>
    %c5_i32_389 = arith.constant 5 : i32
    %1244 = vector.broadcast %c5_i32_389 : i32 to vector<8x1xi32>
    %1245 = arith.cmpi eq, %816, %1244 : vector<8x1xi32>
    %1246 = vector.shape_cast %1203 : vector<1x1xi32> to vector<1x1xi32>
    %1247 = vector.broadcast %1246 : vector<1x1xi32> to vector<8x1xi32>
    %1248 = arith.select %1245, %1247, %1141 : vector<8x1xi1>, vector<8x1xi32>
    %1249 = vector.extract_strided_slice %806 {offsets = [6, 0], sizes = [1, 128], strides = [1, 1]} : vector<8x128xf32> to vector<1x128xf32>
    %1250 = arith.truncf %1170 : vector<1x32xf32> to vector<1x32xbf16>
    %cst_390 = arith.constant dense<0.000000e+00> : vector<1x128xf32>
    %1251 = tpu.matmul %1250, %807, %cst_390 {dimension_numbers = #tpu.dot_dimension_numbers<[1], [0], [0], [1], [0, 0, 1, 1], [], []>} : vector<1x32xbf16>, vector<32x128xbf16>, vector<1x128xf32> -> vector<1x128xf32>
    %1252 = arith.addf %1249, %1251 : vector<1x128xf32>
    %1253 = vector.extract_strided_slice %1252 {offsets = [0, 0], sizes = [1, 32], strides = [1, 1]} : vector<1x128xf32> to vector<1x32xf32>
    %1254 = arith.negf %1253 : vector<1x32xf32>
    %1255 = math.exp %1254 : vector<1x32xf32>
    %cst_391 = arith.constant 1.000000e+00 : f32
    %1256 = vector.broadcast %cst_391 : f32 to vector<1x32xf32>
    %1257 = arith.addf %1256, %1255 : vector<1x32xf32>
    %1258 = arith.divf %1256, %1257 : vector<1x32xf32>
    %1259 = vector.extract_strided_slice %1252 {offsets = [0, 32], sizes = [1, 32], strides = [1, 1]} : vector<1x128xf32> to vector<1x32xf32>
    %1260 = arith.negf %1259 : vector<1x32xf32>
    %1261 = math.exp %1260 : vector<1x32xf32>
    %cst_392 = arith.constant 1.000000e+00 : f32
    %1262 = vector.broadcast %cst_392 : f32 to vector<1x32xf32>
    %1263 = arith.addf %1262, %1261 : vector<1x32xf32>
    %1264 = arith.divf %1262, %1263 : vector<1x32xf32>
    %1265 = vector.extract_strided_slice %1252 {offsets = [0, 64], sizes = [1, 32], strides = [1, 1]} : vector<1x128xf32> to vector<1x32xf32>
    %1266 = math.tanh %1265 : vector<1x32xf32>
    %1267 = vector.extract_strided_slice %1252 {offsets = [0, 96], sizes = [1, 32], strides = [1, 1]} : vector<1x128xf32> to vector<1x32xf32>
    %1268 = arith.negf %1267 : vector<1x32xf32>
    %1269 = math.exp %1268 : vector<1x32xf32>
    %cst_393 = arith.constant 1.000000e+00 : f32
    %1270 = vector.broadcast %cst_393 : f32 to vector<1x32xf32>
    %1271 = arith.addf %1270, %1269 : vector<1x32xf32>
    %1272 = arith.divf %1270, %1271 : vector<1x32xf32>
    %1273 = arith.mulf %1264, %1168 : vector<1x32xf32>
    %1274 = arith.mulf %1258, %1266 : vector<1x32xf32>
    %1275 = arith.addf %1273, %1274 : vector<1x32xf32>
    %1276 = math.tanh %1275 : vector<1x32xf32>
    %1277 = arith.mulf %1272, %1276 : vector<1x32xf32>
    %1278 = arith.truncf %1277 : vector<1x32xf32> to vector<1x32xbf16>
    %cst_394 = arith.constant dense<0.000000e+00> : vector<1x32xf32>
    %1279 = tpu.matmul %1278, %811, %cst_394 {dimension_numbers = #tpu.dot_dimension_numbers<[1], [0], [0], [1], [0, 0, 1, 1], [], []>} : vector<1x32xbf16>, vector<32x32xbf16>, vector<1x32xf32> -> vector<1x32xf32>
    %1280 = vector.broadcast %1279 : vector<1x32xf32> to vector<8x32xf32>
    %1281 = arith.mulf %810, %1280 : vector<8x32xf32>
    %1282 = math.tanh %1281 : vector<8x32xf32>
    %1283 = vector.broadcast %813 : vector<1x32xf32> to vector<8x32xf32>
    %1284 = arith.mulf %1282, %1283 : vector<8x32xf32>
    %1285 = vector.broadcast %1279 : vector<1x32xf32> to vector<8x32xf32>
    %1286 = arith.subf %810, %1285 : vector<8x32xf32>
    %1287 = math.tanh %1286 : vector<8x32xf32>
    %1288 = vector.broadcast %814 : vector<1x32xf32> to vector<8x32xf32>
    %1289 = arith.mulf %1287, %1288 : vector<8x32xf32>
    %1290 = arith.addf %1284, %1289 : vector<8x32xf32>
    %cst_395 = arith.constant dense<0.000000e+00> : vector<8xf32>
    %1291 = vector.multi_reduction <add>, %1290, %cst_395 [1] : vector<8x32xf32> to vector<8xf32>
    %1292 = vector.shape_cast %1291 : vector<8xf32> to vector<8x1xf32>
    %1293 = vector.broadcast %815 : vector<1x1xf32> to vector<8x1xf32>
    %1294 = arith.addf %1292, %1293 : vector<8x1xf32>
    %c6_i32 = arith.constant 6 : i32
    %1295 = vector.broadcast %c6_i32 : i32 to vector<8x1xi32>
    %1296 = arith.cmpi slt, %816, %1295 : vector<8x1xi32>
    %cst_396 = arith.constant 1.000000e+04 : f32
    %1297 = vector.broadcast %cst_396 : f32 to vector<8x1xf32>
    %1298 = arith.subf %1294, %1297 : vector<8x1xf32>
    %1299 = arith.select %1296, %1294, %1298 : vector<8x1xi1>, vector<8x1xf32>
    %cst_397 = arith.constant dense<0xFF800000> : vector<1xf32>
    %1300 = vector.multi_reduction <maximumf>, %1299, %cst_397 [0] : vector<8x1xf32> to vector<1xf32>
    %1301 = vector.shape_cast %1300 : vector<1xf32> to vector<1x1xf32>
    %1302 = vector.broadcast %1301 : vector<1x1xf32> to vector<8x1xf32>
    %1303 = arith.cmpf oge, %1299, %1302 : vector<8x1xf32>
    %cst_398 = arith.constant 8.000000e+00 : f32
    %1304 = vector.broadcast %cst_398 : f32 to vector<8x1xf32>
    %1305 = arith.select %1303, %817, %1304 : vector<8x1xi1>, vector<8x1xf32>
    %cst_399 = arith.constant dense<0x7F800000> : vector<1xf32>
    %1306 = vector.multi_reduction <minimumf>, %1305, %cst_399 [0] : vector<8x1xf32> to vector<1xf32>
    %1307 = vector.shape_cast %1306 : vector<1xf32> to vector<1x1xf32>
    %1308 = arith.fptosi %1307 : vector<1x1xf32> to vector<1x1xi32>
    %c5_i32_400 = arith.constant 5 : i32
    %1309 = vector.broadcast %c5_i32_400 : i32 to vector<1x1xi32>
    %1310 = arith.minsi %1308, %1309 : vector<1x1xi32>
    %c6_401 = arith.constant 6 : index
    %c0_402 = arith.constant 0 : index
    %c0_403 = arith.constant 0 : index
    %1311 = vector.load %arg2[%c6_401, %c0_402, %c0_403] : memref<8x8x1xf32, #tpu.memory_space<vmem>>, vector<1x8x1xf32>
    %1312 = vector.shape_cast %1311 : vector<1x8x1xf32> to vector<8x1xf32>
    %1313 = arith.addf %1299, %1312 : vector<8x1xf32>
    %cst_404 = arith.constant dense<0xFF800000> : vector<1xf32>
    %1314 = vector.multi_reduction <maximumf>, %1313, %cst_404 [0] : vector<8x1xf32> to vector<1xf32>
    %1315 = vector.shape_cast %1314 : vector<1xf32> to vector<1x1xf32>
    %1316 = vector.broadcast %1315 : vector<1x1xf32> to vector<8x1xf32>
    %1317 = arith.cmpf oge, %1313, %1316 : vector<8x1xf32>
    %cst_405 = arith.constant 8.000000e+00 : f32
    %1318 = vector.broadcast %cst_405 : f32 to vector<8x1xf32>
    %1319 = arith.select %1317, %817, %1318 : vector<8x1xi1>, vector<8x1xf32>
    %cst_406 = arith.constant dense<0x7F800000> : vector<1xf32>
    %1320 = vector.multi_reduction <minimumf>, %1319, %cst_406 [0] : vector<8x1xf32> to vector<1xf32>
    %1321 = vector.shape_cast %1320 : vector<1xf32> to vector<1x1xf32>
    %1322 = arith.fptosi %1321 : vector<1x1xf32> to vector<1x1xi32>
    %c5_i32_407 = arith.constant 5 : i32
    %1323 = vector.broadcast %c5_i32_407 : i32 to vector<1x1xi32>
    %1324 = arith.minsi %1322, %1323 : vector<1x1xi32>
    %cst_408 = arith.constant -1.000000e+30 : f32
    %1325 = vector.broadcast %cst_408 : f32 to vector<8x1xf32>
    %1326 = arith.select %1296, %1294, %1325 : vector<8x1xi1>, vector<8x1xf32>
    %cst_409 = arith.constant dense<0xFF800000> : vector<1xf32>
    %1327 = vector.multi_reduction <maximumf>, %1326, %cst_409 [0] : vector<8x1xf32> to vector<1xf32>
    %1328 = vector.shape_cast %1327 : vector<1xf32> to vector<1x1xf32>
    %1329 = vector.broadcast %1328 : vector<1x1xf32> to vector<8x1xf32>
    %1330 = arith.subf %1294, %1329 : vector<8x1xf32>
    %1331 = math.exp %1330 : vector<8x1xf32>
    %cst_410 = arith.constant 0.000000e+00 : f32
    %1332 = vector.broadcast %cst_410 : f32 to vector<8x1xf32>
    %1333 = arith.select %1296, %1331, %1332 : vector<8x1xi1>, vector<8x1xf32>
    %cst_411 = arith.constant dense<0.000000e+00> : vector<1xf32>
    %1334 = vector.multi_reduction <add>, %1333, %cst_411 [0] : vector<8x1xf32> to vector<1xf32>
    %1335 = vector.shape_cast %1334 : vector<1xf32> to vector<1x1xf32>
    %1336 = math.log %1335 : vector<1x1xf32>
    %1337 = arith.addf %1328, %1336 : vector<1x1xf32>
    %1338 = vector.broadcast %1324 : vector<1x1xi32> to vector<8x1xi32>
    %1339 = arith.cmpi eq, %816, %1338 : vector<8x1xi32>
    %cst_412 = arith.constant 0.000000e+00 : f32
    %1340 = vector.broadcast %cst_412 : f32 to vector<8x1xf32>
    %1341 = arith.select %1339, %1294, %1340 : vector<8x1xi1>, vector<8x1xf32>
    %cst_413 = arith.constant dense<0.000000e+00> : vector<1xf32>
    %1342 = vector.multi_reduction <add>, %1341, %cst_413 [0] : vector<8x1xf32> to vector<1xf32>
    %1343 = vector.shape_cast %1342 : vector<1xf32> to vector<1x1xf32>
    %1344 = arith.subf %1337, %1343 : vector<1x1xf32>
    %1345 = arith.addf %1238, %1344 : vector<1x1xf32>
    %c6_i32_414 = arith.constant 6 : i32
    %1346 = vector.broadcast %c6_i32_414 : i32 to vector<8x1xi32>
    %1347 = arith.cmpi eq, %816, %1346 : vector<8x1xi32>
    %1348 = vector.shape_cast %1324 : vector<1x1xi32> to vector<1x1xi32>
    %1349 = vector.broadcast %1348 : vector<1x1xi32> to vector<8x1xi32>
    %1350 = arith.select %1347, %1349, %1243 : vector<8x1xi1>, vector<8x1xi32>
    %c6_i32_415 = arith.constant 6 : i32
    %1351 = vector.broadcast %c6_i32_415 : i32 to vector<8x1xi32>
    %1352 = arith.cmpi eq, %816, %1351 : vector<8x1xi32>
    %1353 = vector.shape_cast %1310 : vector<1x1xi32> to vector<1x1xi32>
    %1354 = vector.broadcast %1353 : vector<1x1xi32> to vector<8x1xi32>
    %1355 = arith.select %1352, %1354, %1248 : vector<8x1xi1>, vector<8x1xi32>
    %1356 = vector.extract_strided_slice %806 {offsets = [7, 0], sizes = [1, 128], strides = [1, 1]} : vector<8x128xf32> to vector<1x128xf32>
    %1357 = arith.truncf %1277 : vector<1x32xf32> to vector<1x32xbf16>
    %cst_416 = arith.constant dense<0.000000e+00> : vector<1x128xf32>
    %1358 = tpu.matmul %1357, %807, %cst_416 {dimension_numbers = #tpu.dot_dimension_numbers<[1], [0], [0], [1], [0, 0, 1, 1], [], []>} : vector<1x32xbf16>, vector<32x128xbf16>, vector<1x128xf32> -> vector<1x128xf32>
    %1359 = arith.addf %1356, %1358 : vector<1x128xf32>
    %1360 = vector.extract_strided_slice %1359 {offsets = [0, 0], sizes = [1, 32], strides = [1, 1]} : vector<1x128xf32> to vector<1x32xf32>
    %1361 = arith.negf %1360 : vector<1x32xf32>
    %1362 = math.exp %1361 : vector<1x32xf32>
    %cst_417 = arith.constant 1.000000e+00 : f32
    %1363 = vector.broadcast %cst_417 : f32 to vector<1x32xf32>
    %1364 = arith.addf %1363, %1362 : vector<1x32xf32>
    %1365 = arith.divf %1363, %1364 : vector<1x32xf32>
    %1366 = vector.extract_strided_slice %1359 {offsets = [0, 32], sizes = [1, 32], strides = [1, 1]} : vector<1x128xf32> to vector<1x32xf32>
    %1367 = arith.negf %1366 : vector<1x32xf32>
    %1368 = math.exp %1367 : vector<1x32xf32>
    %cst_418 = arith.constant 1.000000e+00 : f32
    %1369 = vector.broadcast %cst_418 : f32 to vector<1x32xf32>
    %1370 = arith.addf %1369, %1368 : vector<1x32xf32>
    %1371 = arith.divf %1369, %1370 : vector<1x32xf32>
    %1372 = vector.extract_strided_slice %1359 {offsets = [0, 64], sizes = [1, 32], strides = [1, 1]} : vector<1x128xf32> to vector<1x32xf32>
    %1373 = math.tanh %1372 : vector<1x32xf32>
    %1374 = vector.extract_strided_slice %1359 {offsets = [0, 96], sizes = [1, 32], strides = [1, 1]} : vector<1x128xf32> to vector<1x32xf32>
    %1375 = arith.negf %1374 : vector<1x32xf32>
    %1376 = math.exp %1375 : vector<1x32xf32>
    %cst_419 = arith.constant 1.000000e+00 : f32
    %1377 = vector.broadcast %cst_419 : f32 to vector<1x32xf32>
    %1378 = arith.addf %1377, %1376 : vector<1x32xf32>
    %1379 = arith.divf %1377, %1378 : vector<1x32xf32>
    %1380 = arith.mulf %1371, %1275 : vector<1x32xf32>
    %1381 = arith.mulf %1365, %1373 : vector<1x32xf32>
    %1382 = arith.addf %1380, %1381 : vector<1x32xf32>
    %1383 = math.tanh %1382 : vector<1x32xf32>
    %1384 = arith.mulf %1379, %1383 : vector<1x32xf32>
    %1385 = arith.truncf %1384 : vector<1x32xf32> to vector<1x32xbf16>
    %cst_420 = arith.constant dense<0.000000e+00> : vector<1x32xf32>
    %1386 = tpu.matmul %1385, %811, %cst_420 {dimension_numbers = #tpu.dot_dimension_numbers<[1], [0], [0], [1], [0, 0, 1, 1], [], []>} : vector<1x32xbf16>, vector<32x32xbf16>, vector<1x32xf32> -> vector<1x32xf32>
    %1387 = vector.broadcast %1386 : vector<1x32xf32> to vector<8x32xf32>
    %1388 = arith.mulf %810, %1387 : vector<8x32xf32>
    %1389 = math.tanh %1388 : vector<8x32xf32>
    %1390 = vector.broadcast %813 : vector<1x32xf32> to vector<8x32xf32>
    %1391 = arith.mulf %1389, %1390 : vector<8x32xf32>
    %1392 = vector.broadcast %1386 : vector<1x32xf32> to vector<8x32xf32>
    %1393 = arith.subf %810, %1392 : vector<8x32xf32>
    %1394 = math.tanh %1393 : vector<8x32xf32>
    %1395 = vector.broadcast %814 : vector<1x32xf32> to vector<8x32xf32>
    %1396 = arith.mulf %1394, %1395 : vector<8x32xf32>
    %1397 = arith.addf %1391, %1396 : vector<8x32xf32>
    %cst_421 = arith.constant dense<0.000000e+00> : vector<8xf32>
    %1398 = vector.multi_reduction <add>, %1397, %cst_421 [1] : vector<8x32xf32> to vector<8xf32>
    %1399 = vector.shape_cast %1398 : vector<8xf32> to vector<8x1xf32>
    %1400 = vector.broadcast %815 : vector<1x1xf32> to vector<8x1xf32>
    %1401 = arith.addf %1399, %1400 : vector<8x1xf32>
    %c7_i32 = arith.constant 7 : i32
    %1402 = vector.broadcast %c7_i32 : i32 to vector<8x1xi32>
    %1403 = arith.cmpi slt, %816, %1402 : vector<8x1xi32>
    %cst_422 = arith.constant 1.000000e+04 : f32
    %1404 = vector.broadcast %cst_422 : f32 to vector<8x1xf32>
    %1405 = arith.subf %1401, %1404 : vector<8x1xf32>
    %1406 = arith.select %1403, %1401, %1405 : vector<8x1xi1>, vector<8x1xf32>
    %cst_423 = arith.constant dense<0xFF800000> : vector<1xf32>
    %1407 = vector.multi_reduction <maximumf>, %1406, %cst_423 [0] : vector<8x1xf32> to vector<1xf32>
    %1408 = vector.shape_cast %1407 : vector<1xf32> to vector<1x1xf32>
    %1409 = vector.broadcast %1408 : vector<1x1xf32> to vector<8x1xf32>
    %1410 = arith.cmpf oge, %1406, %1409 : vector<8x1xf32>
    %cst_424 = arith.constant 8.000000e+00 : f32
    %1411 = vector.broadcast %cst_424 : f32 to vector<8x1xf32>
    %1412 = arith.select %1410, %817, %1411 : vector<8x1xi1>, vector<8x1xf32>
    %cst_425 = arith.constant dense<0x7F800000> : vector<1xf32>
    %1413 = vector.multi_reduction <minimumf>, %1412, %cst_425 [0] : vector<8x1xf32> to vector<1xf32>
    %1414 = vector.shape_cast %1413 : vector<1xf32> to vector<1x1xf32>
    %1415 = arith.fptosi %1414 : vector<1x1xf32> to vector<1x1xi32>
    %c6_i32_426 = arith.constant 6 : i32
    %1416 = vector.broadcast %c6_i32_426 : i32 to vector<1x1xi32>
    %1417 = arith.minsi %1415, %1416 : vector<1x1xi32>
    %c7_427 = arith.constant 7 : index
    %c0_428 = arith.constant 0 : index
    %c0_429 = arith.constant 0 : index
    %1418 = vector.load %arg2[%c7_427, %c0_428, %c0_429] : memref<8x8x1xf32, #tpu.memory_space<vmem>>, vector<1x8x1xf32>
    %1419 = vector.shape_cast %1418 : vector<1x8x1xf32> to vector<8x1xf32>
    %1420 = arith.addf %1406, %1419 : vector<8x1xf32>
    %cst_430 = arith.constant dense<0xFF800000> : vector<1xf32>
    %1421 = vector.multi_reduction <maximumf>, %1420, %cst_430 [0] : vector<8x1xf32> to vector<1xf32>
    %1422 = vector.shape_cast %1421 : vector<1xf32> to vector<1x1xf32>
    %1423 = vector.broadcast %1422 : vector<1x1xf32> to vector<8x1xf32>
    %1424 = arith.cmpf oge, %1420, %1423 : vector<8x1xf32>
    %cst_431 = arith.constant 8.000000e+00 : f32
    %1425 = vector.broadcast %cst_431 : f32 to vector<8x1xf32>
    %1426 = arith.select %1424, %817, %1425 : vector<8x1xi1>, vector<8x1xf32>
    %cst_432 = arith.constant dense<0x7F800000> : vector<1xf32>
    %1427 = vector.multi_reduction <minimumf>, %1426, %cst_432 [0] : vector<8x1xf32> to vector<1xf32>
    %1428 = vector.shape_cast %1427 : vector<1xf32> to vector<1x1xf32>
    %1429 = arith.fptosi %1428 : vector<1x1xf32> to vector<1x1xi32>
    %c6_i32_433 = arith.constant 6 : i32
    %1430 = vector.broadcast %c6_i32_433 : i32 to vector<1x1xi32>
    %1431 = arith.minsi %1429, %1430 : vector<1x1xi32>
    %cst_434 = arith.constant -1.000000e+30 : f32
    %1432 = vector.broadcast %cst_434 : f32 to vector<8x1xf32>
    %1433 = arith.select %1403, %1401, %1432 : vector<8x1xi1>, vector<8x1xf32>
    %cst_435 = arith.constant dense<0xFF800000> : vector<1xf32>
    %1434 = vector.multi_reduction <maximumf>, %1433, %cst_435 [0] : vector<8x1xf32> to vector<1xf32>
    %1435 = vector.shape_cast %1434 : vector<1xf32> to vector<1x1xf32>
    %1436 = vector.broadcast %1435 : vector<1x1xf32> to vector<8x1xf32>
    %1437 = arith.subf %1401, %1436 : vector<8x1xf32>
    %1438 = math.exp %1437 : vector<8x1xf32>
    %cst_436 = arith.constant 0.000000e+00 : f32
    %1439 = vector.broadcast %cst_436 : f32 to vector<8x1xf32>
    %1440 = arith.select %1403, %1438, %1439 : vector<8x1xi1>, vector<8x1xf32>
    %cst_437 = arith.constant dense<0.000000e+00> : vector<1xf32>
    %1441 = vector.multi_reduction <add>, %1440, %cst_437 [0] : vector<8x1xf32> to vector<1xf32>
    %1442 = vector.shape_cast %1441 : vector<1xf32> to vector<1x1xf32>
    %1443 = math.log %1442 : vector<1x1xf32>
    %1444 = arith.addf %1435, %1443 : vector<1x1xf32>
    %1445 = vector.broadcast %1431 : vector<1x1xi32> to vector<8x1xi32>
    %1446 = arith.cmpi eq, %816, %1445 : vector<8x1xi32>
    %cst_438 = arith.constant 0.000000e+00 : f32
    %1447 = vector.broadcast %cst_438 : f32 to vector<8x1xf32>
    %1448 = arith.select %1446, %1401, %1447 : vector<8x1xi1>, vector<8x1xf32>
    %cst_439 = arith.constant dense<0.000000e+00> : vector<1xf32>
    %1449 = vector.multi_reduction <add>, %1448, %cst_439 [0] : vector<8x1xf32> to vector<1xf32>
    %1450 = vector.shape_cast %1449 : vector<1xf32> to vector<1x1xf32>
    %1451 = arith.subf %1444, %1450 : vector<1x1xf32>
    %1452 = arith.addf %1345, %1451 : vector<1x1xf32>
    %c7_i32_440 = arith.constant 7 : i32
    %1453 = vector.broadcast %c7_i32_440 : i32 to vector<8x1xi32>
    %1454 = arith.cmpi eq, %816, %1453 : vector<8x1xi32>
    %1455 = vector.shape_cast %1431 : vector<1x1xi32> to vector<1x1xi32>
    %1456 = vector.broadcast %1455 : vector<1x1xi32> to vector<8x1xi32>
    %1457 = arith.select %1454, %1456, %1350 : vector<8x1xi1>, vector<8x1xi32>
    %c7_i32_441 = arith.constant 7 : i32
    %1458 = vector.broadcast %c7_i32_441 : i32 to vector<8x1xi32>
    %1459 = arith.cmpi eq, %816, %1458 : vector<8x1xi32>
    %1460 = vector.shape_cast %1417 : vector<1x1xi32> to vector<1x1xi32>
    %1461 = vector.broadcast %1460 : vector<1x1xi32> to vector<8x1xi32>
    %1462 = arith.select %1459, %1461, %1355 : vector<8x1xi1>, vector<8x1xi32>
    %cst_442 = arith.constant 0.166666389 : f32
    %1463 = vector.broadcast %cst_442 : f32 to vector<1x1xf32>
    %1464 = arith.mulf %1452, %1463 : vector<1x1xf32>
    %c0_443 = arith.constant 0 : index
    %c0_444 = arith.constant 0 : index
    %1465 = vector.load %arg32[%c0_443, %c0_444] : memref<1x1xf32, #tpu.memory_space<vmem>>, vector<1x1xf32>
    tpu.vector_store %arg32[%c0_443, %c0_444], %1464 {strides = array<i32>} : memref<1x1xf32, #tpu.memory_space<vmem>>, vector<1x1xf32>,
    %1466 = vector.extract_strided_slice %773 {offsets = [1, 0], sizes = [7, 32], strides = [1, 1]} : vector<8x32xf32> to vector<7x32xf32>
    %c0_445 = arith.constant 0 : index
    %c0_446 = arith.constant 0 : index
    %1467 = vector.load %arg26[%c0_445, %c0_446] : memref<64x32xbf16, #tpu.memory_space<vmem>>, vector<64x32xbf16>
    %1468 = vector.extract_strided_slice %1467 {offsets = [0, 0], sizes = [32, 32], strides = [1, 1]} : vector<64x32xbf16> to vector<32x32xbf16>
    %1469 = vector.extract_strided_slice %1467 {offsets = [32, 0], sizes = [32, 32], strides = [1, 1]} : vector<64x32xbf16> to vector<32x32xbf16>
    %c0_447 = arith.constant 0 : index
    %c0_448 = arith.constant 0 : index
    %1470 = vector.load %arg27[%c0_447, %c0_448] : memref<1x32xf32, #tpu.memory_space<vmem>>, vector<1x32xf32>
    %c0_449 = arith.constant 0 : index
    %c0_450 = arith.constant 0 : index
    %1471 = vector.load %arg28[%c0_449, %c0_450] : memref<32x4xbf16, #tpu.memory_space<vmem>>, vector<32x4xbf16>
    %c0_451 = arith.constant 0 : index
    %c0_452 = arith.constant 0 : index
    %1472 = vector.load %arg29[%c0_451, %c0_452] : memref<1x4xf32, #tpu.memory_space<vmem>>, vector<1x4xf32>
    %1473 = tpu.iota {dimensions = array<i32: 1>} : vector<7x8xi32>
    %1474 = vector.extract_strided_slice %1457 {offsets = [1, 0], sizes = [7, 1], strides = [1, 1]} : vector<8x1xi32> to vector<7x1xi32>
    %1475 = vector.broadcast %1474 : vector<7x1xi32> to vector<7x8xi32>
    %1476 = arith.cmpi eq, %1473, %1475 : vector<7x8xi32>
    %1477 = arith.extui %1476 : vector<7x8xi1> to vector<7x8xi32>
    %1478 = arith.sitofp %1477 : vector<7x8xi32> to vector<7x8xf32>
    %cst_453 = arith.constant dense<0.000000e+00> : vector<7x32xf32>
    %1479 = tpu.matmul %1478, %773, %cst_453 {dimension_numbers = #tpu.dot_dimension_numbers<[1], [0], [0], [1], [0, 0, 1, 1], [], []>} : vector<7x8xf32>, vector<8x32xf32>, vector<7x32xf32> -> vector<7x32xf32>
    %1480 = arith.truncf %1466 : vector<7x32xf32> to vector<7x32xbf16>
    %cst_454 = arith.constant dense<0.000000e+00> : vector<7x32xf32>
    %1481 = tpu.matmul %1480, %1468, %cst_454 {dimension_numbers = #tpu.dot_dimension_numbers<[1], [0], [0], [1], [0, 0, 1, 1], [], []>} : vector<7x32xbf16>, vector<32x32xbf16>, vector<7x32xf32> -> vector<7x32xf32>
    %1482 = arith.truncf %1479 : vector<7x32xf32> to vector<7x32xbf16>
    %cst_455 = arith.constant dense<0.000000e+00> : vector<7x32xf32>
    %1483 = tpu.matmul %1482, %1469, %cst_455 {dimension_numbers = #tpu.dot_dimension_numbers<[1], [0], [0], [1], [0, 0, 1, 1], [], []>} : vector<7x32xbf16>, vector<32x32xbf16>, vector<7x32xf32> -> vector<7x32xf32>
    %1484 = arith.addf %1481, %1483 : vector<7x32xf32>
    %1485 = vector.broadcast %1470 : vector<1x32xf32> to vector<7x32xf32>
    %1486 = arith.addf %1484, %1485 : vector<7x32xf32>
    %1487 = math.tanh %1486 : vector<7x32xf32>
    %1488 = arith.truncf %1487 : vector<7x32xf32> to vector<7x32xbf16>
    %cst_456 = arith.constant dense<0.000000e+00> : vector<7x4xf32>
    %1489 = tpu.matmul %1488, %1471, %cst_456 {dimension_numbers = #tpu.dot_dimension_numbers<[1], [0], [0], [1], [0, 0, 1, 1], [], []>} : vector<7x32xbf16>, vector<32x4xbf16>, vector<7x4xf32> -> vector<7x4xf32>
    %1490 = vector.broadcast %1472 : vector<1x4xf32> to vector<7x4xf32>
    %1491 = arith.addf %1489, %1490 : vector<7x4xf32>
    %c0_457 = arith.constant 0 : index
    %c0_458 = arith.constant 0 : index
    %1492 = vector.load %arg30[%c0_457, %c0_458] : memref<7x4xf32, #tpu.memory_space<vmem>>, vector<7x4xf32>
    tpu.vector_store %arg30[%c0_457, %c0_458], %1491 {strides = array<i32>} : memref<7x4xf32, #tpu.memory_space<vmem>>, vector<7x4xf32>,
    %1493 = vector.extract_strided_slice %1462 {offsets = [1, 0], sizes = [7, 1], strides = [1, 1]} : vector<8x1xi32> to vector<7x1xi32>
    %1494 = vector.broadcast %1493 : vector<7x1xi32> to vector<7x8xi32>
    %1495 = arith.cmpi eq, %1473, %1494 : vector<7x8xi32>
    %1496 = arith.extui %1495 : vector<7x8xi1> to vector<7x8xi32>
    %1497 = arith.sitofp %1496 : vector<7x8xi32> to vector<7x8xf32>
    %cst_459 = arith.constant dense<0.000000e+00> : vector<7x32xf32>
    %1498 = tpu.matmul %1497, %773, %cst_459 {dimension_numbers = #tpu.dot_dimension_numbers<[1], [0], [0], [1], [0, 0, 1, 1], [], []>} : vector<7x8xf32>, vector<8x32xf32>, vector<7x32xf32> -> vector<7x32xf32>
    %1499 = arith.truncf %1466 : vector<7x32xf32> to vector<7x32xbf16>
    %cst_460 = arith.constant dense<0.000000e+00> : vector<7x32xf32>
    %1500 = tpu.matmul %1499, %1468, %cst_460 {dimension_numbers = #tpu.dot_dimension_numbers<[1], [0], [0], [1], [0, 0, 1, 1], [], []>} : vector<7x32xbf16>, vector<32x32xbf16>, vector<7x32xf32> -> vector<7x32xf32>
    %1501 = arith.truncf %1498 : vector<7x32xf32> to vector<7x32xbf16>
    %cst_461 = arith.constant dense<0.000000e+00> : vector<7x32xf32>
    %1502 = tpu.matmul %1501, %1469, %cst_461 {dimension_numbers = #tpu.dot_dimension_numbers<[1], [0], [0], [1], [0, 0, 1, 1], [], []>} : vector<7x32xbf16>, vector<32x32xbf16>, vector<7x32xf32> -> vector<7x32xf32>
    %1503 = arith.addf %1500, %1502 : vector<7x32xf32>
    %1504 = vector.broadcast %1470 : vector<1x32xf32> to vector<7x32xf32>
    %1505 = arith.addf %1503, %1504 : vector<7x32xf32>
    %1506 = math.tanh %1505 : vector<7x32xf32>
    %1507 = arith.truncf %1506 : vector<7x32xf32> to vector<7x32xbf16>
    %cst_462 = arith.constant dense<0.000000e+00> : vector<7x4xf32>
    %1508 = tpu.matmul %1507, %1471, %cst_462 {dimension_numbers = #tpu.dot_dimension_numbers<[1], [0], [0], [1], [0, 0, 1, 1], [], []>} : vector<7x32xbf16>, vector<32x4xbf16>, vector<7x4xf32> -> vector<7x4xf32>
    %1509 = vector.broadcast %1472 : vector<1x4xf32> to vector<7x4xf32>
    %1510 = arith.addf %1508, %1509 : vector<7x4xf32>
    %c0_463 = arith.constant 0 : index
    %c0_464 = arith.constant 0 : index
    %1511 = vector.load %arg31[%c0_463, %c0_464] : memref<7x4xf32, #tpu.memory_space<vmem>>, vector<7x4xf32>
    tpu.vector_store %arg31[%c0_463, %c0_464], %1510 {strides = array<i32>} : memref<7x4xf32, #tpu.memory_space<vmem>>, vector<7x4xf32>,
    return
  }
}

</mosaic_0001>

<llo_original>
// kernel: classifier_forward.1
$region0: #{classifier_forward.1}
  #allocation0 [shape = 'u32[]', space=smem, size = 0x4, offset = 0x4, fixed_abs, tag = 'smem constant byte address 0x4 - core index']
  #allocation1 [shape = 'u32[144,128]{1,0:T(1,128)}', space=vmem, size = 0x12000, scoped, tag = 'internal scratch']
  #allocation2 [shape = 'f32[8,8,16]{2,1,0:T(8,128)}', space=vmem, size = 0x8000, scoped, tag = 'scratch operand']
  #allocation3 [shape = 'f32[8,8,16]{2,1,0:T(8,128)}', space=vmem, size = 0x8000, scoped, tag = 'scratch operand']
  #allocation4 [shape = 'f32[8,32]{1,0:T(8,128)}', space=vmem, size = 0x1000, scoped, tag = 'scratch operand']
  #allocation5 [shape = 'f32[1,1]{1,0:T(1,128)S(1)}', space=vmem, size = 0x200, scoped, tag = 'scoped memory for classifier_forward.1']
  #allocation6 [shape = 'f32[1,1]{1,0:T(1,128)S(1)}', space=vmem, size = 0x200, scoped, tag = 'scoped memory for classifier_forward.1']
  #allocation7 [shape = 'f32[1,1]{1,0:T(1,128)S(1)}', space=vmem, size = 0x200, scoped, tag = 'scoped memory for classifier_forward.1']
  %s0 = inlined_call_operand.smem [shape: u32[33], index: -1, kind: input, shape index: {}]
  %s1 = sld [smem:[%s0]]
  %s2 = scalar_lea.smem %s0, 1
  %s3 = sld [smem:[%s2]]
  %s4 = scalar_lea.smem %s0, 2
  %s5 = sld [smem:[%s4]]
  %s6 = scalar_lea.smem %s0, 3
  %s7 = sld [smem:[%s6]]
  %s8 = scalar_lea.smem %s0, 4
  %s9 = sld [smem:[%s8]]
  %s10 = scalar_lea.smem %s0, 5
  %s11 = sld [smem:[%s10]]
  %s12 = scalar_lea.smem %s0, 6
  %s13 = sld [smem:[%s12]]
  %s14 = scalar_lea.smem %s0, 7
  %s15 = sld [smem:[%s14]]
  %s16 = scalar_lea.smem %s0, 8
  %s17 = sld [smem:[%s16]]
  %s18 = scalar_lea.smem %s0, 9
  %s19 = sld [smem:[%s18]]
  %s20 = scalar_lea.smem %s0, 10
  %s21 = sld [smem:[%s20]]
  %s22 = scalar_lea.smem %s0, 11
  %s23 = sld [smem:[%s22]]
  %s24 = scalar_lea.smem %s0, 12
  %s25 = sld [smem:[%s24]]
  %s26 = scalar_lea.smem %s0, 13
  %s27 = sld [smem:[%s26]]
  %s28 = scalar_lea.smem %s0, 14
  %s29 = sld [smem:[%s28]]
  %s30 = scalar_lea.smem %s0, 15
  %s31 = sld [smem:[%s30]]
  %s32 = scalar_lea.smem %s0, 16
  %s33 = sld [smem:[%s32]]
  %s34 = scalar_lea.smem %s0, 17
  %s35 = sld [smem:[%s34]]
  %s36 = scalar_lea.smem %s0, 18
  %s37 = sld [smem:[%s36]]
  %s38 = scalar_lea.smem %s0, 19
  %s39 = sld [smem:[%s38]]
  %s40 = scalar_lea.smem %s0, 20
  %s41 = sld [smem:[%s40]]
  %s42 = scalar_lea.smem %s0, 21
  %s43 = sld [smem:[%s42]]
  %s44 = scalar_lea.smem %s0, 22
  %s45 = sld [smem:[%s44]]
  %s46 = scalar_lea.smem %s0, 23
  %s47 = sld [smem:[%s46]]
  %s48 = scalar_lea.smem %s0, 24
  %s49 = sld [smem:[%s48]]
  %s50 = scalar_lea.smem %s0, 25
  %s51 = sld [smem:[%s50]]
  %s52 = scalar_lea.smem %s0, 26
  %s53 = sld [smem:[%s52]]
  %s54 = scalar_lea.smem %s0, 27
  %s55 = sld [smem:[%s54]]
  %s56 = scalar_lea.smem %s0, 28
  %s57 = sld [smem:[%s56]]
  %s58 = scalar_lea.smem %s0, 29
  %s59 = sld [smem:[%s58]]
  %s60 = scalar_lea.smem %s0, 30
  %s61 = sld [smem:[%s60]]
  %s62 = scalar_lea.smem %s0, 31
  %s63 = sld [smem:[%s62]]
  %s64 = scalar_lea.smem %s0, 32
  %s65 = sld [smem:[%s64]]
  %66 = xla_tuple %s61, %s63, %s65
  %s67 = sld [smem:[#allocation0]]
  $region146: #{classifier_forward.1} parent=0
    _
  %s69 = ssub.s32 1, %s67
  %s70 = scalar_select 0, %s69, %s67
  %v71 = vstv %s19
  %72 = vst [vmem:[#allocation5] sm:$0x1] %v71
  %v73 = vstv %s37
  %74 = vst [vmem:[#allocation6] sm:$0x1] %v73
  %v75 = vstv %s51
  %76 = vst [vmem:[#allocation7] sm:$0x1] %v75
  $region1: #{classifier_forward.1} parent=0
    #allocation8 [shape = 'u8[512]{0}', space=vmem, size = 0x400, scoped, tag = 'output window, operand 2, single buffered']
    #allocation9 [shape = 's32[1]{0}', space=sflag, size = 0x4, scoped, tag = 'scoped memory for classifier_forward.1']
    %77 = vsyncpa [#allocation9], 0
    // Predicated region
    $region2: #{classifier_forward.1} parent=1 // pred_check
      _
    $region3: #{classifier_forward.1} parent=1 // pred_check_branch
      %79 = sbr.rel (0) target = $region5
    $region4: #{classifier_forward.1} parent=1 // pred_region
      _
    $region5: #{classifier_forward.1} parent=1 // pred_fallthru
      _
    // Predicated region
    $region6: #{classifier_forward.1} parent=1 // pred_check
      _
    $region7: #{classifier_forward.1} parent=1 // pred_check_branch
      %81 = sbr.rel (0) target = $region9
    $region8: #{classifier_forward.1} parent=1 // pred_region
      _
    $region9: #{classifier_forward.1} parent=1 // pred_fallthru
      _
    // Predicated region
    $region10: #{classifier_forward.1} parent=1 // pred_check
      _
    $region11: #{classifier_forward.1} parent=1 // pred_check_branch
      %83 = sbr.rel (0) target = $region13
    $region12: #{classifier_forward.1} parent=1 // pred_region
      _
    $region13: #{classifier_forward.1} parent=1 // pred_fallthru
      _
    // Predicated region
    $region14: #{classifier_forward.1} parent=1 // pred_check
      _
    $region15: #{classifier_forward.1} parent=1 // pred_check_branch
      %85 = sbr.rel (0) target = $region17
    $region16: #{classifier_forward.1} parent=1 // pred_region
      _
    $region17: #{classifier_forward.1} parent=1 // pred_fallthru
      _
    // Predicated region
    $region18: #{classifier_forward.1} parent=1 // pred_check
      _
    $region19: #{classifier_forward.1} parent=1 // pred_check_branch
      %87 = sbr.rel (0) target = $region21
    $region20: #{classifier_forward.1} parent=1 // pred_region
      _
    $region21: #{classifier_forward.1} parent=1 // pred_fallthru
      _
    // Predicated region
    $region22: #{classifier_forward.1} parent=1 // pred_check
      _
    $region23: #{classifier_forward.1} parent=1 // pred_check_branch
      %89 = sbr.rel (0) target = $region25
    $region24: #{classifier_forward.1} parent=1 // pred_region
      _
    $region25: #{classifier_forward.1} parent=1 // pred_fallthru
      _
    // Predicated region
    $region26: #{classifier_forward.1} parent=1 // pred_check
      _
    $region27: #{classifier_forward.1} parent=1 // pred_check_branch
      %91 = sbr.rel (0) target = $region29
    $region28: #{classifier_forward.1} parent=1 // pred_region
      _
    $region29: #{classifier_forward.1} parent=1 // pred_fallthru
      _
    // Predicated region
    $region30: #{classifier_forward.1} parent=1 // pred_check
      _
    $region31: #{classifier_forward.1} parent=1 // pred_check_branch
      %93 = sbr.rel (0) target = $region33
    $region32: #{classifier_forward.1} parent=1 // pred_region
      _
    $region33: #{classifier_forward.1} parent=1 // pred_fallthru
      _
    // Predicated region
    $region34: #{classifier_forward.1} parent=1 // pred_check
      _
    $region35: #{classifier_forward.1} parent=1 // pred_check_branch
      %95 = sbr.rel (0) target = $region37
    $region36: #{classifier_forward.1} parent=1 // pred_region
      _
    $region37: #{classifier_forward.1} parent=1 // pred_fallthru
      _
    // Predicated region
    $region38: #{classifier_forward.1} parent=1 // pred_check
      _
    $region39: #{classifier_forward.1} parent=1 // pred_check_branch
      %97 = sbr.rel (0) target = $region41
    $region40: #{classifier_forward.1} parent=1 // pred_region
      _
    $region41: #{classifier_forward.1} parent=1 // pred_fallthru
      _
    // Predicated region
    $region42: #{classifier_forward.1} parent=1 // pred_check
      _
    $region43: #{classifier_forward.1} parent=1 // pred_check_branch
      %99 = sbr.rel (0) target = $region45
    $region44: #{classifier_forward.1} parent=1 // pred_region
      _
    $region45: #{classifier_forward.1} parent=1 // pred_fallthru
      _
    // Predicated region
    $region46: #{classifier_forward.1} parent=1 // pred_check
      _
    $region47: #{classifier_forward.1} parent=1 // pred_check_branch
      %101 = sbr.rel (0) target = $region49
    $region48: #{classifier_forward.1} parent=1 // pred_region
      _
    $region49: #{classifier_forward.1} parent=1 // pred_fallthru
      _
    // Predicated region
    $region50: #{classifier_forward.1} parent=1 // pred_check
      _
    $region51: #{classifier_forward.1} parent=1 // pred_check_branch
      %103 = sbr.rel (0) target = $region53
    $region52: #{classifier_forward.1} parent=1 // pred_region
      _
    $region53: #{classifier_forward.1} parent=1 // pred_fallthru
      _
    // Predicated region
    $region54: #{classifier_forward.1} parent=1 // pred_check
      _
    $region55: #{classifier_forward.1} parent=1 // pred_check_branch
      %105 = sbr.rel (0) target = $region57
    $region56: #{classifier_forward.1} parent=1 // pred_region
      _
    $region57: #{classifier_forward.1} parent=1 // pred_fallthru
      _
    // Predicated region
    $region58: #{classifier_forward.1} parent=1 // pred_check
      _
    $region59: #{classifier_forward.1} parent=1 // pred_check_branch
      %107 = sbr.rel (0) target = $region61
    $region60: #{classifier_forward.1} parent=1 // pred_region
      _
    $region61: #{classifier_forward.1} parent=1 // pred_fallthru
      _
    // Predicated region
    $region62: #{classifier_forward.1} parent=1 // pred_check
      _
    $region63: #{classifier_forward.1} parent=1 // pred_check_branch
      %109 = sbr.rel (0) target = $region65
    $region64: #{classifier_forward.1} parent=1 // pred_region
      _
    $region65: #{classifier_forward.1} parent=1 // pred_fallthru
      _
    // Predicated region
    $region66: #{classifier_forward.1} parent=1 // pred_check
      _
    $region67: #{classifier_forward.1} parent=1 // pred_check_branch
      %111 = sbr.rel (0) target = $region69
    $region68: #{classifier_forward.1} parent=1 // pred_region
      _
    $region69: #{classifier_forward.1} parent=1 // pred_fallthru
      _
    // Predicated region
    $region70: #{classifier_forward.1} parent=1 // pred_check
      _
    $region71: #{classifier_forward.1} parent=1 // pred_check_branch
      %113 = sbr.rel (0) target = $region73
    $region72: #{classifier_forward.1} parent=1 // pred_region
      _
    $region73: #{classifier_forward.1} parent=1 // pred_fallthru
      _
    // Predicated region
    $region74: #{classifier_forward.1} parent=1 // pred_check
      _
    $region75: #{classifier_forward.1} parent=1 // pred_check_branch
      %115 = sbr.rel (0) target = $region77
    $region76: #{classifier_forward.1} parent=1 // pred_region
      _
    $region77: #{classifier_forward.1} parent=1 // pred_fallthru
      _
    // Predicated region
    $region78: #{classifier_forward.1} parent=1 // pred_check
      _
    $region79: #{classifier_forward.1} parent=1 // pred_check_branch
      %117 = sbr.rel (0) target = $region81
    $region80: #{classifier_forward.1} parent=1 // pred_region
      _
    $region81: #{classifier_forward.1} parent=1 // pred_fallthru
      _
    // Predicated region
    $region82: #{classifier_forward.1} parent=1 // pred_check
      _
    $region83: #{classifier_forward.1} parent=1 // pred_check_branch
      %119 = sbr.rel (0) target = $region85
    $region84: #{classifier_forward.1} parent=1 // pred_region
      _
    $region85: #{classifier_forward.1} parent=1 // pred_fallthru
      _
    // Predicated region
    $region86: #{classifier_forward.1} parent=1 // pred_check
      _
    $region87: #{classifier_forward.1} parent=1 // pred_check_branch
      %121 = sbr.rel (0) target = $region89
    $region88: #{classifier_forward.1} parent=1 // pred_region
      _
    $region89: #{classifier_forward.1} parent=1 // pred_fallthru
      _
    // Predicated region
    $region90: #{classifier_forward.1} parent=1 // pred_check
      _
    $region91: #{classifier_forward.1} parent=1 // pred_check_branch
      %123 = sbr.rel (0) target = $region93
    $region92: #{classifier_forward.1} parent=1 // pred_region
      _
    $region93: #{classifier_forward.1} parent=1 // pred_fallthru
      _
    // Predicated region
    $region94: #{classifier_forward.1} parent=1 // pred_check
      _
    $region95: #{classifier_forward.1} parent=1 // pred_check_branch
      %125 = sbr.rel (0) target = $region97
    $region96: #{classifier_forward.1} parent=1 // pred_region
      _
    $region97: #{classifier_forward.1} parent=1 // pred_fallthru
      _
    // Predicated region
    $region98: #{classifier_forward.1} parent=1 // pred_check
      _
    $region99: #{classifier_forward.1} parent=1 // pred_check_branch
      %127 = sbr.rel (0) target = $region101
    $region100: #{classifier_forward.1} parent=1 // pred_region
      _
    $region101: #{classifier_forward.1} parent=1 // pred_fallthru
      _
    // Predicated region
    $region102: #{classifier_forward.1} parent=1 // pred_check
      _
    $region103: #{classifier_forward.1} parent=1 // pred_check_branch
      %129 = sbr.rel (0) target = $region105
    $region104: #{classifier_forward.1} parent=1 // pred_region
      _
    $region105: #{classifier_forward.1} parent=1 // pred_fallthru
      _
    // Predicated region
    $region106: #{classifier_forward.1} parent=1 // pred_check
      _
    $region107: #{classifier_forward.1} parent=1 // pred_check_branch
      %131 = sbr.rel (0) target = $region109
    $region108: #{classifier_forward.1} parent=1 // pred_region
      _
    $region109: #{classifier_forward.1} parent=1 // pred_fallthru
      _
    // Predicated region
    $region110: #{classifier_forward.1} parent=1 // pred_check
      _
    $region111: #{classifier_forward.1} parent=1 // pred_check_branch
      %133 = sbr.rel (0) target = $region113
    $region112: #{classifier_forward.1} parent=1 // pred_region
      _
    $region113: #{classifier_forward.1} parent=1 // pred_fallthru
      _
    // Predicated region
    $region114: #{classifier_forward.1} parent=1 // pred_check
      _
    $region115: #{classifier_forward.1} parent=1 // pred_check_branch
      %135 = sbr.rel (0) target = $region117
    $region116: #{classifier_forward.1} parent=1 // pred_region
      _
    $region117: #{classifier_forward.1} parent=1 // pred_fallthru
      _
    // Predicated region
    $region118: #{classifier_forward.1} parent=1 // pred_check
      _
    $region119: #{classifier_forward.1} parent=1 // pred_check_branch
      %137 = sbr.rel (0) target = $region121
    $region120: #{classifier_forward.1} parent=1 // pred_region
      _
    $region121: #{classifier_forward.1} parent=1 // pred_fallthru
      _
    %v139 = vld [vmem:[%s1] sm:$0xff]
    %v140 = vld [vmem:[%s1 + $0x8] sm:$0xff]
    %v141 = vld [vmem:[%s1 + $0x10] sm:$0xff]
    %v142 = vld [vmem:[%s1 + $0x18] sm:$0xff]
    %v143 = vld [vmem:[%s1 + $0x20] sm:$0xff]
    %v144 = vld [vmem:[%s1 + $0x28] sm:$0xff]
    %v145 = vld [vmem:[%s1 + $0x30] sm:$0xff]
    %v146 = vld [vmem:[%s1 + $0x38] sm:$0xff]
    %v147 = vld [vmem:[%s7] sm:$0xf]
    %v148 = vld [vmem:[%s7 + $0x4] sm:$0xf]
    %v149 = vld [vmem:[%s7 + $0x8] sm:$0xf]
    %v150 = vld [vmem:[%s7 + $0xc] sm:$0xf]
    %v151 = vld [vmem:[%s7 + $0x10] sm:$0xf]
    %v152 = vld [vmem:[%s7 + $0x14] sm:$0xf]
    %v153 = vld [vmem:[%s7 + $0x18] sm:$0xf]
    %v154 = vld [vmem:[%s7 + $0x1c] sm:$0xf]
    %v155 = vpack.c.bf16 %v140, %v139
    %v156 = vpack.c.bf16 %v142, %v141
    %v157 = vpack.c.bf16 %v144, %v143
    %v158 = vpack.c.bf16 %v146, %v145
    %v159 = vld [vmem:[%s11] sm:$0x1]
    %v161 = vlaneseq
    %v162 = vshrl.u32 %v161, 7
    %v163 = vsub.s32 0, %v162
    %v164 = vrot.slane %v159, %v163
    %v174 = vunpack.c.l.b16 %v147
    %v175 = vunpack.c.l.b16 %v148
    %v176 = vunpack.c.l.b16 %v149
    %v177 = vunpack.c.l.b16 %v150
    %v178 = vunpack.c.l.b16 %v151
    %v179 = vunpack.c.l.b16 %v152
    %v180 = vunpack.c.l.b16 %v153
    %v181 = vunpack.c.l.b16 %v154
    %v182 = vpack.c.b16 %v175, %v174
    %v183 = vpack.c.b16 %v177, %v176
    %v184 = vpack.c.b16 %v179, %v178
    %v185 = vpack.c.b16 %v181, %v180
    %vm190 = vcmask 523264
    %v192 = vsel %vm190, %v155, 0
    %v195 = vsel %vm190, %v156, 0
    %v198 = vsel %vm190, %v157, 0
    %v201 = vsel %vm190, %v158, 0
    %203 = vmatprep.subr.bf16.mxu0 0
    %204 = vmatpush1.bf16.msra.mxu0 %v182
    %205 = vmatprep.subr.bf16.mxu0 0
    %206 = vmatpush1.bf16.msra.mxu0 %v183
    %207 = vmatprep.subr.bf16.mxu0 0
    %208 = vmatpush1.bf16.msra.mxu0 %v184
    %209 = vmatprep.subr.bf16.mxu0 0
    %210 = vmatpush1.bf16.msra.mxu0 %v185
    %211 = vmatprep.subr.bf16.mxu0 0
    %212 = vmatpush1.bf16.msra.mxu0 0
    %213 = vmatprep.subr.bf16.mxu0 0
    %214 = vmatpush1.bf16.msra.mxu0 0
    %215 = vmatprep.subr.bf16.mxu0 0
    %216 = vmatpush1.bf16.msra.mxu0 0
    %217 = vmatprep.subr.bf16.mxu0 0
    %218 = vmatpush1.bf16.msra.mxu0 0
    %219 = vmatprep.subr.bf16.mxu0 0
    %220 = vmatpush1.bf16.msra.mxu0 0
    %221 = vmatprep.subr.bf16.mxu0 0
    %222 = vmatpush1.bf16.msra.mxu0 0
    %223 = vmatprep.subr.bf16.mxu0 0
    %224 = vmatpush1.bf16.msra.mxu0 0
    %225 = vmatprep.subr.bf16.mxu0 0
    %226 = vmatpush1.bf16.msra.mxu0 0
    %227 = vmatprep.subr.bf16.mxu0 0
    %228 = vmatpush1.bf16.msra.mxu0 0
    %229 = vmatprep.subr.bf16.mxu0 0
    %230 = vmatpush1.bf16.msra.mxu0 0
    %231 = vmatprep.subr.bf16.mxu0 0
    %232 = vmatpush1.bf16.msra.mxu0 0
    %233 = vmatprep.subr.bf16.mxu0 0
    %234 = vmatpush1.bf16.msra.mxu0 0
    %235 = vmatprep.mubr.bf16.mxu0 0
    %236 = vmatmul.mubr.bf16.gmra.mrb[0].mxu0 %v192
    %v237 = vpop.f32.mrb[0].mxu0
    %v238 = vadd.f32 %v164, %v237
    %v239 = vpop.f32.mrb[0].mxu0
    %v240 = vpop.f32.mrb[0].mxu0
    %v241 = vadd.f32 %v164, %v240
    %v242 = vpop.f32.mrb[0].mxu0
    %243 = vmatprep.mubr.bf16.mxu0 0
    %244 = vmatmul.mubr.bf16.gmra.mrb[0].mxu0 %v195
    %v245 = vpop.f32.mrb[0].mxu0
    %v246 = vadd.f32 %v164, %v245
    %v247 = vpop.f32.mrb[0].mxu0
    %v248 = vpop.f32.mrb[0].mxu0
    %v249 = vadd.f32 %v164, %v248
    %v250 = vpop.f32.mrb[0].mxu0
    %251 = vmatprep.mubr.bf16.mxu0 0
    %252 = vmatmul.mubr.bf16.gmra.mrb[0].mxu0 %v198
    %v253 = vpop.f32.mrb[0].mxu0
    %v254 = vadd.f32 %v164, %v253
    %v255 = vpop.f32.mrb[0].mxu0
    %v256 = vpop.f32.mrb[0].mxu0
    %v257 = vadd.f32 %v164, %v256
    %v258 = vpop.f32.mrb[0].mxu0
    %259 = vmatprep.mubr.bf16.mxu0 0
    %260 = vmatmul.mubr.bf16.gmra.mrb[0].mxu0 %v201
    %v261 = vpop.f32.mrb[0].mxu0
    %v262 = vadd.f32 %v164, %v261
    %v263 = vpop.f32.mrb[0].mxu0
    %v264 = vpop.f32.mrb[0].mxu0
    %v265 = vadd.f32 %v164, %v264
    %v266 = vpop.f32.mrb[0].mxu0
    %267 = vdwg.mxu0
    %v268 = vld [vmem:[%s9] sm:$0xf]
    %v269 = vld [vmem:[%s9 + $0x4] sm:$0xf]
    %v270 = vld [vmem:[%s9 + $0x8] sm:$0xf]
    %v271 = vld [vmem:[%s9 + $0xc] sm:$0xf]
    %v276 = vunpack.c.l.b16 %v268
    %v277 = vunpack.c.l.b16 %v269
    %v278 = vunpack.c.l.b16 %v270
    %v279 = vunpack.c.l.b16 %v271
    %v280 = vpack.c.b16 %v277, %v276
    %v281 = vpack.c.b16 %v279, %v278
    %vm284 = vcmask 261120
    %v286 = vsel %vm284, 0, 0
    %288 = vmatprep.subr.bf16.mxu0 0
    %289 = vmatpush1.bf16.msra.mxu0 %v280
    %290 = vmatprep.subr.bf16.mxu0 0
    %291 = vmatpush1.bf16.msra.mxu0 %v281
    %292 = vmatprep.subr.bf16.mxu0 0
    %293 = vmatpush1.bf16.msra.mxu0 0
    %294 = vmatprep.subr.bf16.mxu0 0
    %295 = vmatpush1.bf16.msra.mxu0 0
    %296 = vmatprep.subr.bf16.mxu0 0
    %297 = vmatpush1.bf16.msra.mxu0 0
    %298 = vmatprep.subr.bf16.mxu0 0
    %299 = vmatpush1.bf16.msra.mxu0 0
    %300 = vmatprep.subr.bf16.mxu0 0
    %301 = vmatpush1.bf16.msra.mxu0 0
    %302 = vmatprep.subr.bf16.mxu0 0
    %303 = vmatpush1.bf16.msra.mxu0 0
    %304 = vmatprep.subr.bf16.mxu0 0
    %305 = vmatpush1.bf16.msra.mxu0 0
    %306 = vmatprep.subr.bf16.mxu0 0
    %307 = vmatpush1.bf16.msra.mxu0 0
    %308 = vmatprep.subr.bf16.mxu0 0
    %309 = vmatpush1.bf16.msra.mxu0 0
    %310 = vmatprep.subr.bf16.mxu0 0
    %311 = vmatpush1.bf16.msra.mxu0 0
    %312 = vmatprep.subr.bf16.mxu0 0
    %313 = vmatpush1.bf16.msra.mxu0 0
    %314 = vmatprep.subr.bf16.mxu0 0
    %315 = vmatpush1.bf16.msra.mxu0 0
    %316 = vmatprep.subr.bf16.mxu0 0
    %317 = vmatpush1.bf16.msra.mxu0 0
    %318 = vmatprep.subr.bf16.mxu0 0
    %319 = vmatpush1.bf16.msra.mxu0 0
    %320 = vmatprep.mubr.bf16.mxu0 0
    %321 = vmatmul.mubr.bf16.gmra.mrb[0].mxu0 %v286
    %v322 = vpop.f32.mrb[0].mxu0
    %v323 = vadd.f32 0.0, %v322
    %v324 = vpop.f32.mrb[0].mxu0
    %v325 = vpop.f32.mrb[0].mxu0
    %v326 = vpop.f32.mrb[0].mxu0
    %327 = vdwg.mxu0
    %v328 = vadd.f32 %v238, %v323
    %v329 = vxor.u32 %v328, 2147483648
    %v330 = vmul.f32 %v329, 1.442695
    %v331 = vpow.pop %v330
    %v332 = vadd.f32 %v331, 1.0
    %v333 = vrcp.pop %v332
    %v334 = vmul.f32 1.0, %v333
    %v335 = vtanh.pop %v328
    %v336 = vmul.f32 %v334, 0.0
    %338 = vrot.lane.b32.xlu0 %v335, 64
    %v339 = vpop.permute.xlu0 %338
    %v341 = vmul.f32 %v334, %v339
    %343 = vrot.lane.b32.xlu0 %v341, 32
    %v344 = vpop.permute.xlu0 %343
    %v346 = vadd.f32 %v336, %v344
    %v347 = vtanh.pop %v346
    %349 = vrot.lane.b32.xlu0 %v347, 64
    %v350 = vpop.permute.xlu0 %349
    %v352 = vmul.f32 %v334, %v350
    %354 = vrot.lane.b32.xlu0 %v352, 32
    %v355 = vpop.permute.xlu0 %354
    %vm357 = vcmask 130048
    %358 = vst.msk [vmem:[#allocation2] sm:$0xff] %vm357, %v355
    %359 = vrot.lane.b32.xlu0 %v352, 16
    %v360 = vpop.permute.xlu0 %359
    %s362 = scalar_lea.vmem [#allocation3], 56
    %363 = vst.msk [vmem:[%s362] sm:$0xff] %vm357, %v360
    %v364 = vpack.c.bf16 %v352, %v352
    %366 = vrot.lane.b32.xlu0 %v364, 32
    %v367 = vpop.permute.xlu0 %366
    %v369 = vsel %vm284, %v367, 0
    %371 = vmatprep.subr.bf16.mxu0 0
    %372 = vmatpush1.bf16.msra.mxu0 %v280
    %373 = vmatprep.subr.bf16.mxu0 0
    %374 = vmatpush1.bf16.msra.mxu0 %v281
    %375 = vmatprep.subr.bf16.mxu0 0
    %376 = vmatpush1.bf16.msra.mxu0 0
    %377 = vmatprep.subr.bf16.mxu0 0
    %378 = vmatpush1.bf16.msra.mxu0 0
    %379 = vmatprep.subr.bf16.mxu0 0
    %380 = vmatpush1.bf16.msra.mxu0 0
    %381 = vmatprep.subr.bf16.mxu0 0
    %382 = vmatpush1.bf16.msra.mxu0 0
    %383 = vmatprep.subr.bf16.mxu0 0
    %384 = vmatpush1.bf16.msra.mxu0 0
    %385 = vmatprep.subr.bf16.mxu0 0
    %386 = vmatpush1.bf16.msra.mxu0 0
    %387 = vmatprep.subr.bf16.mxu0 0
    %388 = vmatpush1.bf16.msra.mxu0 0
    %389 = vmatprep.subr.bf16.mxu0 0
    %390 = vmatpush1.bf16.msra.mxu0 0
    %391 = vmatprep.subr.bf16.mxu0 0
    %392 = vmatpush1.bf16.msra.mxu0 0
    %393 = vmatprep.subr.bf16.mxu0 0
    %394 = vmatpush1.bf16.msra.mxu0 0
    %395 = vmatprep.subr.bf16.mxu0 0
    %396 = vmatpush1.bf16.msra.mxu0 0
    %397 = vmatprep.subr.bf16.mxu0 0
    %398 = vmatpush1.bf16.msra.mxu0 0
    %399 = vmatprep.subr.bf16.mxu0 0
    %400 = vmatpush1.bf16.msra.mxu0 0
    %401 = vmatprep.subr.bf16.mxu0 0
    %402 = vmatpush1.bf16.msra.mxu0 0
    %403 = vmatprep.mubr.bf16.mxu0 0
    %404 = vmatmul.mubr.bf16.gmra.mrb[0].mxu0 %v369
    %v405 = vpop.f32.mrb[0].mxu0
    %v406 = vadd.f32 0.0, %v405
    %v407 = vpop.f32.mrb[0].mxu0
    %v408 = vpop.f32.mrb[0].mxu0
    %v409 = vpop.f32.mrb[0].mxu0
    %410 = vdwg.mxu0
    %v411 = vadd.f32 %v241, %v406
    %v412 = vxor.u32 %v411, 2147483648
    %v413 = vmul.f32 %v412, 1.442695
    %v414 = vpow.pop %v413
    %v415 = vadd.f32 %v414, 1.0
    %v416 = vrcp.pop %v415
    %v417 = vmul.f32 1.0, %v416
    %v418 = vtanh.pop %v411
    %v419 = vmul.f32 %v417, %v346
    %421 = vrot.lane.b32.xlu0 %v418, 64
    %v422 = vpop.permute.xlu0 %421
    %v424 = vmul.f32 %v417, %v422
    %426 = vrot.lane.b32.xlu0 %v424, 32
    %v427 = vpop.permute.xlu0 %426
    %v429 = vadd.f32 %v419, %v427
    %v430 = vtanh.pop %v429
    %432 = vrot.lane.b32.xlu0 %v430, 64
    %v433 = vpop.permute.xlu0 %432
    %v435 = vmul.f32 %v417, %v433
    %437 = vrot.lane.b32.xlu0 %v435, 32
    %v438 = vpop.permute.xlu0 %437
    %s440 = scalar_lea.vmem [#allocation2], 8
    %441 = vst.msk [vmem:[%s440] sm:$0xff] %vm357, %v438
    %442 = vrot.lane.b32.xlu0 %v435, 16
    %v443 = vpop.permute.xlu0 %442
    %s445 = scalar_lea.vmem [#allocation3], 48
    %446 = vst.msk [vmem:[%s445] sm:$0xff] %vm357, %v443
    %v447 = vpack.c.bf16 %v435, %v435
    %449 = vrot.lane.b32.xlu0 %v447, 32
    %v450 = vpop.permute.xlu0 %449
    %v452 = vsel %vm284, %v450, 0
    %454 = vmatprep.subr.bf16.mxu0 0
    %455 = vmatpush1.bf16.msra.mxu0 %v280
    %456 = vmatprep.subr.bf16.mxu0 0
    %457 = vmatpush1.bf16.msra.mxu0 %v281
    %458 = vmatprep.subr.bf16.mxu0 0
    %459 = vmatpush1.bf16.msra.mxu0 0
    %460 = vmatprep.subr.bf16.mxu0 0
    %461 = vmatpush1.bf16.msra.mxu0 0
    %462 = vmatprep.subr.bf16.mxu0 0
    %463 = vmatpush1.bf16.msra.mxu0 0
    %464 = vmatprep.subr.bf16.mxu0 0
    %465 = vmatpush1.bf16.msra.mxu0 0
    %466 = vmatprep.subr.bf16.mxu0 0
    %467 = vmatpush1.bf16.msra.mxu0 0
    %468 = vmatprep.subr.bf16.mxu0 0
    %469 = vmatpush1.bf16.msra.mxu0 0
    %470 = vmatprep.subr.bf16.mxu0 0
    %471 = vmatpush1.bf16.msra.mxu0 0
    %472 = vmatprep.subr.bf16.mxu0 0
    %473 = vmatpush1.bf16.msra.mxu0 0
    %474 = vmatprep.subr.bf16.mxu0 0
    %475 = vmatpush1.bf16.msra.mxu0 0
    %476 = vmatprep.subr.bf16.mxu0 0
    %477 = vmatpush1.bf16.msra.mxu0 0
    %478 = vmatprep.subr.bf16.mxu0 0
    %479 = vmatpush1.bf16.msra.mxu0 0
    %480 = vmatprep.subr.bf16.mxu0 0
    %481 = vmatpush1.bf16.msra.mxu0 0
    %482 = vmatprep.subr.bf16.mxu0 0
    %483 = vmatpush1.bf16.msra.mxu0 0
    %484 = vmatprep.subr.bf16.mxu0 0
    %485 = vmatpush1.bf16.msra.mxu0 0
    %486 = vmatprep.mubr.bf16.mxu0 0
    %487 = vmatmul.mubr.bf16.gmra.mrb[0].mxu0 %v452
    %v488 = vpop.f32.mrb[0].mxu0
    %v489 = vadd.f32 0.0, %v488
    %v490 = vpop.f32.mrb[0].mxu0
    %v491 = vpop.f32.mrb[0].mxu0
    %v492 = vpop.f32.mrb[0].mxu0
    %493 = vdwg.mxu0
    %v494 = vadd.f32 %v246, %v489
    %v495 = vxor.u32 %v494, 2147483648
    %v496 = vmul.f32 %v495, 1.442695
    %v497 = vpow.pop %v496
    %v498 = vadd.f32 %v497, 1.0
    %v499 = vrcp.pop %v498
    %v500 = vmul.f32 1.0, %v499
    %v501 = vtanh.pop %v494
    %v502 = vmul.f32 %v500, %v429
    %504 = vrot.lane.b32.xlu0 %v501, 64
    %v505 = vpop.permute.xlu0 %504
    %v507 = vmul.f32 %v500, %v505
    %509 = vrot.lane.b32.xlu0 %v507, 32
    %v510 = vpop.permute.xlu0 %509
    %v512 = vadd.f32 %v502, %v510
    %v513 = vtanh.pop %v512
    %515 = vrot.lane.b32.xlu0 %v513, 64
    %v516 = vpop.permute.xlu0 %515
    %v518 = vmul.f32 %v500, %v516
    %520 = vrot.lane.b32.xlu0 %v518, 32
    %v521 = vpop.permute.xlu0 %520
    %s523 = scalar_lea.vmem [#allocation2], 16
    %524 = vst.msk [vmem:[%s523] sm:$0xff] %vm357, %v521
    %525 = vrot.lane.b32.xlu0 %v518, 16
    %v526 = vpop.permute.xlu0 %525
    %s528 = scalar_lea.vmem [#allocation3], 40
    %529 = vst.msk [vmem:[%s528] sm:$0xff] %vm357, %v526
    %v530 = vpack.c.bf16 %v518, %v518
    %532 = vrot.lane.b32.xlu0 %v530, 32
    %v533 = vpop.permute.xlu0 %532
    %v535 = vsel %vm284, %v533, 0
    %537 = vmatprep.subr.bf16.mxu0 0
    %538 = vmatpush1.bf16.msra.mxu0 %v280
    %539 = vmatprep.subr.bf16.mxu0 0
    %540 = vmatpush1.bf16.msra.mxu0 %v281
    %541 = vmatprep.subr.bf16.mxu0 0
    %542 = vmatpush1.bf16.msra.mxu0 0
    %543 = vmatprep.subr.bf16.mxu0 0
    %544 = vmatpush1.bf16.msra.mxu0 0
    %545 = vmatprep.subr.bf16.mxu0 0
    %546 = vmatpush1.bf16.msra.mxu0 0
    %547 = vmatprep.subr.bf16.mxu0 0
    %548 = vmatpush1.bf16.msra.mxu0 0
    %549 = vmatprep.subr.bf16.mxu0 0
    %550 = vmatpush1.bf16.msra.mxu0 0
    %551 = vmatprep.subr.bf16.mxu0 0
    %552 = vmatpush1.bf16.msra.mxu0 0
    %553 = vmatprep.subr.bf16.mxu0 0
    %554 = vmatpush1.bf16.msra.mxu0 0
    %555 = vmatprep.subr.bf16.mxu0 0
    %556 = vmatpush1.bf16.msra.mxu0 0
    %557 = vmatprep.subr.bf16.mxu0 0
    %558 = vmatpush1.bf16.msra.mxu0 0
    %559 = vmatprep.subr.bf16.mxu0 0
    %560 = vmatpush1.bf16.msra.mxu0 0
    %561 = vmatprep.subr.bf16.mxu0 0
    %562 = vmatpush1.bf16.msra.mxu0 0
    %563 = vmatprep.subr.bf16.mxu0 0
    %564 = vmatpush1.bf16.msra.mxu0 0
    %565 = vmatprep.subr.bf16.mxu0 0
    %566 = vmatpush1.bf16.msra.mxu0 0
    %567 = vmatprep.subr.bf16.mxu0 0
    %568 = vmatpush1.bf16.msra.mxu0 0
    %569 = vmatprep.mubr.bf16.mxu0 0
    %570 = vmatmul.mubr.bf16.gmra.mrb[0].mxu0 %v535
    %v571 = vpop.f32.mrb[0].mxu0
    %v572 = vadd.f32 0.0, %v571
    %v573 = vpop.f32.mrb[0].mxu0
    %v574 = vpop.f32.mrb[0].mxu0
    %v575 = vpop.f32.mrb[0].mxu0
    %576 = vdwg.mxu0
    %v577 = vadd.f32 %v249, %v572
    %v578 = vxor.u32 %v577, 2147483648
    %v579 = vmul.f32 %v578, 1.442695
    %v580 = vpow.pop %v579
    %v581 = vadd.f32 %v580, 1.0
    %v582 = vrcp.pop %v581
    %v583 = vmul.f32 1.0, %v582
    %v584 = vtanh.pop %v577
    %v585 = vmul.f32 %v583, %v512
    %587 = vrot.lane.b32.xlu0 %v584, 64
    %v588 = vpop.permute.xlu0 %587
    %v590 = vmul.f32 %v583, %v588
    %592 = vrot.lane.b32.xlu0 %v590, 32
    %v593 = vpop.permute.xlu0 %592
    %v595 = vadd.f32 %v585, %v593
    %v596 = vtanh.pop %v595
    %598 = vrot.lane.b32.xlu0 %v596, 64
    %v599 = vpop.permute.xlu0 %598
    %v601 = vmul.f32 %v583, %v599
    %603 = vrot.lane.b32.xlu0 %v601, 32
    %v604 = vpop.permute.xlu0 %603
    %s606 = scalar_lea.vmem [#allocation2], 24
    %607 = vst.msk [vmem:[%s606] sm:$0xff] %vm357, %v604
    %608 = vrot.lane.b32.xlu0 %v601, 16
    %v609 = vpop.permute.xlu0 %608
    %s611 = scalar_lea.vmem [#allocation3], 32
    %612 = vst.msk [vmem:[%s611] sm:$0xff] %vm357, %v609
    %v613 = vpack.c.bf16 %v601, %v601
    %615 = vrot.lane.b32.xlu0 %v613, 32
    %v616 = vpop.permute.xlu0 %615
    %v618 = vsel %vm284, %v616, 0
    %620 = vmatprep.subr.bf16.mxu0 0
    %621 = vmatpush1.bf16.msra.mxu0 %v280
    %622 = vmatprep.subr.bf16.mxu0 0
    %623 = vmatpush1.bf16.msra.mxu0 %v281
    %624 = vmatprep.subr.bf16.mxu0 0
    %625 = vmatpush1.bf16.msra.mxu0 0
    %626 = vmatprep.subr.bf16.mxu0 0
    %627 = vmatpush1.bf16.msra.mxu0 0
    %628 = vmatprep.subr.bf16.mxu0 0
    %629 = vmatpush1.bf16.msra.mxu0 0
    %630 = vmatprep.subr.bf16.mxu0 0
    %631 = vmatpush1.bf16.msra.mxu0 0
    %632 = vmatprep.subr.bf16.mxu0 0
    %633 = vmatpush1.bf16.msra.mxu0 0
    %634 = vmatprep.subr.bf16.mxu0 0
    %635 = vmatpush1.bf16.msra.mxu0 0
    %636 = vmatprep.subr.bf16.mxu0 0
    %637 = vmatpush1.bf16.msra.mxu0 0
    %638 = vmatprep.subr.bf16.mxu0 0
    %639 = vmatpush1.bf16.msra.mxu0 0
    %640 = vmatprep.subr.bf16.mxu0 0
    %641 = vmatpush1.bf16.msra.mxu0 0
    %642 = vmatprep.subr.bf16.mxu0 0
    %643 = vmatpush1.bf16.msra.mxu0 0
    %644 = vmatprep.subr.bf16.mxu0 0
    %645 = vmatpush1.bf16.msra.mxu0 0
    %646 = vmatprep.subr.bf16.mxu0 0
    %647 = vmatpush1.bf16.msra.mxu0 0
    %648 = vmatprep.subr.bf16.mxu0 0
    %649 = vmatpush1.bf16.msra.mxu0 0
    %650 = vmatprep.subr.bf16.mxu0 0
    %651 = vmatpush1.bf16.msra.mxu0 0
    %652 = vmatprep.mubr.bf16.mxu0 0
    %653 = vmatmul.mubr.bf16.gmra.mrb[0].mxu0 %v618
    %v654 = vpop.f32.mrb[0].mxu0
    %v655 = vadd.f32 0.0, %v654
    %v656 = vpop.f32.mrb[0].mxu0
    %v657 = vpop.f32.mrb[0].mxu0
    %v658 = vpop.f32.mrb[0].mxu0
    %659 = vdwg.mxu0
    %v660 = vadd.f32 %v254, %v655
    %v661 = vxor.u32 %v660, 2147483648
    %v662 = vmul.f32 %v661, 1.442695
    %v663 = vpow.pop %v662
    %v664 = vadd.f32 %v663, 1.0
    %v665 = vrcp.pop %v664
    %v666 = vmul.f32 1.0, %v665
    %v667 = vtanh.pop %v660
    %v668 = vmul.f32 %v666, %v595
    %670 = vrot.lane.b32.xlu0 %v667, 64
    %v671 = vpop.permute.xlu0 %670
    %v673 = vmul.f32 %v666, %v671
    %675 = vrot.lane.b32.xlu0 %v673, 32
    %v676 = vpop.permute.xlu0 %675
    %v678 = vadd.f32 %v668, %v676
    %v679 = vtanh.pop %v678
    %681 = vrot.lane.b32.xlu0 %v679, 64
    %v682 = vpop.permute.xlu0 %681
    %v684 = vmul.f32 %v666, %v682
    %686 = vrot.lane.b32.xlu0 %v684, 32
    %v687 = vpop.permute.xlu0 %686
    %s689 = scalar_lea.vmem [#allocation2], 32
    %690 = vst.msk [vmem:[%s689] sm:$0xff] %vm357, %v687
    %691 = vrot.lane.b32.xlu0 %v684, 16
    %v692 = vpop.permute.xlu0 %691
    %s694 = scalar_lea.vmem [#allocation3], 24
    %695 = vst.msk [vmem:[%s694] sm:$0xff] %vm357, %v692
    %v696 = vpack.c.bf16 %v684, %v684
    %698 = vrot.lane.b32.xlu0 %v696, 32
    %v699 = vpop.permute.xlu0 %698
    %v701 = vsel %vm284, %v699, 0
    %703 = vmatprep.subr.bf16.mxu0 0
    %704 = vmatpush1.bf16.msra.mxu0 %v280
    %705 = vmatprep.subr.bf16.mxu0 0
    %706 = vmatpush1.bf16.msra.mxu0 %v281
    %707 = vmatprep.subr.bf16.mxu0 0
    %708 = vmatpush1.bf16.msra.mxu0 0
    %709 = vmatprep.subr.bf16.mxu0 0
    %710 = vmatpush1.bf16.msra.mxu0 0
    %711 = vmatprep.subr.bf16.mxu0 0
    %712 = vmatpush1.bf16.msra.mxu0 0
    %713 = vmatprep.subr.bf16.mxu0 0
    %714 = vmatpush1.bf16.msra.mxu0 0
    %715 = vmatprep.subr.bf16.mxu0 0
    %716 = vmatpush1.bf16.msra.mxu0 0
    %717 = vmatprep.subr.bf16.mxu0 0
    %718 = vmatpush1.bf16.msra.mxu0 0
    %719 = vmatprep.subr.bf16.mxu0 0
    %720 = vmatpush1.bf16.msra.mxu0 0
    %721 = vmatprep.subr.bf16.mxu0 0
    %722 = vmatpush1.bf16.msra.mxu0 0
    %723 = vmatprep.subr.bf16.mxu0 0
    %724 = vmatpush1.bf16.msra.mxu0 0
    %725 = vmatprep.subr.bf16.mxu0 0
    %726 = vmatpush1.bf16.msra.mxu0 0
    %727 = vmatprep.subr.bf16.mxu0 0
    %728 = vmatpush1.bf16.msra.mxu0 0
    %729 = vmatprep.subr.bf16.mxu0 0
    %730 = vmatpush1.bf16.msra.mxu0 0
    %731 = vmatprep.subr.bf16.mxu0 0
    %732 = vmatpush1.bf16.msra.mxu0 0
    %733 = vmatprep.subr.bf16.mxu0 0
    %734 = vmatpush1.bf16.msra.mxu0 0
    %735 = vmatprep.mubr.bf16.mxu0 0
    %736 = vmatmul.mubr.bf16.gmra.mrb[0].mxu0 %v701
    %v737 = vpop.f32.mrb[0].mxu0
    %v738 = vadd.f32 0.0, %v737
    %v739 = vpop.f32.mrb[0].mxu0
    %v740 = vpop.f32.mrb[0].mxu0
    %v741 = vpop.f32.mrb[0].mxu0
    %742 = vdwg.mxu0
    %v743 = vadd.f32 %v257, %v738
    %v744 = vxor.u32 %v743, 2147483648
    %v745 = vmul.f32 %v744, 1.442695
    %v746 = vpow.pop %v745
    %v747 = vadd.f32 %v746, 1.0
    %v748 = vrcp.pop %v747
    %v749 = vmul.f32 1.0, %v748
    %v750 = vtanh.pop %v743
    %v751 = vmul.f32 %v749, %v678
    %753 = vrot.lane.b32.xlu0 %v750, 64
    %v754 = vpop.permute.xlu0 %753
    %v756 = vmul.f32 %v749, %v754
    %758 = vrot.lane.b32.xlu0 %v756, 32
    %v759 = vpop.permute.xlu0 %758
    %v761 = vadd.f32 %v751, %v759
    %v762 = vtanh.pop %v761
    %764 = vrot.lane.b32.xlu0 %v762, 64
    %v765 = vpop.permute.xlu0 %764
    %v767 = vmul.f32 %v749, %v765
    %769 = vrot.lane.b32.xlu0 %v767, 32
    %v770 = vpop.permute.xlu0 %769
    %s772 = scalar_lea.vmem [#allocation2], 40
    %773 = vst.msk [vmem:[%s772] sm:$0xff] %vm357, %v770
    %774 = vrot.lane.b32.xlu0 %v767, 16
    %v775 = vpop.permute.xlu0 %774
    %s777 = scalar_lea.vmem [#allocation3], 16
    %778 = vst.msk [vmem:[%s777] sm:$0xff] %vm357, %v775
    %v779 = vpack.c.bf16 %v767, %v767
    %781 = vrot.lane.b32.xlu0 %v779, 32
    %v782 = vpop.permute.xlu0 %781
    %v784 = vsel %vm284, %v782, 0
    %786 = vmatprep.subr.bf16.mxu0 0
    %787 = vmatpush1.bf16.msra.mxu0 %v280
    %788 = vmatprep.subr.bf16.mxu0 0
    %789 = vmatpush1.bf16.msra.mxu0 %v281
    %790 = vmatprep.subr.bf16.mxu0 0
    %791 = vmatpush1.bf16.msra.mxu0 0
    %792 = vmatprep.subr.bf16.mxu0 0
    %793 = vmatpush1.bf16.msra.mxu0 0
    %794 = vmatprep.subr.bf16.mxu0 0
    %795 = vmatpush1.bf16.msra.mxu0 0
    %796 = vmatprep.subr.bf16.mxu0 0
    %797 = vmatpush1.bf16.msra.mxu0 0
    %798 = vmatprep.subr.bf16.mxu0 0
    %799 = vmatpush1.bf16.msra.mxu0 0
    %800 = vmatprep.subr.bf16.mxu0 0
    %801 = vmatpush1.bf16.msra.mxu0 0
    %802 = vmatprep.subr.bf16.mxu0 0
    %803 = vmatpush1.bf16.msra.mxu0 0
    %804 = vmatprep.subr.bf16.mxu0 0
    %805 = vmatpush1.bf16.msra.mxu0 0
    %806 = vmatprep.subr.bf16.mxu0 0
    %807 = vmatpush1.bf16.msra.mxu0 0
    %808 = vmatprep.subr.bf16.mxu0 0
    %809 = vmatpush1.bf16.msra.mxu0 0
    %810 = vmatprep.subr.bf16.mxu0 0
    %811 = vmatpush1.bf16.msra.mxu0 0
    %812 = vmatprep.subr.bf16.mxu0 0
    %813 = vmatpush1.bf16.msra.mxu0 0
    %814 = vmatprep.subr.bf16.mxu0 0
    %815 = vmatpush1.bf16.msra.mxu0 0
    %816 = vmatprep.subr.bf16.mxu0 0
    %817 = vmatpush1.bf16.msra.mxu0 0
    %818 = vmatprep.mubr.bf16.mxu0 0
    %819 = vmatmul.mubr.bf16.gmra.mrb[0].mxu0 %v784
    %v820 = vpop.f32.mrb[0].mxu0
    %v821 = vadd.f32 0.0, %v820
    %v822 = vpop.f32.mrb[0].mxu0
    %v823 = vpop.f32.mrb[0].mxu0
    %v824 = vpop.f32.mrb[0].mxu0
    %825 = vdwg.mxu0
    %v826 = vadd.f32 %v262, %v821
    %v827 = vxor.u32 %v826, 2147483648
    %v828 = vmul.f32 %v827, 1.442695
    %v829 = vpow.pop %v828
    %v830 = vadd.f32 %v829, 1.0
    %v831 = vrcp.pop %v830
    %v832 = vmul.f32 1.0, %v831
    %v833 = vtanh.pop %v826
    %v834 = vmul.f32 %v832, %v761
    %836 = vrot.lane.b32.xlu0 %v833, 64
    %v837 = vpop.permute.xlu0 %836
    %v839 = vmul.f32 %v832, %v837
    %841 = vrot.lane.b32.xlu0 %v839, 32
    %v842 = vpop.permute.xlu0 %841
    %v844 = vadd.f32 %v834, %v842
    %v845 = vtanh.pop %v844
    %847 = vrot.lane.b32.xlu0 %v845, 64
    %v848 = vpop.permute.xlu0 %847
    %v850 = vmul.f32 %v832, %v848
    %852 = vrot.lane.b32.xlu0 %v850, 32
    %v853 = vpop.permute.xlu0 %852
    %s855 = scalar_lea.vmem [#allocation2], 48
    %856 = vst.msk [vmem:[%s855] sm:$0xff] %vm357, %v853
    %857 = vrot.lane.b32.xlu0 %v850, 16
    %v858 = vpop.permute.xlu0 %857
    %s860 = scalar_lea.vmem [#allocation3], 8
    %861 = vst.msk [vmem:[%s860] sm:$0xff] %vm357, %v858
    %v862 = vpack.c.bf16 %v850, %v850
    %864 = vrot.lane.b32.xlu0 %v862, 32
    %v865 = vpop.permute.xlu0 %864
    %v867 = vsel %vm284, %v865, 0
    %869 = vmatprep.subr.bf16.mxu0 0
    %870 = vmatpush1.bf16.msra.mxu0 %v280
    %871 = vmatprep.subr.bf16.mxu0 0
    %872 = vmatpush1.bf16.msra.mxu0 %v281
    %873 = vmatprep.subr.bf16.mxu0 0
    %874 = vmatpush1.bf16.msra.mxu0 0
    %875 = vmatprep.subr.bf16.mxu0 0
    %876 = vmatpush1.bf16.msra.mxu0 0
    %877 = vmatprep.subr.bf16.mxu0 0
    %878 = vmatpush1.bf16.msra.mxu0 0
    %879 = vmatprep.subr.bf16.mxu0 0
    %880 = vmatpush1.bf16.msra.mxu0 0
    %881 = vmatprep.subr.bf16.mxu0 0
    %882 = vmatpush1.bf16.msra.mxu0 0
    %883 = vmatprep.subr.bf16.mxu0 0
    %884 = vmatpush1.bf16.msra.mxu0 0
    %885 = vmatprep.subr.bf16.mxu0 0
    %886 = vmatpush1.bf16.msra.mxu0 0
    %887 = vmatprep.subr.bf16.mxu0 0
    %888 = vmatpush1.bf16.msra.mxu0 0
    %889 = vmatprep.subr.bf16.mxu0 0
    %890 = vmatpush1.bf16.msra.mxu0 0
    %891 = vmatprep.subr.bf16.mxu0 0
    %892 = vmatpush1.bf16.msra.mxu0 0
    %893 = vmatprep.subr.bf16.mxu0 0
    %894 = vmatpush1.bf16.msra.mxu0 0
    %895 = vmatprep.subr.bf16.mxu0 0
    %896 = vmatpush1.bf16.msra.mxu0 0
    %897 = vmatprep.subr.bf16.mxu0 0
    %898 = vmatpush1.bf16.msra.mxu0 0
    %899 = vmatprep.subr.bf16.mxu0 0
    %900 = vmatpush1.bf16.msra.mxu0 0
    %901 = vmatprep.mubr.bf16.mxu0 0
    %902 = vmatmul.mubr.bf16.gmra.mrb[0].mxu0 %v867
    %v903 = vpop.f32.mrb[0].mxu0
    %v904 = vadd.f32 0.0, %v903
    %v905 = vpop.f32.mrb[0].mxu0
    %v906 = vpop.f32.mrb[0].mxu0
    %v907 = vpop.f32.mrb[0].mxu0
    %908 = vdwg.mxu0
    %v909 = vadd.f32 %v265, %v904
    %v910 = vxor.u32 %v909, 2147483648
    %v911 = vmul.f32 %v910, 1.442695
    %v912 = vpow.pop %v911
    %v913 = vadd.f32 %v912, 1.0
    %v914 = vrcp.pop %v913
    %v915 = vmul.f32 1.0, %v914
    %v916 = vtanh.pop %v909
    %v917 = vmul.f32 %v915, %v844
    %919 = vrot.lane.b32.xlu0 %v916, 64
    %v920 = vpop.permute.xlu0 %919
    %v922 = vmul.f32 %v915, %v920
    %924 = vrot.lane.b32.xlu0 %v922, 32
    %v925 = vpop.permute.xlu0 %924
    %v927 = vadd.f32 %v917, %v925
    %v928 = vtanh.pop %v927
    %930 = vrot.lane.b32.xlu0 %v928, 64
    %v931 = vpop.permute.xlu0 %930
    %v933 = vmul.f32 %v915, %v931
    %935 = vrot.lane.b32.xlu0 %v933, 32
    %v936 = vpop.permute.xlu0 %935
    %s938 = scalar_lea.vmem [#allocation2], 56
    %939 = vst.msk [vmem:[%s938] sm:$0xff] %vm357, %v936
    %940 = vrot.lane.b32.xlu0 %v933, 16
    %v941 = vpop.permute.xlu0 %940
    %943 = vst.msk [vmem:[#allocation3] sm:$0xff] %vm357, %v941
    %v944 = vld [vmem:[%s13] sm:$0xf]
    %v945 = vld [vmem:[%s13 + $0x4] sm:$0xf]
    %v946 = vld [vmem:[%s13 + $0x8] sm:$0xf]
    %v947 = vld [vmem:[%s13 + $0xc] sm:$0xf]
    %v948 = vld [vmem:[#allocation2] sm:$0xff]
    %v949 = vld [vmem:[#allocation2 + $0x8] sm:$0xff]
    %v950 = vld [vmem:[#allocation2 + $0x10] sm:$0xff]
    %v951 = vld [vmem:[#allocation2 + $0x18] sm:$0xff]
    %v952 = vld [vmem:[#allocation2 + $0x20] sm:$0xff]
    %v953 = vld [vmem:[#allocation2 + $0x28] sm:$0xff]
    %v954 = vld [vmem:[#allocation2 + $0x30] sm:$0xff]
    %v955 = vld [vmem:[#allocation2 + $0x38] sm:$0xff]
    %v956 = vld [vmem:[#allocation3] sm:$0xff]
    %v957 = vld [vmem:[#allocation3 + $0x8] sm:$0xff]
    %v958 = vld [vmem:[#allocation3 + $0x10] sm:$0xff]
    %v959 = vld [vmem:[#allocation3 + $0x18] sm:$0xff]
    %v960 = vld [vmem:[#allocation3 + $0x20] sm:$0xff]
    %v961 = vld [vmem:[#allocation3 + $0x28] sm:$0xff]
    %v962 = vld [vmem:[#allocation3 + $0x30] sm:$0xff]
    %v963 = vld [vmem:[#allocation3 + $0x38] sm:$0xff]
    %v964 = vpack.c.bf16 %v949, %v948
    %v965 = vpack.c.bf16 %v951, %v950
    %v966 = vpack.c.bf16 %v953, %v952
    %v967 = vpack.c.bf16 %v955, %v954
    %v968 = vpack.c.bf16 %v957, %v956
    %v969 = vpack.c.bf16 %v959, %v958
    %v970 = vpack.c.bf16 %v961, %v960
    %v971 = vpack.c.bf16 %v963, %v962
    %v974 = vunpack.c.l.b16 %v946
    %v975 = vunpack.c.l.b16 %v947
    %v976 = vpack.c.b16 %v975, %v974
    %v979 = vsel %vm357, %v968, 0
    %v982 = vsel %vm357, %v969, 0
    %v985 = vsel %vm357, %v970, 0
    %v988 = vsel %vm357, %v971, 0
    %990 = vmatprep.subr.bf16.mxu0 0
    %991 = vmatpush1.bf16.msra.mxu0 %v976
    %992 = vmatprep.subr.bf16.mxu0 0
    %993 = vmatpush1.bf16.msra.mxu0 0
    %994 = vmatprep.subr.bf16.mxu0 0
    %995 = vmatpush1.bf16.msra.mxu0 0
    %996 = vmatprep.subr.bf16.mxu0 0
    %997 = vmatpush1.bf16.msra.mxu0 0
    %998 = vmatprep.subr.bf16.mxu0 0
    %999 = vmatpush1.bf16.msra.mxu0 0
    %1000 = vmatprep.subr.bf16.mxu0 0
    %1001 = vmatpush1.bf16.msra.mxu0 0
    %1002 = vmatprep.subr.bf16.mxu0 0
    %1003 = vmatpush1.bf16.msra.mxu0 0
    %1004 = vmatprep.subr.bf16.mxu0 0
    %1005 = vmatpush1.bf16.msra.mxu0 0
    %1006 = vmatprep.subr.bf16.mxu0 0
    %1007 = vmatpush1.bf16.msra.mxu0 0
    %1008 = vmatprep.subr.bf16.mxu0 0
    %1009 = vmatpush1.bf16.msra.mxu0 0
    %1010 = vmatprep.subr.bf16.mxu0 0
    %1011 = vmatpush1.bf16.msra.mxu0 0
    %1012 = vmatprep.subr.bf16.mxu0 0
    %1013 = vmatpush1.bf16.msra.mxu0 0
    %1014 = vmatprep.subr.bf16.mxu0 0
    %1015 = vmatpush1.bf16.msra.mxu0 0
    %1016 = vmatprep.subr.bf16.mxu0 0
    %1017 = vmatpush1.bf16.msra.mxu0 0
    %1018 = vmatprep.subr.bf16.mxu0 0
    %1019 = vmatpush1.bf16.msra.mxu0 0
    %1020 = vmatprep.subr.bf16.mxu0 0
    %1021 = vmatpush1.bf16.msra.mxu0 0
    %1022 = vmatprep.mubr.bf16.mxu0 0
    %1023 = vmatmul.mubr.bf16.gmra.mrb[0].mxu0 %v979
    %v1024 = vpop.f32.mrb[0].mxu0
    %v1025 = vadd.f32 0.0, %v1024
    %v1026 = vpop.f32.mrb[0].mxu0
    %v1027 = vpop.f32.mrb[0].mxu0
    %v1028 = vadd.f32 0.0, %v1027
    %v1029 = vpop.f32.mrb[0].mxu0
    %1030 = vmatprep.mubr.bf16.mxu0 0
    %1031 = vmatmul.mubr.bf16.gmra.mrb[0].mxu0 %v982
    %v1032 = vpop.f32.mrb[0].mxu0
    %v1033 = vadd.f32 0.0, %v1032
    %v1034 = vpop.f32.mrb[0].mxu0
    %v1035 = vpop.f32.mrb[0].mxu0
    %v1036 = vadd.f32 0.0, %v1035
    %v1037 = vpop.f32.mrb[0].mxu0
    %1038 = vmatprep.mubr.bf16.mxu0 0
    %1039 = vmatmul.mubr.bf16.gmra.mrb[0].mxu0 %v985
    %v1040 = vpop.f32.mrb[0].mxu0
    %v1041 = vadd.f32 0.0, %v1040
    %v1042 = vpop.f32.mrb[0].mxu0
    %v1043 = vpop.f32.mrb[0].mxu0
    %v1044 = vadd.f32 0.0, %v1043
    %v1045 = vpop.f32.mrb[0].mxu0
    %1046 = vmatprep.mubr.bf16.mxu0 0
    %1047 = vmatmul.mubr.bf16.gmra.mrb[0].mxu0 %v988
    %v1048 = vpop.f32.mrb[0].mxu0
    %v1049 = vadd.f32 0.0, %v1048
    %v1050 = vpop.f32.mrb[0].mxu0
    %v1051 = vpop.f32.mrb[0].mxu0
    %v1052 = vadd.f32 0.0, %v1051
    %v1053 = vpop.f32.mrb[0].mxu0
    %1054 = vdwg.mxu0
    %v1057 = vunpack.c.l.b16 %v944
    %v1058 = vunpack.c.l.b16 %v945
    %v1059 = vpack.c.b16 %v1058, %v1057
    %v1062 = vsel %vm357, %v964, 0
    %v1065 = vsel %vm357, %v965, 0
    %v1068 = vsel %vm357, %v966, 0
    %v1071 = vsel %vm357, %v967, 0
    %1073 = vmatprep.subr.bf16.mxu0 0
    %1074 = vmatpush1.bf16.msra.mxu0 %v1059
    %1075 = vmatprep.subr.bf16.mxu0 0
    %1076 = vmatpush1.bf16.msra.mxu0 0
    %1077 = vmatprep.subr.bf16.mxu0 0
    %1078 = vmatpush1.bf16.msra.mxu0 0
    %1079 = vmatprep.subr.bf16.mxu0 0
    %1080 = vmatpush1.bf16.msra.mxu0 0
    %1081 = vmatprep.subr.bf16.mxu0 0
    %1082 = vmatpush1.bf16.msra.mxu0 0
    %1083 = vmatprep.subr.bf16.mxu0 0
    %1084 = vmatpush1.bf16.msra.mxu0 0
    %1085 = vmatprep.subr.bf16.mxu0 0
    %1086 = vmatpush1.bf16.msra.mxu0 0
    %1087 = vmatprep.subr.bf16.mxu0 0
    %1088 = vmatpush1.bf16.msra.mxu0 0
    %1089 = vmatprep.subr.bf16.mxu0 0
    %1090 = vmatpush1.bf16.msra.mxu0 0
    %1091 = vmatprep.subr.bf16.mxu0 0
    %1092 = vmatpush1.bf16.msra.mxu0 0
    %1093 = vmatprep.subr.bf16.mxu0 0
    %1094 = vmatpush1.bf16.msra.mxu0 0
    %1095 = vmatprep.subr.bf16.mxu0 0
    %1096 = vmatpush1.bf16.msra.mxu0 0
    %1097 = vmatprep.subr.bf16.mxu0 0
    %1098 = vmatpush1.bf16.msra.mxu0 0
    %1099 = vmatprep.subr.bf16.mxu0 0
    %1100 = vmatpush1.bf16.msra.mxu0 0
    %1101 = vmatprep.subr.bf16.mxu0 0
    %1102 = vmatpush1.bf16.msra.mxu0 0
    %1103 = vmatprep.subr.bf16.mxu0 0
    %1104 = vmatpush1.bf16.msra.mxu0 0
    %1105 = vmatprep.mubr.bf16.mxu0 0
    %1106 = vmatmul.mubr.bf16.gmra.mrb[0].mxu0 %v1062
    %v1107 = vpop.f32.mrb[0].mxu0
    %v1108 = vadd.f32 %v1025, %v1107
    %v1109 = vpop.f32.mrb[0].mxu0
    %v1110 = vpop.f32.mrb[0].mxu0
    %v1111 = vadd.f32 %v1028, %v1110
    %v1112 = vpop.f32.mrb[0].mxu0
    %1113 = vmatprep.mubr.bf16.mxu0 0
    %1114 = vmatmul.mubr.bf16.gmra.mrb[0].mxu0 %v1065
    %v1115 = vpop.f32.mrb[0].mxu0
    %v1116 = vadd.f32 %v1033, %v1115
    %v1117 = vpop.f32.mrb[0].mxu0
    %v1118 = vpop.f32.mrb[0].mxu0
    %v1119 = vadd.f32 %v1036, %v1118
    %v1120 = vpop.f32.mrb[0].mxu0
    %1121 = vmatprep.mubr.bf16.mxu0 0
    %1122 = vmatmul.mubr.bf16.gmra.mrb[0].mxu0 %v1068
    %v1123 = vpop.f32.mrb[0].mxu0
    %v1124 = vadd.f32 %v1041, %v1123
    %v1125 = vpop.f32.mrb[0].mxu0
    %v1126 = vpop.f32.mrb[0].mxu0
    %v1127 = vadd.f32 %v1044, %v1126
    %v1128 = vpop.f32.mrb[0].mxu0
    %1129 = vmatprep.mubr.bf16.mxu0 0
    %1130 = vmatmul.mubr.bf16.gmra.mrb[0].mxu0 %v1071
    %v1131 = vpop.f32.mrb[0].mxu0
    %v1132 = vadd.f32 %v1049, %v1131
    %v1133 = vpop.f32.mrb[0].mxu0
    %v1134 = vpop.f32.mrb[0].mxu0
    %v1135 = vadd.f32 %v1052, %v1134
    %v1136 = vpop.f32.mrb[0].mxu0
    %1137 = vdwg.mxu0
    %v1138 = vld [vmem:[%s15] sm:$0x1]
    %v1140 = vlaneseq
    %v1141 = vshrl.u32 %v1140, 7
    %v1142 = vsub.s32 0, %v1141
    %v1143 = vrot.slane %v1138, %v1142
    %v1145 = vadd.f32 %v1108, %v1143
    %v1146 = vadd.f32 %v1111, %v1143
    %v1147 = vadd.f32 %v1116, %v1143
    %v1148 = vadd.f32 %v1119, %v1143
    %v1149 = vadd.f32 %v1124, %v1143
    %v1150 = vadd.f32 %v1127, %v1143
    %v1151 = vadd.f32 %v1132, %v1143
    %v1152 = vadd.f32 %v1135, %v1143
    %v1153 = vtanh.pop %v1145
    %v1154 = vtanh.pop %v1146
    %v1155 = vtanh.pop %v1147
    %v1156 = vtanh.pop %v1148
    %v1157 = vtanh.pop %v1149
    %v1158 = vtanh.pop %v1150
    %v1159 = vtanh.pop %v1151
    %v1160 = vtanh.pop %v1152
    %v1161 = vld [vmem:[%s17] sm:$0xf]
    %v1162 = vld [vmem:[%s17 + $0x4] sm:$0xf]
    %v1163 = vld [vmem:[%s17 + $0x8] sm:$0xf]
    %v1164 = vld [vmem:[%s17 + $0xc] sm:$0xf]
    %v1165 = vpack.c.bf16 %v1154, %v1153
    %v1166 = vpack.c.bf16 %v1156, %v1155
    %v1167 = vpack.c.bf16 %v1158, %v1157
    %v1168 = vpack.c.bf16 %v1160, %v1159
    %v1169 = vld [vmem:[#allocation5] sm:$0x1]
    %v1171 = vlaneseq
    %v1172 = vshrl.u32 %v1171, 7
    %v1173 = vsub.s32 0, %v1172
    %v1174 = vrot.slane %v1169, %v1173
    %v1180 = vunpack.c.l.b16 %v1161
    %v1181 = vunpack.c.l.b16 %v1162
    %v1182 = vunpack.c.l.b16 %v1163
    %v1183 = vunpack.c.l.b16 %v1164
    %v1184 = vpack.c.b16 %v1181, %v1180
    %v1185 = vpack.c.b16 %v1183, %v1182
    %v1189 = vsel %vm284, %v1165, 0
    %v1192 = vsel %vm284, %v1166, 0
    %v1195 = vsel %vm284, %v1167, 0
    %v1198 = vsel %vm284, %v1168, 0
    %1200 = vmatprep.subr.bf16.mxu0 0
    %1201 = vmatpush1.bf16.msra.mxu0 %v1184
    %1202 = vmatprep.subr.bf16.mxu0 0
    %1203 = vmatpush1.bf16.msra.mxu0 %v1185
    %1204 = vmatprep.subr.bf16.mxu0 0
    %1205 = vmatpush1.bf16.msra.mxu0 0
    %1206 = vmatprep.subr.bf16.mxu0 0
    %1207 = vmatpush1.bf16.msra.mxu0 0
    %1208 = vmatprep.subr.bf16.mxu0 0
    %1209 = vmatpush1.bf16.msra.mxu0 0
    %1210 = vmatprep.subr.bf16.mxu0 0
    %1211 = vmatpush1.bf16.msra.mxu0 0
    %1212 = vmatprep.subr.bf16.mxu0 0
    %1213 = vmatpush1.bf16.msra.mxu0 0
    %1214 = vmatprep.subr.bf16.mxu0 0
    %1215 = vmatpush1.bf16.msra.mxu0 0
    %1216 = vmatprep.subr.bf16.mxu0 0
    %1217 = vmatpush1.bf16.msra.mxu0 0
    %1218 = vmatprep.subr.bf16.mxu0 0
    %1219 = vmatpush1.bf16.msra.mxu0 0
    %1220 = vmatprep.subr.bf16.mxu0 0
    %1221 = vmatpush1.bf16.msra.mxu0 0
    %1222 = vmatprep.subr.bf16.mxu0 0
    %1223 = vmatpush1.bf16.msra.mxu0 0
    %1224 = vmatprep.subr.bf16.mxu0 0
    %1225 = vmatpush1.bf16.msra.mxu0 0
    %1226 = vmatprep.subr.bf16.mxu0 0
    %1227 = vmatpush1.bf16.msra.mxu0 0
    %1228 = vmatprep.subr.bf16.mxu0 0
    %1229 = vmatpush1.bf16.msra.mxu0 0
    %1230 = vmatprep.subr.bf16.mxu0 0
    %1231 = vmatpush1.bf16.msra.mxu0 0
    %1232 = vmatprep.mubr.bf16.mxu0 0
    %1233 = vmatmul.mubr.bf16.gmra.mrb[0].mxu0 %v1189
    %v1234 = vpop.f32.mrb[0].mxu0
    %v1235 = vadd.f32 %v1174, %v1234
    %v1236 = vpop.f32.mrb[0].mxu0
    %v1237 = vpop.f32.mrb[0].mxu0
    %v1238 = vadd.f32 %v1174, %v1237
    %v1239 = vpop.f32.mrb[0].mxu0
    %1240 = vmatprep.mubr.bf16.mxu0 0
    %1241 = vmatmul.mubr.bf16.gmra.mrb[0].mxu0 %v1192
    %v1242 = vpop.f32.mrb[0].mxu0
    %v1243 = vadd.f32 %v1174, %v1242
    %v1244 = vpop.f32.mrb[0].mxu0
    %v1245 = vpop.f32.mrb[0].mxu0
    %v1246 = vadd.f32 %v1174, %v1245
    %v1247 = vpop.f32.mrb[0].mxu0
    %1248 = vmatprep.mubr.bf16.mxu0 0
    %1249 = vmatmul.mubr.bf16.gmra.mrb[0].mxu0 %v1195
    %v1250 = vpop.f32.mrb[0].mxu0
    %v1251 = vadd.f32 %v1174, %v1250
    %v1252 = vpop.f32.mrb[0].mxu0
    %v1253 = vpop.f32.mrb[0].mxu0
    %v1254 = vadd.f32 %v1174, %v1253
    %v1255 = vpop.f32.mrb[0].mxu0
    %1256 = vmatprep.mubr.bf16.mxu0 0
    %1257 = vmatmul.mubr.bf16.gmra.mrb[0].mxu0 %v1198
    %v1258 = vpop.f32.mrb[0].mxu0
    %v1259 = vadd.f32 %v1174, %v1258
    %v1260 = vpop.f32.mrb[0].mxu0
    %v1261 = vpop.f32.mrb[0].mxu0
    %v1262 = vadd.f32 %v1174, %v1261
    %v1263 = vpop.f32.mrb[0].mxu0
    %1264 = vdwg.mxu0
    %v1265 = vld [vmem:[%s3] sm:$0xff]
    %vm1266 = vcmp.gt.f32.partialorder %v1265, 0.0
    %v1267 = vsub.f32 %v1235, 10000.0
    %v1268 = vsel %vm1266, %v1235, %v1267
    %s1269 = scalar_lea.vmem %s3, 8
    %v1270 = vld [vmem:[%s1269] sm:$0xff]
    %vm1271 = vcmp.gt.f32.partialorder %v1270, 0.0
    %v1272 = vsub.f32 %v1238, 10000.0
    %v1273 = vsel %vm1271, %v1238, %v1272
    %s1274 = scalar_lea.vmem %s3, 16
    %v1275 = vld [vmem:[%s1274] sm:$0xff]
    %vm1276 = vcmp.gt.f32.partialorder %v1275, 0.0
    %v1277 = vsub.f32 %v1243, 10000.0
    %v1278 = vsel %vm1276, %v1243, %v1277
    %s1279 = scalar_lea.vmem %s3, 24
    %v1280 = vld [vmem:[%s1279] sm:$0xff]
    %vm1281 = vcmp.gt.f32.partialorder %v1280, 0.0
    %v1282 = vsub.f32 %v1246, 10000.0
    %v1283 = vsel %vm1281, %v1246, %v1282
    %s1284 = scalar_lea.vmem %s3, 32
    %v1285 = vld [vmem:[%s1284] sm:$0xff]
    %vm1286 = vcmp.gt.f32.partialorder %v1285, 0.0
    %v1287 = vsub.f32 %v1251, 10000.0
    %v1288 = vsel %vm1286, %v1251, %v1287
    %s1289 = scalar_lea.vmem %s3, 40
    %v1290 = vld [vmem:[%s1289] sm:$0xff]
    %vm1291 = vcmp.gt.f32.partialorder %v1290, 0.0
    %v1292 = vsub.f32 %v1254, 10000.0
    %v1293 = vsel %vm1291, %v1254, %v1292
    %s1294 = scalar_lea.vmem %s3, 48
    %v1295 = vld [vmem:[%s1294] sm:$0xff]
    %vm1296 = vcmp.gt.f32.partialorder %v1295, 0.0
    %v1297 = vsub.f32 %v1259, 10000.0
    %v1298 = vsel %vm1296, %v1259, %v1297
    %s1299 = scalar_lea.vmem %s3, 56
    %v1300 = vld [vmem:[%s1299] sm:$0xff]
    %vm1301 = vcmp.gt.f32.partialorder %v1300, 0.0
    %v1302 = vsub.f32 %v1262, 10000.0
    %v1303 = vsel %vm1301, %v1262, %v1302
    %v1304 = vmax.f32 %v1268, %v1273
    %v1305 = vmax.f32 %v1304, %v1278
    %v1306 = vmax.f32 %v1305, %v1283
    %v1307 = vmax.f32 %v1306, %v1288
    %v1308 = vmax.f32 %v1307, %v1293
    %v1309 = vmax.f32 %v1308, %v1298
    %v1310 = vmax.f32 %v1309, %v1303
    %v1311 = vsub.f32 %v1268, %v1310
    %v1312 = vmul.f32 %v1311, 1.442695
    %v1313 = vpow.pop %v1312
    %v1314 = vadd.f32 %v1313, 0.0
    %v1315 = vld [vmem:[#allocation2] sm:$0xff]
    %1317 = vset.pattern.permute.xlu0 0
    %1318 = vperm.xlu0 %1317, %v1313
    %v1319 = vpop.permute.xlu0 %1318
    %v1321 = vmul.f32 %v1319, %v1315
    %v1322 = vadd.f32 %v1321, 0.0
    %v1323 = vld [vmem:[#allocation3] sm:$0xff]
    %v1324 = vmul.f32 %v1319, %v1323
    %v1325 = vadd.f32 %v1324, 0.0
    %v1326 = vsub.f32 %v1273, %v1310
    %v1327 = vmul.f32 %v1326, 1.442695
    %v1328 = vpow.pop %v1327
    %v1329 = vadd.f32 %v1314, %v1328
    %v1330 = vld [vmem:[%s440] sm:$0xff]
    %1332 = vset.pattern.permute.xlu0 0
    %1333 = vperm.xlu0 %1332, %v1328
    %v1334 = vpop.permute.xlu0 %1333
    %v1336 = vmul.f32 %v1334, %v1330
    %v1337 = vadd.f32 %v1322, %v1336
    %v1338 = vld [vmem:[%s860] sm:$0xff]
    %v1339 = vmul.f32 %v1334, %v1338
    %v1340 = vadd.f32 %v1325, %v1339
    %v1341 = vsub.f32 %v1278, %v1310
    %v1342 = vmul.f32 %v1341, 1.442695
    %v1343 = vpow.pop %v1342
    %v1344 = vadd.f32 %v1329, %v1343
    %v1345 = vld [vmem:[%s523] sm:$0xff]
    %1347 = vset.pattern.permute.xlu0 0
    %1348 = vperm.xlu0 %1347, %v1343
    %v1349 = vpop.permute.xlu0 %1348
    %v1351 = vmul.f32 %v1349, %v1345
    %v1352 = vadd.f32 %v1337, %v1351
    %v1353 = vld [vmem:[%s777] sm:$0xff]
    %v1354 = vmul.f32 %v1349, %v1353
    %v1355 = vadd.f32 %v1340, %v1354
    %v1356 = vsub.f32 %v1283, %v1310
    %v1357 = vmul.f32 %v1356, 1.442695
    %v1358 = vpow.pop %v1357
    %v1359 = vadd.f32 %v1344, %v1358
    %v1360 = vld [vmem:[%s606] sm:$0xff]
    %1362 = vset.pattern.permute.xlu0 0
    %1363 = vperm.xlu0 %1362, %v1358
    %v1364 = vpop.permute.xlu0 %1363
    %v1366 = vmul.f32 %v1364, %v1360
    %v1367 = vadd.f32 %v1352, %v1366
    %v1368 = vld [vmem:[%s694] sm:$0xff]
    %v1369 = vmul.f32 %v1364, %v1368
    %v1370 = vadd.f32 %v1355, %v1369
    %v1371 = vsub.f32 %v1288, %v1310
    %v1372 = vmul.f32 %v1371, 1.442695
    %v1373 = vpow.pop %v1372
    %v1374 = vadd.f32 %v1359, %v1373
    %v1375 = vld [vmem:[%s689] sm:$0xff]
    %1377 = vset.pattern.permute.xlu0 0
    %1378 = vperm.xlu0 %1377, %v1373
    %v1379 = vpop.permute.xlu0 %1378
    %v1381 = vmul.f32 %v1379, %v1375
    %v1382 = vadd.f32 %v1367, %v1381
    %v1383 = vld [vmem:[%s611] sm:$0xff]
    %v1384 = vmul.f32 %v1379, %v1383
    %v1385 = vadd.f32 %v1370, %v1384
    %v1386 = vsub.f32 %v1293, %v1310
    %v1387 = vmul.f32 %v1386, 1.442695
    %v1388 = vpow.pop %v1387
    %v1389 = vadd.f32 %v1374, %v1388
    %v1390 = vld [vmem:[%s772] sm:$0xff]
    %1392 = vset.pattern.permute.xlu0 0
    %1393 = vperm.xlu0 %1392, %v1388
    %v1394 = vpop.permute.xlu0 %1393
    %v1396 = vmul.f32 %v1394, %v1390
    %v1397 = vadd.f32 %v1382, %v1396
    %v1398 = vld [vmem:[%s528] sm:$0xff]
    %v1399 = vmul.f32 %v1394, %v1398
    %v1400 = vadd.f32 %v1385, %v1399
    %v1401 = vsub.f32 %v1298, %v1310
    %v1402 = vmul.f32 %v1401, 1.442695
    %v1403 = vpow.pop %v1402
    %v1404 = vadd.f32 %v1389, %v1403
    %v1405 = vld [vmem:[%s855] sm:$0xff]
    %1407 = vset.pattern.permute.xlu0 0
    %1408 = vperm.xlu0 %1407, %v1403
    %v1409 = vpop.permute.xlu0 %1408
    %v1411 = vmul.f32 %v1409, %v1405
    %v1412 = vadd.f32 %v1397, %v1411
    %v1413 = vld [vmem:[%s445] sm:$0xff]
    %v1414 = vmul.f32 %v1409, %v1413
    %v1415 = vadd.f32 %v1400, %v1414
    %v1416 = vsub.f32 %v1303, %v1310
    %v1417 = vmul.f32 %v1416, 1.442695
    %v1418 = vpow.pop %v1417
    %v1419 = vadd.f32 %v1404, %v1418
    %v1420 = vld [vmem:[%s938] sm:$0xff]
    %1422 = vset.pattern.permute.xlu0 0
    %1423 = vperm.xlu0 %1422, %v1418
    %v1424 = vpop.permute.xlu0 %1423
    %v1426 = vmul.f32 %v1424, %v1420
    %v1427 = vadd.f32 %v1412, %v1426
    %v1428 = vld [vmem:[%s362] sm:$0xff]
    %v1429 = vmul.f32 %v1424, %v1428
    %v1430 = vadd.f32 %v1415, %v1429
    %v1431 = vrcp.pop %v1419
    %1433 = vset.pattern.permute.xlu0 0
    %1434 = vperm.xlu0 %1433, %v1431
    %v1435 = vpop.permute.xlu0 %1434
    %v1437 = vmul.f32 %v1427, %v1435
    %v1438 = vmul.f32 %v1430, %v1435
    %v1439 = vld [vmem:[%s21] sm:$0xf]
    %v1440 = vld [vmem:[%s21 + $0x4] sm:$0xf]
    %v1441 = vld [vmem:[%s21 + $0x8] sm:$0xf]
    %v1442 = vld [vmem:[%s21 + $0xc] sm:$0xf]
    %v1443 = vpack.c.bf16 %v1437, %v1437
    %v1444 = vpack.c.bf16 %v1438, %v1438
    %v1447 = vunpack.c.l.b16 %v1441
    %v1448 = vunpack.c.l.b16 %v1442
    %v1449 = vpack.c.b16 %v1448, %v1447
    %v1452 = vsel %vm357, %v1444, 0
    %1454 = vmatprep.subr.bf16.mxu0 0
    %1455 = vmatpush1.bf16.msra.mxu0 %v1449
    %1456 = vmatprep.subr.bf16.mxu0 0
    %1457 = vmatpush1.bf16.msra.mxu0 0
    %1458 = vmatprep.subr.bf16.mxu0 0
    %1459 = vmatpush1.bf16.msra.mxu0 0
    %1460 = vmatprep.subr.bf16.mxu0 0
    %1461 = vmatpush1.bf16.msra.mxu0 0
    %1462 = vmatprep.subr.bf16.mxu0 0
    %1463 = vmatpush1.bf16.msra.mxu0 0
    %1464 = vmatprep.subr.bf16.mxu0 0
    %1465 = vmatpush1.bf16.msra.mxu0 0
    %1466 = vmatprep.subr.bf16.mxu0 0
    %1467 = vmatpush1.bf16.msra.mxu0 0
    %1468 = vmatprep.subr.bf16.mxu0 0
    %1469 = vmatpush1.bf16.msra.mxu0 0
    %1470 = vmatprep.subr.bf16.mxu0 0
    %1471 = vmatpush1.bf16.msra.mxu0 0
    %1472 = vmatprep.subr.bf16.mxu0 0
    %1473 = vmatpush1.bf16.msra.mxu0 0
    %1474 = vmatprep.subr.bf16.mxu0 0
    %1475 = vmatpush1.bf16.msra.mxu0 0
    %1476 = vmatprep.subr.bf16.mxu0 0
    %1477 = vmatpush1.bf16.msra.mxu0 0
    %1478 = vmatprep.subr.bf16.mxu0 0
    %1479 = vmatpush1.bf16.msra.mxu0 0
    %1480 = vmatprep.subr.bf16.mxu0 0
    %1481 = vmatpush1.bf16.msra.mxu0 0
    %1482 = vmatprep.subr.bf16.mxu0 0
    %1483 = vmatpush1.bf16.msra.mxu0 0
    %1484 = vmatprep.subr.bf16.mxu0 0
    %1485 = vmatpush1.bf16.msra.mxu0 0
    %1486 = vmatprep.mubr.bf16.mxu0 0
    %1487 = vmatmul.mubr.bf16.gmra.mrb[0].mxu0 %v1452
    %v1488 = vpop.f32.mrb[0].mxu0
    %v1489 = vadd.f32 0.0, %v1488
    %v1490 = vpop.f32.mrb[0].mxu0
    %v1491 = vpop.f32.mrb[0].mxu0
    %v1492 = vpop.f32.mrb[0].mxu0
    %1493 = vdwg.mxu0
    %v1496 = vunpack.c.l.b16 %v1439
    %v1497 = vunpack.c.l.b16 %v1440
    %v1498 = vpack.c.b16 %v1497, %v1496
    %v1501 = vsel %vm357, %v1443, 0
    %1503 = vmatprep.subr.bf16.mxu0 0
    %1504 = vmatpush1.bf16.msra.mxu0 %v1498
    %1505 = vmatprep.subr.bf16.mxu0 0
    %1506 = vmatpush1.bf16.msra.mxu0 0
    %1507 = vmatprep.subr.bf16.mxu0 0
    %1508 = vmatpush1.bf16.msra.mxu0 0
    %1509 = vmatprep.subr.bf16.mxu0 0
    %1510 = vmatpush1.bf16.msra.mxu0 0
    %1511 = vmatprep.subr.bf16.mxu0 0
    %1512 = vmatpush1.bf16.msra.mxu0 0
    %1513 = vmatprep.subr.bf16.mxu0 0
    %1514 = vmatpush1.bf16.msra.mxu0 0
    %1515 = vmatprep.subr.bf16.mxu0 0
    %1516 = vmatpush1.bf16.msra.mxu0 0
    %1517 = vmatprep.subr.bf16.mxu0 0
    %1518 = vmatpush1.bf16.msra.mxu0 0
    %1519 = vmatprep.subr.bf16.mxu0 0
    %1520 = vmatpush1.bf16.msra.mxu0 0
    %1521 = vmatprep.subr.bf16.mxu0 0
    %1522 = vmatpush1.bf16.msra.mxu0 0
    %1523 = vmatprep.subr.bf16.mxu0 0
    %1524 = vmatpush1.bf16.msra.mxu0 0
    %1525 = vmatprep.subr.bf16.mxu0 0
    %1526 = vmatpush1.bf16.msra.mxu0 0
    %1527 = vmatprep.subr.bf16.mxu0 0
    %1528 = vmatpush1.bf16.msra.mxu0 0
    %1529 = vmatprep.subr.bf16.mxu0 0
    %1530 = vmatpush1.bf16.msra.mxu0 0
    %1531 = vmatprep.subr.bf16.mxu0 0
    %1532 = vmatpush1.bf16.msra.mxu0 0
    %1533 = vmatprep.subr.bf16.mxu0 0
    %1534 = vmatpush1.bf16.msra.mxu0 0
    %1535 = vmatprep.mubr.bf16.mxu0 0
    %1536 = vmatmul.mubr.bf16.gmra.mrb[0].mxu0 %v1501
    %v1537 = vpop.f32.mrb[0].mxu0
    %v1538 = vadd.f32 %v1489, %v1537
    %v1539 = vpop.f32.mrb[0].mxu0
    %v1540 = vpop.f32.mrb[0].mxu0
    %v1541 = vpop.f32.mrb[0].mxu0
    %1542 = vdwg.mxu0
    %v1543 = vld [vmem:[%s23] sm:$0x1]
    %v1545 = vlaneseq
    %v1546 = vshrl.u32 %v1545, 7
    %v1547 = vsub.s32 0, %v1546
    %v1548 = vrot.slane %v1543, %v1547
    %v1550 = vadd.f32 %v1538, %v1548
    %v1551 = vtanh.pop %v1550
    %v1552 = vld [vmem:[%s25] sm:$0xf]
    %v1553 = vld [vmem:[%s25 + $0x4] sm:$0xf]
    %v1554 = vld [vmem:[%s25 + $0x8] sm:$0xf]
    %v1555 = vld [vmem:[%s25 + $0xc] sm:$0xf]
    %v1556 = vpack.c.bf16 %v1551, %v1551
    %v1557 = vld [vmem:[%s29] sm:$0x1]
    %v1559 = vlaneseq
    %v1560 = vshrl.u32 %v1559, 7
    %v1561 = vsub.s32 0, %v1560
    %v1562 = vrot.slane %v1557, %v1561
    %v1568 = vunpack.c.l.b16 %v1552
    %v1569 = vunpack.c.l.b16 %v1553
    %v1570 = vunpack.c.l.b16 %v1554
    %v1571 = vunpack.c.l.b16 %v1555
    %v1572 = vpack.c.b16 %v1569, %v1568
    %v1573 = vpack.c.b16 %v1571, %v1570
    %v1577 = vsel %vm284, %v1556, 0
    %1579 = vmatprep.subr.bf16.mxu0 0
    %1580 = vmatpush1.bf16.msra.mxu0 %v1572
    %1581 = vmatprep.subr.bf16.mxu0 0
    %1582 = vmatpush1.bf16.msra.mxu0 %v1573
    %1583 = vmatprep.subr.bf16.mxu0 0
    %1584 = vmatpush1.bf16.msra.mxu0 0
    %1585 = vmatprep.subr.bf16.mxu0 0
    %1586 = vmatpush1.bf16.msra.mxu0 0
    %1587 = vmatprep.subr.bf16.mxu0 0
    %1588 = vmatpush1.bf16.msra.mxu0 0
    %1589 = vmatprep.subr.bf16.mxu0 0
    %1590 = vmatpush1.bf16.msra.mxu0 0
    %1591 = vmatprep.subr.bf16.mxu0 0
    %1592 = vmatpush1.bf16.msra.mxu0 0
    %1593 = vmatprep.subr.bf16.mxu0 0
    %1594 = vmatpush1.bf16.msra.mxu0 0
    %1595 = vmatprep.subr.bf16.mxu0 0
    %1596 = vmatpush1.bf16.msra.mxu0 0
    %1597 = vmatprep.subr.bf16.mxu0 0
    %1598 = vmatpush1.bf16.msra.mxu0 0
    %1599 = vmatprep.subr.bf16.mxu0 0
    %1600 = vmatpush1.bf16.msra.mxu0 0
    %1601 = vmatprep.subr.bf16.mxu0 0
    %1602 = vmatpush1.bf16.msra.mxu0 0
    %1603 = vmatprep.subr.bf16.mxu0 0
    %1604 = vmatpush1.bf16.msra.mxu0 0
    %1605 = vmatprep.subr.bf16.mxu0 0
    %1606 = vmatpush1.bf16.msra.mxu0 0
    %1607 = vmatprep.subr.bf16.mxu0 0
    %1608 = vmatpush1.bf16.msra.mxu0 0
    %1609 = vmatprep.subr.bf16.mxu0 0
    %1610 = vmatpush1.bf16.msra.mxu0 0
    %1611 = vmatprep.mubr.bf16.mxu0 0
    %1612 = vmatmul.mubr.bf16.gmra.mrb[0].mxu0 %v1577
    %v1613 = vpop.f32.mrb[0].mxu0
    %v1614 = vadd.f32 %v1562, %v1613
    %v1615 = vpop.f32.mrb[0].mxu0
    %v1616 = vpop.f32.mrb[0].mxu0
    %v1617 = vpop.f32.mrb[0].mxu0
    %1618 = vdwg.mxu0
    %v1619 = vld [vmem:[%s27] sm:$0xf]
    %v1620 = vld [vmem:[%s27 + $0x4] sm:$0xf]
    %v1621 = vld [vmem:[%s27 + $0x8] sm:$0xf]
    %v1622 = vld [vmem:[%s27 + $0xc] sm:$0xf]
    %v1627 = vunpack.c.l.b16 %v1619
    %v1628 = vunpack.c.l.b16 %v1620
    %v1629 = vunpack.c.l.b16 %v1621
    %v1630 = vunpack.c.l.b16 %v1622
    %v1631 = vpack.c.b16 %v1628, %v1627
    %v1632 = vpack.c.b16 %v1630, %v1629
    %1635 = vmatprep.subr.bf16.mxu0 0
    %1636 = vmatpush1.bf16.msra.mxu0 %v1631
    %1637 = vmatprep.subr.bf16.mxu0 0
    %1638 = vmatpush1.bf16.msra.mxu0 %v1632
    %1639 = vmatprep.subr.bf16.mxu0 0
    %1640 = vmatpush1.bf16.msra.mxu0 0
    %1641 = vmatprep.subr.bf16.mxu0 0
    %1642 = vmatpush1.bf16.msra.mxu0 0
    %1643 = vmatprep.subr.bf16.mxu0 0
    %1644 = vmatpush1.bf16.msra.mxu0 0
    %1645 = vmatprep.subr.bf16.mxu0 0
    %1646 = vmatpush1.bf16.msra.mxu0 0
    %1647 = vmatprep.subr.bf16.mxu0 0
    %1648 = vmatpush1.bf16.msra.mxu0 0
    %1649 = vmatprep.subr.bf16.mxu0 0
    %1650 = vmatpush1.bf16.msra.mxu0 0
    %1651 = vmatprep.subr.bf16.mxu0 0
    %1652 = vmatpush1.bf16.msra.mxu0 0
    %1653 = vmatprep.subr.bf16.mxu0 0
    %1654 = vmatpush1.bf16.msra.mxu0 0
    %1655 = vmatprep.subr.bf16.mxu0 0
    %1656 = vmatpush1.bf16.msra.mxu0 0
    %1657 = vmatprep.subr.bf16.mxu0 0
    %1658 = vmatpush1.bf16.msra.mxu0 0
    %1659 = vmatprep.subr.bf16.mxu0 0
    %1660 = vmatpush1.bf16.msra.mxu0 0
    %1661 = vmatprep.subr.bf16.mxu0 0
    %1662 = vmatpush1.bf16.msra.mxu0 0
    %1663 = vmatprep.subr.bf16.mxu0 0
    %1664 = vmatpush1.bf16.msra.mxu0 0
    %1665 = vmatprep.subr.bf16.mxu0 0
    %1666 = vmatpush1.bf16.msra.mxu0 0
    %1667 = vmatprep.mubr.bf16.mxu0 0
    %1668 = vmatmul.mubr.bf16.gmra.mrb[0].mxu0 %v286
    %v1669 = vpop.f32.mrb[0].mxu0
    %v1670 = vadd.f32 0.0, %v1669
    %v1671 = vpop.f32.mrb[0].mxu0
    %v1672 = vpop.f32.mrb[0].mxu0
    %v1673 = vpop.f32.mrb[0].mxu0
    %1674 = vdwg.mxu0
    %v1675 = vadd.f32 %v1614, %v1670
    %v1676 = vxor.u32 %v1675, 2147483648
    %v1677 = vmul.f32 %v1676, 1.442695
    %v1678 = vpow.pop %v1677
    %v1679 = vadd.f32 %v1678, 1.0
    %v1680 = vrcp.pop %v1679
    %v1681 = vmul.f32 1.0, %v1680
    %v1682 = vtanh.pop %v1675
    %v1683 = vmul.f32 %v1681, 0.0
    %1685 = vrot.lane.b32.xlu0 %v1682, 64
    %v1686 = vpop.permute.xlu0 %1685
    %v1688 = vmul.f32 %v1681, %v1686
    %1690 = vrot.lane.b32.xlu0 %v1688, 32
    %v1691 = vpop.permute.xlu0 %1690
    %v1693 = vadd.f32 %v1683, %v1691
    %v1694 = vtanh.pop %v1693
    %1696 = vrot.lane.b32.xlu0 %v1694, 64
    %v1697 = vpop.permute.xlu0 %1696
    %v1699 = vmul.f32 %v1681, %v1697
    %1701 = vrot.lane.b32.xlu0 %v1699, 32
    %v1702 = vpop.permute.xlu0 %1701
    %vm1704 = vcmask 253952
    %1705 = vst.msk [vmem:[#allocation4] sm:$0x1] %vm1704, %v1702
    %v1706 = vpack.c.bf16 %v1699, %v1699
    %1708 = vrot.lane.b32.xlu0 %v1706, 32
    %v1709 = vpop.permute.xlu0 %1708
    %v1711 = vsel %vm284, %v1709, 0
    %1713 = vmatprep.subr.bf16.mxu0 0
    %1714 = vmatpush1.bf16.msra.mxu0 %v1631
    %1715 = vmatprep.subr.bf16.mxu0 0
    %1716 = vmatpush1.bf16.msra.mxu0 %v1632
    %1717 = vmatprep.subr.bf16.mxu0 0
    %1718 = vmatpush1.bf16.msra.mxu0 0
    %1719 = vmatprep.subr.bf16.mxu0 0
    %1720 = vmatpush1.bf16.msra.mxu0 0
    %1721 = vmatprep.subr.bf16.mxu0 0
    %1722 = vmatpush1.bf16.msra.mxu0 0
    %1723 = vmatprep.subr.bf16.mxu0 0
    %1724 = vmatpush1.bf16.msra.mxu0 0
    %1725 = vmatprep.subr.bf16.mxu0 0
    %1726 = vmatpush1.bf16.msra.mxu0 0
    %1727 = vmatprep.subr.bf16.mxu0 0
    %1728 = vmatpush1.bf16.msra.mxu0 0
    %1729 = vmatprep.subr.bf16.mxu0 0
    %1730 = vmatpush1.bf16.msra.mxu0 0
    %1731 = vmatprep.subr.bf16.mxu0 0
    %1732 = vmatpush1.bf16.msra.mxu0 0
    %1733 = vmatprep.subr.bf16.mxu0 0
    %1734 = vmatpush1.bf16.msra.mxu0 0
    %1735 = vmatprep.subr.bf16.mxu0 0
    %1736 = vmatpush1.bf16.msra.mxu0 0
    %1737 = vmatprep.subr.bf16.mxu0 0
    %1738 = vmatpush1.bf16.msra.mxu0 0
    %1739 = vmatprep.subr.bf16.mxu0 0
    %1740 = vmatpush1.bf16.msra.mxu0 0
    %1741 = vmatprep.subr.bf16.mxu0 0
    %1742 = vmatpush1.bf16.msra.mxu0 0
    %1743 = vmatprep.subr.bf16.mxu0 0
    %1744 = vmatpush1.bf16.msra.mxu0 0
    %1745 = vmatprep.mubr.bf16.mxu0 0
    %1746 = vmatmul.mubr.bf16.gmra.mrb[0].mxu0 %v1711
    %v1747 = vpop.f32.mrb[0].mxu0
    %v1748 = vadd.f32 0.0, %v1747
    %v1749 = vpop.f32.mrb[0].mxu0
    %v1750 = vpop.f32.mrb[0].mxu0
    %v1751 = vpop.f32.mrb[0].mxu0
    %1752 = vdwg.mxu0
    %v1754 = vrot.slane %v1748, 7
    %v1756 = vadd.f32 %v1614, %v1754
    %v1757 = vxor.u32 %v1756, 2147483648
    %v1758 = vmul.f32 %v1757, 1.442695
    %v1759 = vpow.pop %v1758
    %v1760 = vadd.f32 %v1759, 1.0
    %v1761 = vrcp.pop %v1760
    %v1762 = vmul.f32 1.0, %v1761
    %v1763 = vtanh.pop %v1756
    %v1765 = vrot.slane %v1693, 7
    %v1767 = vmul.f32 %v1762, %v1765
    %1769 = vrot.lane.b32.xlu0 %v1763, 64
    %v1770 = vpop.permute.xlu0 %1769
    %v1772 = vmul.f32 %v1762, %v1770
    %1774 = vrot.lane.b32.xlu0 %v1772, 32
    %v1775 = vpop.permute.xlu0 %1774
    %v1777 = vadd.f32 %v1767, %v1775
    %v1778 = vtanh.pop %v1777
    %1780 = vrot.lane.b32.xlu0 %v1778, 64
    %v1781 = vpop.permute.xlu0 %1780
    %v1783 = vmul.f32 %v1762, %v1781
    %1785 = vrot.lane.b32.xlu0 %v1783, 32
    %v1786 = vpop.permute.xlu0 %1785
    %vm1788 = vcmask 254977
    %1789 = vst.msk [vmem:[#allocation4] sm:$0x2] %vm1788, %v1786
    %v1790 = vpack.c.bf16 %v1783, %v1783
    %v1792 = vshrl.u32 %v1790, 16
    %1794 = vrot.lane.b32.xlu0 %v1792, 32
    %v1795 = vpop.permute.xlu0 %1794
    %v1797 = vsel %vm284, %v1795, 0
    %1799 = vmatprep.subr.bf16.mxu0 0
    %1800 = vmatpush1.bf16.msra.mxu0 %v1631
    %1801 = vmatprep.subr.bf16.mxu0 0
    %1802 = vmatpush1.bf16.msra.mxu0 %v1632
    %1803 = vmatprep.subr.bf16.mxu0 0
    %1804 = vmatpush1.bf16.msra.mxu0 0
    %1805 = vmatprep.subr.bf16.mxu0 0
    %1806 = vmatpush1.bf16.msra.mxu0 0
    %1807 = vmatprep.subr.bf16.mxu0 0
    %1808 = vmatpush1.bf16.msra.mxu0 0
    %1809 = vmatprep.subr.bf16.mxu0 0
    %1810 = vmatpush1.bf16.msra.mxu0 0
    %1811 = vmatprep.subr.bf16.mxu0 0
    %1812 = vmatpush1.bf16.msra.mxu0 0
    %1813 = vmatprep.subr.bf16.mxu0 0
    %1814 = vmatpush1.bf16.msra.mxu0 0
    %1815 = vmatprep.subr.bf16.mxu0 0
    %1816 = vmatpush1.bf16.msra.mxu0 0
    %1817 = vmatprep.subr.bf16.mxu0 0
    %1818 = vmatpush1.bf16.msra.mxu0 0
    %1819 = vmatprep.subr.bf16.mxu0 0
    %1820 = vmatpush1.bf16.msra.mxu0 0
    %1821 = vmatprep.subr.bf16.mxu0 0
    %1822 = vmatpush1.bf16.msra.mxu0 0
    %1823 = vmatprep.subr.bf16.mxu0 0
    %1824 = vmatpush1.bf16.msra.mxu0 0
    %1825 = vmatprep.subr.bf16.mxu0 0
    %1826 = vmatpush1.bf16.msra.mxu0 0
    %1827 = vmatprep.subr.bf16.mxu0 0
    %1828 = vmatpush1.bf16.msra.mxu0 0
    %1829 = vmatprep.subr.bf16.mxu0 0
    %1830 = vmatpush1.bf16.msra.mxu0 0
    %1831 = vmatprep.mubr.bf16.mxu0 0
    %1832 = vmatmul.mubr.bf16.gmra.mrb[0].mxu0 %v1797
    %v1833 = vpop.f32.mrb[0].mxu0
    %v1834 = vadd.f32 0.0, %v1833
    %v1835 = vpop.f32.mrb[0].mxu0
    %v1836 = vpop.f32.mrb[0].mxu0
    %v1837 = vpop.f32.mrb[0].mxu0
    %1838 = vdwg.mxu0
    %v1840 = vrot.slane %v1834, 6
    %v1842 = vadd.f32 %v1614, %v1840
    %v1843 = vxor.u32 %v1842, 2147483648
    %v1844 = vmul.f32 %v1843, 1.442695
    %v1845 = vpow.pop %v1844
    %v1846 = vadd.f32 %v1845, 1.0
    %v1847 = vrcp.pop %v1846
    %v1848 = vmul.f32 1.0, %v1847
    %v1849 = vtanh.pop %v1842
    %v1851 = vrot.slane %v1777, 7
    %v1853 = vmul.f32 %v1848, %v1851
    %1855 = vrot.lane.b32.xlu0 %v1849, 64
    %v1856 = vpop.permute.xlu0 %1855
    %v1858 = vmul.f32 %v1848, %v1856
    %1860 = vrot.lane.b32.xlu0 %v1858, 32
    %v1861 = vpop.permute.xlu0 %1860
    %v1863 = vadd.f32 %v1853, %v1861
    %v1864 = vtanh.pop %v1863
    %1866 = vrot.lane.b32.xlu0 %v1864, 64
    %v1867 = vpop.permute.xlu0 %1866
    %v1869 = vmul.f32 %v1848, %v1867
    %1871 = vrot.lane.b32.xlu0 %v1869, 32
    %v1872 = vpop.permute.xlu0 %1871
    %vm1874 = vcmask 256002
    %1875 = vst.msk [vmem:[#allocation4] sm:$0x4] %vm1874, %v1872
    %v1876 = vpack.c.bf16 %v1869, %v1869
    %v1878 = vrot.slane %v1876, 1
    %1879 = vrot.lane.b32.xlu0 %v1878, 32
    %v1880 = vpop.permute.xlu0 %1879
    %v1882 = vsel %vm284, %v1880, 0
    %1884 = vmatprep.subr.bf16.mxu0 0
    %1885 = vmatpush1.bf16.msra.mxu0 %v1631
    %1886 = vmatprep.subr.bf16.mxu0 0
    %1887 = vmatpush1.bf16.msra.mxu0 %v1632
    %1888 = vmatprep.subr.bf16.mxu0 0
    %1889 = vmatpush1.bf16.msra.mxu0 0
    %1890 = vmatprep.subr.bf16.mxu0 0
    %1891 = vmatpush1.bf16.msra.mxu0 0
    %1892 = vmatprep.subr.bf16.mxu0 0
    %1893 = vmatpush1.bf16.msra.mxu0 0
    %1894 = vmatprep.subr.bf16.mxu0 0
    %1895 = vmatpush1.bf16.msra.mxu0 0
    %1896 = vmatprep.subr.bf16.mxu0 0
    %1897 = vmatpush1.bf16.msra.mxu0 0
    %1898 = vmatprep.subr.bf16.mxu0 0
    %1899 = vmatpush1.bf16.msra.mxu0 0
    %1900 = vmatprep.subr.bf16.mxu0 0
    %1901 = vmatpush1.bf16.msra.mxu0 0
    %1902 = vmatprep.subr.bf16.mxu0 0
    %1903 = vmatpush1.bf16.msra.mxu0 0
    %1904 = vmatprep.subr.bf16.mxu0 0
    %1905 = vmatpush1.bf16.msra.mxu0 0
    %1906 = vmatprep.subr.bf16.mxu0 0
    %1907 = vmatpush1.bf16.msra.mxu0 0
    %1908 = vmatprep.subr.bf16.mxu0 0
    %1909 = vmatpush1.bf16.msra.mxu0 0
    %1910 = vmatprep.subr.bf16.mxu0 0
    %1911 = vmatpush1.bf16.msra.mxu0 0
    %1912 = vmatprep.subr.bf16.mxu0 0
    %1913 = vmatpush1.bf16.msra.mxu0 0
    %1914 = vmatprep.subr.bf16.mxu0 0
    %1915 = vmatpush1.bf16.msra.mxu0 0
    %1916 = vmatprep.mubr.bf16.mxu0 0
    %1917 = vmatmul.mubr.bf16.gmra.mrb[0].mxu0 %v1882
    %v1918 = vpop.f32.mrb[0].mxu0
    %v1919 = vadd.f32 0.0, %v1918
    %v1920 = vpop.f32.mrb[0].mxu0
    %v1921 = vpop.f32.mrb[0].mxu0
    %v1922 = vpop.f32.mrb[0].mxu0
    %1923 = vdwg.mxu0
    %v1925 = vrot.slane %v1919, 5
    %v1927 = vadd.f32 %v1614, %v1925
    %v1928 = vxor.u32 %v1927, 2147483648
    %v1929 = vmul.f32 %v1928, 1.442695
    %v1930 = vpow.pop %v1929
    %v1931 = vadd.f32 %v1930, 1.0
    %v1932 = vrcp.pop %v1931
    %v1933 = vmul.f32 1.0, %v1932
    %v1934 = vtanh.pop %v1927
    %v1936 = vrot.slane %v1863, 7
    %v1938 = vmul.f32 %v1933, %v1936
    %1940 = vrot.lane.b32.xlu0 %v1934, 64
    %v1941 = vpop.permute.xlu0 %1940
    %v1943 = vmul.f32 %v1933, %v1941
    %1945 = vrot.lane.b32.xlu0 %v1943, 32
    %v1946 = vpop.permute.xlu0 %1945
    %v1948 = vadd.f32 %v1938, %v1946
    %v1949 = vtanh.pop %v1948
    %1951 = vrot.lane.b32.xlu0 %v1949, 64
    %v1952 = vpop.permute.xlu0 %1951
    %v1954 = vmul.f32 %v1933, %v1952
    %1956 = vrot.lane.b32.xlu0 %v1954, 32
    %v1957 = vpop.permute.xlu0 %1956
    %vm1959 = vcmask 257027
    %1960 = vst.msk [vmem:[#allocation4] sm:$0x8] %vm1959, %v1957
    %v1961 = vpack.c.bf16 %v1954, %v1954
    %v1963 = vshrl.u32 %v1961, 16
    %v1965 = vrot.slane %v1963, 1
    %1966 = vrot.lane.b32.xlu0 %v1965, 32
    %v1967 = vpop.permute.xlu0 %1966
    %v1969 = vsel %vm284, %v1967, 0
    %1971 = vmatprep.subr.bf16.mxu0 0
    %1972 = vmatpush1.bf16.msra.mxu0 %v1631
    %1973 = vmatprep.subr.bf16.mxu0 0
    %1974 = vmatpush1.bf16.msra.mxu0 %v1632
    %1975 = vmatprep.subr.bf16.mxu0 0
    %1976 = vmatpush1.bf16.msra.mxu0 0
    %1977 = vmatprep.subr.bf16.mxu0 0
    %1978 = vmatpush1.bf16.msra.mxu0 0
    %1979 = vmatprep.subr.bf16.mxu0 0
    %1980 = vmatpush1.bf16.msra.mxu0 0
    %1981 = vmatprep.subr.bf16.mxu0 0
    %1982 = vmatpush1.bf16.msra.mxu0 0
    %1983 = vmatprep.subr.bf16.mxu0 0
    %1984 = vmatpush1.bf16.msra.mxu0 0
    %1985 = vmatprep.subr.bf16.mxu0 0
    %1986 = vmatpush1.bf16.msra.mxu0 0
    %1987 = vmatprep.subr.bf16.mxu0 0
    %1988 = vmatpush1.bf16.msra.mxu0 0
    %1989 = vmatprep.subr.bf16.mxu0 0
    %1990 = vmatpush1.bf16.msra.mxu0 0
    %1991 = vmatprep.subr.bf16.mxu0 0
    %1992 = vmatpush1.bf16.msra.mxu0 0
    %1993 = vmatprep.subr.bf16.mxu0 0
    %1994 = vmatpush1.bf16.msra.mxu0 0
    %1995 = vmatprep.subr.bf16.mxu0 0
    %1996 = vmatpush1.bf16.msra.mxu0 0
    %1997 = vmatprep.subr.bf16.mxu0 0
    %1998 = vmatpush1.bf16.msra.mxu0 0
    %1999 = vmatprep.subr.bf16.mxu0 0
    %2000 = vmatpush1.bf16.msra.mxu0 0
    %2001 = vmatprep.subr.bf16.mxu0 0
    %2002 = vmatpush1.bf16.msra.mxu0 0
    %2003 = vmatprep.mubr.bf16.mxu0 0
    %2004 = vmatmul.mubr.bf16.gmra.mrb[0].mxu0 %v1969
    %v2005 = vpop.f32.mrb[0].mxu0
    %v2006 = vadd.f32 0.0, %v2005
    %v2007 = vpop.f32.mrb[0].mxu0
    %v2008 = vpop.f32.mrb[0].mxu0
    %v2009 = vpop.f32.mrb[0].mxu0
    %2010 = vdwg.mxu0
    %v2012 = vrot.slane %v2006, 4
    %v2014 = vadd.f32 %v1614, %v2012
    %v2015 = vxor.u32 %v2014, 2147483648
    %v2016 = vmul.f32 %v2015, 1.442695
    %v2017 = vpow.pop %v2016
    %v2018 = vadd.f32 %v2017, 1.0
    %v2019 = vrcp.pop %v2018
    %v2020 = vmul.f32 1.0, %v2019
    %v2021 = vtanh.pop %v2014
    %v2023 = vrot.slane %v1948, 7
    %v2025 = vmul.f32 %v2020, %v2023
    %2027 = vrot.lane.b32.xlu0 %v2021, 64
    %v2028 = vpop.permute.xlu0 %2027
    %v2030 = vmul.f32 %v2020, %v2028
    %2032 = vrot.lane.b32.xlu0 %v2030, 32
    %v2033 = vpop.permute.xlu0 %2032
    %v2035 = vadd.f32 %v2025, %v2033
    %v2036 = vtanh.pop %v2035
    %2038 = vrot.lane.b32.xlu0 %v2036, 64
    %v2039 = vpop.permute.xlu0 %2038
    %v2041 = vmul.f32 %v2020, %v2039
    %2043 = vrot.lane.b32.xlu0 %v2041, 32
    %v2044 = vpop.permute.xlu0 %2043
    %vm2046 = vcmask 258052
    %2047 = vst.msk [vmem:[#allocation4] sm:$0x10] %vm2046, %v2044
    %v2048 = vpack.c.bf16 %v2041, %v2041
    %v2050 = vrot.slane %v2048, 2
    %2051 = vrot.lane.b32.xlu0 %v2050, 32
    %v2052 = vpop.permute.xlu0 %2051
    %v2054 = vsel %vm284, %v2052, 0
    %2056 = vmatprep.subr.bf16.mxu0 0
    %2057 = vmatpush1.bf16.msra.mxu0 %v1631
    %2058 = vmatprep.subr.bf16.mxu0 0
    %2059 = vmatpush1.bf16.msra.mxu0 %v1632
    %2060 = vmatprep.subr.bf16.mxu0 0
    %2061 = vmatpush1.bf16.msra.mxu0 0
    %2062 = vmatprep.subr.bf16.mxu0 0
    %2063 = vmatpush1.bf16.msra.mxu0 0
    %2064 = vmatprep.subr.bf16.mxu0 0
    %2065 = vmatpush1.bf16.msra.mxu0 0
    %2066 = vmatprep.subr.bf16.mxu0 0
    %2067 = vmatpush1.bf16.msra.mxu0 0
    %2068 = vmatprep.subr.bf16.mxu0 0
    %2069 = vmatpush1.bf16.msra.mxu0 0
    %2070 = vmatprep.subr.bf16.mxu0 0
    %2071 = vmatpush1.bf16.msra.mxu0 0
    %2072 = vmatprep.subr.bf16.mxu0 0
    %2073 = vmatpush1.bf16.msra.mxu0 0
    %2074 = vmatprep.subr.bf16.mxu0 0
    %2075 = vmatpush1.bf16.msra.mxu0 0
    %2076 = vmatprep.subr.bf16.mxu0 0
    %2077 = vmatpush1.bf16.msra.mxu0 0
    %2078 = vmatprep.subr.bf16.mxu0 0
    %2079 = vmatpush1.bf16.msra.mxu0 0
    %2080 = vmatprep.subr.bf16.mxu0 0
    %2081 = vmatpush1.bf16.msra.mxu0 0
    %2082 = vmatprep.subr.bf16.mxu0 0
    %2083 = vmatpush1.bf16.msra.mxu0 0
    %2084 = vmatprep.subr.bf16.mxu0 0
    %2085 = vmatpush1.bf16.msra.mxu0 0
    %2086 = vmatprep.subr.bf16.mxu0 0
    %2087 = vmatpush1.bf16.msra.mxu0 0
    %2088 = vmatprep.mubr.bf16.mxu0 0
    %2089 = vmatmul.mubr.bf16.gmra.mrb[0].mxu0 %v2054
    %v2090 = vpop.f32.mrb[0].mxu0
    %v2091 = vadd.f32 0.0, %v2090
    %v2092 = vpop.f32.mrb[0].mxu0
    %v2093 = vpop.f32.mrb[0].mxu0
    %v2094 = vpop.f32.mrb[0].mxu0
    %2095 = vdwg.mxu0
    %v2097 = vrot.slane %v2091, 3
    %v2099 = vadd.f32 %v1614, %v2097
    %v2100 = vxor.u32 %v2099, 2147483648
    %v2101 = vmul.f32 %v2100, 1.442695
    %v2102 = vpow.pop %v2101
    %v2103 = vadd.f32 %v2102, 1.0
    %v2104 = vrcp.pop %v2103
    %v2105 = vmul.f32 1.0, %v2104
    %v2106 = vtanh.pop %v2099
    %v2108 = vrot.slane %v2035, 7
    %v2110 = vmul.f32 %v2105, %v2108
    %2112 = vrot.lane.b32.xlu0 %v2106, 64
    %v2113 = vpop.permute.xlu0 %2112
    %v2115 = vmul.f32 %v2105, %v2113
    %2117 = vrot.lane.b32.xlu0 %v2115, 32
    %v2118 = vpop.permute.xlu0 %2117
    %v2120 = vadd.f32 %v2110, %v2118
    %v2121 = vtanh.pop %v2120
    %2123 = vrot.lane.b32.xlu0 %v2121, 64
    %v2124 = vpop.permute.xlu0 %2123
    %v2126 = vmul.f32 %v2105, %v2124
    %2128 = vrot.lane.b32.xlu0 %v2126, 32
    %v2129 = vpop.permute.xlu0 %2128
    %vm2131 = vcmask 259077
    %2132 = vst.msk [vmem:[#allocation4] sm:$0x20] %vm2131, %v2129
    %v2133 = vpack.c.bf16 %v2126, %v2126
    %v2135 = vshrl.u32 %v2133, 16
    %v2137 = vrot.slane %v2135, 2
    %2138 = vrot.lane.b32.xlu0 %v2137, 32
    %v2139 = vpop.permute.xlu0 %2138
    %v2141 = vsel %vm284, %v2139, 0
    %2143 = vmatprep.subr.bf16.mxu0 0
    %2144 = vmatpush1.bf16.msra.mxu0 %v1631
    %2145 = vmatprep.subr.bf16.mxu0 0
    %2146 = vmatpush1.bf16.msra.mxu0 %v1632
    %2147 = vmatprep.subr.bf16.mxu0 0
    %2148 = vmatpush1.bf16.msra.mxu0 0
    %2149 = vmatprep.subr.bf16.mxu0 0
    %2150 = vmatpush1.bf16.msra.mxu0 0
    %2151 = vmatprep.subr.bf16.mxu0 0
    %2152 = vmatpush1.bf16.msra.mxu0 0
    %2153 = vmatprep.subr.bf16.mxu0 0
    %2154 = vmatpush1.bf16.msra.mxu0 0
    %2155 = vmatprep.subr.bf16.mxu0 0
    %2156 = vmatpush1.bf16.msra.mxu0 0
    %2157 = vmatprep.subr.bf16.mxu0 0
    %2158 = vmatpush1.bf16.msra.mxu0 0
    %2159 = vmatprep.subr.bf16.mxu0 0
    %2160 = vmatpush1.bf16.msra.mxu0 0
    %2161 = vmatprep.subr.bf16.mxu0 0
    %2162 = vmatpush1.bf16.msra.mxu0 0
    %2163 = vmatprep.subr.bf16.mxu0 0
    %2164 = vmatpush1.bf16.msra.mxu0 0
    %2165 = vmatprep.subr.bf16.mxu0 0
    %2166 = vmatpush1.bf16.msra.mxu0 0
    %2167 = vmatprep.subr.bf16.mxu0 0
    %2168 = vmatpush1.bf16.msra.mxu0 0
    %2169 = vmatprep.subr.bf16.mxu0 0
    %2170 = vmatpush1.bf16.msra.mxu0 0
    %2171 = vmatprep.subr.bf16.mxu0 0
    %2172 = vmatpush1.bf16.msra.mxu0 0
    %2173 = vmatprep.subr.bf16.mxu0 0
    %2174 = vmatpush1.bf16.msra.mxu0 0
    %2175 = vmatprep.mubr.bf16.mxu0 0
    %2176 = vmatmul.mubr.bf16.gmra.mrb[0].mxu0 %v2141
    %v2177 = vpop.f32.mrb[0].mxu0
    %v2178 = vadd.f32 0.0, %v2177
    %v2179 = vpop.f32.mrb[0].mxu0
    %v2180 = vpop.f32.mrb[0].mxu0
    %v2181 = vpop.f32.mrb[0].mxu0
    %2182 = vdwg.mxu0
    %v2184 = vrot.slane %v2178, 2
    %v2186 = vadd.f32 %v1614, %v2184
    %v2187 = vxor.u32 %v2186, 2147483648
    %v2188 = vmul.f32 %v2187, 1.442695
    %v2189 = vpow.pop %v2188
    %v2190 = vadd.f32 %v2189, 1.0
    %v2191 = vrcp.pop %v2190
    %v2192 = vmul.f32 1.0, %v2191
    %v2193 = vtanh.pop %v2186
    %v2195 = vrot.slane %v2120, 7
    %v2197 = vmul.f32 %v2192, %v2195
    %2199 = vrot.lane.b32.xlu0 %v2193, 64
    %v2200 = vpop.permute.xlu0 %2199
    %v2202 = vmul.f32 %v2192, %v2200
    %2204 = vrot.lane.b32.xlu0 %v2202, 32
    %v2205 = vpop.permute.xlu0 %2204
    %v2207 = vadd.f32 %v2197, %v2205
    %v2208 = vtanh.pop %v2207
    %2210 = vrot.lane.b32.xlu0 %v2208, 64
    %v2211 = vpop.permute.xlu0 %2210
    %v2213 = vmul.f32 %v2192, %v2211
    %2215 = vrot.lane.b32.xlu0 %v2213, 32
    %v2216 = vpop.permute.xlu0 %2215
    %vm2218 = vcmask 260102
    %2219 = vst.msk [vmem:[#allocation4] sm:$0x40] %vm2218, %v2216
    %v2220 = vpack.c.bf16 %v2213, %v2213
    %v2222 = vrot.slane %v2220, 3
    %2223 = vrot.lane.b32.xlu0 %v2222, 32
    %v2224 = vpop.permute.xlu0 %2223
    %v2226 = vsel %vm284, %v2224, 0
    %2228 = vmatprep.subr.bf16.mxu0 0
    %2229 = vmatpush1.bf16.msra.mxu0 %v1631
    %2230 = vmatprep.subr.bf16.mxu0 0
    %2231 = vmatpush1.bf16.msra.mxu0 %v1632
    %2232 = vmatprep.subr.bf16.mxu0 0
    %2233 = vmatpush1.bf16.msra.mxu0 0
    %2234 = vmatprep.subr.bf16.mxu0 0
    %2235 = vmatpush1.bf16.msra.mxu0 0
    %2236 = vmatprep.subr.bf16.mxu0 0
    %2237 = vmatpush1.bf16.msra.mxu0 0
    %2238 = vmatprep.subr.bf16.mxu0 0
    %2239 = vmatpush1.bf16.msra.mxu0 0
    %2240 = vmatprep.subr.bf16.mxu0 0
    %2241 = vmatpush1.bf16.msra.mxu0 0
    %2242 = vmatprep.subr.bf16.mxu0 0
    %2243 = vmatpush1.bf16.msra.mxu0 0
    %2244 = vmatprep.subr.bf16.mxu0 0
    %2245 = vmatpush1.bf16.msra.mxu0 0
    %2246 = vmatprep.subr.bf16.mxu0 0
    %2247 = vmatpush1.bf16.msra.mxu0 0
    %2248 = vmatprep.subr.bf16.mxu0 0
    %2249 = vmatpush1.bf16.msra.mxu0 0
    %2250 = vmatprep.subr.bf16.mxu0 0
    %2251 = vmatpush1.bf16.msra.mxu0 0
    %2252 = vmatprep.subr.bf16.mxu0 0
    %2253 = vmatpush1.bf16.msra.mxu0 0
    %2254 = vmatprep.subr.bf16.mxu0 0
    %2255 = vmatpush1.bf16.msra.mxu0 0
    %2256 = vmatprep.subr.bf16.mxu0 0
    %2257 = vmatpush1.bf16.msra.mxu0 0
    %2258 = vmatprep.subr.bf16.mxu0 0
    %2259 = vmatpush1.bf16.msra.mxu0 0
    %2260 = vmatprep.mubr.bf16.mxu0 0
    %2261 = vmatmul.mubr.bf16.gmra.mrb[0].mxu0 %v2226
    %v2262 = vpop.f32.mrb[0].mxu0
    %v2263 = vadd.f32 0.0, %v2262
    %v2264 = vpop.f32.mrb[0].mxu0
    %v2265 = vpop.f32.mrb[0].mxu0
    %v2266 = vpop.f32.mrb[0].mxu0
    %2267 = vdwg.mxu0
    %v2269 = vrot.slane %v2263, 1
    %v2271 = vadd.f32 %v1614, %v2269
    %v2272 = vxor.u32 %v2271, 2147483648
    %v2273 = vmul.f32 %v2272, 1.442695
    %v2274 = vpow.pop %v2273
    %v2275 = vadd.f32 %v2274, 1.0
    %v2276 = vrcp.pop %v2275
    %v2277 = vmul.f32 1.0, %v2276
    %v2278 = vtanh.pop %v2271
    %v2280 = vrot.slane %v2207, 7
    %v2282 = vmul.f32 %v2277, %v2280
    %2284 = vrot.lane.b32.xlu0 %v2278, 64
    %v2285 = vpop.permute.xlu0 %2284
    %v2287 = vmul.f32 %v2277, %v2285
    %2289 = vrot.lane.b32.xlu0 %v2287, 32
    %v2290 = vpop.permute.xlu0 %2289
    %v2292 = vadd.f32 %v2282, %v2290
    %v2293 = vtanh.pop %v2292
    %2295 = vrot.lane.b32.xlu0 %v2293, 64
    %v2296 = vpop.permute.xlu0 %2295
    %v2298 = vmul.f32 %v2277, %v2296
    %2300 = vrot.lane.b32.xlu0 %v2298, 32
    %v2301 = vpop.permute.xlu0 %2300
    %vm2303 = vcmask 261127
    %2304 = vst.msk [vmem:[#allocation4] sm:$0x80] %vm2303, %v2301
    %v2305 = vld [vmem:[#allocation4] sm:$0xff]
    %v2306 = vld [vmem:[%s31] sm:$0xf]
    %v2307 = vld [vmem:[%s31 + $0x4] sm:$0xf]
    %v2308 = vld [vmem:[%s31 + $0x8] sm:$0xf]
    %v2309 = vld [vmem:[%s31 + $0xc] sm:$0xf]
    %v2310 = vpack.c.bf16 %v2305, %v2305
    %v2311 = vld [vmem:[%s33] sm:$0x1]
    %v2313 = vlaneseq
    %v2314 = vshrl.u32 %v2313, 7
    %v2315 = vsub.s32 0, %v2314
    %v2316 = vrot.slane %v2311, %v2315
    %v2322 = vunpack.c.l.b16 %v2306
    %v2323 = vunpack.c.l.b16 %v2307
    %v2324 = vunpack.c.l.b16 %v2308
    %v2325 = vunpack.c.l.b16 %v2309
    %v2326 = vpack.c.b16 %v2323, %v2322
    %v2327 = vpack.c.b16 %v2325, %v2324
    %v2331 = vsel %vm284, %v2310, 0
    %2333 = vmatprep.subr.bf16.mxu0 0
    %2334 = vmatpush1.bf16.msra.mxu0 %v2326
    %2335 = vmatprep.subr.bf16.mxu0 0
    %2336 = vmatpush1.bf16.msra.mxu0 %v2327
    %2337 = vmatprep.subr.bf16.mxu0 0
    %2338 = vmatpush1.bf16.msra.mxu0 0
    %2339 = vmatprep.subr.bf16.mxu0 0
    %2340 = vmatpush1.bf16.msra.mxu0 0
    %2341 = vmatprep.subr.bf16.mxu0 0
    %2342 = vmatpush1.bf16.msra.mxu0 0
    %2343 = vmatprep.subr.bf16.mxu0 0
    %2344 = vmatpush1.bf16.msra.mxu0 0
    %2345 = vmatprep.subr.bf16.mxu0 0
    %2346 = vmatpush1.bf16.msra.mxu0 0
    %2347 = vmatprep.subr.bf16.mxu0 0
    %2348 = vmatpush1.bf16.msra.mxu0 0
    %2349 = vmatprep.subr.bf16.mxu0 0
    %2350 = vmatpush1.bf16.msra.mxu0 0
    %2351 = vmatprep.subr.bf16.mxu0 0
    %2352 = vmatpush1.bf16.msra.mxu0 0
    %2353 = vmatprep.subr.bf16.mxu0 0
    %2354 = vmatpush1.bf16.msra.mxu0 0
    %2355 = vmatprep.subr.bf16.mxu0 0
    %2356 = vmatpush1.bf16.msra.mxu0 0
    %2357 = vmatprep.subr.bf16.mxu0 0
    %2358 = vmatpush1.bf16.msra.mxu0 0
    %2359 = vmatprep.subr.bf16.mxu0 0
    %2360 = vmatpush1.bf16.msra.mxu0 0
    %2361 = vmatprep.subr.bf16.mxu0 0
    %2362 = vmatpush1.bf16.msra.mxu0 0
    %2363 = vmatprep.subr.bf16.mxu0 0
    %2364 = vmatpush1.bf16.msra.mxu0 0
    %2365 = vmatprep.mubr.bf16.mxu0 0
    %2366 = vmatmul.mubr.bf16.gmra.mrb[0].mxu0 %v2331
    %v2367 = vpop.f32.mrb[0].mxu0
    %v2368 = vadd.f32 %v2316, %v2367
    %v2369 = vpop.f32.mrb[0].mxu0
    %v2370 = vpop.f32.mrb[0].mxu0
    %v2371 = vpop.f32.mrb[0].mxu0
    %2372 = vdwg.mxu0
    %v2373 = vtanh.pop %v2368
    %v2374 = vld [vmem:[%s35] sm:$0xf]
    %v2375 = vld [vmem:[%s35 + $0x4] sm:$0xf]
    %v2376 = vld [vmem:[%s35 + $0x8] sm:$0xf]
    %v2377 = vld [vmem:[%s35 + $0xc] sm:$0xf]
    %v2378 = vpack.c.bf16 %v2373, %v2373
    %v2379 = vld [vmem:[#allocation6] sm:$0x1]
    %v2381 = vlaneseq
    %v2382 = vshrl.u32 %v2381, 7
    %v2383 = vsub.s32 0, %v2382
    %v2384 = vrot.slane %v2379, %v2383
    %v2390 = vunpack.c.l.b16 %v2374
    %v2391 = vunpack.c.l.b16 %v2375
    %v2392 = vunpack.c.l.b16 %v2376
    %v2393 = vunpack.c.l.b16 %v2377
    %v2394 = vpack.c.b16 %v2391, %v2390
    %v2395 = vpack.c.b16 %v2393, %v2392
    %v2399 = vsel %vm284, %v2378, 0
    %2401 = vmatprep.subr.bf16.mxu0 0
    %2402 = vmatpush1.bf16.msra.mxu0 %v2394
    %2403 = vmatprep.subr.bf16.mxu0 0
    %2404 = vmatpush1.bf16.msra.mxu0 %v2395
    %2405 = vmatprep.subr.bf16.mxu0 0
    %2406 = vmatpush1.bf16.msra.mxu0 0
    %2407 = vmatprep.subr.bf16.mxu0 0
    %2408 = vmatpush1.bf16.msra.mxu0 0
    %2409 = vmatprep.subr.bf16.mxu0 0
    %2410 = vmatpush1.bf16.msra.mxu0 0
    %2411 = vmatprep.subr.bf16.mxu0 0
    %2412 = vmatpush1.bf16.msra.mxu0 0
    %2413 = vmatprep.subr.bf16.mxu0 0
    %2414 = vmatpush1.bf16.msra.mxu0 0
    %2415 = vmatprep.subr.bf16.mxu0 0
    %2416 = vmatpush1.bf16.msra.mxu0 0
    %2417 = vmatprep.subr.bf16.mxu0 0
    %2418 = vmatpush1.bf16.msra.mxu0 0
    %2419 = vmatprep.subr.bf16.mxu0 0
    %2420 = vmatpush1.bf16.msra.mxu0 0
    %2421 = vmatprep.subr.bf16.mxu0 0
    %2422 = vmatpush1.bf16.msra.mxu0 0
    %2423 = vmatprep.subr.bf16.mxu0 0
    %2424 = vmatpush1.bf16.msra.mxu0 0
    %2425 = vmatprep.subr.bf16.mxu0 0
    %2426 = vmatpush1.bf16.msra.mxu0 0
    %2427 = vmatprep.subr.bf16.mxu0 0
    %2428 = vmatpush1.bf16.msra.mxu0 0
    %2429 = vmatprep.subr.bf16.mxu0 0
    %2430 = vmatpush1.bf16.msra.mxu0 0
    %2431 = vmatprep.subr.bf16.mxu0 0
    %2432 = vmatpush1.bf16.msra.mxu0 0
    %2433 = vmatprep.mubr.bf16.mxu0 0
    %2434 = vmatmul.mubr.bf16.gmra.mrb[0].mxu0 %v2399
    %v2435 = vpop.f32.mrb[0].mxu0
    %v2436 = vadd.f32 %v2384, %v2435
    %v2437 = vpop.f32.mrb[0].mxu0
    %v2438 = vpop.f32.mrb[0].mxu0
    %v2439 = vpop.f32.mrb[0].mxu0
    %2440 = vdwg.mxu0
    %vm2441 = vcmask 7168
    %v2442 = vsel %vm2441, %v2436, -inf
    %v2443 = vrot.slane %v2442, 4
    %v2444 = vmax.f32 %v2442, %v2443
    %v2445 = vrot.slane %v2444, 2
    %v2446 = vmax.f32 %v2444, %v2445
    %v2447 = vrot.slane %v2446, 1
    %v2448 = vmax.f32 %v2446, %v2447
    %v2449 = vsub.f32 %v2436, %v2448
    %v2450 = vmul.f32 %v2449, 1.442695
    %v2451 = vpow.pop %v2450
    %v2452 = vsel %vm2441, %v2451, 0.0
    %v2453 = vrot.slane %v2452, 4
    %v2454 = vadd.f32 %v2452, %v2453
    %v2455 = vrot.slane %v2454, 2
    %v2456 = vadd.f32 %v2454, %v2455
    %v2457 = vrot.slane %v2456, 1
    %v2458 = vadd.f32 %v2456, %v2457
    %v2459 = vrcp.pop %v2458
    %v2460 = vmul.f32 %v2451, %v2459
    %2462 = vset.pattern.permute.xlu0 0
    %2463 = vperm.xlu0 %2462, %v2460
    %v2464 = vpop.permute.xlu0 %2463
    %v2466 = vmul.f32 %v2305, %v2464
    %v2467 = vsel %vm284, %v2466, 0.0
    %v2468 = vrot.slane %v2467, 4
    %v2469 = vadd.f32 %v2467, %v2468
    %v2470 = vrot.slane %v2469, 2
    %v2471 = vadd.f32 %v2469, %v2470
    %v2472 = vrot.slane %v2471, 1
    %v2473 = vadd.f32 %v2471, %v2472
    %v2474 = vld [vmem:[%s39] sm:$0xf]
    %v2475 = vld [vmem:[%s39 + $0x4] sm:$0xf]
    %v2476 = vld [vmem:[%s39 + $0x8] sm:$0xf]
    %v2477 = vld [vmem:[%s39 + $0xc] sm:$0xf]
    %v2478 = vld [vmem:[%s43] sm:$0x1]
    %v2480 = vlaneseq
    %v2481 = vshrl.u32 %v2480, 7
    %v2482 = vsub.s32 0, %v2481
    %v2483 = vrot.slane %v2478, %v2482
    %v2489 = vunpack.c.l.b16 %v2474
    %v2490 = vunpack.c.l.b16 %v2475
    %v2491 = vunpack.c.l.b16 %v2476
    %v2492 = vunpack.c.l.b16 %v2477
    %v2493 = vpack.c.b16 %v2490, %v2489
    %v2494 = vpack.c.b16 %v2492, %v2491
    %2497 = vmatprep.subr.bf16.mxu0 0
    %2498 = vmatpush1.bf16.msra.mxu0 %v2493
    %2499 = vmatprep.subr.bf16.mxu0 0
    %2500 = vmatpush1.bf16.msra.mxu0 %v2494
    %2501 = vmatprep.subr.bf16.mxu0 0
    %2502 = vmatpush1.bf16.msra.mxu0 0
    %2503 = vmatprep.subr.bf16.mxu0 0
    %2504 = vmatpush1.bf16.msra.mxu0 0
    %2505 = vmatprep.subr.bf16.mxu0 0
    %2506 = vmatpush1.bf16.msra.mxu0 0
    %2507 = vmatprep.subr.bf16.mxu0 0
    %2508 = vmatpush1.bf16.msra.mxu0 0
    %2509 = vmatprep.subr.bf16.mxu0 0
    %2510 = vmatpush1.bf16.msra.mxu0 0
    %2511 = vmatprep.subr.bf16.mxu0 0
    %2512 = vmatpush1.bf16.msra.mxu0 0
    %2513 = vmatprep.subr.bf16.mxu0 0
    %2514 = vmatpush1.bf16.msra.mxu0 0
    %2515 = vmatprep.subr.bf16.mxu0 0
    %2516 = vmatpush1.bf16.msra.mxu0 0
    %2517 = vmatprep.subr.bf16.mxu0 0
    %2518 = vmatpush1.bf16.msra.mxu0 0
    %2519 = vmatprep.subr.bf16.mxu0 0
    %2520 = vmatpush1.bf16.msra.mxu0 0
    %2521 = vmatprep.subr.bf16.mxu0 0
    %2522 = vmatpush1.bf16.msra.mxu0 0
    %2523 = vmatprep.subr.bf16.mxu0 0
    %2524 = vmatpush1.bf16.msra.mxu0 0
    %2525 = vmatprep.subr.bf16.mxu0 0
    %2526 = vmatpush1.bf16.msra.mxu0 0
    %2527 = vmatprep.subr.bf16.mxu0 0
    %2528 = vmatpush1.bf16.msra.mxu0 0
    %2529 = vmatprep.mubr.bf16.mxu0 0
    %2530 = vmatmul.mubr.bf16.gmra.mrb[0].mxu0 %v2331
    %v2531 = vpop.f32.mrb[0].mxu0
    %v2532 = vadd.f32 %v2483, %v2531
    %v2533 = vpop.f32.mrb[0].mxu0
    %v2534 = vpop.f32.mrb[0].mxu0
    %v2535 = vpop.f32.mrb[0].mxu0
    %2536 = vdwg.mxu0
    %v2537 = vld [vmem:[%s41] sm:$0xf]
    %v2538 = vld [vmem:[%s41 + $0x4] sm:$0xf]
    %v2539 = vld [vmem:[%s41 + $0x8] sm:$0xf]
    %v2540 = vld [vmem:[%s41 + $0xc] sm:$0xf]
    %v2541 = vld [vmem:[%s45] sm:$0xf]
    %v2542 = vld [vmem:[%s45 + $0x4] sm:$0xf]
    %v2543 = vld [vmem:[%s45 + $0x8] sm:$0xf]
    %v2544 = vld [vmem:[%s45 + $0xc] sm:$0xf]
    %v2549 = vunpack.c.l.b16 %v2541
    %v2550 = vunpack.c.l.b16 %v2542
    %v2551 = vunpack.c.l.b16 %v2543
    %v2552 = vunpack.c.l.b16 %v2544
    %v2553 = vpack.c.b16 %v2550, %v2549
    %v2554 = vpack.c.b16 %v2552, %v2551
    %2557 = vmatprep.subr.bf16.mxu0 0
    %2558 = vmatpush1.bf16.msra.mxu0 %v2553
    %2559 = vmatprep.subr.bf16.mxu0 0
    %2560 = vmatpush1.bf16.msra.mxu0 %v2554
    %2561 = vmatprep.subr.bf16.mxu0 0
    %2562 = vmatpush1.bf16.msra.mxu0 0
    %2563 = vmatprep.subr.bf16.mxu0 0
    %2564 = vmatpush1.bf16.msra.mxu0 0
    %2565 = vmatprep.subr.bf16.mxu0 0
    %2566 = vmatpush1.bf16.msra.mxu0 0
    %2567 = vmatprep.subr.bf16.mxu0 0
    %2568 = vmatpush1.bf16.msra.mxu0 0
    %2569 = vmatprep.subr.bf16.mxu0 0
    %2570 = vmatpush1.bf16.msra.mxu0 0
    %2571 = vmatprep.subr.bf16.mxu0 0
    %2572 = vmatpush1.bf16.msra.mxu0 0
    %2573 = vmatprep.subr.bf16.mxu0 0
    %2574 = vmatpush1.bf16.msra.mxu0 0
    %2575 = vmatprep.subr.bf16.mxu0 0
    %2576 = vmatpush1.bf16.msra.mxu0 0
    %2577 = vmatprep.subr.bf16.mxu0 0
    %2578 = vmatpush1.bf16.msra.mxu0 0
    %2579 = vmatprep.subr.bf16.mxu0 0
    %2580 = vmatpush1.bf16.msra.mxu0 0
    %2581 = vmatprep.subr.bf16.mxu0 0
    %2582 = vmatpush1.bf16.msra.mxu0 0
    %2583 = vmatprep.subr.bf16.mxu0 0
    %2584 = vmatpush1.bf16.msra.mxu0 0
    %2585 = vmatprep.subr.bf16.mxu0 0
    %2586 = vmatpush1.bf16.msra.mxu0 0
    %2587 = vmatprep.subr.bf16.mxu0 0
    %2588 = vmatpush1.bf16.msra.mxu0 0
    %2589 = vmatprep.mubr.bf16.mxu0 0
    %2590 = vmatmul.mubr.bf16.gmra.mrb[0].mxu0 %v2331
    %v2591 = vpop.f32.mrb[0].mxu0
    %v2592 = vadd.f32 0.0, %v2591
    %v2593 = vpop.f32.mrb[0].mxu0
    %v2594 = vpop.f32.mrb[0].mxu0
    %v2595 = vpop.f32.mrb[0].mxu0
    %2596 = vdwg.mxu0
    %v2597 = vld [vmem:[%s47] sm:$0xf]
    %v2598 = vld [vmem:[%s47 + $0x4] sm:$0xf]
    %v2599 = vld [vmem:[%s47 + $0x8] sm:$0xf]
    %v2600 = vld [vmem:[%s47 + $0xc] sm:$0xf]
    %v2601 = vld [vmem:[%s49] sm:$0x1]
    %v2602 = vld [vmem:[#allocation7] sm:$0x1]
    %v2603 = vlaneseq
    %v2604 = vshrl.u32 %v2603, 7
    %v2605 = vcvt.s32.f32 %v2604
    %v2606 = vpack.c.bf16 %v2473, %v2473
    %v2611 = vunpack.c.l.b16 %v2537
    %v2612 = vunpack.c.l.b16 %v2538
    %v2613 = vunpack.c.l.b16 %v2539
    %v2614 = vunpack.c.l.b16 %v2540
    %v2615 = vpack.c.b16 %v2612, %v2611
    %v2616 = vpack.c.b16 %v2614, %v2613
    %v2620 = vsel %vm284, %v2606, 0
    %2622 = vmatprep.subr.bf16.mxu0 0
    %2623 = vmatpush1.bf16.msra.mxu0 %v2615
    %2624 = vmatprep.subr.bf16.mxu0 0
    %2625 = vmatpush1.bf16.msra.mxu0 %v2616
    %2626 = vmatprep.subr.bf16.mxu0 0
    %2627 = vmatpush1.bf16.msra.mxu0 0
    %2628 = vmatprep.subr.bf16.mxu0 0
    %2629 = vmatpush1.bf16.msra.mxu0 0
    %2630 = vmatprep.subr.bf16.mxu0 0
    %2631 = vmatpush1.bf16.msra.mxu0 0
    %2632 = vmatprep.subr.bf16.mxu0 0
    %2633 = vmatpush1.bf16.msra.mxu0 0
    %2634 = vmatprep.subr.bf16.mxu0 0
    %2635 = vmatpush1.bf16.msra.mxu0 0
    %2636 = vmatprep.subr.bf16.mxu0 0
    %2637 = vmatpush1.bf16.msra.mxu0 0
    %2638 = vmatprep.subr.bf16.mxu0 0
    %2639 = vmatpush1.bf16.msra.mxu0 0
    %2640 = vmatprep.subr.bf16.mxu0 0
    %2641 = vmatpush1.bf16.msra.mxu0 0
    %2642 = vmatprep.subr.bf16.mxu0 0
    %2643 = vmatpush1.bf16.msra.mxu0 0
    %2644 = vmatprep.subr.bf16.mxu0 0
    %2645 = vmatpush1.bf16.msra.mxu0 0
    %2646 = vmatprep.subr.bf16.mxu0 0
    %2647 = vmatpush1.bf16.msra.mxu0 0
    %2648 = vmatprep.subr.bf16.mxu0 0
    %2649 = vmatpush1.bf16.msra.mxu0 0
    %2650 = vmatprep.subr.bf16.mxu0 0
    %2651 = vmatpush1.bf16.msra.mxu0 0
    %2652 = vmatprep.subr.bf16.mxu0 0
    %2653 = vmatpush1.bf16.msra.mxu0 0
    %2654 = vmatprep.mubr.bf16.mxu0 0
    %2655 = vmatmul.mubr.bf16.gmra.mrb[0].mxu0 %v2620
    %v2656 = vpop.f32.mrb[0].mxu0
    %v2657 = vadd.f32 0.0, %v2656
    %v2658 = vpop.f32.mrb[0].mxu0
    %v2659 = vpop.f32.mrb[0].mxu0
    %v2660 = vpop.f32.mrb[0].mxu0
    %2661 = vdwg.mxu0
    %v2663 = vrot.slane %v2657, 6
    %v2665 = vadd.f32 %v2532, %v2663
    %v2666 = vxor.u32 %v2665, 2147483648
    %v2667 = vmul.f32 %v2666, 1.442695
    %v2668 = vpow.pop %v2667
    %v2669 = vadd.f32 %v2668, 1.0
    %v2670 = vrcp.pop %v2669
    %v2671 = vmul.f32 1.0, %v2670
    %v2672 = vtanh.pop %v2665
    %2674 = vrot.lane.b32.xlu0 %v2473, 32
    %v2675 = vpop.permute.xlu0 %2674
    %v2677 = vmul.f32 %v2671, %v2675
    %2679 = vrot.lane.b32.xlu0 %v2672, 64
    %v2680 = vpop.permute.xlu0 %2679
    %v2682 = vmul.f32 %v2671, %v2680
    %2684 = vrot.lane.b32.xlu0 %v2682, 32
    %v2685 = vpop.permute.xlu0 %2684
    %v2687 = vadd.f32 %v2677, %v2685
    %v2688 = vtanh.pop %v2687
    %2690 = vrot.lane.b32.xlu0 %v2688, 64
    %v2691 = vpop.permute.xlu0 %2690
    %v2693 = vmul.f32 %v2671, %v2691
    %v2694 = vpack.c.bf16 %v2693, %v2693
    %v2696 = vrot.slane %v2694, 1
    %2697 = vrot.lane.b32.xlu0 %v2696, 32
    %v2698 = vpop.permute.xlu0 %2697
    %v2703 = vunpack.c.l.b16 %v2597
    %v2704 = vunpack.c.l.b16 %v2598
    %v2705 = vunpack.c.l.b16 %v2599
    %v2706 = vunpack.c.l.b16 %v2600
    %v2707 = vpack.c.b16 %v2704, %v2703
    %v2708 = vpack.c.b16 %v2706, %v2705
    %v2712 = vsel %vm284, %v2698, 0
    %2714 = vmatprep.subr.bf16.mxu0 0
    %2715 = vmatpush1.bf16.msra.mxu0 %v2707
    %2716 = vmatprep.subr.bf16.mxu0 0
    %2717 = vmatpush1.bf16.msra.mxu0 %v2708
    %2718 = vmatprep.subr.bf16.mxu0 0
    %2719 = vmatpush1.bf16.msra.mxu0 0
    %2720 = vmatprep.subr.bf16.mxu0 0
    %2721 = vmatpush1.bf16.msra.mxu0 0
    %2722 = vmatprep.subr.bf16.mxu0 0
    %2723 = vmatpush1.bf16.msra.mxu0 0
    %2724 = vmatprep.subr.bf16.mxu0 0
    %2725 = vmatpush1.bf16.msra.mxu0 0
    %2726 = vmatprep.subr.bf16.mxu0 0
    %2727 = vmatpush1.bf16.msra.mxu0 0
    %2728 = vmatprep.subr.bf16.mxu0 0
    %2729 = vmatpush1.bf16.msra.mxu0 0
    %2730 = vmatprep.subr.bf16.mxu0 0
    %2731 = vmatpush1.bf16.msra.mxu0 0
    %2732 = vmatprep.subr.bf16.mxu0 0
    %2733 = vmatpush1.bf16.msra.mxu0 0
    %2734 = vmatprep.subr.bf16.mxu0 0
    %2735 = vmatpush1.bf16.msra.mxu0 0
    %2736 = vmatprep.subr.bf16.mxu0 0
    %2737 = vmatpush1.bf16.msra.mxu0 0
    %2738 = vmatprep.subr.bf16.mxu0 0
    %2739 = vmatpush1.bf16.msra.mxu0 0
    %2740 = vmatprep.subr.bf16.mxu0 0
    %2741 = vmatpush1.bf16.msra.mxu0 0
    %2742 = vmatprep.subr.bf16.mxu0 0
    %2743 = vmatpush1.bf16.msra.mxu0 0
    %2744 = vmatprep.subr.bf16.mxu0 0
    %2745 = vmatpush1.bf16.msra.mxu0 0
    %2746 = vmatprep.mubr.bf16.mxu0 0
    %2747 = vmatmul.mubr.bf16.gmra.mrb[0].mxu0 %v2712
    %v2748 = vpop.f32.mrb[0].mxu0
    %v2749 = vadd.f32 0.0, %v2748
    %v2750 = vpop.f32.mrb[0].mxu0
    %v2751 = vpop.f32.mrb[0].mxu0
    %v2752 = vpop.f32.mrb[0].mxu0
    %2753 = vdwg.mxu0
    %v2754 = vlaneseq
    %v2755 = vshrl.u32 %v2754, 7
    %v2756 = vsub.s32 0, %v2755
    %v2757 = vrot.slane %v2749, %v2756
    %v2758 = vmul.f32 %v2592, %v2757
    %v2759 = vtanh.pop %v2758
    %v2761 = vlaneseq
    %v2762 = vshrl.u32 %v2761, 7
    %v2763 = vsub.s32 0, %v2762
    %v2764 = vrot.slane %v2601, %v2763
    %v2766 = vmul.f32 %v2759, %v2764
    %v2767 = vsub.f32 %v2592, %v2757
    %v2768 = vtanh.pop %v2767
    %2769 = vrot.lane.b32.xlu0 %v2764, 96
    %v2770 = vpop.permute.xlu0 %2769
    %v2772 = vmul.f32 %v2768, %v2770
    %v2773 = vadd.f32 %v2766, %v2772
    %v2774 = vsel %vm284, %v2773, 0.0
    %2775 = vadd.xlane.f32.xlu0 %v2774
    %v2776 = vpop.xlane.xlu0 %2775
    %v2778 = vlaneseq
    %v2779 = vshrl.u32 %v2778, 7
    %v2780 = vsub.s32 0, %v2779
    %v2781 = vrot.slane %v2602, %v2780
    %v2783 = vadd.f32 %v2776, %v2781
    %vm2784 = vcmp.lt.s32.totalorder %v2604, 2
    %v2785 = vsub.f32 %v2783, 10000.0
    %v2786 = vsel %vm2784, %v2783, %v2785
    %v2787 = vsel %vm2441, %v2786, -inf
    %v2788 = vrot.slane %v2787, 4
    %v2789 = vmax.f32 %v2787, %v2788
    %v2790 = vrot.slane %v2789, 2
    %v2791 = vmax.f32 %v2789, %v2790
    %v2792 = vrot.slane %v2791, 1
    %v2793 = vmax.f32 %v2791, %v2792
    %vm2794 = vcmp.ge.f32.partialorder %v2786, %v2793
    %v2795 = vsel %vm2794, %v2605, 8.0
    %v2796 = vsel %vm2441, %v2795, inf
    %v2797 = vrot.slane %v2796, 4
    %v2798 = vmin.f32 %v2796, %v2797
    %v2799 = vrot.slane %v2798, 2
    %v2800 = vmin.f32 %v2798, %v2799
    %v2801 = vrot.slane %v2800, 1
    %v2802 = vmin.f32 %v2800, %v2801
    %v2803 = vcvt.f32.s32.to.zero.pseudo %v2802
    %vm2804 = vcmp.lt.s32.totalorder %v2803, 1
    %v2805 = vsel %vm2804, %v2803, 1
    %s2806 = scalar_lea.vmem %s5, 16
    %v2807 = vld [vmem:[%s2806] sm:$0xff]
    %v2808 = vadd.f32 %v2786, %v2807
    %v2809 = vsel %vm2441, %v2808, -inf
    %v2810 = vrot.slane %v2809, 4
    %v2811 = vmax.f32 %v2809, %v2810
    %v2812 = vrot.slane %v2811, 2
    %v2813 = vmax.f32 %v2811, %v2812
    %v2814 = vrot.slane %v2813, 1
    %v2815 = vmax.f32 %v2813, %v2814
    %vm2816 = vcmp.ge.f32.partialorder %v2808, %v2815
    %v2817 = vsel %vm2816, %v2605, 8.0
    %v2818 = vsel %vm2441, %v2817, inf
    %v2819 = vrot.slane %v2818, 4
    %v2820 = vmin.f32 %v2818, %v2819
    %v2821 = vrot.slane %v2820, 2
    %v2822 = vmin.f32 %v2820, %v2821
    %v2823 = vrot.slane %v2822, 1
    %v2824 = vmin.f32 %v2822, %v2823
    %v2825 = vcvt.f32.s32.to.zero.pseudo %v2824
    %vm2826 = vcmp.lt.s32.totalorder %v2825, 1
    %v2827 = vsel %vm2826, %v2825, 1
    %v2828 = vsel %vm2784, %v2783, -1e+30
    %v2829 = vsel %vm2441, %v2828, -inf
    %v2830 = vrot.slane %v2829, 4
    %v2831 = vmax.f32 %v2829, %v2830
    %v2832 = vrot.slane %v2831, 2
    %v2833 = vmax.f32 %v2831, %v2832
    %v2834 = vrot.slane %v2833, 1
    %v2835 = vmax.f32 %v2833, %v2834
    %v2836 = vsub.f32 %v2783, %v2835
    %v2837 = vmul.f32 %v2836, 1.442695
    %v2838 = vpow.pop %v2837
    %v2839 = vsel %vm2784, %v2838, 0.0
    %v2840 = vsel %vm2441, %v2839, 0.0
    %v2841 = vrot.slane %v2840, 4
    %v2842 = vadd.f32 %v2840, %v2841
    %v2843 = vrot.slane %v2842, 2
    %v2844 = vadd.f32 %v2842, %v2843
    %v2845 = vrot.slane %v2844, 1
    %v2846 = vadd.f32 %v2844, %v2845
    %v2847 = vlog2.pop %v2846
    %v2848 = vmul.f32 %v2847, 0.6931472
    %v2849 = vadd.f32 %v2835, %v2848
    %vm2850 = vcmp.eq.s32.totalorder %v2604, %v2827
    %v2851 = vsel %vm2850, %v2783, 0.0
    %v2852 = vsel %vm2441, %v2851, 0.0
    %v2853 = vrot.slane %v2852, 4
    %v2854 = vadd.f32 %v2852, %v2853
    %v2855 = vrot.slane %v2854, 2
    %v2856 = vadd.f32 %v2854, %v2855
    %v2857 = vrot.slane %v2856, 1
    %v2858 = vadd.f32 %v2856, %v2857
    %v2859 = vsub.f32 %v2849, %v2858
    %v2860 = vadd.f32 %v2859, 0.0
    %vm2861 = vcmp.eq.s32.totalorder %v2604, 2
    %v2862 = vsel %vm2861, %v2827, 0
    %v2863 = vsel %vm2861, %v2805, 0
    %2864 = vmatprep.subr.bf16.mxu0 0
    %2865 = vmatpush1.bf16.msra.mxu0 %v2615
    %2866 = vmatprep.subr.bf16.mxu0 0
    %2867 = vmatpush1.bf16.msra.mxu0 %v2616
    %2868 = vmatprep.subr.bf16.mxu0 0
    %2869 = vmatpush1.bf16.msra.mxu0 0
    %2870 = vmatprep.subr.bf16.mxu0 0
    %2871 = vmatpush1.bf16.msra.mxu0 0
    %2872 = vmatprep.subr.bf16.mxu0 0
    %2873 = vmatpush1.bf16.msra.mxu0 0
    %2874 = vmatprep.subr.bf16.mxu0 0
    %2875 = vmatpush1.bf16.msra.mxu0 0
    %2876 = vmatprep.subr.bf16.mxu0 0
    %2877 = vmatpush1.bf16.msra.mxu0 0
    %2878 = vmatprep.subr.bf16.mxu0 0
    %2879 = vmatpush1.bf16.msra.mxu0 0
    %2880 = vmatprep.subr.bf16.mxu0 0
    %2881 = vmatpush1.bf16.msra.mxu0 0
    %2882 = vmatprep.subr.bf16.mxu0 0
    %2883 = vmatpush1.bf16.msra.mxu0 0
    %2884 = vmatprep.subr.bf16.mxu0 0
    %2885 = vmatpush1.bf16.msra.mxu0 0
    %2886 = vmatprep.subr.bf16.mxu0 0
    %2887 = vmatpush1.bf16.msra.mxu0 0
    %2888 = vmatprep.subr.bf16.mxu0 0
    %2889 = vmatpush1.bf16.msra.mxu0 0
    %2890 = vmatprep.subr.bf16.mxu0 0
    %2891 = vmatpush1.bf16.msra.mxu0 0
    %2892 = vmatprep.subr.bf16.mxu0 0
    %2893 = vmatpush1.bf16.msra.mxu0 0
    %2894 = vmatprep.subr.bf16.mxu0 0
    %2895 = vmatpush1.bf16.msra.mxu0 0
    %2896 = vmatprep.mubr.bf16.mxu0 0
    %2897 = vmatmul.mubr.bf16.gmra.mrb[0].mxu0 %v2712
    %v2898 = vpop.f32.mrb[0].mxu0
    %v2899 = vadd.f32 0.0, %v2898
    %v2900 = vpop.f32.mrb[0].mxu0
    %v2901 = vpop.f32.mrb[0].mxu0
    %v2902 = vpop.f32.mrb[0].mxu0
    %2903 = vdwg.mxu0
    %v2905 = vrot.slane %v2899, 5
    %v2907 = vadd.f32 %v2532, %v2905
    %v2908 = vxor.u32 %v2907, 2147483648
    %v2909 = vmul.f32 %v2908, 1.442695
    %v2910 = vpow.pop %v2909
    %v2911 = vadd.f32 %v2910, 1.0
    %v2912 = vrcp.pop %v2911
    %v2913 = vmul.f32 1.0, %v2912
    %v2914 = vtanh.pop %v2907
    %v2916 = vrot.slane %v2687, 7
    %v2918 = vmul.f32 %v2913, %v2916
    %2920 = vrot.lane.b32.xlu0 %v2914, 64
    %v2921 = vpop.permute.xlu0 %2920
    %v2923 = vmul.f32 %v2913, %v2921
    %2925 = vrot.lane.b32.xlu0 %v2923, 32
    %v2926 = vpop.permute.xlu0 %2925
    %v2928 = vadd.f32 %v2918, %v2926
    %v2929 = vtanh.pop %v2928
    %2931 = vrot.lane.b32.xlu0 %v2929, 64
    %v2932 = vpop.permute.xlu0 %2931
    %v2934 = vmul.f32 %v2913, %v2932
    %v2935 = vpack.c.bf16 %v2934, %v2934
    %v2937 = vshrl.u32 %v2935, 16
    %v2939 = vrot.slane %v2937, 1
    %2940 = vrot.lane.b32.xlu0 %v2939, 32
    %v2941 = vpop.permute.xlu0 %2940
    %v2943 = vsel %vm284, %v2941, 0
    %2945 = vmatprep.subr.bf16.mxu0 0
    %2946 = vmatpush1.bf16.msra.mxu0 %v2707
    %2947 = vmatprep.subr.bf16.mxu0 0
    %2948 = vmatpush1.bf16.msra.mxu0 %v2708
    %2949 = vmatprep.subr.bf16.mxu0 0
    %2950 = vmatpush1.bf16.msra.mxu0 0
    %2951 = vmatprep.subr.bf16.mxu0 0
    %2952 = vmatpush1.bf16.msra.mxu0 0
    %2953 = vmatprep.subr.bf16.mxu0 0
    %2954 = vmatpush1.bf16.msra.mxu0 0
    %2955 = vmatprep.subr.bf16.mxu0 0
    %2956 = vmatpush1.bf16.msra.mxu0 0
    %2957 = vmatprep.subr.bf16.mxu0 0
    %2958 = vmatpush1.bf16.msra.mxu0 0
    %2959 = vmatprep.subr.bf16.mxu0 0
    %2960 = vmatpush1.bf16.msra.mxu0 0
    %2961 = vmatprep.subr.bf16.mxu0 0
    %2962 = vmatpush1.bf16.msra.mxu0 0
    %2963 = vmatprep.subr.bf16.mxu0 0
    %2964 = vmatpush1.bf16.msra.mxu0 0
    %2965 = vmatprep.subr.bf16.mxu0 0
    %2966 = vmatpush1.bf16.msra.mxu0 0
    %2967 = vmatprep.subr.bf16.mxu0 0
    %2968 = vmatpush1.bf16.msra.mxu0 0
    %2969 = vmatprep.subr.bf16.mxu0 0
    %2970 = vmatpush1.bf16.msra.mxu0 0
    %2971 = vmatprep.subr.bf16.mxu0 0
    %2972 = vmatpush1.bf16.msra.mxu0 0
    %2973 = vmatprep.subr.bf16.mxu0 0
    %2974 = vmatpush1.bf16.msra.mxu0 0
    %2975 = vmatprep.subr.bf16.mxu0 0
    %2976 = vmatpush1.bf16.msra.mxu0 0
    %2977 = vmatprep.mubr.bf16.mxu0 0
    %2978 = vmatmul.mubr.bf16.gmra.mrb[0].mxu0 %v2943
    %v2979 = vpop.f32.mrb[0].mxu0
    %v2980 = vadd.f32 0.0, %v2979
    %v2981 = vpop.f32.mrb[0].mxu0
    %v2982 = vpop.f32.mrb[0].mxu0
    %v2983 = vpop.f32.mrb[0].mxu0
    %2984 = vdwg.mxu0
    %v2985 = vlaneseq
    %v2986 = vshrl.u32 %v2985, 7
    %v2987 = vsub.s32 0, %v2986
    %v2988 = vrot.slane %v2980, %v2987
    %v2989 = vmul.f32 %v2592, %v2988
    %v2990 = vtanh.pop %v2989
    %v2991 = vmul.f32 %v2990, %v2764
    %v2992 = vsub.f32 %v2592, %v2988
    %v2993 = vtanh.pop %v2992
    %v2994 = vmul.f32 %v2993, %v2770
    %v2995 = vadd.f32 %v2991, %v2994
    %v2996 = vsel %vm284, %v2995, 0.0
    %2997 = vadd.xlane.f32.xlu0 %v2996
    %v2998 = vpop.xlane.xlu0 %2997
    %v2999 = vadd.f32 %v2998, %v2781
    %vm3000 = vcmp.lt.s32.totalorder %v2604, 3
    %v3001 = vsub.f32 %v2999, 10000.0
    %v3002 = vsel %vm3000, %v2999, %v3001
    %v3003 = vsel %vm2441, %v3002, -inf
    %v3004 = vrot.slane %v3003, 4
    %v3005 = vmax.f32 %v3003, %v3004
    %v3006 = vrot.slane %v3005, 2
    %v3007 = vmax.f32 %v3005, %v3006
    %v3008 = vrot.slane %v3007, 1
    %v3009 = vmax.f32 %v3007, %v3008
    %vm3010 = vcmp.ge.f32.partialorder %v3002, %v3009
    %v3011 = vsel %vm3010, %v2605, 8.0
    %v3012 = vsel %vm2441, %v3011, inf
    %v3013 = vrot.slane %v3012, 4
    %v3014 = vmin.f32 %v3012, %v3013
    %v3015 = vrot.slane %v3014, 2
    %v3016 = vmin.f32 %v3014, %v3015
    %v3017 = vrot.slane %v3016, 1
    %v3018 = vmin.f32 %v3016, %v3017
    %v3019 = vcvt.f32.s32.to.zero.pseudo %v3018
    %vm3020 = vcmp.lt.s32.totalorder %v3019, 2
    %v3021 = vsel %vm3020, %v3019, 2
    %s3022 = scalar_lea.vmem %s5, 24
    %v3023 = vld [vmem:[%s3022] sm:$0xff]
    %v3024 = vadd.f32 %v3002, %v3023
    %v3025 = vsel %vm2441, %v3024, -inf
    %v3026 = vrot.slane %v3025, 4
    %v3027 = vmax.f32 %v3025, %v3026
    %v3028 = vrot.slane %v3027, 2
    %v3029 = vmax.f32 %v3027, %v3028
    %v3030 = vrot.slane %v3029, 1
    %v3031 = vmax.f32 %v3029, %v3030
    %vm3032 = vcmp.ge.f32.partialorder %v3024, %v3031
    %v3033 = vsel %vm3032, %v2605, 8.0
    %v3034 = vsel %vm2441, %v3033, inf
    %v3035 = vrot.slane %v3034, 4
    %v3036 = vmin.f32 %v3034, %v3035
    %v3037 = vrot.slane %v3036, 2
    %v3038 = vmin.f32 %v3036, %v3037
    %v3039 = vrot.slane %v3038, 1
    %v3040 = vmin.f32 %v3038, %v3039
    %v3041 = vcvt.f32.s32.to.zero.pseudo %v3040
    %vm3042 = vcmp.lt.s32.totalorder %v3041, 2
    %v3043 = vsel %vm3042, %v3041, 2
    %v3044 = vsel %vm3000, %v2999, -1e+30
    %v3045 = vsel %vm2441, %v3044, -inf
    %v3046 = vrot.slane %v3045, 4
    %v3047 = vmax.f32 %v3045, %v3046
    %v3048 = vrot.slane %v3047, 2
    %v3049 = vmax.f32 %v3047, %v3048
    %v3050 = vrot.slane %v3049, 1
    %v3051 = vmax.f32 %v3049, %v3050
    %v3052 = vsub.f32 %v2999, %v3051
    %v3053 = vmul.f32 %v3052, 1.442695
    %v3054 = vpow.pop %v3053
    %v3055 = vsel %vm3000, %v3054, 0.0
    %v3056 = vsel %vm2441, %v3055, 0.0
    %v3057 = vrot.slane %v3056, 4
    %v3058 = vadd.f32 %v3056, %v3057
    %v3059 = vrot.slane %v3058, 2
    %v3060 = vadd.f32 %v3058, %v3059
    %v3061 = vrot.slane %v3060, 1
    %v3062 = vadd.f32 %v3060, %v3061
    %v3063 = vlog2.pop %v3062
    %v3064 = vmul.f32 %v3063, 0.6931472
    %v3065 = vadd.f32 %v3051, %v3064
    %vm3066 = vcmp.eq.s32.totalorder %v2604, %v3043
    %v3067 = vsel %vm3066, %v2999, 0.0
    %v3068 = vsel %vm2441, %v3067, 0.0
    %v3069 = vrot.slane %v3068, 4
    %v3070 = vadd.f32 %v3068, %v3069
    %v3071 = vrot.slane %v3070, 2
    %v3072 = vadd.f32 %v3070, %v3071
    %v3073 = vrot.slane %v3072, 1
    %v3074 = vadd.f32 %v3072, %v3073
    %v3075 = vsub.f32 %v3065, %v3074
    %v3076 = vadd.f32 %v2860, %v3075
    %vm3077 = vcmp.eq.s32.totalorder %v2604, 3
    %v3078 = vsel %vm3077, %v3043, %v2862
    %v3079 = vsel %vm3077, %v3021, %v2863
    %3080 = vmatprep.subr.bf16.mxu0 0
    %3081 = vmatpush1.bf16.msra.mxu0 %v2615
    %3082 = vmatprep.subr.bf16.mxu0 0
    %3083 = vmatpush1.bf16.msra.mxu0 %v2616
    %3084 = vmatprep.subr.bf16.mxu0 0
    %3085 = vmatpush1.bf16.msra.mxu0 0
    %3086 = vmatprep.subr.bf16.mxu0 0
    %3087 = vmatpush1.bf16.msra.mxu0 0
    %3088 = vmatprep.subr.bf16.mxu0 0
    %3089 = vmatpush1.bf16.msra.mxu0 0
    %3090 = vmatprep.subr.bf16.mxu0 0
    %3091 = vmatpush1.bf16.msra.mxu0 0
    %3092 = vmatprep.subr.bf16.mxu0 0
    %3093 = vmatpush1.bf16.msra.mxu0 0
    %3094 = vmatprep.subr.bf16.mxu0 0
    %3095 = vmatpush1.bf16.msra.mxu0 0
    %3096 = vmatprep.subr.bf16.mxu0 0
    %3097 = vmatpush1.bf16.msra.mxu0 0
    %3098 = vmatprep.subr.bf16.mxu0 0
    %3099 = vmatpush1.bf16.msra.mxu0 0
    %3100 = vmatprep.subr.bf16.mxu0 0
    %3101 = vmatpush1.bf16.msra.mxu0 0
    %3102 = vmatprep.subr.bf16.mxu0 0
    %3103 = vmatpush1.bf16.msra.mxu0 0
    %3104 = vmatprep.subr.bf16.mxu0 0
    %3105 = vmatpush1.bf16.msra.mxu0 0
    %3106 = vmatprep.subr.bf16.mxu0 0
    %3107 = vmatpush1.bf16.msra.mxu0 0
    %3108 = vmatprep.subr.bf16.mxu0 0
    %3109 = vmatpush1.bf16.msra.mxu0 0
    %3110 = vmatprep.subr.bf16.mxu0 0
    %3111 = vmatpush1.bf16.msra.mxu0 0
    %3112 = vmatprep.mubr.bf16.mxu0 0
    %3113 = vmatmul.mubr.bf16.gmra.mrb[0].mxu0 %v2943
    %v3114 = vpop.f32.mrb[0].mxu0
    %v3115 = vadd.f32 0.0, %v3114
    %v3116 = vpop.f32.mrb[0].mxu0
    %v3117 = vpop.f32.mrb[0].mxu0
    %v3118 = vpop.f32.mrb[0].mxu0
    %3119 = vdwg.mxu0
    %v3121 = vrot.slane %v3115, 4
    %v3123 = vadd.f32 %v2532, %v3121
    %v3124 = vxor.u32 %v3123, 2147483648
    %v3125 = vmul.f32 %v3124, 1.442695
    %v3126 = vpow.pop %v3125
    %v3127 = vadd.f32 %v3126, 1.0
    %v3128 = vrcp.pop %v3127
    %v3129 = vmul.f32 1.0, %v3128
    %v3130 = vtanh.pop %v3123
    %v3132 = vrot.slane %v2928, 7
    %v3134 = vmul.f32 %v3129, %v3132
    %3136 = vrot.lane.b32.xlu0 %v3130, 64
    %v3137 = vpop.permute.xlu0 %3136
    %v3139 = vmul.f32 %v3129, %v3137
    %3141 = vrot.lane.b32.xlu0 %v3139, 32
    %v3142 = vpop.permute.xlu0 %3141
    %v3144 = vadd.f32 %v3134, %v3142
    %v3145 = vtanh.pop %v3144
    %3147 = vrot.lane.b32.xlu0 %v3145, 64
    %v3148 = vpop.permute.xlu0 %3147
    %v3150 = vmul.f32 %v3129, %v3148
    %v3151 = vpack.c.bf16 %v3150, %v3150
    %v3153 = vrot.slane %v3151, 2
    %3154 = vrot.lane.b32.xlu0 %v3153, 32
    %v3155 = vpop.permute.xlu0 %3154
    %v3157 = vsel %vm284, %v3155, 0
    %3159 = vmatprep.subr.bf16.mxu0 0
    %3160 = vmatpush1.bf16.msra.mxu0 %v2707
    %3161 = vmatprep.subr.bf16.mxu0 0
    %3162 = vmatpush1.bf16.msra.mxu0 %v2708
    %3163 = vmatprep.subr.bf16.mxu0 0
    %3164 = vmatpush1.bf16.msra.mxu0 0
    %3165 = vmatprep.subr.bf16.mxu0 0
    %3166 = vmatpush1.bf16.msra.mxu0 0
    %3167 = vmatprep.subr.bf16.mxu0 0
    %3168 = vmatpush1.bf16.msra.mxu0 0
    %3169 = vmatprep.subr.bf16.mxu0 0
    %3170 = vmatpush1.bf16.msra.mxu0 0
    %3171 = vmatprep.subr.bf16.mxu0 0
    %3172 = vmatpush1.bf16.msra.mxu0 0
    %3173 = vmatprep.subr.bf16.mxu0 0
    %3174 = vmatpush1.bf16.msra.mxu0 0
    %3175 = vmatprep.subr.bf16.mxu0 0
    %3176 = vmatpush1.bf16.msra.mxu0 0
    %3177 = vmatprep.subr.bf16.mxu0 0
    %3178 = vmatpush1.bf16.msra.mxu0 0
    %3179 = vmatprep.subr.bf16.mxu0 0
    %3180 = vmatpush1.bf16.msra.mxu0 0
    %3181 = vmatprep.subr.bf16.mxu0 0
    %3182 = vmatpush1.bf16.msra.mxu0 0
    %3183 = vmatprep.subr.bf16.mxu0 0
    %3184 = vmatpush1.bf16.msra.mxu0 0
    %3185 = vmatprep.subr.bf16.mxu0 0
    %3186 = vmatpush1.bf16.msra.mxu0 0
    %3187 = vmatprep.subr.bf16.mxu0 0
    %3188 = vmatpush1.bf16.msra.mxu0 0
    %3189 = vmatprep.subr.bf16.mxu0 0
    %3190 = vmatpush1.bf16.msra.mxu0 0
    %3191 = vmatprep.mubr.bf16.mxu0 0
    %3192 = vmatmul.mubr.bf16.gmra.mrb[0].mxu0 %v3157
    %v3193 = vpop.f32.mrb[0].mxu0
    %v3194 = vadd.f32 0.0, %v3193
    %v3195 = vpop.f32.mrb[0].mxu0
    %v3196 = vpop.f32.mrb[0].mxu0
    %v3197 = vpop.f32.mrb[0].mxu0
    %3198 = vdwg.mxu0
    %v3199 = vlaneseq
    %v3200 = vshrl.u32 %v3199, 7
    %v3201 = vsub.s32 0, %v3200
    %v3202 = vrot.slane %v3194, %v3201
    %v3203 = vmul.f32 %v2592, %v3202
    %v3204 = vtanh.pop %v3203
    %v3205 = vmul.f32 %v3204, %v2764
    %v3206 = vsub.f32 %v2592, %v3202
    %v3207 = vtanh.pop %v3206
    %v3208 = vmul.f32 %v3207, %v2770
    %v3209 = vadd.f32 %v3205, %v3208
    %v3210 = vsel %vm284, %v3209, 0.0
    %3211 = vadd.xlane.f32.xlu0 %v3210
    %v3212 = vpop.xlane.xlu0 %3211
    %v3213 = vadd.f32 %v3212, %v2781
    %vm3214 = vcmp.lt.s32.totalorder %v2604, 4
    %v3215 = vsub.f32 %v3213, 10000.0
    %v3216 = vsel %vm3214, %v3213, %v3215
    %v3217 = vsel %vm2441, %v3216, -inf
    %v3218 = vrot.slane %v3217, 4
    %v3219 = vmax.f32 %v3217, %v3218
    %v3220 = vrot.slane %v3219, 2
    %v3221 = vmax.f32 %v3219, %v3220
    %v3222 = vrot.slane %v3221, 1
    %v3223 = vmax.f32 %v3221, %v3222
    %vm3224 = vcmp.ge.f32.partialorder %v3216, %v3223
    %v3225 = vsel %vm3224, %v2605, 8.0
    %v3226 = vsel %vm2441, %v3225, inf
    %v3227 = vrot.slane %v3226, 4
    %v3228 = vmin.f32 %v3226, %v3227
    %v3229 = vrot.slane %v3228, 2
    %v3230 = vmin.f32 %v3228, %v3229
    %v3231 = vrot.slane %v3230, 1
    %v3232 = vmin.f32 %v3230, %v3231
    %v3233 = vcvt.f32.s32.to.zero.pseudo %v3232
    %vm3234 = vcmp.lt.s32.totalorder %v3233, 3
    %v3235 = vsel %vm3234, %v3233, 3
    %s3236 = scalar_lea.vmem %s5, 32
    %v3237 = vld [vmem:[%s3236] sm:$0xff]
    %v3238 = vadd.f32 %v3216, %v3237
    %v3239 = vsel %vm2441, %v3238, -inf
    %v3240 = vrot.slane %v3239, 4
    %v3241 = vmax.f32 %v3239, %v3240
    %v3242 = vrot.slane %v3241, 2
    %v3243 = vmax.f32 %v3241, %v3242
    %v3244 = vrot.slane %v3243, 1
    %v3245 = vmax.f32 %v3243, %v3244
    %vm3246 = vcmp.ge.f32.partialorder %v3238, %v3245
    %v3247 = vsel %vm3246, %v2605, 8.0
    %v3248 = vsel %vm2441, %v3247, inf
    %v3249 = vrot.slane %v3248, 4
    %v3250 = vmin.f32 %v3248, %v3249
    %v3251 = vrot.slane %v3250, 2
    %v3252 = vmin.f32 %v3250, %v3251
    %v3253 = vrot.slane %v3252, 1
    %v3254 = vmin.f32 %v3252, %v3253
    %v3255 = vcvt.f32.s32.to.zero.pseudo %v3254
    %vm3256 = vcmp.lt.s32.totalorder %v3255, 3
    %v3257 = vsel %vm3256, %v3255, 3
    %v3258 = vsel %vm3214, %v3213, -1e+30
    %v3259 = vsel %vm2441, %v3258, -inf
    %v3260 = vrot.slane %v3259, 4
    %v3261 = vmax.f32 %v3259, %v3260
    %v3262 = vrot.slane %v3261, 2
    %v3263 = vmax.f32 %v3261, %v3262
    %v3264 = vrot.slane %v3263, 1
    %v3265 = vmax.f32 %v3263, %v3264
    %v3266 = vsub.f32 %v3213, %v3265
    %v3267 = vmul.f32 %v3266, 1.442695
    %v3268 = vpow.pop %v3267
    %v3269 = vsel %vm3214, %v3268, 0.0
    %v3270 = vsel %vm2441, %v3269, 0.0
    %v3271 = vrot.slane %v3270, 4
    %v3272 = vadd.f32 %v3270, %v3271
    %v3273 = vrot.slane %v3272, 2
    %v3274 = vadd.f32 %v3272, %v3273
    %v3275 = vrot.slane %v3274, 1
    %v3276 = vadd.f32 %v3274, %v3275
    %v3277 = vlog2.pop %v3276
    %v3278 = vmul.f32 %v3277, 0.6931472
    %v3279 = vadd.f32 %v3265, %v3278
    %vm3280 = vcmp.eq.s32.totalorder %v2604, %v3257
    %v3281 = vsel %vm3280, %v3213, 0.0
    %v3282 = vsel %vm2441, %v3281, 0.0
    %v3283 = vrot.slane %v3282, 4
    %v3284 = vadd.f32 %v3282, %v3283
    %v3285 = vrot.slane %v3284, 2
    %v3286 = vadd.f32 %v3284, %v3285
    %v3287 = vrot.slane %v3286, 1
    %v3288 = vadd.f32 %v3286, %v3287
    %v3289 = vsub.f32 %v3279, %v3288
    %v3290 = vadd.f32 %v3076, %v3289
    %vm3291 = vcmp.eq.s32.totalorder %v2604, 4
    %v3292 = vsel %vm3291, %v3257, %v3078
    %v3293 = vsel %vm3291, %v3235, %v3079
    %3294 = vmatprep.subr.bf16.mxu0 0
    %3295 = vmatpush1.bf16.msra.mxu0 %v2615
    %3296 = vmatprep.subr.bf16.mxu0 0
    %3297 = vmatpush1.bf16.msra.mxu0 %v2616
    %3298 = vmatprep.subr.bf16.mxu0 0
    %3299 = vmatpush1.bf16.msra.mxu0 0
    %3300 = vmatprep.subr.bf16.mxu0 0
    %3301 = vmatpush1.bf16.msra.mxu0 0
    %3302 = vmatprep.subr.bf16.mxu0 0
    %3303 = vmatpush1.bf16.msra.mxu0 0
    %3304 = vmatprep.subr.bf16.mxu0 0
    %3305 = vmatpush1.bf16.msra.mxu0 0
    %3306 = vmatprep.subr.bf16.mxu0 0
    %3307 = vmatpush1.bf16.msra.mxu0 0
    %3308 = vmatprep.subr.bf16.mxu0 0
    %3309 = vmatpush1.bf16.msra.mxu0 0
    %3310 = vmatprep.subr.bf16.mxu0 0
    %3311 = vmatpush1.bf16.msra.mxu0 0
    %3312 = vmatprep.subr.bf16.mxu0 0
    %3313 = vmatpush1.bf16.msra.mxu0 0
    %3314 = vmatprep.subr.bf16.mxu0 0
    %3315 = vmatpush1.bf16.msra.mxu0 0
    %3316 = vmatprep.subr.bf16.mxu0 0
    %3317 = vmatpush1.bf16.msra.mxu0 0
    %3318 = vmatprep.subr.bf16.mxu0 0
    %3319 = vmatpush1.bf16.msra.mxu0 0
    %3320 = vmatprep.subr.bf16.mxu0 0
    %3321 = vmatpush1.bf16.msra.mxu0 0
    %3322 = vmatprep.subr.bf16.mxu0 0
    %3323 = vmatpush1.bf16.msra.mxu0 0
    %3324 = vmatprep.subr.bf16.mxu0 0
    %3325 = vmatpush1.bf16.msra.mxu0 0
    %3326 = vmatprep.mubr.bf16.mxu0 0
    %3327 = vmatmul.mubr.bf16.gmra.mrb[0].mxu0 %v3157
    %v3328 = vpop.f32.mrb[0].mxu0
    %v3329 = vadd.f32 0.0, %v3328
    %v3330 = vpop.f32.mrb[0].mxu0
    %v3331 = vpop.f32.mrb[0].mxu0
    %v3332 = vpop.f32.mrb[0].mxu0
    %3333 = vdwg.mxu0
    %v3335 = vrot.slane %v3329, 3
    %v3337 = vadd.f32 %v2532, %v3335
    %v3338 = vxor.u32 %v3337, 2147483648
    %v3339 = vmul.f32 %v3338, 1.442695
    %v3340 = vpow.pop %v3339
    %v3341 = vadd.f32 %v3340, 1.0
    %v3342 = vrcp.pop %v3341
    %v3343 = vmul.f32 1.0, %v3342
    %v3344 = vtanh.pop %v3337
    %v3346 = vrot.slane %v3144, 7
    %v3348 = vmul.f32 %v3343, %v3346
    %3350 = vrot.lane.b32.xlu0 %v3344, 64
    %v3351 = vpop.permute.xlu0 %3350
    %v3353 = vmul.f32 %v3343, %v3351
    %3355 = vrot.lane.b32.xlu0 %v3353, 32
    %v3356 = vpop.permute.xlu0 %3355
    %v3358 = vadd.f32 %v3348, %v3356
    %v3359 = vtanh.pop %v3358
    %3361 = vrot.lane.b32.xlu0 %v3359, 64
    %v3362 = vpop.permute.xlu0 %3361
    %v3364 = vmul.f32 %v3343, %v3362
    %v3365 = vpack.c.bf16 %v3364, %v3364
    %v3367 = vshrl.u32 %v3365, 16
    %v3369 = vrot.slane %v3367, 2
    %3370 = vrot.lane.b32.xlu0 %v3369, 32
    %v3371 = vpop.permute.xlu0 %3370
    %v3373 = vsel %vm284, %v3371, 0
    %3375 = vmatprep.subr.bf16.mxu0 0
    %3376 = vmatpush1.bf16.msra.mxu0 %v2707
    %3377 = vmatprep.subr.bf16.mxu0 0
    %3378 = vmatpush1.bf16.msra.mxu0 %v2708
    %3379 = vmatprep.subr.bf16.mxu0 0
    %3380 = vmatpush1.bf16.msra.mxu0 0
    %3381 = vmatprep.subr.bf16.mxu0 0
    %3382 = vmatpush1.bf16.msra.mxu0 0
    %3383 = vmatprep.subr.bf16.mxu0 0
    %3384 = vmatpush1.bf16.msra.mxu0 0
    %3385 = vmatprep.subr.bf16.mxu0 0
    %3386 = vmatpush1.bf16.msra.mxu0 0
    %3387 = vmatprep.subr.bf16.mxu0 0
    %3388 = vmatpush1.bf16.msra.mxu0 0
    %3389 = vmatprep.subr.bf16.mxu0 0
    %3390 = vmatpush1.bf16.msra.mxu0 0
    %3391 = vmatprep.subr.bf16.mxu0 0
    %3392 = vmatpush1.bf16.msra.mxu0 0
    %3393 = vmatprep.subr.bf16.mxu0 0
    %3394 = vmatpush1.bf16.msra.mxu0 0
    %3395 = vmatprep.subr.bf16.mxu0 0
    %3396 = vmatpush1.bf16.msra.mxu0 0
    %3397 = vmatprep.subr.bf16.mxu0 0
    %3398 = vmatpush1.bf16.msra.mxu0 0
    %3399 = vmatprep.subr.bf16.mxu0 0
    %3400 = vmatpush1.bf16.msra.mxu0 0
    %3401 = vmatprep.subr.bf16.mxu0 0
    %3402 = vmatpush1.bf16.msra.mxu0 0
    %3403 = vmatprep.subr.bf16.mxu0 0
    %3404 = vmatpush1.bf16.msra.mxu0 0
    %3405 = vmatprep.subr.bf16.mxu0 0
    %3406 = vmatpush1.bf16.msra.mxu0 0
    %3407 = vmatprep.mubr.bf16.mxu0 0
    %3408 = vmatmul.mubr.bf16.gmra.mrb[0].mxu0 %v3373
    %v3409 = vpop.f32.mrb[0].mxu0
    %v3410 = vadd.f32 0.0, %v3409
    %v3411 = vpop.f32.mrb[0].mxu0
    %v3412 = vpop.f32.mrb[0].mxu0
    %v3413 = vpop.f32.mrb[0].mxu0
    %3414 = vdwg.mxu0
    %v3415 = vlaneseq
    %v3416 = vshrl.u32 %v3415, 7
    %v3417 = vsub.s32 0, %v3416
    %v3418 = vrot.slane %v3410, %v3417
    %v3419 = vmul.f32 %v2592, %v3418
    %v3420 = vtanh.pop %v3419
    %v3421 = vmul.f32 %v3420, %v2764
    %v3422 = vsub.f32 %v2592, %v3418
    %v3423 = vtanh.pop %v3422
    %v3424 = vmul.f32 %v3423, %v2770
    %v3425 = vadd.f32 %v3421, %v3424
    %v3426 = vsel %vm284, %v3425, 0.0
    %3427 = vadd.xlane.f32.xlu0 %v3426
    %v3428 = vpop.xlane.xlu0 %3427
    %v3429 = vadd.f32 %v3428, %v2781
    %vm3430 = vcmp.lt.s32.totalorder %v2604, 5
    %v3431 = vsub.f32 %v3429, 10000.0
    %v3432 = vsel %vm3430, %v3429, %v3431
    %v3433 = vsel %vm2441, %v3432, -inf
    %v3434 = vrot.slane %v3433, 4
    %v3435 = vmax.f32 %v3433, %v3434
    %v3436 = vrot.slane %v3435, 2
    %v3437 = vmax.f32 %v3435, %v3436
    %v3438 = vrot.slane %v3437, 1
    %v3439 = vmax.f32 %v3437, %v3438
    %vm3440 = vcmp.ge.f32.partialorder %v3432, %v3439
    %v3441 = vsel %vm3440, %v2605, 8.0
    %v3442 = vsel %vm2441, %v3441, inf
    %v3443 = vrot.slane %v3442, 4
    %v3444 = vmin.f32 %v3442, %v3443
    %v3445 = vrot.slane %v3444, 2
    %v3446 = vmin.f32 %v3444, %v3445
    %v3447 = vrot.slane %v3446, 1
    %v3448 = vmin.f32 %v3446, %v3447
    %v3449 = vcvt.f32.s32.to.zero.pseudo %v3448
    %vm3450 = vcmp.lt.s32.totalorder %v3449, 4
    %v3451 = vsel %vm3450, %v3449, 4
    %s3452 = scalar_lea.vmem %s5, 40
    %v3453 = vld [vmem:[%s3452] sm:$0xff]
    %v3454 = vadd.f32 %v3432, %v3453
    %v3455 = vsel %vm2441, %v3454, -inf
    %v3456 = vrot.slane %v3455, 4
    %v3457 = vmax.f32 %v3455, %v3456
    %v3458 = vrot.slane %v3457, 2
    %v3459 = vmax.f32 %v3457, %v3458
    %v3460 = vrot.slane %v3459, 1
    %v3461 = vmax.f32 %v3459, %v3460
    %vm3462 = vcmp.ge.f32.partialorder %v3454, %v3461
    %v3463 = vsel %vm3462, %v2605, 8.0
    %v3464 = vsel %vm2441, %v3463, inf
    %v3465 = vrot.slane %v3464, 4
    %v3466 = vmin.f32 %v3464, %v3465
    %v3467 = vrot.slane %v3466, 2
    %v3468 = vmin.f32 %v3466, %v3467
    %v3469 = vrot.slane %v3468, 1
    %v3470 = vmin.f32 %v3468, %v3469
    %v3471 = vcvt.f32.s32.to.zero.pseudo %v3470
    %vm3472 = vcmp.lt.s32.totalorder %v3471, 4
    %v3473 = vsel %vm3472, %v3471, 4
    %v3474 = vsel %vm3430, %v3429, -1e+30
    %v3475 = vsel %vm2441, %v3474, -inf
    %v3476 = vrot.slane %v3475, 4
    %v3477 = vmax.f32 %v3475, %v3476
    %v3478 = vrot.slane %v3477, 2
    %v3479 = vmax.f32 %v3477, %v3478
    %v3480 = vrot.slane %v3479, 1
    %v3481 = vmax.f32 %v3479, %v3480
    %v3482 = vsub.f32 %v3429, %v3481
    %v3483 = vmul.f32 %v3482, 1.442695
    %v3484 = vpow.pop %v3483
    %v3485 = vsel %vm3430, %v3484, 0.0
    %v3486 = vsel %vm2441, %v3485, 0.0
    %v3487 = vrot.slane %v3486, 4
    %v3488 = vadd.f32 %v3486, %v3487
    %v3489 = vrot.slane %v3488, 2
    %v3490 = vadd.f32 %v3488, %v3489
    %v3491 = vrot.slane %v3490, 1
    %v3492 = vadd.f32 %v3490, %v3491
    %v3493 = vlog2.pop %v3492
    %v3494 = vmul.f32 %v3493, 0.6931472
    %v3495 = vadd.f32 %v3481, %v3494
    %vm3496 = vcmp.eq.s32.totalorder %v2604, %v3473
    %v3497 = vsel %vm3496, %v3429, 0.0
    %v3498 = vsel %vm2441, %v3497, 0.0
    %v3499 = vrot.slane %v3498, 4
    %v3500 = vadd.f32 %v3498, %v3499
    %v3501 = vrot.slane %v3500, 2
    %v3502 = vadd.f32 %v3500, %v3501
    %v3503 = vrot.slane %v3502, 1
    %v3504 = vadd.f32 %v3502, %v3503
    %v3505 = vsub.f32 %v3495, %v3504
    %v3506 = vadd.f32 %v3290, %v3505
    %vm3507 = vcmp.eq.s32.totalorder %v2604, 5
    %v3508 = vsel %vm3507, %v3473, %v3292
    %v3509 = vsel %vm3507, %v3451, %v3293
    %3510 = vmatprep.subr.bf16.mxu0 0
    %3511 = vmatpush1.bf16.msra.mxu0 %v2615
    %3512 = vmatprep.subr.bf16.mxu0 0
    %3513 = vmatpush1.bf16.msra.mxu0 %v2616
    %3514 = vmatprep.subr.bf16.mxu0 0
    %3515 = vmatpush1.bf16.msra.mxu0 0
    %3516 = vmatprep.subr.bf16.mxu0 0
    %3517 = vmatpush1.bf16.msra.mxu0 0
    %3518 = vmatprep.subr.bf16.mxu0 0
    %3519 = vmatpush1.bf16.msra.mxu0 0
    %3520 = vmatprep.subr.bf16.mxu0 0
    %3521 = vmatpush1.bf16.msra.mxu0 0
    %3522 = vmatprep.subr.bf16.mxu0 0
    %3523 = vmatpush1.bf16.msra.mxu0 0
    %3524 = vmatprep.subr.bf16.mxu0 0
    %3525 = vmatpush1.bf16.msra.mxu0 0
    %3526 = vmatprep.subr.bf16.mxu0 0
    %3527 = vmatpush1.bf16.msra.mxu0 0
    %3528 = vmatprep.subr.bf16.mxu0 0
    %3529 = vmatpush1.bf16.msra.mxu0 0
    %3530 = vmatprep.subr.bf16.mxu0 0
    %3531 = vmatpush1.bf16.msra.mxu0 0
    %3532 = vmatprep.subr.bf16.mxu0 0
    %3533 = vmatpush1.bf16.msra.mxu0 0
    %3534 = vmatprep.subr.bf16.mxu0 0
    %3535 = vmatpush1.bf16.msra.mxu0 0
    %3536 = vmatprep.subr.bf16.mxu0 0
    %3537 = vmatpush1.bf16.msra.mxu0 0
    %3538 = vmatprep.subr.bf16.mxu0 0
    %3539 = vmatpush1.bf16.msra.mxu0 0
    %3540 = vmatprep.subr.bf16.mxu0 0
    %3541 = vmatpush1.bf16.msra.mxu0 0
    %3542 = vmatprep.mubr.bf16.mxu0 0
    %3543 = vmatmul.mubr.bf16.gmra.mrb[0].mxu0 %v3373
    %v3544 = vpop.f32.mrb[0].mxu0
    %v3545 = vadd.f32 0.0, %v3544
    %v3546 = vpop.f32.mrb[0].mxu0
    %v3547 = vpop.f32.mrb[0].mxu0
    %v3548 = vpop.f32.mrb[0].mxu0
    %3549 = vdwg.mxu0
    %v3551 = vrot.slane %v3545, 2
    %v3553 = vadd.f32 %v2532, %v3551
    %v3554 = vxor.u32 %v3553, 2147483648
    %v3555 = vmul.f32 %v3554, 1.442695
    %v3556 = vpow.pop %v3555
    %v3557 = vadd.f32 %v3556, 1.0
    %v3558 = vrcp.pop %v3557
    %v3559 = vmul.f32 1.0, %v3558
    %v3560 = vtanh.pop %v3553
    %v3562 = vrot.slane %v3358, 7
    %v3564 = vmul.f32 %v3559, %v3562
    %3566 = vrot.lane.b32.xlu0 %v3560, 64
    %v3567 = vpop.permute.xlu0 %3566
    %v3569 = vmul.f32 %v3559, %v3567
    %3571 = vrot.lane.b32.xlu0 %v3569, 32
    %v3572 = vpop.permute.xlu0 %3571
    %v3574 = vadd.f32 %v3564, %v3572
    %v3575 = vtanh.pop %v3574
    %3577 = vrot.lane.b32.xlu0 %v3575, 64
    %v3578 = vpop.permute.xlu0 %3577
    %v3580 = vmul.f32 %v3559, %v3578
    %v3581 = vpack.c.bf16 %v3580, %v3580
    %v3583 = vrot.slane %v3581, 3
    %3584 = vrot.lane.b32.xlu0 %v3583, 32
    %v3585 = vpop.permute.xlu0 %3584
    %v3587 = vsel %vm284, %v3585, 0
    %3589 = vmatprep.subr.bf16.mxu0 0
    %3590 = vmatpush1.bf16.msra.mxu0 %v2707
    %3591 = vmatprep.subr.bf16.mxu0 0
    %3592 = vmatpush1.bf16.msra.mxu0 %v2708
    %3593 = vmatprep.subr.bf16.mxu0 0
    %3594 = vmatpush1.bf16.msra.mxu0 0
    %3595 = vmatprep.subr.bf16.mxu0 0
    %3596 = vmatpush1.bf16.msra.mxu0 0
    %3597 = vmatprep.subr.bf16.mxu0 0
    %3598 = vmatpush1.bf16.msra.mxu0 0
    %3599 = vmatprep.subr.bf16.mxu0 0
    %3600 = vmatpush1.bf16.msra.mxu0 0
    %3601 = vmatprep.subr.bf16.mxu0 0
    %3602 = vmatpush1.bf16.msra.mxu0 0
    %3603 = vmatprep.subr.bf16.mxu0 0
    %3604 = vmatpush1.bf16.msra.mxu0 0
    %3605 = vmatprep.subr.bf16.mxu0 0
    %3606 = vmatpush1.bf16.msra.mxu0 0
    %3607 = vmatprep.subr.bf16.mxu0 0
    %3608 = vmatpush1.bf16.msra.mxu0 0
    %3609 = vmatprep.subr.bf16.mxu0 0
    %3610 = vmatpush1.bf16.msra.mxu0 0
    %3611 = vmatprep.subr.bf16.mxu0 0
    %3612 = vmatpush1.bf16.msra.mxu0 0
    %3613 = vmatprep.subr.bf16.mxu0 0
    %3614 = vmatpush1.bf16.msra.mxu0 0
    %3615 = vmatprep.subr.bf16.mxu0 0
    %3616 = vmatpush1.bf16.msra.mxu0 0
    %3617 = vmatprep.subr.bf16.mxu0 0
    %3618 = vmatpush1.bf16.msra.mxu0 0
    %3619 = vmatprep.subr.bf16.mxu0 0
    %3620 = vmatpush1.bf16.msra.mxu0 0
    %3621 = vmatprep.mubr.bf16.mxu0 0
    %3622 = vmatmul.mubr.bf16.gmra.mrb[0].mxu0 %v3587
    %v3623 = vpop.f32.mrb[0].mxu0
    %v3624 = vadd.f32 0.0, %v3623
    %v3625 = vpop.f32.mrb[0].mxu0
    %v3626 = vpop.f32.mrb[0].mxu0
    %v3627 = vpop.f32.mrb[0].mxu0
    %3628 = vdwg.mxu0
    %v3629 = vlaneseq
    %v3630 = vshrl.u32 %v3629, 7
    %v3631 = vsub.s32 0, %v3630
    %v3632 = vrot.slane %v3624, %v3631
    %v3633 = vmul.f32 %v2592, %v3632
    %v3634 = vtanh.pop %v3633
    %v3635 = vmul.f32 %v3634, %v2764
    %v3636 = vsub.f32 %v2592, %v3632
    %v3637 = vtanh.pop %v3636
    %v3638 = vmul.f32 %v3637, %v2770
    %v3639 = vadd.f32 %v3635, %v3638
    %v3640 = vsel %vm284, %v3639, 0.0
    %3641 = vadd.xlane.f32.xlu0 %v3640
    %v3642 = vpop.xlane.xlu0 %3641
    %v3643 = vadd.f32 %v3642, %v2781
    %vm3644 = vcmp.lt.s32.totalorder %v2604, 6
    %v3645 = vsub.f32 %v3643, 10000.0
    %v3646 = vsel %vm3644, %v3643, %v3645
    %v3647 = vsel %vm2441, %v3646, -inf
    %v3648 = vrot.slane %v3647, 4
    %v3649 = vmax.f32 %v3647, %v3648
    %v3650 = vrot.slane %v3649, 2
    %v3651 = vmax.f32 %v3649, %v3650
    %v3652 = vrot.slane %v3651, 1
    %v3653 = vmax.f32 %v3651, %v3652
    %vm3654 = vcmp.ge.f32.partialorder %v3646, %v3653
    %v3655 = vsel %vm3654, %v2605, 8.0
    %v3656 = vsel %vm2441, %v3655, inf
    %v3657 = vrot.slane %v3656, 4
    %v3658 = vmin.f32 %v3656, %v3657
    %v3659 = vrot.slane %v3658, 2
    %v3660 = vmin.f32 %v3658, %v3659
    %v3661 = vrot.slane %v3660, 1
    %v3662 = vmin.f32 %v3660, %v3661
    %v3663 = vcvt.f32.s32.to.zero.pseudo %v3662
    %vm3664 = vcmp.lt.s32.totalorder %v3663, 5
    %v3665 = vsel %vm3664, %v3663, 5
    %s3666 = scalar_lea.vmem %s5, 48
    %v3667 = vld [vmem:[%s3666] sm:$0xff]
    %v3668 = vadd.f32 %v3646, %v3667
    %v3669 = vsel %vm2441, %v3668, -inf
    %v3670 = vrot.slane %v3669, 4
    %v3671 = vmax.f32 %v3669, %v3670
    %v3672 = vrot.slane %v3671, 2
    %v3673 = vmax.f32 %v3671, %v3672
    %v3674 = vrot.slane %v3673, 1
    %v3675 = vmax.f32 %v3673, %v3674
    %vm3676 = vcmp.ge.f32.partialorder %v3668, %v3675
    %v3677 = vsel %vm3676, %v2605, 8.0
    %v3678 = vsel %vm2441, %v3677, inf
    %v3679 = vrot.slane %v3678, 4
    %v3680 = vmin.f32 %v3678, %v3679
    %v3681 = vrot.slane %v3680, 2
    %v3682 = vmin.f32 %v3680, %v3681
    %v3683 = vrot.slane %v3682, 1
    %v3684 = vmin.f32 %v3682, %v3683
    %v3685 = vcvt.f32.s32.to.zero.pseudo %v3684
    %vm3686 = vcmp.lt.s32.totalorder %v3685, 5
    %v3687 = vsel %vm3686, %v3685, 5
    %v3688 = vsel %vm3644, %v3643, -1e+30
    %v3689 = vsel %vm2441, %v3688, -inf
    %v3690 = vrot.slane %v3689, 4
    %v3691 = vmax.f32 %v3689, %v3690
    %v3692 = vrot.slane %v3691, 2
    %v3693 = vmax.f32 %v3691, %v3692
    %v3694 = vrot.slane %v3693, 1
    %v3695 = vmax.f32 %v3693, %v3694
    %v3696 = vsub.f32 %v3643, %v3695
    %v3697 = vmul.f32 %v3696, 1.442695
    %v3698 = vpow.pop %v3697
    %v3699 = vsel %vm3644, %v3698, 0.0
    %v3700 = vsel %vm2441, %v3699, 0.0
    %v3701 = vrot.slane %v3700, 4
    %v3702 = vadd.f32 %v3700, %v3701
    %v3703 = vrot.slane %v3702, 2
    %v3704 = vadd.f32 %v3702, %v3703
    %v3705 = vrot.slane %v3704, 1
    %v3706 = vadd.f32 %v3704, %v3705
    %v3707 = vlog2.pop %v3706
    %v3708 = vmul.f32 %v3707, 0.6931472
    %v3709 = vadd.f32 %v3695, %v3708
    %vm3710 = vcmp.eq.s32.totalorder %v2604, %v3687
    %v3711 = vsel %vm3710, %v3643, 0.0
    %v3712 = vsel %vm2441, %v3711, 0.0
    %v3713 = vrot.slane %v3712, 4
    %v3714 = vadd.f32 %v3712, %v3713
    %v3715 = vrot.slane %v3714, 2
    %v3716 = vadd.f32 %v3714, %v3715
    %v3717 = vrot.slane %v3716, 1
    %v3718 = vadd.f32 %v3716, %v3717
    %v3719 = vsub.f32 %v3709, %v3718
    %v3720 = vadd.f32 %v3506, %v3719
    %vm3721 = vcmp.eq.s32.totalorder %v2604, 6
    %v3722 = vsel %vm3721, %v3687, %v3508
    %v3723 = vsel %vm3721, %v3665, %v3509
    %3724 = vmatprep.subr.bf16.mxu0 0
    %3725 = vmatpush1.bf16.msra.mxu0 %v2615
    %3726 = vmatprep.subr.bf16.mxu0 0
    %3727 = vmatpush1.bf16.msra.mxu0 %v2616
    %3728 = vmatprep.subr.bf16.mxu0 0
    %3729 = vmatpush1.bf16.msra.mxu0 0
    %3730 = vmatprep.subr.bf16.mxu0 0
    %3731 = vmatpush1.bf16.msra.mxu0 0
    %3732 = vmatprep.subr.bf16.mxu0 0
    %3733 = vmatpush1.bf16.msra.mxu0 0
    %3734 = vmatprep.subr.bf16.mxu0 0
    %3735 = vmatpush1.bf16.msra.mxu0 0
    %3736 = vmatprep.subr.bf16.mxu0 0
    %3737 = vmatpush1.bf16.msra.mxu0 0
    %3738 = vmatprep.subr.bf16.mxu0 0
    %3739 = vmatpush1.bf16.msra.mxu0 0
    %3740 = vmatprep.subr.bf16.mxu0 0
    %3741 = vmatpush1.bf16.msra.mxu0 0
    %3742 = vmatprep.subr.bf16.mxu0 0
    %3743 = vmatpush1.bf16.msra.mxu0 0
    %3744 = vmatprep.subr.bf16.mxu0 0
    %3745 = vmatpush1.bf16.msra.mxu0 0
    %3746 = vmatprep.subr.bf16.mxu0 0
    %3747 = vmatpush1.bf16.msra.mxu0 0
    %3748 = vmatprep.subr.bf16.mxu0 0
    %3749 = vmatpush1.bf16.msra.mxu0 0
    %3750 = vmatprep.subr.bf16.mxu0 0
    %3751 = vmatpush1.bf16.msra.mxu0 0
    %3752 = vmatprep.subr.bf16.mxu0 0
    %3753 = vmatpush1.bf16.msra.mxu0 0
    %3754 = vmatprep.subr.bf16.mxu0 0
    %3755 = vmatpush1.bf16.msra.mxu0 0
    %3756 = vmatprep.mubr.bf16.mxu0 0
    %3757 = vmatmul.mubr.bf16.gmra.mrb[0].mxu0 %v3587
    %v3758 = vpop.f32.mrb[0].mxu0
    %v3759 = vadd.f32 0.0, %v3758
    %v3760 = vpop.f32.mrb[0].mxu0
    %v3761 = vpop.f32.mrb[0].mxu0
    %v3762 = vpop.f32.mrb[0].mxu0
    %3763 = vdwg.mxu0
    %v3765 = vrot.slane %v3759, 1
    %v3767 = vadd.f32 %v2532, %v3765
    %v3768 = vxor.u32 %v3767, 2147483648
    %v3769 = vmul.f32 %v3768, 1.442695
    %v3770 = vpow.pop %v3769
    %v3771 = vadd.f32 %v3770, 1.0
    %v3772 = vrcp.pop %v3771
    %v3773 = vmul.f32 1.0, %v3772
    %v3774 = vtanh.pop %v3767
    %v3776 = vrot.slane %v3574, 7
    %v3778 = vmul.f32 %v3773, %v3776
    %3780 = vrot.lane.b32.xlu0 %v3774, 64
    %v3781 = vpop.permute.xlu0 %3780
    %v3783 = vmul.f32 %v3773, %v3781
    %3785 = vrot.lane.b32.xlu0 %v3783, 32
    %v3786 = vpop.permute.xlu0 %3785
    %v3788 = vadd.f32 %v3778, %v3786
    %v3789 = vtanh.pop %v3788
    %3791 = vrot.lane.b32.xlu0 %v3789, 64
    %v3792 = vpop.permute.xlu0 %3791
    %v3794 = vmul.f32 %v3773, %v3792
    %v3795 = vpack.c.bf16 %v3794, %v3794
    %v3797 = vshrl.u32 %v3795, 16
    %v3799 = vrot.slane %v3797, 3
    %3800 = vrot.lane.b32.xlu0 %v3799, 32
    %v3801 = vpop.permute.xlu0 %3800
    %v3803 = vsel %vm284, %v3801, 0
    %3805 = vmatprep.subr.bf16.mxu0 0
    %3806 = vmatpush1.bf16.msra.mxu0 %v2707
    %3807 = vmatprep.subr.bf16.mxu0 0
    %3808 = vmatpush1.bf16.msra.mxu0 %v2708
    %3809 = vmatprep.subr.bf16.mxu0 0
    %3810 = vmatpush1.bf16.msra.mxu0 0
    %3811 = vmatprep.subr.bf16.mxu0 0
    %3812 = vmatpush1.bf16.msra.mxu0 0
    %3813 = vmatprep.subr.bf16.mxu0 0
    %3814 = vmatpush1.bf16.msra.mxu0 0
    %3815 = vmatprep.subr.bf16.mxu0 0
    %3816 = vmatpush1.bf16.msra.mxu0 0
    %3817 = vmatprep.subr.bf16.mxu0 0
    %3818 = vmatpush1.bf16.msra.mxu0 0
    %3819 = vmatprep.subr.bf16.mxu0 0
    %3820 = vmatpush1.bf16.msra.mxu0 0
    %3821 = vmatprep.subr.bf16.mxu0 0
    %3822 = vmatpush1.bf16.msra.mxu0 0
    %3823 = vmatprep.subr.bf16.mxu0 0
    %3824 = vmatpush1.bf16.msra.mxu0 0
    %3825 = vmatprep.subr.bf16.mxu0 0
    %3826 = vmatpush1.bf16.msra.mxu0 0
    %3827 = vmatprep.subr.bf16.mxu0 0
    %3828 = vmatpush1.bf16.msra.mxu0 0
    %3829 = vmatprep.subr.bf16.mxu0 0
    %3830 = vmatpush1.bf16.msra.mxu0 0
    %3831 = vmatprep.subr.bf16.mxu0 0
    %3832 = vmatpush1.bf16.msra.mxu0 0
    %3833 = vmatprep.subr.bf16.mxu0 0
    %3834 = vmatpush1.bf16.msra.mxu0 0
    %3835 = vmatprep.subr.bf16.mxu0 0
    %3836 = vmatpush1.bf16.msra.mxu0 0
    %3837 = vmatprep.mubr.bf16.mxu0 0
    %3838 = vmatmul.mubr.bf16.gmra.mrb[0].mxu0 %v3803
    %v3839 = vpop.f32.mrb[0].mxu0
    %v3840 = vadd.f32 0.0, %v3839
    %v3841 = vpop.f32.mrb[0].mxu0
    %v3842 = vpop.f32.mrb[0].mxu0
    %v3843 = vpop.f32.mrb[0].mxu0
    %3844 = vdwg.mxu0
    %v3845 = vlaneseq
    %v3846 = vshrl.u32 %v3845, 7
    %v3847 = vsub.s32 0, %v3846
    %v3848 = vrot.slane %v3840, %v3847
    %v3849 = vmul.f32 %v2592, %v3848
    %v3850 = vtanh.pop %v3849
    %v3851 = vmul.f32 %v3850, %v2764
    %v3852 = vsub.f32 %v2592, %v3848
    %v3853 = vtanh.pop %v3852
    %v3854 = vmul.f32 %v3853, %v2770
    %v3855 = vadd.f32 %v3851, %v3854
    %v3856 = vsel %vm284, %v3855, 0.0
    %3857 = vadd.xlane.f32.xlu0 %v3856
    %v3858 = vpop.xlane.xlu0 %3857
    %v3859 = vadd.f32 %v3858, %v2781
    %vm3860 = vcmp.lt.s32.totalorder %v2604, 7
    %v3861 = vsub.f32 %v3859, 10000.0
    %v3862 = vsel %vm3860, %v3859, %v3861
    %v3863 = vsel %vm2441, %v3862, -inf
    %v3864 = vrot.slane %v3863, 4
    %v3865 = vmax.f32 %v3863, %v3864
    %v3866 = vrot.slane %v3865, 2
    %v3867 = vmax.f32 %v3865, %v3866
    %v3868 = vrot.slane %v3867, 1
    %v3869 = vmax.f32 %v3867, %v3868
    %vm3870 = vcmp.ge.f32.partialorder %v3862, %v3869
    %v3871 = vsel %vm3870, %v2605, 8.0
    %v3872 = vsel %vm2441, %v3871, inf
    %v3873 = vrot.slane %v3872, 4
    %v3874 = vmin.f32 %v3872, %v3873
    %v3875 = vrot.slane %v3874, 2
    %v3876 = vmin.f32 %v3874, %v3875
    %v3877 = vrot.slane %v3876, 1
    %v3878 = vmin.f32 %v3876, %v3877
    %v3879 = vcvt.f32.s32.to.zero.pseudo %v3878
    %vm3880 = vcmp.lt.s32.totalorder %v3879, 6
    %v3881 = vsel %vm3880, %v3879, 6
    %s3882 = scalar_lea.vmem %s5, 56
    %v3883 = vld [vmem:[%s3882] sm:$0xff]
    %v3884 = vadd.f32 %v3862, %v3883
    %v3885 = vsel %vm2441, %v3884, -inf
    %v3886 = vrot.slane %v3885, 4
    %v3887 = vmax.f32 %v3885, %v3886
    %v3888 = vrot.slane %v3887, 2
    %v3889 = vmax.f32 %v3887, %v3888
    %v3890 = vrot.slane %v3889, 1
    %v3891 = vmax.f32 %v3889, %v3890
    %vm3892 = vcmp.ge.f32.partialorder %v3884, %v3891
    %v3893 = vsel %vm3892, %v2605, 8.0
    %v3894 = vsel %vm2441, %v3893, inf
    %v3895 = vrot.slane %v3894, 4
    %v3896 = vmin.f32 %v3894, %v3895
    %v3897 = vrot.slane %v3896, 2
    %v3898 = vmin.f32 %v3896, %v3897
    %v3899 = vrot.slane %v3898, 1
    %v3900 = vmin.f32 %v3898, %v3899
    %v3901 = vcvt.f32.s32.to.zero.pseudo %v3900
    %vm3902 = vcmp.lt.s32.totalorder %v3901, 6
    %v3903 = vsel %vm3902, %v3901, 6
    %v3904 = vsel %vm3860, %v3859, -1e+30
    %v3905 = vsel %vm2441, %v3904, -inf
    %v3906 = vrot.slane %v3905, 4
    %v3907 = vmax.f32 %v3905, %v3906
    %v3908 = vrot.slane %v3907, 2
    %v3909 = vmax.f32 %v3907, %v3908
    %v3910 = vrot.slane %v3909, 1
    %v3911 = vmax.f32 %v3909, %v3910
    %v3912 = vsub.f32 %v3859, %v3911
    %v3913 = vmul.f32 %v3912, 1.442695
    %v3914 = vpow.pop %v3913
    %v3915 = vsel %vm3860, %v3914, 0.0
    %v3916 = vsel %vm2441, %v3915, 0.0
    %v3917 = vrot.slane %v3916, 4
    %v3918 = vadd.f32 %v3916, %v3917
    %v3919 = vrot.slane %v3918, 2
    %v3920 = vadd.f32 %v3918, %v3919
    %v3921 = vrot.slane %v3920, 1
    %v3922 = vadd.f32 %v3920, %v3921
    %v3923 = vlog2.pop %v3922
    %v3924 = vmul.f32 %v3923, 0.6931472
    %v3925 = vadd.f32 %v3911, %v3924
    %vm3926 = vcmp.eq.s32.totalorder %v2604, %v3903
    %v3927 = vsel %vm3926, %v3859, 0.0
    %v3928 = vsel %vm2441, %v3927, 0.0
    %v3929 = vrot.slane %v3928, 4
    %v3930 = vadd.f32 %v3928, %v3929
    %v3931 = vrot.slane %v3930, 2
    %v3932 = vadd.f32 %v3930, %v3931
    %v3933 = vrot.slane %v3932, 1
    %v3934 = vadd.f32 %v3932, %v3933
    %v3935 = vsub.f32 %v3925, %v3934
    %v3936 = vadd.f32 %v3720, %v3935
    %vm3937 = vcmp.eq.s32.totalorder %v2604, 7
    %v3938 = vsel %vm3937, %v3903, %v3722
    %v3939 = vsel %vm3937, %v3881, %v3723
    %v3940 = vmul.f32 %v3936, 0.16666639
    %vm3941 = vcmask 0
    %3942 = vst.msk [vmem:[#allocation8] sm:$0x1] %vm3941, %v3940
    %v3943 = vld [vmem:[%s53] sm:$0xf]
    %v3944 = vld [vmem:[%s53 + $0x4] sm:$0xf]
    %v3945 = vld [vmem:[%s53 + $0x8] sm:$0xf]
    %v3946 = vld [vmem:[%s53 + $0xc] sm:$0xf]
    %v3947 = vld [vmem:[%s53 + $0x10] sm:$0xf]
    %v3948 = vld [vmem:[%s53 + $0x14] sm:$0xf]
    %v3949 = vld [vmem:[%s53 + $0x18] sm:$0xf]
    %v3950 = vld [vmem:[%s53 + $0x1c] sm:$0xf]
    %v3951 = vld [vmem:[%s55] sm:$0x1]
    %v3952 = vld [vmem:[%s57] sm:$0xf]
    %v3953 = vld [vmem:[%s57 + $0x4] sm:$0xf]
    %v3954 = vld [vmem:[%s57 + $0x8] sm:$0xf]
    %v3955 = vld [vmem:[%s57 + $0xc] sm:$0xf]
    %v3956 = vld [vmem:[%s59] sm:$0x1]
    %v3957 = vlaneseq
    %v3958 = vand.u32 %v3957, 127
    %3959 = vset.pattern.permute.xlu0 0
    %3960 = vperm.xlu0 %3959, %v3938
    %v3961 = vpop.permute.xlu0 %3960
    %vm3962 = vcmp.eq.s32.totalorder %v3958, %v3961
    %v3963 = vsel %vm3962, 1, 0
    %v3964 = vcvt.s32.f32 %v3963
    %v3966 = vrot.slane %v3964, 1
    %vm3967 = vcmask 64512
    %v3968 = vsel %vm3967, %v3966, 0
    %3970 = vmatprep.subr.mxu0 0.0
    %3971 = vmatpush1.msra.mxu0 %v2305
    %3972 = vmatprep.subr.mxu0 0.0
    %3973 = vmatpush1.msra.mxu0 0.0
    %3974 = vmatprep.subr.mxu0 0.0
    %3975 = vmatpush1.msra.mxu0 0.0
    %3976 = vmatprep.subr.mxu0 0.0
    %3977 = vmatpush1.msra.mxu0 0.0
    %3978 = vmatprep.subr.mxu0 0.0
    %3979 = vmatpush1.msra.mxu0 0.0
    %3980 = vmatprep.subr.mxu0 0.0
    %3981 = vmatpush1.msra.mxu0 0.0
    %3982 = vmatprep.subr.mxu0 0.0
    %3983 = vmatpush1.msra.mxu0 0.0
    %3984 = vmatprep.subr.mxu0 0.0
    %3985 = vmatpush1.msra.mxu0 0.0
    %3986 = vmatprep.subr.mxu0 0.0
    %3987 = vmatpush1.msra.mxu0 0.0
    %3988 = vmatprep.subr.mxu0 0.0
    %3989 = vmatpush1.msra.mxu0 0.0
    %3990 = vmatprep.subr.mxu0 0.0
    %3991 = vmatpush1.msra.mxu0 0.0
    %3992 = vmatprep.subr.mxu0 0.0
    %3993 = vmatpush1.msra.mxu0 0.0
    %3994 = vmatprep.subr.mxu0 0.0
    %3995 = vmatpush1.msra.mxu0 0.0
    %3996 = vmatprep.subr.mxu0 0.0
    %3997 = vmatpush1.msra.mxu0 0.0
    %3998 = vmatprep.subr.mxu0 0.0
    %3999 = vmatpush1.msra.mxu0 0.0
    %4000 = vmatprep.subr.mxu0 0.0
    %4001 = vmatpush1.msra.mxu0 0.0
    %4002 = vmatprep.subr.mxu0 0.0
    %4003 = vmatpush1.msra.mxu0 0.0
    %4004 = vmatprep.subr.mxu0 0.0
    %4005 = vmatpush1.msra.mxu0 0.0
    %4006 = vmatprep.subr.mxu0 0.0
    %4007 = vmatpush1.msra.mxu0 0.0
    %4008 = vmatprep.subr.mxu0 0.0
    %4009 = vmatpush1.msra.mxu0 0.0
    %4010 = vmatprep.subr.mxu0 0.0
    %4011 = vmatpush1.msra.mxu0 0.0
    %4012 = vmatprep.subr.mxu0 0.0
    %4013 = vmatpush1.msra.mxu0 0.0
    %4014 = vmatprep.subr.mxu0 0.0
    %4015 = vmatpush1.msra.mxu0 0.0
    %4016 = vmatprep.subr.mxu0 0.0
    %4017 = vmatpush1.msra.mxu0 0.0
    %4018 = vmatprep.subr.mxu0 0.0
    %4019 = vmatpush1.msra.mxu0 0.0
    %4020 = vmatprep.subr.mxu0 0.0
    %4021 = vmatpush1.msra.mxu0 0.0
    %4022 = vmatprep.subr.mxu0 0.0
    %4023 = vmatpush1.msra.mxu0 0.0
    %4024 = vmatprep.subr.mxu0 0.0
    %4025 = vmatpush1.msra.mxu0 0.0
    %4026 = vmatprep.subr.mxu0 0.0
    %4027 = vmatpush1.msra.mxu0 0.0
    %4028 = vmatprep.subr.mxu0 0.0
    %4029 = vmatpush1.msra.mxu0 0.0
    %4030 = vmatprep.subr.mxu0 0.0
    %4031 = vmatpush1.msra.mxu0 0.0
    %4032 = vmatprep.subr.mxu0 0.0
    %4033 = vmatpush1.msra.mxu0 0.0
    %4034 = vmatprep.mubr.f32.mxu0 0.0
    %4035 = vmatmul.mubr.f32.gmra.mrb[0].mxu0 %v3968
    %v4036 = vpop.f32.mrb[0].mxu0
    %v4037 = vadd.f32 0.0, %v4036
    %v4038 = vpop.f32.mrb[0].mxu0
    %4039 = vdwg.mxu0
    %v4040 = vpack.c.bf16 %v4037, %v4037
    %v4045 = vunpack.c.l.b16 %v3947
    %v4046 = vunpack.c.l.b16 %v3948
    %v4047 = vunpack.c.l.b16 %v3949
    %v4048 = vunpack.c.l.b16 %v3950
    %v4049 = vpack.c.b16 %v4046, %v4045
    %v4050 = vpack.c.b16 %v4048, %v4047
    %v4054 = vsel %vm284, %v4040, 0
    %4056 = vmatprep.subr.bf16.mxu0 0
    %4057 = vmatpush1.bf16.msra.mxu0 %v4049
    %4058 = vmatprep.subr.bf16.mxu0 0
    %4059 = vmatpush1.bf16.msra.mxu0 %v4050
    %4060 = vmatprep.subr.bf16.mxu0 0
    %4061 = vmatpush1.bf16.msra.mxu0 0
    %4062 = vmatprep.subr.bf16.mxu0 0
    %4063 = vmatpush1.bf16.msra.mxu0 0
    %4064 = vmatprep.subr.bf16.mxu0 0
    %4065 = vmatpush1.bf16.msra.mxu0 0
    %4066 = vmatprep.subr.bf16.mxu0 0
    %4067 = vmatpush1.bf16.msra.mxu0 0
    %4068 = vmatprep.subr.bf16.mxu0 0
    %4069 = vmatpush1.bf16.msra.mxu0 0
    %4070 = vmatprep.subr.bf16.mxu0 0
    %4071 = vmatpush1.bf16.msra.mxu0 0
    %4072 = vmatprep.subr.bf16.mxu0 0
    %4073 = vmatpush1.bf16.msra.mxu0 0
    %4074 = vmatprep.subr.bf16.mxu0 0
    %4075 = vmatpush1.bf16.msra.mxu0 0
    %4076 = vmatprep.subr.bf16.mxu0 0
    %4077 = vmatpush1.bf16.msra.mxu0 0
    %4078 = vmatprep.subr.bf16.mxu0 0
    %4079 = vmatpush1.bf16.msra.mxu0 0
    %4080 = vmatprep.subr.bf16.mxu0 0
    %4081 = vmatpush1.bf16.msra.mxu0 0
    %4082 = vmatprep.subr.bf16.mxu0 0
    %4083 = vmatpush1.bf16.msra.mxu0 0
    %4084 = vmatprep.subr.bf16.mxu0 0
    %4085 = vmatpush1.bf16.msra.mxu0 0
    %4086 = vmatprep.subr.bf16.mxu0 0
    %4087 = vmatpush1.bf16.msra.mxu0 0
    %4088 = vmatprep.mubr.bf16.mxu0 0
    %4089 = vmatmul.mubr.bf16.gmra.mrb[0].mxu0 %v4054
    %v4090 = vpop.f32.mrb[0].mxu0
    %v4091 = vadd.f32 0.0, %v4090
    %v4092 = vpop.f32.mrb[0].mxu0
    %v4093 = vpop.f32.mrb[0].mxu0
    %v4094 = vpop.f32.mrb[0].mxu0
    %4095 = vdwg.mxu0
    %v4096 = vshrl.u32 %v2310, 16
    %v4098 = vshll.u32 %v2310, 16
    %v4100 = vrot.slane %v4098, 1
    %v4101 = vor.u32 %v4096, %v4100
    %v4106 = vunpack.c.l.b16 %v3943
    %v4107 = vunpack.c.l.b16 %v3944
    %v4108 = vunpack.c.l.b16 %v3945
    %v4109 = vunpack.c.l.b16 %v3946
    %v4110 = vpack.c.b16 %v4107, %v4106
    %v4111 = vpack.c.b16 %v4109, %v4108
    %v4115 = vsel %vm284, %v4101, 0
    %4117 = vmatprep.subr.bf16.mxu0 0
    %4118 = vmatpush1.bf16.msra.mxu0 %v4110
    %4119 = vmatprep.subr.bf16.mxu0 0
    %4120 = vmatpush1.bf16.msra.mxu0 %v4111
    %4121 = vmatprep.subr.bf16.mxu0 0
    %4122 = vmatpush1.bf16.msra.mxu0 0
    %4123 = vmatprep.subr.bf16.mxu0 0
    %4124 = vmatpush1.bf16.msra.mxu0 0
    %4125 = vmatprep.subr.bf16.mxu0 0
    %4126 = vmatpush1.bf16.msra.mxu0 0
    %4127 = vmatprep.subr.bf16.mxu0 0
    %4128 = vmatpush1.bf16.msra.mxu0 0
    %4129 = vmatprep.subr.bf16.mxu0 0
    %4130 = vmatpush1.bf16.msra.mxu0 0
    %4131 = vmatprep.subr.bf16.mxu0 0
    %4132 = vmatpush1.bf16.msra.mxu0 0
    %4133 = vmatprep.subr.bf16.mxu0 0
    %4134 = vmatpush1.bf16.msra.mxu0 0
    %4135 = vmatprep.subr.bf16.mxu0 0
    %4136 = vmatpush1.bf16.msra.mxu0 0
    %4137 = vmatprep.subr.bf16.mxu0 0
    %4138 = vmatpush1.bf16.msra.mxu0 0
    %4139 = vmatprep.subr.bf16.mxu0 0
    %4140 = vmatpush1.bf16.msra.mxu0 0
    %4141 = vmatprep.subr.bf16.mxu0 0
    %4142 = vmatpush1.bf16.msra.mxu0 0
    %4143 = vmatprep.subr.bf16.mxu0 0
    %4144 = vmatpush1.bf16.msra.mxu0 0
    %4145 = vmatprep.subr.bf16.mxu0 0
    %4146 = vmatpush1.bf16.msra.mxu0 0
    %4147 = vmatprep.subr.bf16.mxu0 0
    %4148 = vmatpush1.bf16.msra.mxu0 0
    %4149 = vmatprep.mubr.bf16.mxu0 0
    %4150 = vmatmul.mubr.bf16.gmra.mrb[0].mxu0 %v4115
    %v4151 = vpop.f32.mrb[0].mxu0
    %v4152 = vadd.f32 %v4091, %v4151
    %v4153 = vpop.f32.mrb[0].mxu0
    %v4154 = vpop.f32.mrb[0].mxu0
    %v4155 = vpop.f32.mrb[0].mxu0
    %4156 = vdwg.mxu0
    %v4158 = vlaneseq
    %v4159 = vshrl.u32 %v4158, 7
    %v4160 = vsub.s32 0, %v4159
    %v4161 = vrot.slane %v3951, %v4160
    %v4163 = vadd.f32 %v4152, %v4161
    %v4164 = vtanh.pop %v4163
    %v4165 = vpack.c.bf16 %v4164, %v4164
    %v4167 = vlaneseq
    %v4168 = vshrl.u32 %v4167, 7
    %v4169 = vsub.s32 0, %v4168
    %v4170 = vrot.slane %v3956, %v4169
    %v4176 = vunpack.c.l.b16 %v3952
    %v4177 = vunpack.c.l.b16 %v3953
    %v4178 = vunpack.c.l.b16 %v3954
    %v4179 = vunpack.c.l.b16 %v3955
    %v4180 = vpack.c.b16 %v4177, %v4176
    %v4181 = vpack.c.b16 %v4179, %v4178
    %v4185 = vsel %vm284, %v4165, 0
    %4187 = vmatprep.subr.bf16.mxu0 0
    %4188 = vmatpush1.bf16.msra.mxu0 %v4180
    %4189 = vmatprep.subr.bf16.mxu0 0
    %4190 = vmatpush1.bf16.msra.mxu0 %v4181
    %4191 = vmatprep.subr.bf16.mxu0 0
    %4192 = vmatpush1.bf16.msra.mxu0 0
    %4193 = vmatprep.subr.bf16.mxu0 0
    %4194 = vmatpush1.bf16.msra.mxu0 0
    %4195 = vmatprep.subr.bf16.mxu0 0
    %4196 = vmatpush1.bf16.msra.mxu0 0
    %4197 = vmatprep.subr.bf16.mxu0 0
    %4198 = vmatpush1.bf16.msra.mxu0 0
    %4199 = vmatprep.subr.bf16.mxu0 0
    %4200 = vmatpush1.bf16.msra.mxu0 0
    %4201 = vmatprep.subr.bf16.mxu0 0
    %4202 = vmatpush1.bf16.msra.mxu0 0
    %4203 = vmatprep.subr.bf16.mxu0 0
    %4204 = vmatpush1.bf16.msra.mxu0 0
    %4205 = vmatprep.subr.bf16.mxu0 0
    %4206 = vmatpush1.bf16.msra.mxu0 0
    %4207 = vmatprep.subr.bf16.mxu0 0
    %4208 = vmatpush1.bf16.msra.mxu0 0
    %4209 = vmatprep.subr.bf16.mxu0 0
    %4210 = vmatpush1.bf16.msra.mxu0 0
    %4211 = vmatprep.subr.bf16.mxu0 0
    %4212 = vmatpush1.bf16.msra.mxu0 0
    %4213 = vmatprep.subr.bf16.mxu0 0
    %4214 = vmatpush1.bf16.msra.mxu0 0
    %4215 = vmatprep.subr.bf16.mxu0 0
    %4216 = vmatpush1.bf16.msra.mxu0 0
    %4217 = vmatprep.subr.bf16.mxu0 0
    %4218 = vmatpush1.bf16.msra.mxu0 0
    %4219 = vmatprep.mubr.bf16.mxu0 0
    %4220 = vmatmul.mubr.bf16.gmra.mrb[0].mxu0 %v4185
    %v4221 = vpop.f32.mrb[0].mxu0
    %v4222 = vadd.f32 %v4170, %v4221
    %v4223 = vpop.f32.mrb[0].mxu0
    %v4224 = vpop.f32.mrb[0].mxu0
    %v4225 = vpop.f32.mrb[0].mxu0
    %4226 = vdwg.mxu0
    %vm4227 = vcmask 30720
    %4228 = vst.msk [vmem:[%s61] sm:$0x7f] %vm4227, %v4222
    %4229 = vset.pattern.permute.xlu0 0
    %4230 = vperm.xlu0 %4229, %v3939
    %v4231 = vpop.permute.xlu0 %4230
    %vm4232 = vcmp.eq.s32.totalorder %v3958, %v4231
    %v4233 = vsel %vm4232, 1, 0
    %v4234 = vcvt.s32.f32 %v4233
    %v4236 = vrot.slane %v4234, 1
    %v4237 = vsel %vm3967, %v4236, 0
    %4239 = vmatprep.subr.mxu0 0.0
    %4240 = vmatpush1.msra.mxu0 %v2305
    %4241 = vmatprep.subr.mxu0 0.0
    %4242 = vmatpush1.msra.mxu0 0.0
    %4243 = vmatprep.subr.mxu0 0.0
    %4244 = vmatpush1.msra.mxu0 0.0
    %4245 = vmatprep.subr.mxu0 0.0
    %4246 = vmatpush1.msra.mxu0 0.0
    %4247 = vmatprep.subr.mxu0 0.0
    %4248 = vmatpush1.msra.mxu0 0.0
    %4249 = vmatprep.subr.mxu0 0.0
    %4250 = vmatpush1.msra.mxu0 0.0
    %4251 = vmatprep.subr.mxu0 0.0
    %4252 = vmatpush1.msra.mxu0 0.0
    %4253 = vmatprep.subr.mxu0 0.0
    %4254 = vmatpush1.msra.mxu0 0.0
    %4255 = vmatprep.subr.mxu0 0.0
    %4256 = vmatpush1.msra.mxu0 0.0
    %4257 = vmatprep.subr.mxu0 0.0
    %4258 = vmatpush1.msra.mxu0 0.0
    %4259 = vmatprep.subr.mxu0 0.0
    %4260 = vmatpush1.msra.mxu0 0.0
    %4261 = vmatprep.subr.mxu0 0.0
    %4262 = vmatpush1.msra.mxu0 0.0
    %4263 = vmatprep.subr.mxu0 0.0
    %4264 = vmatpush1.msra.mxu0 0.0
    %4265 = vmatprep.subr.mxu0 0.0
    %4266 = vmatpush1.msra.mxu0 0.0
    %4267 = vmatprep.subr.mxu0 0.0
    %4268 = vmatpush1.msra.mxu0 0.0
    %4269 = vmatprep.subr.mxu0 0.0
    %4270 = vmatpush1.msra.mxu0 0.0
    %4271 = vmatprep.subr.mxu0 0.0
    %4272 = vmatpush1.msra.mxu0 0.0
    %4273 = vmatprep.subr.mxu0 0.0
    %4274 = vmatpush1.msra.mxu0 0.0
    %4275 = vmatprep.subr.mxu0 0.0
    %4276 = vmatpush1.msra.mxu0 0.0
    %4277 = vmatprep.subr.mxu0 0.0
    %4278 = vmatpush1.msra.mxu0 0.0
    %4279 = vmatprep.subr.mxu0 0.0
    %4280 = vmatpush1.msra.mxu0 0.0
    %4281 = vmatprep.subr.mxu0 0.0
    %4282 = vmatpush1.msra.mxu0 0.0
    %4283 = vmatprep.subr.mxu0 0.0
    %4284 = vmatpush1.msra.mxu0 0.0
    %4285 = vmatprep.subr.mxu0 0.0
    %4286 = vmatpush1.msra.mxu0 0.0
    %4287 = vmatprep.subr.mxu0 0.0
    %4288 = vmatpush1.msra.mxu0 0.0
    %4289 = vmatprep.subr.mxu0 0.0
    %4290 = vmatpush1.msra.mxu0 0.0
    %4291 = vmatprep.subr.mxu0 0.0
    %4292 = vmatpush1.msra.mxu0 0.0
    %4293 = vmatprep.subr.mxu0 0.0
    %4294 = vmatpush1.msra.mxu0 0.0
    %4295 = vmatprep.subr.mxu0 0.0
    %4296 = vmatpush1.msra.mxu0 0.0
    %4297 = vmatprep.subr.mxu0 0.0
    %4298 = vmatpush1.msra.mxu0 0.0
    %4299 = vmatprep.subr.mxu0 0.0
    %4300 = vmatpush1.msra.mxu0 0.0
    %4301 = vmatprep.subr.mxu0 0.0
    %4302 = vmatpush1.msra.mxu0 0.0
    %4303 = vmatprep.mubr.f32.mxu0 0.0
    %4304 = vmatmul.mubr.f32.gmra.mrb[0].mxu0 %v4237
    %v4305 = vpop.f32.mrb[0].mxu0
    %v4306 = vadd.f32 0.0, %v4305
    %v4307 = vpop.f32.mrb[0].mxu0
    %4308 = vdwg.mxu0
    %v4309 = vpack.c.bf16 %v4306, %v4306
    %v4311 = vsel %vm284, %v4309, 0
    %4313 = vmatprep.subr.bf16.mxu0 0
    %4314 = vmatpush1.bf16.msra.mxu0 %v4049
    %4315 = vmatprep.subr.bf16.mxu0 0
    %4316 = vmatpush1.bf16.msra.mxu0 %v4050
    %4317 = vmatprep.subr.bf16.mxu0 0
    %4318 = vmatpush1.bf16.msra.mxu0 0
    %4319 = vmatprep.subr.bf16.mxu0 0
    %4320 = vmatpush1.bf16.msra.mxu0 0
    %4321 = vmatprep.subr.bf16.mxu0 0
    %4322 = vmatpush1.bf16.msra.mxu0 0
    %4323 = vmatprep.subr.bf16.mxu0 0
    %4324 = vmatpush1.bf16.msra.mxu0 0
    %4325 = vmatprep.subr.bf16.mxu0 0
    %4326 = vmatpush1.bf16.msra.mxu0 0
    %4327 = vmatprep.subr.bf16.mxu0 0
    %4328 = vmatpush1.bf16.msra.mxu0 0
    %4329 = vmatprep.subr.bf16.mxu0 0
    %4330 = vmatpush1.bf16.msra.mxu0 0
    %4331 = vmatprep.subr.bf16.mxu0 0
    %4332 = vmatpush1.bf16.msra.mxu0 0
    %4333 = vmatprep.subr.bf16.mxu0 0
    %4334 = vmatpush1.bf16.msra.mxu0 0
    %4335 = vmatprep.subr.bf16.mxu0 0
    %4336 = vmatpush1.bf16.msra.mxu0 0
    %4337 = vmatprep.subr.bf16.mxu0 0
    %4338 = vmatpush1.bf16.msra.mxu0 0
    %4339 = vmatprep.subr.bf16.mxu0 0
    %4340 = vmatpush1.bf16.msra.mxu0 0
    %4341 = vmatprep.subr.bf16.mxu0 0
    %4342 = vmatpush1.bf16.msra.mxu0 0
    %4343 = vmatprep.subr.bf16.mxu0 0
    %4344 = vmatpush1.bf16.msra.mxu0 0
    %4345 = vmatprep.mubr.bf16.mxu0 0
    %4346 = vmatmul.mubr.bf16.gmra.mrb[0].mxu0 %v4311
    %v4347 = vpop.f32.mrb[0].mxu0
    %v4348 = vadd.f32 0.0, %v4347
    %v4349 = vpop.f32.mrb[0].mxu0
    %v4350 = vpop.f32.mrb[0].mxu0
    %v4351 = vpop.f32.mrb[0].mxu0
    %4352 = vdwg.mxu0
    %4353 = vmatprep.subr.bf16.mxu0 0
    %4354 = vmatpush1.bf16.msra.mxu0 %v4110
    %4355 = vmatprep.subr.bf16.mxu0 0
    %4356 = vmatpush1.bf16.msra.mxu0 %v4111
    %4357 = vmatprep.subr.bf16.mxu0 0
    %4358 = vmatpush1.bf16.msra.mxu0 0
    %4359 = vmatprep.subr.bf16.mxu0 0
    %4360 = vmatpush1.bf16.msra.mxu0 0
    %4361 = vmatprep.subr.bf16.mxu0 0
    %4362 = vmatpush1.bf16.msra.mxu0 0
    %4363 = vmatprep.subr.bf16.mxu0 0
    %4364 = vmatpush1.bf16.msra.mxu0 0
    %4365 = vmatprep.subr.bf16.mxu0 0
    %4366 = vmatpush1.bf16.msra.mxu0 0
    %4367 = vmatprep.subr.bf16.mxu0 0
    %4368 = vmatpush1.bf16.msra.mxu0 0
    %4369 = vmatprep.subr.bf16.mxu0 0
    %4370 = vmatpush1.bf16.msra.mxu0 0
    %4371 = vmatprep.subr.bf16.mxu0 0
    %4372 = vmatpush1.bf16.msra.mxu0 0
    %4373 = vmatprep.subr.bf16.mxu0 0
    %4374 = vmatpush1.bf16.msra.mxu0 0
    %4375 = vmatprep.subr.bf16.mxu0 0
    %4376 = vmatpush1.bf16.msra.mxu0 0
    %4377 = vmatprep.subr.bf16.mxu0 0
    %4378 = vmatpush1.bf16.msra.mxu0 0
    %4379 = vmatprep.subr.bf16.mxu0 0
    %4380 = vmatpush1.bf16.msra.mxu0 0
    %4381 = vmatprep.subr.bf16.mxu0 0
    %4382 = vmatpush1.bf16.msra.mxu0 0
    %4383 = vmatprep.subr.bf16.mxu0 0
    %4384 = vmatpush1.bf16.msra.mxu0 0
    %4385 = vmatprep.mubr.bf16.mxu0 0
    %4386 = vmatmul.mubr.bf16.gmra.mrb[0].mxu0 %v4115
    %v4387 = vpop.f32.mrb[0].mxu0
    %v4388 = vadd.f32 %v4348, %v4387
    %v4389 = vpop.f32.mrb[0].mxu0
    %v4390 = vpop.f32.mrb[0].mxu0
    %v4391 = vpop.f32.mrb[0].mxu0
    %4392 = vdwg.mxu0
    %v4393 = vadd.f32 %v4388, %v4161
    %v4394 = vtanh.pop %v4393
    %v4395 = vpack.c.bf16 %v4394, %v4394
    %v4397 = vsel %vm284, %v4395, 0
    %4399 = vmatprep.subr.bf16.mxu0 0
    %4400 = vmatpush1.bf16.msra.mxu0 %v4180
    %4401 = vmatprep.subr.bf16.mxu0 0
    %4402 = vmatpush1.bf16.msra.mxu0 %v4181
    %4403 = vmatprep.subr.bf16.mxu0 0
    %4404 = vmatpush1.bf16.msra.mxu0 0
    %4405 = vmatprep.subr.bf16.mxu0 0
    %4406 = vmatpush1.bf16.msra.mxu0 0
    %4407 = vmatprep.subr.bf16.mxu0 0
    %4408 = vmatpush1.bf16.msra.mxu0 0
    %4409 = vmatprep.subr.bf16.mxu0 0
    %4410 = vmatpush1.bf16.msra.mxu0 0
    %4411 = vmatprep.subr.bf16.mxu0 0
    %4412 = vmatpush1.bf16.msra.mxu0 0
    %4413 = vmatprep.subr.bf16.mxu0 0
    %4414 = vmatpush1.bf16.msra.mxu0 0
    %4415 = vmatprep.subr.bf16.mxu0 0
    %4416 = vmatpush1.bf16.msra.mxu0 0
    %4417 = vmatprep.subr.bf16.mxu0 0
    %4418 = vmatpush1.bf16.msra.mxu0 0
    %4419 = vmatprep.subr.bf16.mxu0 0
    %4420 = vmatpush1.bf16.msra.mxu0 0
    %4421 = vmatprep.subr.bf16.mxu0 0
    %4422 = vmatpush1.bf16.msra.mxu0 0
    %4423 = vmatprep.subr.bf16.mxu0 0
    %4424 = vmatpush1.bf16.msra.mxu0 0
    %4425 = vmatprep.subr.bf16.mxu0 0
    %4426 = vmatpush1.bf16.msra.mxu0 0
    %4427 = vmatprep.subr.bf16.mxu0 0
    %4428 = vmatpush1.bf16.msra.mxu0 0
    %4429 = vmatprep.subr.bf16.mxu0 0
    %4430 = vmatpush1.bf16.msra.mxu0 0
    %4431 = vmatprep.mubr.bf16.mxu0 0
    %4432 = vmatmul.mubr.bf16.gmra.mrb[0].mxu0 %v4397
    %v4433 = vpop.f32.mrb[0].mxu0
    %v4434 = vadd.f32 %v4170, %v4433
    %v4435 = vpop.f32.mrb[0].mxu0
    %v4436 = vpop.f32.mrb[0].mxu0
    %v4437 = vpop.f32.mrb[0].mxu0
    %4438 = vdwg.mxu0
    %4439 = vst.msk [vmem:[%s63] sm:$0x7f] %vm4227, %v4434
    // Predicated region
    $region122: #{classifier_forward.1} parent=1 // pred_check
      _
    $region123: #{classifier_forward.1} parent=1 // pred_check_branch
      %4441 = sbr.rel (0) target = $region125
    $region124: #{classifier_forward.1} parent=1 // pred_region
      _
    $region125: #{classifier_forward.1} parent=1 // pred_fallthru
      _
    // Predicated region
    $region126: #{classifier_forward.1} parent=1 // pred_check
      _
    $region127: #{classifier_forward.1} parent=1 // pred_check_branch
      %4443 = sbr.rel (0) target = $region129
    $region128: #{classifier_forward.1} parent=1 // pred_region
      _
    $region129: #{classifier_forward.1} parent=1 // pred_fallthru
      _
    // Predicated region
    $region130: #{classifier_forward.1} parent=1 // pred_check
      _
    $region131: #{classifier_forward.1} parent=1 // pred_check_branch
      %4445 = sbr.rel (0) target = $region133
    $region132: #{classifier_forward.1} parent=1 // pred_region
      %s4447 = ssub.s32 16, 16
      %4448 = vsyncadd [#allocation9], %s4447
      %s4450 = sshll.u32 [#allocation8], 4
      %s4451 = int_to_ptr.vmem [resolvable:$true] %s4450
      %4453 = dma.vmem_to_hbm [thread:$0]  %s4451, 16, %s65, [#allocation9]
    $region133: #{classifier_forward.1} parent=1 // pred_fallthru
      _
    // Predicated region
    $region134: #{classifier_forward.1} parent=1 // pred_check
      _
    $region135: #{classifier_forward.1} parent=1 // pred_check_branch
      %4455 = sbr.rel (0) target = $region137
    $region136: #{classifier_forward.1} parent=1 // pred_region
      _
    $region137: #{classifier_forward.1} parent=1 // pred_fallthru
      _
    // Predicated region
    $region138: #{classifier_forward.1} parent=1 // pred_check
      _
    $region139: #{classifier_forward.1} parent=1 // pred_check_branch
      %4457 = sbr.rel (0) target = $region141
    $region140: #{classifier_forward.1} parent=1 // pred_region
      _
    $region141: #{classifier_forward.1} parent=1 // pred_fallthru
      _
    // Predicated region
    $region142: #{classifier_forward.1} parent=1 // pred_check
      _
    $region143: #{classifier_forward.1} parent=1 // pred_check_branch
      %4459 = sbr.rel (0) target = $region145
    $region144: #{classifier_forward.1} parent=1 // pred_region
      %4460 = dma.done [#allocation9], 16
    $region145: #{classifier_forward.1} parent=1 // pred_fallthru
      _
    %4461 = vsyncpa [#allocation9], 1

</llo_original>
